<compile_context>
chip_gen: v5e
topology: v5e:2x2
jax: 0.10.0
libtpu: 0.0.40
codegen_flags: <defaults>
</compile_context>

<pallas_src>
import functools

import jax
import jax.numpy as jnp
from jax.experimental import pallas as pl
from jax.experimental.pallas import tpu as pltpu


def _round_up(x, m):
    return (x + m - 1) // m * m


def _row_tile(m, cap=256):
    """Largest multiple of 8 that divides m and is <= cap (m is a multiple of 8)."""
    best = 8
    t = 8
    limit = min(m, cap)
    while t <= limit:
        if m % t == 0:
            best = t
        t += 8
    return best


# ----------------------------------------------------------------------------
# Tiled MXU matmul: bf16 operands, f32 accumulator.  C[M,N] = A[M,K] @ B[K,N].
# ----------------------------------------------------------------------------
def _matmul_kernel(a_ref, b_ref, o_ref, acc_ref):
    @pl.when(pl.program_id(2) == 0)
    def _():
        acc_ref[...] = jnp.zeros_like(acc_ref)

    acc_ref[...] += jnp.dot(a_ref[...], b_ref[...],
                            preferred_element_type=jnp.float32)

    @pl.when(pl.program_id(2) == pl.num_programs(2) - 1)
    def _():
        o_ref[...] = acc_ref[...].astype(o_ref.dtype)


def pallas_matmul(a, b, out_dtype=jnp.float32):
    M, K = a.shape
    K2, N = b.shape
    assert K == K2
    # Per-layer tile choice: match real M (no 128-padding waste at small batch),
    # whole-K single step (K <= 1024 everywhere in this net), wide N tiles.
    tm = min(128, _round_up(M, 16))
    tn = min(512, _round_up(N, 128))
    tk = min(1024, _round_up(K, 128))
    Mp, Kp, Np = _round_up(M, tm), _round_up(K, tk), _round_up(N, tn)

    a_p = jnp.pad(a, ((0, Mp - M), (0, Kp - K))).astype(jnp.bfloat16)
    b_p = jnp.pad(b, ((0, Kp - K), (0, Np - N))).astype(jnp.bfloat16)

    out = pl.pallas_call(
        _matmul_kernel,
        out_shape=jax.ShapeDtypeStruct((Mp, Np), out_dtype),
        grid_spec=pltpu.PrefetchScalarGridSpec(
            num_scalar_prefetch=0,
            grid=(Mp // tm, Np // tn, Kp // tk),
            in_specs=[pl.BlockSpec((tm, tk), lambda i, j, k: (i, k)),
                      pl.BlockSpec((tk, tn), lambda i, j, k: (k, j))],
            out_specs=pl.BlockSpec((tm, tn), lambda i, j, k: (i, j)),
            scratch_shapes=[pltpu.VMEM((tm, tn), jnp.float32)]),
        compiler_params=pltpu.CompilerParams(
            dimension_semantics=("parallel", "parallel", "arbitrary"),
            vmem_limit_bytes=32 * 1024 * 1024),
    )(a_p, b_p)
    return out[:M, :N]


# ----------------------------------------------------------------------------
# BatchNorm2d (training-mode batch statistics) + ELU, two-pass, tiled over rows.
# y: (M, C) slab with rows ordered (b, h, w); stats are global over all rows.
# ----------------------------------------------------------------------------
def _bn_stats_kernel(y_ref, s_ref):
    @pl.when(pl.program_id(0) == 0)
    def _():
        s_ref[...] = jnp.zeros_like(s_ref)
    y = y_ref[...]
    ssum = jnp.sum(y, axis=0, keepdims=True)          # (1, C)
    ssq = jnp.sum(y * y, axis=0, keepdims=True)       # (1, C)
    s_ref[...] += jnp.concatenate([ssum, ssq], axis=0)


def _bn_apply_elu_kernel(y_ref, s_ref, o_ref, *, inv_m):
    s = s_ref[...]
    mean = s[0:1, :] * inv_m
    var = jnp.maximum(s[1:2, :] * inv_m - mean * mean, 0.0)   # biased var (PyTorch)
    x = (y_ref[...] - mean) * jax.lax.rsqrt(var + 1e-5)       # gamma=1, beta=0
    # ELU(alpha=1).  (exp(x)-1 rather than expm1 for guaranteed Mosaic lowering.)
    o_ref[...] = jnp.where(x > 0.0, x,
                           jnp.exp(jnp.minimum(x, 0.0)) - 1.0).astype(o_ref.dtype)


def pallas_bn_elu(y, out_dtype=jnp.bfloat16):
    # TODO(synk): BN running_mean/running_var buffer updates (training-time side
    # effect) are not materialized; only the forward output is reproduced.
    M, C = y.shape
    tb = _row_tile(M, cap=256)
    grid = (M // tb,)

    stats = pl.pallas_call(
        _bn_stats_kernel,
        out_shape=jax.ShapeDtypeStruct((2, C), jnp.float32),
        grid=grid,
        in_specs=[pl.BlockSpec((tb, C), lambda i: (i, 0))],
        out_specs=pl.BlockSpec((2, C), lambda i: (0, 0)),
        compiler_params=pltpu.CompilerParams(
            dimension_semantics=("arbitrary",)),
    )(y)

    out = pl.pallas_call(
        functools.partial(_bn_apply_elu_kernel, inv_m=1.0 / M),
        out_shape=jax.ShapeDtypeStruct((M, C), out_dtype),
        grid=grid,
        in_specs=[pl.BlockSpec((tb, C), lambda i: (i, 0)),
                  pl.BlockSpec((2, C), lambda i: (0, 0))],
        out_specs=pl.BlockSpec((tb, C), lambda i: (i, 0)),
        compiler_params=pltpu.CompilerParams(
            dimension_semantics=("parallel",)),
    )(y, stats)
    return out


# ----------------------------------------------------------------------------
# Final Sigmoid: tiled, lane-dense elementwise kernel on a flat (rows, 128) view.
# ----------------------------------------------------------------------------
def _sigmoid_kernel(y_ref, o_ref):
    y = y_ref[...]
    o_ref[...] = (1.0 / (1.0 + jnp.exp(-y))).astype(o_ref.dtype)


def pallas_sigmoid_nhwc(x):
    B, H, W, C = x.shape                 # B*H*W*C is a multiple of 128 here
    flat = x.reshape(-1, 128)
    R = flat.shape[0]
    tb = _row_tile(R, cap=512)
    out = pl.pallas_call(
        _sigmoid_kernel,
        out_shape=jax.ShapeDtypeStruct((R, 128), jnp.float32),
        grid=(R // tb,),
        in_specs=[pl.BlockSpec((tb, 128), lambda i: (i, 0))],
        out_specs=pl.BlockSpec((tb, 128), lambda i: (i, 0)),
        compiler_params=pltpu.CompilerParams(
            dimension_semantics=("parallel",)),
    )(flat)
    return out.reshape(B, H, W, C)


# ----------------------------------------------------------------------------
# ConvTranspose2d lowering helpers (all heavy compute is in pallas_matmul).
# ----------------------------------------------------------------------------
def _w_to_mat(w):
    """PyTorch ConvTranspose2d weight (Cin, Cout, k, k) -> (Cin, k*k*Cout)."""
    Cin, Cout, k, _ = w.shape
    return w.transpose(0, 2, 3, 1).reshape(Cin, k * k * Cout)


def _col2im_stride2(cols, B, H, W, Cout):
    """Overlap-add for ConvTranspose2d(k=4, stride=2, pad=1).

    cols: (B, H, W, 4, 4, Cout) with axes (b, ih, iw, kh, kw, co), where
    cols[b,ih,iw,kh,kw,:] = x[b,ih,iw,:] @ w[:, :, kh, kw].
    Output row oy=2*qy+py gathers taps from kh = oy + 1 - 2*ih:
      py=0: (ih=qy, kh=1) + (ih=qy-1, kh=3);  py=1: (ih=qy, kh=2) + (ih=qy+1, kh=0).
    Same decomposition along width.  Returns NHWC (B, 2H, 2W, Cout).
    """
    h0 = cols[:, :, :, 1] + jnp.pad(
        cols[:, :, :, 3], ((0, 0), (1, 0), (0, 0), (0, 0), (0, 0)))[:, :-1]
    h1 = cols[:, :, :, 2] + jnp.pad(
        cols[:, :, :, 0], ((0, 0), (0, 1), (0, 0), (0, 0), (0, 0)))[:, 1:]

    def width_phases(t):                 # t: (B, H, W, 4, Cout), axis 3 = kw
        w0 = t[:, :, :, 1] + jnp.pad(
            t[:, :, :, 3], ((0, 0), (0, 0), (1, 0), (0, 0)))[:, :, :-1]
        w1 = t[:, :, :, 2] + jnp.pad(
            t[:, :, :, 0], ((0, 0), (0, 0), (0, 1), (0, 0)))[:, :, 1:]
        return w0, w1

    y00, y01 = width_phases(h0)
    y10, y11 = width_phases(h1)
    row0 = jnp.stack([y00, y01], axis=3)     # (B, H, W, 2, Cout)   px axis
    row1 = jnp.stack([y10, y11], axis=3)
    out = jnp.stack([row0, row1], axis=2)    # (B, H, 2, W, 2, Cout) py axis
    return out.reshape(B, 2 * H, 2 * W, Cout)


def _convt_s2(a_rows, w, B, H):
    """ConvTranspose2d(k=4, s=2, p=1) on an NHWC row-slab a_rows=(B*H*H, Cin)."""
    Cout = w.shape[1]
    cols = pallas_matmul(a_rows, _w_to_mat(w))          # (B*H*H, 16*Cout) f32
    cols = cols.reshape(B, H, H, 4, 4, Cout)
    return _col2im_stride2(cols, B, H, H, Cout)         # (B, 2H, 2H, Cout)


# ----------------------------------------------------------------------------
# Generator forward pass.
# ----------------------------------------------------------------------------
@jax.jit
def generator_forward(z, params):
    W1, W2, W3, W4 = params
    B = z.shape[0]

    # Layer 1: ConvT(100->512, k4, s1, p0) on a 1x1 input == plain matmul.
    y = pallas_matmul(z.reshape(B, -1), _w_to_mat(W1))   # (B, 4*4*512)
    a = pallas_bn_elu(y.reshape(B * 16, 512))            # (B*16, 512) bf16

    # Layer 2: ConvT(512->256, k4, s2, p1) -> BN -> ELU   (B, 8, 8, 256)
    x = _convt_s2(a, W2, B, 4)
    a = pallas_bn_elu(x.reshape(B * 64, 256))

    # Layer 3: ConvT(256->128, k4, s2, p1) -> BN -> ELU   (B, 16, 16, 128)
    x = _convt_s2(a, W3, B, 8)
    a = pallas_bn_elu(x.reshape(B * 256, 128))

    # Layer 4: ConvT(128->3, k4, s2, p1) -> Sigmoid       (B, 32, 32, 3)
    x = _convt_s2(a, W4, B, 16)
    x = pallas_sigmoid_nhwc(x)
    return x.transpose(0, 3, 1, 2)                       # NCHW (B, 3, 32, 32)


def init_params(key):
    k1, k2, k3, k4 = jax.random.split(key, 4)
    # PyTorch ConvTranspose2d weight layout: (Cin, Cout, k, k); bias=False everywhere.
    W1 = jax.random.normal(k1, (100, 512, 4, 4), jnp.float32) * 0.05
    W2 = jax.random.normal(k2, (512, 256, 4, 4), jnp.float32) * 0.05
    W3 = jax.random.normal(k3, (256, 128, 4, 4), jnp.float32) * 0.05
    W4 = jax.random.normal(k4, (128, 3, 4, 4), jnp.float32) * 0.05
    return (W1, W2, W3, W4)


if __name__ == "__main__":
    key = jax.random.PRNGKey(0)
    kp, kz = jax.random.split(key)
    params = init_params(kp)
    z = jax.random.normal(kz, (2, 100), jnp.float32)     # small batch, latent=100

    out = generator_forward(z, params)
    out = jax.block_until_ready(out)

    assert out.shape == (2, 3, 32, 32), out.shape
    assert out.dtype == jnp.float32
    assert bool(jnp.all(jnp.isfinite(out)))
    assert bool(jnp.all((out >= 0.0) & (out <= 1.0)))    # sigmoid range
    print("KERNEL_OK")
</pallas_src>

<mosaic_0001>
module attributes {stable_mosaic.version = 11 : i64} {
  func.func @_matmul_kernel(%arg0: i32, %arg1: i32, %arg2: i32, %arg3: memref<16x128xbf16, #tpu.memory_space<vmem>>, %arg4: memref<128x512xbf16, #tpu.memory_space<vmem>>, %arg5: memref<16x512xf32, #tpu.memory_space<vmem>>, %arg6: memref<16x512xf32, #tpu.memory_space<vmem>>) attributes {dimension_semantics = [#tpu.dimension_semantics<parallel>, #tpu.dimension_semantics<parallel>, #tpu.dimension_semantics<arbitrary>], iteration_bounds = array<i64: 1, 16, 1>, scalar_prefetch = 0 : i64, scratch_operands = 1 : i64, tpu.core_type = #tpu.core_type<tc>, window_params = [{transform_indices = @transform_0, window_bounds = array<i64: 16, 128>}, {transform_indices = @transform_1, window_bounds = array<i64: 128, 512>}, {transform_indices = @transform_2, window_bounds = array<i64: 16, 512>}]} {
    %c0_i32 = arith.constant 0 : i32
    %0 = arith.cmpi eq, %arg2, %c0_i32 : i32
    %1 = arith.extui %0 : i1 to i32
    %c0_i32_0 = arith.constant 0 : i32
    %2 = arith.cmpi ne, %1, %c0_i32_0 : i32
    scf.if %2 {
      %cst_10 = arith.constant 0.000000e+00 : f32
      %12 = vector.broadcast %cst_10 : f32 to vector<16x512xf32>
      %c0_11 = arith.constant 0 : index
      %c0_12 = arith.constant 0 : index
      %13 = vector.load %arg6[%c0_11, %c0_12] : memref<16x512xf32, #tpu.memory_space<vmem>>, vector<16x512xf32>
      tpu.vector_store %arg6[%c0_11, %c0_12], %12 {strides = array<i32>} : memref<16x512xf32, #tpu.memory_space<vmem>>, vector<16x512xf32>,
    } else {
    }
    %c0 = arith.constant 0 : index
    %c0_1 = arith.constant 0 : index
    %3 = vector.load %arg6[%c0, %c0_1] : memref<16x512xf32, #tpu.memory_space<vmem>>, vector<16x512xf32>
    %c0_2 = arith.constant 0 : index
    %c0_3 = arith.constant 0 : index
    %4 = vector.load %arg3[%c0_2, %c0_3] : memref<16x128xbf16, #tpu.memory_space<vmem>>, vector<16x128xbf16>
    %c0_4 = arith.constant 0 : index
    %c0_5 = arith.constant 0 : index
    %5 = vector.load %arg4[%c0_4, %c0_5] : memref<128x512xbf16, #tpu.memory_space<vmem>>, vector<128x512xbf16>
    %cst = arith.constant dense<0.000000e+00> : vector<16x512xf32>
    %6 = tpu.matmul %4, %5, %cst {dimension_numbers = #tpu.dot_dimension_numbers<[1], [0], [0], [1], [0, 0, 1, 1], [], []>} : vector<16x128xbf16>, vector<128x512xbf16>, vector<16x512xf32> -> vector<16x512xf32>
    %7 = arith.addf %3, %6 : vector<16x512xf32>
    %c0_6 = arith.constant 0 : index
    %c0_7 = arith.constant 0 : index
    %8 = vector.load %arg6[%c0_6, %c0_7] : memref<16x512xf32, #tpu.memory_space<vmem>>, vector<16x512xf32>
    tpu.vector_store %arg6[%c0_6, %c0_7], %7 {strides = array<i32>} : memref<16x512xf32, #tpu.memory_space<vmem>>, vector<16x512xf32>,
    %c0_i32_8 = arith.constant 0 : i32
    %9 = arith.cmpi eq, %arg2, %c0_i32_8 : i32
    %10 = arith.extui %9 : i1 to i32
    %c0_i32_9 = arith.constant 0 : i32
    %11 = arith.cmpi ne, %10, %c0_i32_9 : i32
    scf.if %11 {
      %c0_10 = arith.constant 0 : index
      %c0_11 = arith.constant 0 : index
      %12 = vector.load %arg6[%c0_10, %c0_11] : memref<16x512xf32, #tpu.memory_space<vmem>>, vector<16x512xf32>
      %c0_12 = arith.constant 0 : index
      %c0_13 = arith.constant 0 : index
      %13 = vector.load %arg5[%c0_12, %c0_13] : memref<16x512xf32, #tpu.memory_space<vmem>>, vector<16x512xf32>
      tpu.vector_store %arg5[%c0_12, %c0_13], %12 {strides = array<i32>} : memref<16x512xf32, #tpu.memory_space<vmem>>, vector<16x512xf32>,
    } else {
    }
    return
  }
  func.func @transform_0(%arg0: i32, %arg1: i32, %arg2: i32) -> (i32, i32) {
    %c0_i32 = arith.constant 0 : i32
    return %arg0, %arg2 : i32, i32
  }
  func.func @transform_1(%arg0: i32, %arg1: i32, %arg2: i32) -> (i32, i32) {
    %c0_i32 = arith.constant 0 : i32
    return %arg2, %arg1 : i32, i32
  }
  func.func @transform_2(%arg0: i32, %arg1: i32, %arg2: i32) -> (i32, i32) {
    %c0_i32 = arith.constant 0 : i32
    return %arg0, %arg1 : i32, i32
  }
}

module attributes {stable_mosaic.version = 11 : i64} {
  func.func @_bn_stats_kernel(%arg0: i32, %arg1: memref<32x512xf32, #tpu.memory_space<vmem>>, %arg2: memref<2x512xf32, #tpu.memory_space<vmem>>) attributes {dimension_semantics = [#tpu.dimension_semantics<arbitrary>], iteration_bounds = array<i64: 1>, scalar_prefetch = 0 : i64, scratch_operands = 0 : i64, tpu.core_type = #tpu.core_type<tc>, window_params = [{transform_indices = @transform_0, window_bounds = array<i64: 32, 512>}, {pipeline_mode = #tpu.pipeline_mode<synchronous>, transform_indices = @transform_1, window_bounds = array<i64: 2, 512>}]} {
    %c0_i32 = arith.constant 0 : i32
    %0 = arith.cmpi eq, %arg0, %c0_i32 : i32
    %1 = arith.extui %0 : i1 to i32
    %c0_i32_0 = arith.constant 0 : i32
    %2 = arith.cmpi ne, %1, %c0_i32_0 : i32
    scf.if %2 {
      %cst_7 = arith.constant 0.000000e+00 : f32
      %13 = vector.broadcast %cst_7 : f32 to vector<2x512xf32>
      %c0_8 = arith.constant 0 : index
      %c0_9 = arith.constant 0 : index
      %14 = vector.load %arg2[%c0_8, %c0_9] : memref<2x512xf32, #tpu.memory_space<vmem>>, vector<2x512xf32>
      tpu.vector_store %arg2[%c0_8, %c0_9], %13 {strides = array<i32>} : memref<2x512xf32, #tpu.memory_space<vmem>>, vector<2x512xf32>,
    } else {
    }
    %c0 = arith.constant 0 : index
    %c0_1 = arith.constant 0 : index
    %3 = vector.load %arg1[%c0, %c0_1] : memref<32x512xf32, #tpu.memory_space<vmem>>, vector<32x512xf32>
    %cst = arith.constant dense<0.000000e+00> : vector<512xf32>
    %4 = vector.multi_reduction <add>, %3, %cst [0] : vector<32x512xf32> to vector<512xf32>
    %5 = vector.shape_cast %4 : vector<512xf32> to vector<1x512xf32>
    %6 = arith.mulf %3, %3 : vector<32x512xf32>
    %cst_2 = arith.constant dense<0.000000e+00> : vector<512xf32>
    %7 = vector.multi_reduction <add>, %6, %cst_2 [0] : vector<32x512xf32> to vector<512xf32>
    %8 = vector.shape_cast %7 : vector<512xf32> to vector<1x512xf32>
    %c0_3 = arith.constant 0 : index
    %c0_4 = arith.constant 0 : index
    %9 = vector.load %arg2[%c0_3, %c0_4] : memref<2x512xf32, #tpu.memory_space<vmem>>, vector<2x512xf32>
    %10 = tpu.concatenate %5, %8 in 0 : vector<1x512xf32>, vector<1x512xf32> -> vector<2x512xf32>
    %11 = arith.addf %9, %10 : vector<2x512xf32>
    %c0_5 = arith.constant 0 : index
    %c0_6 = arith.constant 0 : index
    %12 = vector.load %arg2[%c0_5, %c0_6] : memref<2x512xf32, #tpu.memory_space<vmem>>, vector<2x512xf32>
    tpu.vector_store %arg2[%c0_5, %c0_6], %11 {strides = array<i32>} : memref<2x512xf32, #tpu.memory_space<vmem>>, vector<2x512xf32>,
    return
  }
  func.func @transform_0(%arg0: i32) -> (i32, i32) {
    %c0_i32 = arith.constant 0 : i32
    %c0_i32_0 = arith.constant 0 : i32
    return %arg0, %c0_i32 : i32, i32
  }
  func.func @transform_1(%arg0: i32) -> (i32, i32) {
    %c0_i32 = arith.constant 0 : i32
    %c0_i32_0 = arith.constant 0 : i32
    %c0_i32_1 = arith.constant 0 : i32
    return %c0_i32, %c0_i32_0 : i32, i32
  }
}

module attributes {stable_mosaic.version = 11 : i64} {
  func.func @_bn_apply_elu_kernel(%arg0: i32, %arg1: memref<32x512xf32, #tpu.memory_space<vmem>>, %arg2: memref<2x512xf32, #tpu.memory_space<vmem>>, %arg3: memref<32x512xbf16, #tpu.memory_space<vmem>>) attributes {dimension_semantics = [#tpu.dimension_semantics<parallel>], iteration_bounds = array<i64: 1>, scalar_prefetch = 0 : i64, scratch_operands = 0 : i64, tpu.core_type = #tpu.core_type<tc>, window_params = [{transform_indices = @transform_0, window_bounds = array<i64: 32, 512>}, {pipeline_mode = #tpu.pipeline_mode<synchronous>, transform_indices = @transform_1, window_bounds = array<i64: 2, 512>}, {transform_indices = @transform_2, window_bounds = array<i64: 32, 512>}]} {
    %c0 = arith.constant 0 : index
    %c0_0 = arith.constant 0 : index
    %0 = vector.load %arg2[%c0, %c0_0] : memref<2x512xf32, #tpu.memory_space<vmem>>, vector<2x512xf32>
    %1 = vector.extract_strided_slice %0 {offsets = [0, 0], sizes = [1, 512], strides = [1, 1]} : vector<2x512xf32> to vector<1x512xf32>
    %cst = arith.constant 3.125000e-02 : f32
    %2 = vector.broadcast %cst : f32 to vector<1x512xf32>
    %3 = arith.mulf %1, %2 : vector<1x512xf32>
    %4 = vector.extract_strided_slice %0 {offsets = [1, 0], sizes = [1, 512], strides = [1, 1]} : vector<2x512xf32> to vector<1x512xf32>
    %cst_1 = arith.constant 3.125000e-02 : f32
    %5 = vector.broadcast %cst_1 : f32 to vector<1x512xf32>
    %6 = arith.mulf %4, %5 : vector<1x512xf32>
    %7 = arith.mulf %3, %3 : vector<1x512xf32>
    %8 = arith.subf %6, %7 : vector<1x512xf32>
    %cst_2 = arith.constant 0.000000e+00 : f32
    %9 = vector.broadcast %cst_2 : f32 to vector<1x512xf32>
    %10 = arith.maximumf %8, %9 : vector<1x512xf32>
    %c0_3 = arith.constant 0 : index
    %c0_4 = arith.constant 0 : index
    %11 = vector.load %arg1[%c0_3, %c0_4] : memref<32x512xf32, #tpu.memory_space<vmem>>, vector<32x512xf32>
    %12 = vector.broadcast %3 : vector<1x512xf32> to vector<32x512xf32>
    %13 = arith.subf %11, %12 : vector<32x512xf32>
    %cst_5 = arith.constant 9.99999974E-6 : f32
    %14 = vector.broadcast %cst_5 : f32 to vector<1x512xf32>
    %15 = arith.addf %10, %14 : vector<1x512xf32>
    %16 = math.rsqrt %15 : vector<1x512xf32>
    %17 = vector.broadcast %16 : vector<1x512xf32> to vector<32x512xf32>
    %18 = arith.mulf %13, %17 : vector<32x512xf32>
    %cst_6 = arith.constant 0.000000e+00 : f32
    %19 = vector.broadcast %cst_6 : f32 to vector<32x512xf32>
    %20 = arith.cmpf ogt, %18, %19 : vector<32x512xf32>
    %cst_7 = arith.constant 0.000000e+00 : f32
    %21 = vector.broadcast %cst_7 : f32 to vector<32x512xf32>
    %22 = arith.minimumf %18, %21 : vector<32x512xf32>
    %23 = math.exp %22 : vector<32x512xf32>
    %cst_8 = arith.constant 1.000000e+00 : f32
    %24 = vector.broadcast %cst_8 : f32 to vector<32x512xf32>
    %25 = arith.subf %23, %24 : vector<32x512xf32>
    %26 = arith.select %20, %18, %25 : vector<32x512xi1>, vector<32x512xf32>
    %27 = arith.truncf %26 : vector<32x512xf32> to vector<32x512xbf16>
    %c0_9 = arith.constant 0 : index
    %c0_10 = arith.constant 0 : index
    %28 = vector.load %arg3[%c0_9, %c0_10] : memref<32x512xbf16, #tpu.memory_space<vmem>>, vector<32x512xbf16>
    tpu.vector_store %arg3[%c0_9, %c0_10], %27 {strides = array<i32>} : memref<32x512xbf16, #tpu.memory_space<vmem>>, vector<32x512xbf16>,
    return
  }
  func.func @transform_0(%arg0: i32) -> (i32, i32) {
    %c0_i32 = arith.constant 0 : i32
    %c0_i32_0 = arith.constant 0 : i32
    return %arg0, %c0_i32 : i32, i32
  }
  func.func @transform_1(%arg0: i32) -> (i32, i32) {
    %c0_i32 = arith.constant 0 : i32
    %c0_i32_0 = arith.constant 0 : i32
    %c0_i32_1 = arith.constant 0 : i32
    return %c0_i32, %c0_i32_0 : i32, i32
  }
  func.func @transform_2(%arg0: i32) -> (i32, i32) {
    %c0_i32 = arith.constant 0 : i32
    %c0_i32_0 = arith.constant 0 : i32
    return %arg0, %c0_i32 : i32, i32
  }
}

module attributes {stable_mosaic.version = 11 : i64} {
  func.func @_matmul_kernel(%arg0: i32, %arg1: i32, %arg2: i32, %arg3: memref<32x512xbf16, #tpu.memory_space<vmem>>, %arg4: memref<512x512xbf16, #tpu.memory_space<vmem>>, %arg5: memref<32x512xf32, #tpu.memory_space<vmem>>, %arg6: memref<32x512xf32, #tpu.memory_space<vmem>>) attributes {dimension_semantics = [#tpu.dimension_semantics<parallel>, #tpu.dimension_semantics<parallel>, #tpu.dimension_semantics<arbitrary>], iteration_bounds = array<i64: 1, 8, 1>, scalar_prefetch = 0 : i64, scratch_operands = 1 : i64, tpu.core_type = #tpu.core_type<tc>, window_params = [{transform_indices = @transform_0, window_bounds = array<i64: 32, 512>}, {transform_indices = @transform_1, window_bounds = array<i64: 512, 512>}, {transform_indices = @transform_2, window_bounds = array<i64: 32, 512>}]} {
    %c0_i32 = arith.constant 0 : i32
    %0 = arith.cmpi eq, %arg2, %c0_i32 : i32
    %1 = arith.extui %0 : i1 to i32
    %c0_i32_0 = arith.constant 0 : i32
    %2 = arith.cmpi ne, %1, %c0_i32_0 : i32
    scf.if %2 {
      %cst_10 = arith.constant 0.000000e+00 : f32
      %12 = vector.broadcast %cst_10 : f32 to vector<32x512xf32>
      %c0_11 = arith.constant 0 : index
      %c0_12 = arith.constant 0 : index
      %13 = vector.load %arg6[%c0_11, %c0_12] : memref<32x512xf32, #tpu.memory_space<vmem>>, vector<32x512xf32>
      tpu.vector_store %arg6[%c0_11, %c0_12], %12 {strides = array<i32>} : memref<32x512xf32, #tpu.memory_space<vmem>>, vector<32x512xf32>,
    } else {
    }
    %c0 = arith.constant 0 : index
    %c0_1 = arith.constant 0 : index
    %3 = vector.load %arg6[%c0, %c0_1] : memref<32x512xf32, #tpu.memory_space<vmem>>, vector<32x512xf32>
    %c0_2 = arith.constant 0 : index
    %c0_3 = arith.constant 0 : index
    %4 = vector.load %arg3[%c0_2, %c0_3] : memref<32x512xbf16, #tpu.memory_space<vmem>>, vector<32x512xbf16>
    %c0_4 = arith.constant 0 : index
    %c0_5 = arith.constant 0 : index
    %5 = vector.load %arg4[%c0_4, %c0_5] : memref<512x512xbf16, #tpu.memory_space<vmem>>, vector<512x512xbf16>
    %cst = arith.constant dense<0.000000e+00> : vector<32x512xf32>
    %6 = tpu.matmul %4, %5, %cst {dimension_numbers = #tpu.dot_dimension_numbers<[1], [0], [0], [1], [0, 0, 1, 1], [], []>} : vector<32x512xbf16>, vector<512x512xbf16>, vector<32x512xf32> -> vector<32x512xf32>
    %7 = arith.addf %3, %6 : vector<32x512xf32>
    %c0_6 = arith.constant 0 : index
    %c0_7 = arith.constant 0 : index
    %8 = vector.load %arg6[%c0_6, %c0_7] : memref<32x512xf32, #tpu.memory_space<vmem>>, vector<32x512xf32>
    tpu.vector_store %arg6[%c0_6, %c0_7], %7 {strides = array<i32>} : memref<32x512xf32, #tpu.memory_space<vmem>>, vector<32x512xf32>,
    %c0_i32_8 = arith.constant 0 : i32
    %9 = arith.cmpi eq, %arg2, %c0_i32_8 : i32
    %10 = arith.extui %9 : i1 to i32
    %c0_i32_9 = arith.constant 0 : i32
    %11 = arith.cmpi ne, %10, %c0_i32_9 : i32
    scf.if %11 {
      %c0_10 = arith.constant 0 : index
      %c0_11 = arith.constant 0 : index
      %12 = vector.load %arg6[%c0_10, %c0_11] : memref<32x512xf32, #tpu.memory_space<vmem>>, vector<32x512xf32>
      %c0_12 = arith.constant 0 : index
      %c0_13 = arith.constant 0 : index
      %13 = vector.load %arg5[%c0_12, %c0_13] : memref<32x512xf32, #tpu.memory_space<vmem>>, vector<32x512xf32>
      tpu.vector_store %arg5[%c0_12, %c0_13], %12 {strides = array<i32>} : memref<32x512xf32, #tpu.memory_space<vmem>>, vector<32x512xf32>,
    } else {
    }
    return
  }
  func.func @transform_0(%arg0: i32, %arg1: i32, %arg2: i32) -> (i32, i32) {
    %c0_i32 = arith.constant 0 : i32
    return %arg0, %arg2 : i32, i32
  }
  func.func @transform_1(%arg0: i32, %arg1: i32, %arg2: i32) -> (i32, i32) {
    %c0_i32 = arith.constant 0 : i32
    return %arg2, %arg1 : i32, i32
  }
  func.func @transform_2(%arg0: i32, %arg1: i32, %arg2: i32) -> (i32, i32) {
    %c0_i32 = arith.constant 0 : i32
    return %arg0, %arg1 : i32, i32
  }
}

module attributes {stable_mosaic.version = 11 : i64} {
  func.func @_bn_apply_elu_kernel(%arg0: i32, %arg1: memref<128x256xf32, #tpu.memory_space<vmem>>, %arg2: memref<2x256xf32, #tpu.memory_space<vmem>>, %arg3: memref<128x256xbf16, #tpu.memory_space<vmem>>) attributes {dimension_semantics = [#tpu.dimension_semantics<parallel>], iteration_bounds = array<i64: 1>, scalar_prefetch = 0 : i64, scratch_operands = 0 : i64, tpu.core_type = #tpu.core_type<tc>, window_params = [{transform_indices = @transform_0, window_bounds = array<i64: 128, 256>}, {pipeline_mode = #tpu.pipeline_mode<synchronous>, transform_indices = @transform_1, window_bounds = array<i64: 2, 256>}, {transform_indices = @transform_2, window_bounds = array<i64: 128, 256>}]} {
    %c0 = arith.constant 0 : index
    %c0_0 = arith.constant 0 : index
    %0 = vector.load %arg2[%c0, %c0_0] : memref<2x256xf32, #tpu.memory_space<vmem>>, vector<2x256xf32>
    %1 = vector.extract_strided_slice %0 {offsets = [0, 0], sizes = [1, 256], strides = [1, 1]} : vector<2x256xf32> to vector<1x256xf32>
    %cst = arith.constant 7.812500e-03 : f32
    %2 = vector.broadcast %cst : f32 to vector<1x256xf32>
    %3 = arith.mulf %1, %2 : vector<1x256xf32>
    %4 = vector.extract_strided_slice %0 {offsets = [1, 0], sizes = [1, 256], strides = [1, 1]} : vector<2x256xf32> to vector<1x256xf32>
    %cst_1 = arith.constant 7.812500e-03 : f32
    %5 = vector.broadcast %cst_1 : f32 to vector<1x256xf32>
    %6 = arith.mulf %4, %5 : vector<1x256xf32>
    %7 = arith.mulf %3, %3 : vector<1x256xf32>
    %8 = arith.subf %6, %7 : vector<1x256xf32>
    %cst_2 = arith.constant 0.000000e+00 : f32
    %9 = vector.broadcast %cst_2 : f32 to vector<1x256xf32>
    %10 = arith.maximumf %8, %9 : vector<1x256xf32>
    %c0_3 = arith.constant 0 : index
    %c0_4 = arith.constant 0 : index
    %11 = vector.load %arg1[%c0_3, %c0_4] : memref<128x256xf32, #tpu.memory_space<vmem>>, vector<128x256xf32>
    %12 = vector.broadcast %3 : vector<1x256xf32> to vector<128x256xf32>
    %13 = arith.subf %11, %12 : vector<128x256xf32>
    %cst_5 = arith.constant 9.99999974E-6 : f32
    %14 = vector.broadcast %cst_5 : f32 to vector<1x256xf32>
    %15 = arith.addf %10, %14 : vector<1x256xf32>
    %16 = math.rsqrt %15 : vector<1x256xf32>
    %17 = vector.broadcast %16 : vector<1x256xf32> to vector<128x256xf32>
    %18 = arith.mulf %13, %17 : vector<128x256xf32>
    %cst_6 = arith.constant 0.000000e+00 : f32
    %19 = vector.broadcast %cst_6 : f32 to vector<128x256xf32>
    %20 = arith.cmpf ogt, %18, %19 : vector<128x256xf32>
    %cst_7 = arith.constant 0.000000e+00 : f32
    %21 = vector.broadcast %cst_7 : f32 to vector<128x256xf32>
    %22 = arith.minimumf %18, %21 : vector<128x256xf32>
    %23 = math.exp %22 : vector<128x256xf32>
    %cst_8 = arith.constant 1.000000e+00 : f32
    %24 = vector.broadcast %cst_8 : f32 to vector<128x256xf32>
    %25 = arith.subf %23, %24 : vector<128x256xf32>
    %26 = arith.select %20, %18, %25 : vector<128x256xi1>, vector<128x256xf32>
    %27 = arith.truncf %26 : vector<128x256xf32> to vector<128x256xbf16>
    %c0_9 = arith.constant 0 : index
    %c0_10 = arith.constant 0 : index
    %28 = vector.load %arg3[%c0_9, %c0_10] : memref<128x256xbf16, #tpu.memory_space<vmem>>, vector<128x256xbf16>
    tpu.vector_store %arg3[%c0_9, %c0_10], %27 {strides = array<i32>} : memref<128x256xbf16, #tpu.memory_space<vmem>>, vector<128x256xbf16>,
    return
  }
  func.func @transform_0(%arg0: i32) -> (i32, i32) {
    %c0_i32 = arith.constant 0 : i32
    %c0_i32_0 = arith.constant 0 : i32
    return %arg0, %c0_i32 : i32, i32
  }
  func.func @transform_1(%arg0: i32) -> (i32, i32) {
    %c0_i32 = arith.constant 0 : i32
    %c0_i32_0 = arith.constant 0 : i32
    %c0_i32_1 = arith.constant 0 : i32
    return %c0_i32, %c0_i32_0 : i32, i32
  }
  func.func @transform_2(%arg0: i32) -> (i32, i32) {
    %c0_i32 = arith.constant 0 : i32
    %c0_i32_0 = arith.constant 0 : i32
    return %arg0, %c0_i32 : i32, i32
  }
}

module attributes {stable_mosaic.version = 11 : i64} {
  func.func @_bn_stats_kernel(%arg0: i32, %arg1: memref<128x256xf32, #tpu.memory_space<vmem>>, %arg2: memref<2x256xf32, #tpu.memory_space<vmem>>) attributes {dimension_semantics = [#tpu.dimension_semantics<arbitrary>], iteration_bounds = array<i64: 1>, scalar_prefetch = 0 : i64, scratch_operands = 0 : i64, tpu.core_type = #tpu.core_type<tc>, window_params = [{transform_indices = @transform_0, window_bounds = array<i64: 128, 256>}, {pipeline_mode = #tpu.pipeline_mode<synchronous>, transform_indices = @transform_1, window_bounds = array<i64: 2, 256>}]} {
    %c0_i32 = arith.constant 0 : i32
    %0 = arith.cmpi eq, %arg0, %c0_i32 : i32
    %1 = arith.extui %0 : i1 to i32
    %c0_i32_0 = arith.constant 0 : i32
    %2 = arith.cmpi ne, %1, %c0_i32_0 : i32
    scf.if %2 {
      %cst_7 = arith.constant 0.000000e+00 : f32
      %13 = vector.broadcast %cst_7 : f32 to vector<2x256xf32>
      %c0_8 = arith.constant 0 : index
      %c0_9 = arith.constant 0 : index
      %14 = vector.load %arg2[%c0_8, %c0_9] : memref<2x256xf32, #tpu.memory_space<vmem>>, vector<2x256xf32>
      tpu.vector_store %arg2[%c0_8, %c0_9], %13 {strides = array<i32>} : memref<2x256xf32, #tpu.memory_space<vmem>>, vector<2x256xf32>,
    } else {
    }
    %c0 = arith.constant 0 : index
    %c0_1 = arith.constant 0 : index
    %3 = vector.load %arg1[%c0, %c0_1] : memref<128x256xf32, #tpu.memory_space<vmem>>, vector<128x256xf32>
    %cst = arith.constant dense<0.000000e+00> : vector<256xf32>
    %4 = vector.multi_reduction <add>, %3, %cst [0] : vector<128x256xf32> to vector<256xf32>
    %5 = vector.shape_cast %4 : vector<256xf32> to vector<1x256xf32>
    %6 = arith.mulf %3, %3 : vector<128x256xf32>
    %cst_2 = arith.constant dense<0.000000e+00> : vector<256xf32>
    %7 = vector.multi_reduction <add>, %6, %cst_2 [0] : vector<128x256xf32> to vector<256xf32>
    %8 = vector.shape_cast %7 : vector<256xf32> to vector<1x256xf32>
    %c0_3 = arith.constant 0 : index
    %c0_4 = arith.constant 0 : index
    %9 = vector.load %arg2[%c0_3, %c0_4] : memref<2x256xf32, #tpu.memory_space<vmem>>, vector<2x256xf32>
    %10 = tpu.concatenate %5, %8 in 0 : vector<1x256xf32>, vector<1x256xf32> -> vector<2x256xf32>
    %11 = arith.addf %9, %10 : vector<2x256xf32>
    %c0_5 = arith.constant 0 : index
    %c0_6 = arith.constant 0 : index
    %12 = vector.load %arg2[%c0_5, %c0_6] : memref<2x256xf32, #tpu.memory_space<vmem>>, vector<2x256xf32>
    tpu.vector_store %arg2[%c0_5, %c0_6], %11 {strides = array<i32>} : memref<2x256xf32, #tpu.memory_space<vmem>>, vector<2x256xf32>,
    return
  }
  func.func @transform_0(%arg0: i32) -> (i32, i32) {
    %c0_i32 = arith.constant 0 : i32
    %c0_i32_0 = arith.constant 0 : i32
    return %arg0, %c0_i32 : i32, i32
  }
  func.func @transform_1(%arg0: i32) -> (i32, i32) {
    %c0_i32 = arith.constant 0 : i32
    %c0_i32_0 = arith.constant 0 : i32
    %c0_i32_1 = arith.constant 0 : i32
    return %c0_i32, %c0_i32_0 : i32, i32
  }
}

module attributes {stable_mosaic.version = 11 : i64} {
  func.func @_matmul_kernel(%arg0: i32, %arg1: i32, %arg2: i32, %arg3: memref<128x256xbf16, #tpu.memory_space<vmem>>, %arg4: memref<256x512xbf16, #tpu.memory_space<vmem>>, %arg5: memref<128x512xf32, #tpu.memory_space<vmem>>, %arg6: memref<128x512xf32, #tpu.memory_space<vmem>>) attributes {dimension_semantics = [#tpu.dimension_semantics<parallel>, #tpu.dimension_semantics<parallel>, #tpu.dimension_semantics<arbitrary>], iteration_bounds = array<i64: 1, 4, 1>, scalar_prefetch = 0 : i64, scratch_operands = 1 : i64, tpu.core_type = #tpu.core_type<tc>, window_params = [{transform_indices = @transform_0, window_bounds = array<i64: 128, 256>}, {transform_indices = @transform_1, window_bounds = array<i64: 256, 512>}, {transform_indices = @transform_2, window_bounds = array<i64: 128, 512>}]} {
    %c0_i32 = arith.constant 0 : i32
    %0 = arith.cmpi eq, %arg2, %c0_i32 : i32
    %1 = arith.extui %0 : i1 to i32
    %c0_i32_0 = arith.constant 0 : i32
    %2 = arith.cmpi ne, %1, %c0_i32_0 : i32
    scf.if %2 {
      %cst_10 = arith.constant 0.000000e+00 : f32
      %12 = vector.broadcast %cst_10 : f32 to vector<128x512xf32>
      %c0_11 = arith.constant 0 : index
      %c0_12 = arith.constant 0 : index
      %13 = vector.load %arg6[%c0_11, %c0_12] : memref<128x512xf32, #tpu.memory_space<vmem>>, vector<128x512xf32>
      tpu.vector_store %arg6[%c0_11, %c0_12], %12 {strides = array<i32>} : memref<128x512xf32, #tpu.memory_space<vmem>>, vector<128x512xf32>,
    } else {
    }
    %c0 = arith.constant 0 : index
    %c0_1 = arith.constant 0 : index
    %3 = vector.load %arg6[%c0, %c0_1] : memref<128x512xf32, #tpu.memory_space<vmem>>, vector<128x512xf32>
    %c0_2 = arith.constant 0 : index
    %c0_3 = arith.constant 0 : index
    %4 = vector.load %arg3[%c0_2, %c0_3] : memref<128x256xbf16, #tpu.memory_space<vmem>>, vector<128x256xbf16>
    %c0_4 = arith.constant 0 : index
    %c0_5 = arith.constant 0 : index
    %5 = vector.load %arg4[%c0_4, %c0_5] : memref<256x512xbf16, #tpu.memory_space<vmem>>, vector<256x512xbf16>
    %cst = arith.constant dense<0.000000e+00> : vector<128x512xf32>
    %6 = tpu.matmul %4, %5, %cst {dimension_numbers = #tpu.dot_dimension_numbers<[1], [0], [0], [1], [0, 0, 1, 1], [], []>} : vector<128x256xbf16>, vector<256x512xbf16>, vector<128x512xf32> -> vector<128x512xf32>
    %7 = arith.addf %3, %6 : vector<128x512xf32>
    %c0_6 = arith.constant 0 : index
    %c0_7 = arith.constant 0 : index
    %8 = vector.load %arg6[%c0_6, %c0_7] : memref<128x512xf32, #tpu.memory_space<vmem>>, vector<128x512xf32>
    tpu.vector_store %arg6[%c0_6, %c0_7], %7 {strides = array<i32>} : memref<128x512xf32, #tpu.memory_space<vmem>>, vector<128x512xf32>,
    %c0_i32_8 = arith.constant 0 : i32
    %9 = arith.cmpi eq, %arg2, %c0_i32_8 : i32
    %10 = arith.extui %9 : i1 to i32
    %c0_i32_9 = arith.constant 0 : i32
    %11 = arith.cmpi ne, %10, %c0_i32_9 : i32
    scf.if %11 {
      %c0_10 = arith.constant 0 : index
      %c0_11 = arith.constant 0 : index
      %12 = vector.load %arg6[%c0_10, %c0_11] : memref<128x512xf32, #tpu.memory_space<vmem>>, vector<128x512xf32>
      %c0_12 = arith.constant 0 : index
      %c0_13 = arith.constant 0 : index
      %13 = vector.load %arg5[%c0_12, %c0_13] : memref<128x512xf32, #tpu.memory_space<vmem>>, vector<128x512xf32>
      tpu.vector_store %arg5[%c0_12, %c0_13], %12 {strides = array<i32>} : memref<128x512xf32, #tpu.memory_space<vmem>>, vector<128x512xf32>,
    } else {
    }
    return
  }
  func.func @transform_0(%arg0: i32, %arg1: i32, %arg2: i32) -> (i32, i32) {
    %c0_i32 = arith.constant 0 : i32
    return %arg0, %arg2 : i32, i32
  }
  func.func @transform_1(%arg0: i32, %arg1: i32, %arg2: i32) -> (i32, i32) {
    %c0_i32 = arith.constant 0 : i32
    return %arg2, %arg1 : i32, i32
  }
  func.func @transform_2(%arg0: i32, %arg1: i32, %arg2: i32) -> (i32, i32) {
    %c0_i32 = arith.constant 0 : i32
    return %arg0, %arg1 : i32, i32
  }
}

module attributes {stable_mosaic.version = 11 : i64} {
  func.func @_bn_stats_kernel(%arg0: i32, %arg1: memref<256x128xf32, #tpu.memory_space<vmem>>, %arg2: memref<2x128xf32, #tpu.memory_space<vmem>>) attributes {dimension_semantics = [#tpu.dimension_semantics<arbitrary>], iteration_bounds = array<i64: 2>, scalar_prefetch = 0 : i64, scratch_operands = 0 : i64, tpu.core_type = #tpu.core_type<tc>, window_params = [{transform_indices = @transform_0, window_bounds = array<i64: 256, 128>}, {pipeline_mode = #tpu.pipeline_mode<synchronous>, transform_indices = @transform_1, window_bounds = array<i64: 2, 128>}]} {
    %c0_i32 = arith.constant 0 : i32
    %0 = arith.cmpi eq, %arg0, %c0_i32 : i32
    %1 = arith.extui %0 : i1 to i32
    %c0_i32_0 = arith.constant 0 : i32
    %2 = arith.cmpi ne, %1, %c0_i32_0 : i32
    scf.if %2 {
      %cst_7 = arith.constant 0.000000e+00 : f32
      %13 = vector.broadcast %cst_7 : f32 to vector<2x128xf32>
      %c0_8 = arith.constant 0 : index
      %c0_9 = arith.constant 0 : index
      %14 = vector.load %arg2[%c0_8, %c0_9] : memref<2x128xf32, #tpu.memory_space<vmem>>, vector<2x128xf32>
      tpu.vector_store %arg2[%c0_8, %c0_9], %13 {strides = array<i32>} : memref<2x128xf32, #tpu.memory_space<vmem>>, vector<2x128xf32>,
    } else {
    }
    %c0 = arith.constant 0 : index
    %c0_1 = arith.constant 0 : index
    %3 = vector.load %arg1[%c0, %c0_1] : memref<256x128xf32, #tpu.memory_space<vmem>>, vector<256x128xf32>
    %cst = arith.constant dense<0.000000e+00> : vector<128xf32>
    %4 = vector.multi_reduction <add>, %3, %cst [0] : vector<256x128xf32> to vector<128xf32>
    %5 = vector.shape_cast %4 : vector<128xf32> to vector<1x128xf32>
    %6 = arith.mulf %3, %3 : vector<256x128xf32>
    %cst_2 = arith.constant dense<0.000000e+00> : vector<128xf32>
    %7 = vector.multi_reduction <add>, %6, %cst_2 [0] : vector<256x128xf32> to vector<128xf32>
    %8 = vector.shape_cast %7 : vector<128xf32> to vector<1x128xf32>
    %c0_3 = arith.constant 0 : index
    %c0_4 = arith.constant 0 : index
    %9 = vector.load %arg2[%c0_3, %c0_4] : memref<2x128xf32, #tpu.memory_space<vmem>>, vector<2x128xf32>
    %10 = tpu.concatenate %5, %8 in 0 : vector<1x128xf32>, vector<1x128xf32> -> vector<2x128xf32>
    %11 = arith.addf %9, %10 : vector<2x128xf32>
    %c0_5 = arith.constant 0 : index
    %c0_6 = arith.constant 0 : index
    %12 = vector.load %arg2[%c0_5, %c0_6] : memref<2x128xf32, #tpu.memory_space<vmem>>, vector<2x128xf32>
    tpu.vector_store %arg2[%c0_5, %c0_6], %11 {strides = array<i32>} : memref<2x128xf32, #tpu.memory_space<vmem>>, vector<2x128xf32>,
    return
  }
  func.func @transform_0(%arg0: i32) -> (i32, i32) {
    %c0_i32 = arith.constant 0 : i32
    %c0_i32_0 = arith.constant 0 : i32
    return %arg0, %c0_i32 : i32, i32
  }
  func.func @transform_1(%arg0: i32) -> (i32, i32) {
    %c0_i32 = arith.constant 0 : i32
    %c0_i32_0 = arith.constant 0 : i32
    %c0_i32_1 = arith.constant 0 : i32
    return %c0_i32, %c0_i32_0 : i32, i32
  }
}

module attributes {stable_mosaic.version = 11 : i64} {
  func.func @_matmul_kernel(%arg0: i32, %arg1: i32, %arg2: i32, %arg3: memref<128x128xbf16, #tpu.memory_space<vmem>>, %arg4: memref<128x128xbf16, #tpu.memory_space<vmem>>, %arg5: memref<128x128xf32, #tpu.memory_space<vmem>>, %arg6: memref<128x128xf32, #tpu.memory_space<vmem>>) attributes {dimension_semantics = [#tpu.dimension_semantics<parallel>, #tpu.dimension_semantics<parallel>, #tpu.dimension_semantics<arbitrary>], iteration_bounds = array<i64: 4, 1, 1>, scalar_prefetch = 0 : i64, scratch_operands = 1 : i64, tpu.core_type = #tpu.core_type<tc>, window_params = [{transform_indices = @transform_0, window_bounds = array<i64: 128, 128>}, {transform_indices = @transform_1, window_bounds = array<i64: 128, 128>}, {transform_indices = @transform_2, window_bounds = array<i64: 128, 128>}]} {
    %c0_i32 = arith.constant 0 : i32
    %0 = arith.cmpi eq, %arg2, %c0_i32 : i32
    %1 = arith.extui %0 : i1 to i32
    %c0_i32_0 = arith.constant 0 : i32
    %2 = arith.cmpi ne, %1, %c0_i32_0 : i32
    scf.if %2 {
      %cst_10 = arith.constant 0.000000e+00 : f32
      %12 = vector.broadcast %cst_10 : f32 to vector<128x128xf32>
      %c0_11 = arith.constant 0 : index
      %c0_12 = arith.constant 0 : index
      %13 = vector.load %arg6[%c0_11, %c0_12] : memref<128x128xf32, #tpu.memory_space<vmem>>, vector<128x128xf32>
      tpu.vector_store %arg6[%c0_11, %c0_12], %12 {strides = array<i32>} : memref<128x128xf32, #tpu.memory_space<vmem>>, vector<128x128xf32>,
    } else {
    }
    %c0 = arith.constant 0 : index
    %c0_1 = arith.constant 0 : index
    %3 = vector.load %arg6[%c0, %c0_1] : memref<128x128xf32, #tpu.memory_space<vmem>>, vector<128x128xf32>
    %c0_2 = arith.constant 0 : index
    %c0_3 = arith.constant 0 : index
    %4 = vector.load %arg3[%c0_2, %c0_3] : memref<128x128xbf16, #tpu.memory_space<vmem>>, vector<128x128xbf16>
    %c0_4 = arith.constant 0 : index
    %c0_5 = arith.constant 0 : index
    %5 = vector.load %arg4[%c0_4, %c0_5] : memref<128x128xbf16, #tpu.memory_space<vmem>>, vector<128x128xbf16>
    %cst = arith.constant dense<0.000000e+00> : vector<128x128xf32>
    %6 = tpu.matmul %4, %5, %cst {dimension_numbers = #tpu.dot_dimension_numbers<[1], [0], [0], [1], [0, 0, 1, 1], [], []>} : vector<128x128xbf16>, vector<128x128xbf16>, vector<128x128xf32> -> vector<128x128xf32>
    %7 = arith.addf %3, %6 : vector<128x128xf32>
    %c0_6 = arith.constant 0 : index
    %c0_7 = arith.constant 0 : index
    %8 = vector.load %arg6[%c0_6, %c0_7] : memref<128x128xf32, #tpu.memory_space<vmem>>, vector<128x128xf32>
    tpu.vector_store %arg6[%c0_6, %c0_7], %7 {strides = array<i32>} : memref<128x128xf32, #tpu.memory_space<vmem>>, vector<128x128xf32>,
    %c0_i32_8 = arith.constant 0 : i32
    %9 = arith.cmpi eq, %arg2, %c0_i32_8 : i32
    %10 = arith.extui %9 : i1 to i32
    %c0_i32_9 = arith.constant 0 : i32
    %11 = arith.cmpi ne, %10, %c0_i32_9 : i32
    scf.if %11 {
      %c0_10 = arith.constant 0 : index
      %c0_11 = arith.constant 0 : index
      %12 = vector.load %arg6[%c0_10, %c0_11] : memref<128x128xf32, #tpu.memory_space<vmem>>, vector<128x128xf32>
      %c0_12 = arith.constant 0 : index
      %c0_13 = arith.constant 0 : index
      %13 = vector.load %arg5[%c0_12, %c0_13] : memref<128x128xf32, #tpu.memory_space<vmem>>, vector<128x128xf32>
      tpu.vector_store %arg5[%c0_12, %c0_13], %12 {strides = array<i32>} : memref<128x128xf32, #tpu.memory_space<vmem>>, vector<128x128xf32>,
    } else {
    }
    return
  }
  func.func @transform_0(%arg0: i32, %arg1: i32, %arg2: i32) -> (i32, i32) {
    %c0_i32 = arith.constant 0 : i32
    return %arg0, %arg2 : i32, i32
  }
  func.func @transform_1(%arg0: i32, %arg1: i32, %arg2: i32) -> (i32, i32) {
    %c0_i32 = arith.constant 0 : i32
    return %arg2, %arg1 : i32, i32
  }
  func.func @transform_2(%arg0: i32, %arg1: i32, %arg2: i32) -> (i32, i32) {
    %c0_i32 = arith.constant 0 : i32
    return %arg0, %arg1 : i32, i32
  }
}

module attributes {stable_mosaic.version = 11 : i64} {
  func.func @_bn_apply_elu_kernel(%arg0: i32, %arg1: memref<256x128xf32, #tpu.memory_space<vmem>>, %arg2: memref<2x128xf32, #tpu.memory_space<vmem>>, %arg3: memref<256x128xbf16, #tpu.memory_space<vmem>>) attributes {dimension_semantics = [#tpu.dimension_semantics<parallel>], iteration_bounds = array<i64: 2>, scalar_prefetch = 0 : i64, scratch_operands = 0 : i64, tpu.core_type = #tpu.core_type<tc>, window_params = [{transform_indices = @transform_0, window_bounds = array<i64: 256, 128>}, {pipeline_mode = #tpu.pipeline_mode<synchronous>, transform_indices = @transform_1, window_bounds = array<i64: 2, 128>}, {transform_indices = @transform_2, window_bounds = array<i64: 256, 128>}]} {
    %c0 = arith.constant 0 : index
    %c0_0 = arith.constant 0 : index
    %0 = vector.load %arg2[%c0, %c0_0] : memref<2x128xf32, #tpu.memory_space<vmem>>, vector<2x128xf32>
    %1 = vector.extract_strided_slice %0 {offsets = [0, 0], sizes = [1, 128], strides = [1, 1]} : vector<2x128xf32> to vector<1x128xf32>
    %cst = arith.constant 0.001953125 : f32
    %2 = vector.broadcast %cst : f32 to vector<1x128xf32>
    %3 = arith.mulf %1, %2 : vector<1x128xf32>
    %4 = vector.extract_strided_slice %0 {offsets = [1, 0], sizes = [1, 128], strides = [1, 1]} : vector<2x128xf32> to vector<1x128xf32>
    %cst_1 = arith.constant 0.001953125 : f32
    %5 = vector.broadcast %cst_1 : f32 to vector<1x128xf32>
    %6 = arith.mulf %4, %5 : vector<1x128xf32>
    %7 = arith.mulf %3, %3 : vector<1x128xf32>
    %8 = arith.subf %6, %7 : vector<1x128xf32>
    %cst_2 = arith.constant 0.000000e+00 : f32
    %9 = vector.broadcast %cst_2 : f32 to vector<1x128xf32>
    %10 = arith.maximumf %8, %9 : vector<1x128xf32>
    %c0_3 = arith.constant 0 : index
    %c0_4 = arith.constant 0 : index
    %11 = vector.load %arg1[%c0_3, %c0_4] : memref<256x128xf32, #tpu.memory_space<vmem>>, vector<256x128xf32>
    %12 = vector.broadcast %3 : vector<1x128xf32> to vector<256x128xf32>
    %13 = arith.subf %11, %12 : vector<256x128xf32>
    %cst_5 = arith.constant 9.99999974E-6 : f32
    %14 = vector.broadcast %cst_5 : f32 to vector<1x128xf32>
    %15 = arith.addf %10, %14 : vector<1x128xf32>
    %16 = math.rsqrt %15 : vector<1x128xf32>
    %17 = vector.broadcast %16 : vector<1x128xf32> to vector<256x128xf32>
    %18 = arith.mulf %13, %17 : vector<256x128xf32>
    %cst_6 = arith.constant 0.000000e+00 : f32
    %19 = vector.broadcast %cst_6 : f32 to vector<256x128xf32>
    %20 = arith.cmpf ogt, %18, %19 : vector<256x128xf32>
    %cst_7 = arith.constant 0.000000e+00 : f32
    %21 = vector.broadcast %cst_7 : f32 to vector<256x128xf32>
    %22 = arith.minimumf %18, %21 : vector<256x128xf32>
    %23 = math.exp %22 : vector<256x128xf32>
    %cst_8 = arith.constant 1.000000e+00 : f32
    %24 = vector.broadcast %cst_8 : f32 to vector<256x128xf32>
    %25 = arith.subf %23, %24 : vector<256x128xf32>
    %26 = arith.select %20, %18, %25 : vector<256x128xi1>, vector<256x128xf32>
    %27 = arith.truncf %26 : vector<256x128xf32> to vector<256x128xbf16>
    %c0_9 = arith.constant 0 : index
    %c0_10 = arith.constant 0 : index
    %28 = vector.load %arg3[%c0_9, %c0_10] : memref<256x128xbf16, #tpu.memory_space<vmem>>, vector<256x128xbf16>
    tpu.vector_store %arg3[%c0_9, %c0_10], %27 {strides = array<i32>} : memref<256x128xbf16, #tpu.memory_space<vmem>>, vector<256x128xbf16>,
    return
  }
  func.func @transform_0(%arg0: i32) -> (i32, i32) {
    %c0_i32 = arith.constant 0 : i32
    %c0_i32_0 = arith.constant 0 : i32
    return %arg0, %c0_i32 : i32, i32
  }
  func.func @transform_1(%arg0: i32) -> (i32, i32) {
    %c0_i32 = arith.constant 0 : i32
    %c0_i32_0 = arith.constant 0 : i32
    %c0_i32_1 = arith.constant 0 : i32
    return %c0_i32, %c0_i32_0 : i32, i32
  }
  func.func @transform_2(%arg0: i32) -> (i32, i32) {
    %c0_i32 = arith.constant 0 : i32
    %c0_i32_0 = arith.constant 0 : i32
    return %arg0, %c0_i32 : i32, i32
  }
}

module attributes {stable_mosaic.version = 11 : i64} {
  func.func @_sigmoid_kernel(%arg0: i32, %arg1: memref<48x128xf32, #tpu.memory_space<vmem>>, %arg2: memref<48x128xf32, #tpu.memory_space<vmem>>) attributes {dimension_semantics = [#tpu.dimension_semantics<parallel>], iteration_bounds = array<i64: 1>, scalar_prefetch = 0 : i64, scratch_operands = 0 : i64, tpu.core_type = #tpu.core_type<tc>, window_params = [{transform_indices = @transform_0, window_bounds = array<i64: 48, 128>}, {transform_indices = @transform_1, window_bounds = array<i64: 48, 128>}]} {
    %c0 = arith.constant 0 : index
    %c0_0 = arith.constant 0 : index
    %0 = vector.load %arg1[%c0, %c0_0] : memref<48x128xf32, #tpu.memory_space<vmem>>, vector<48x128xf32>
    %cst = arith.constant 0.000000e+00 : f32
    %1 = vector.broadcast %cst : f32 to vector<48x128xf32>
    %2 = arith.subf %1, %0 : vector<48x128xf32>
    %3 = math.exp %2 : vector<48x128xf32>
    %cst_1 = arith.constant 1.000000e+00 : f32
    %4 = vector.broadcast %cst_1 : f32 to vector<48x128xf32>
    %5 = arith.addf %4, %3 : vector<48x128xf32>
    %cst_2 = arith.constant 1.000000e+00 : f32
    %6 = vector.broadcast %cst_2 : f32 to vector<48x128xf32>
    %7 = arith.divf %6, %5 : vector<48x128xf32>
    %c0_3 = arith.constant 0 : index
    %c0_4 = arith.constant 0 : index
    %8 = vector.load %arg2[%c0_3, %c0_4] : memref<48x128xf32, #tpu.memory_space<vmem>>, vector<48x128xf32>
    tpu.vector_store %arg2[%c0_3, %c0_4], %7 {strides = array<i32>} : memref<48x128xf32, #tpu.memory_space<vmem>>, vector<48x128xf32>,
    return
  }
  func.func @transform_0(%arg0: i32) -> (i32, i32) {
    %c0_i32 = arith.constant 0 : i32
    %c0_i32_0 = arith.constant 0 : i32
    return %arg0, %c0_i32 : i32, i32
  }
  func.func @transform_1(%arg0: i32) -> (i32, i32) {
    %c0_i32 = arith.constant 0 : i32
    %c0_i32_0 = arith.constant 0 : i32
    return %arg0, %c0_i32 : i32, i32
  }
}

</mosaic_0001>

<llo_original>
// kernel: generator_forward.11
$region0: #{generator_forward.11}
  #allocation0 [shape = 'u32[]', space=smem, size = 0x4, offset = 0x4, fixed_abs, tag = 'smem constant byte address 0x4 - core index']
  #allocation1 [shape = 'u32[72,128]{1,0:T(1,128)}', space=vmem, size = 0x9000, scoped, tag = 'internal scratch']
  #allocation2 [shape = 'f32[16,512]{1,0:T(8,128)}', space=vmem, size = 0x8000, scoped, tag = 'scratch operand']
  %s0 = inlined_call_operand.vmem [shape: bf16[16,128], index: 0, kind: input, shape index: {}]
  %s1 = inlined_call_operand.vmem [shape: bf16[128,8192], index: 1, kind: input, shape index: {}]
  %s2 = inlined_call_operand.vmem [shape: f32[16,8192], index: 2, kind: output, shape index: {}]
  %s3 = sld [smem:[#allocation0]]
  $region91: #{generator_forward.11} parent=0
    _
  %s5 = ssub.s32 1, %s3
  %s6 = scalar_select 0, %s5, %s3
  $region1: #{generator_forward.11} parent=0
    #allocation3 [shape = 'u8[262144]{0}', space=vmem, size = 0x40000, scoped, tag = 'input window, operand 1']
    #allocation4 [shape = 'u8[65536]{0}', space=vmem, size = 0x10000, scoped, tag = 'output window, operand 0']
    loop: start=0, step=1, limit=18
    $region2: #{generator_forward.11} parent=1 // loop_pre_header
      _
    $region3: #{generator_forward.11} parent=1 // loop_header
      %s8 = sphi 0, %s12
      %p9 = scmp.ge.s32.totalorder %s8, 18
      %s15 = sphi 0, %s34
      %s16 = sphi 0, %s30
      %s17 = sphi 0, %s26
      %s18 = sphi 0, %s15
      %s19 = sphi 0, %s16
      %s20 = sphi 0, %s17
      %s21 = sphi 0, %s18
      %s22 = sphi 0, %s19
      %s23 = sphi 0, %s20
      %s39 = sphi 0, %s41
      %s42 = sphi 0, %s39
      %s43 = sphi 0, %s42
      %s59 = sphi 0, %s43
      %s67 = sphi 0, %s69
      %s70 = sphi 0, %s67
      %s71 = sphi 0, %s70
      %s87 = sphi 0, %s71
      %s95 = sphi 0, %s97
      %s98 = sphi 0, %s95
      %s99 = sphi 0, %s98
      %s115 = sphi 0, %s99
    $region4: #{generator_forward.11} parent=1 // loop_header_branch
      %11 = sbr.rel (%p9) target = $region8
    $region5: #{generator_forward.11} parent=1 // loop_body
      %s13 = ssub.s32 %s8, 1
      %s14 = ssub.s32 %s8, 2
      %s24 = sadd.s32 1, %s17
      %p25 = scmp.ge.s32.totalorder %s24, 1
      %s26 = scalar_select %p25, 0, %s24
      %s27 = sadd.s32 1, %s16
      %s28 = scalar_select %p25, %s27, %s16
      %p29 = scmp.ge.s32.totalorder %s28, 16
      %s30 = scalar_select %p29, 0, %s28
      %s31 = sadd.s32 1, %s15
      %s32 = scalar_select %p29, %s31, %s15
      %p33 = scmp.ge.s32.totalorder %s32, 1
      %s34 = scalar_select %p33, 0, %s32
      %s35 = ssub.s32 %s15, %s34
      %s36 = ssub.s32 %s17, %s26
      %s37 = sor.u32 %s35, %s36
      %p38 = scmp.eq.s32.totalorder %s37, 0
      %s40 = sadd.s32 %s39, 1
      %s41 = scalar_select %p38, %s39, %s40
      %p44 = pneg %p38
      %p45 = scmp.eq.s32.totalorder %s8, 15
      %p46 = por %p44, %p45
      %p47 = scmp.ne.s32.totalorder %s39, %s42
      %p48 = scmp.eq.s32.totalorder %s8, 0
      %p49 = por %p47, %p48
      %p50 = scmp.ne.s32.totalorder %s39, %s42
      %p51 = scmp.eq.s32.totalorder %s13, 15
      %p52 = por %p50, %p51
      %p53 = scmp.ne.s32.totalorder %s42, %s43
      %p54 = scmp.eq.s32.totalorder %s13, 0
      %p55 = por %p53, %p54
      %p56 = scmp.ne.s32.totalorder %s42, %s43
      %p57 = scmp.eq.s32.totalorder %s14, 15
      %p58 = por %p56, %p57
      %p60 = scmp.ne.s32.totalorder %s43, %s59
      %p61 = scmp.eq.s32.totalorder %s14, 0
      %p62 = por %p60, %p61
      %s63 = ssub.s32 %s17, %s26
      %s64 = ssub.s32 %s16, %s30
      %s65 = sor.u32 %s63, %s64
      %p66 = scmp.eq.s32.totalorder %s65, 0
      %s68 = sadd.s32 %s67, 1
      %s69 = scalar_select %p66, %s67, %s68
      %p72 = pneg %p66
      %p73 = scmp.eq.s32.totalorder %s8, 15
      %p74 = por %p72, %p73
      %p75 = scmp.ne.s32.totalorder %s67, %s70
      %p76 = scmp.eq.s32.totalorder %s8, 0
      %p77 = por %p75, %p76
      %p78 = scmp.ne.s32.totalorder %s67, %s70
      %p79 = scmp.eq.s32.totalorder %s13, 15
      %p80 = por %p78, %p79
      %p81 = scmp.ne.s32.totalorder %s70, %s71
      %p82 = scmp.eq.s32.totalorder %s13, 0
      %p83 = por %p81, %p82
      %p84 = scmp.ne.s32.totalorder %s70, %s71
      %p85 = scmp.eq.s32.totalorder %s14, 15
      %p86 = por %p84, %p85
      %p88 = scmp.ne.s32.totalorder %s71, %s87
      %p89 = scmp.eq.s32.totalorder %s14, 0
      %p90 = por %p88, %p89
      %s91 = ssub.s32 %s15, %s34
      %s92 = ssub.s32 %s16, %s30
      %s93 = sor.u32 %s91, %s92
      %p94 = scmp.eq.s32.totalorder %s93, 0
      %s96 = sadd.s32 %s95, 1
      %s97 = scalar_select %p94, %s95, %s96
      %p100 = pneg %p94
      %p101 = scmp.eq.s32.totalorder %s8, 15
      %p102 = por %p100, %p101
      %p103 = scmp.ne.s32.totalorder %s95, %s98
      %p104 = scmp.eq.s32.totalorder %s8, 0
      %p105 = por %p103, %p104
      %p106 = scmp.ne.s32.totalorder %s95, %s98
      %p107 = scmp.eq.s32.totalorder %s13, 15
      %p108 = por %p106, %p107
      %p109 = scmp.ne.s32.totalorder %s98, %s99
      %p110 = scmp.eq.s32.totalorder %s13, 0
      %p111 = por %p109, %p110
      %p112 = scmp.ne.s32.totalorder %s98, %s99
      %p113 = scmp.eq.s32.totalorder %s14, 15
      %p114 = por %p112, %p113
      %p116 = scmp.ne.s32.totalorder %s99, %s115
      %p117 = scmp.eq.s32.totalorder %s14, 0
      %p118 = por %p116, %p117
      %p119 = scmp.le.s32.totalorder 1, %s8
      %p120 = scmp.lt.s32.totalorder %s8, 17
      %p121 = pnand %p119, %p120
      %p122 = pneg %p121
      // Predicated region
      $region9: #{generator_forward.11} parent=5 // pred_check
        _
      $region10: #{generator_forward.11} parent=5 // pred_check_branch
        %124 = sbr.rel (%p121) target = $region12
      $region11: #{generator_forward.11} parent=5 // pred_region
        %s125 = ssub.s32 %s8, 1
        // Predicated region
        $region13: #{generator_forward.11} parent=11 // pred_check
          %p126 = pneg %p55
        $region14: #{generator_forward.11} parent=11 // pred_check_branch
          %128 = sbr.rel (%p126) target = $region16
        $region15: #{generator_forward.11} parent=11 // pred_region
          %s129 = smul.u32 2, %s18
          %p130 = scmp.lt.s32.totalorder %s129, 1
          %s131 = scalar_select %p130, %s129, 1
          %p132 = scmp.lt.s32.totalorder %s20, 0
          %s133 = scalar_select %p132, %s20, 0
          %s134 = sadd.s32 %s133, %s131
          %s135 = smul.addr %s134, 4
          %s136 = scalar_lea.vmem %s0, %s135
          %s137 = smul.u32 2, %s18
        $region16: #{generator_forward.11} parent=11 // pred_fallthru
          _
      $region12: #{generator_forward.11} parent=5 // pred_fallthru
        _
      %p138 = scmp.lt.s32.totalorder %s8, 16
      // Predicated region
      $region17: #{generator_forward.11} parent=5 // pred_check
        %p139 = pneg %p138
      $region18: #{generator_forward.11} parent=5 // pred_check_branch
        %141 = sbr.rel (%p139) target = $region20
      $region19: #{generator_forward.11} parent=5 // pred_region
        // Predicated region
        $region21: #{generator_forward.11} parent=19 // pred_check
          %p142 = pneg %p77
        $region22: #{generator_forward.11} parent=19 // pred_check_branch
          %144 = sbr.rel (%p142) target = $region24
        $region23: #{generator_forward.11} parent=19 // pred_region
          %s145 = sand.u32 %s67, 1
          %s146 = sand.u32 %s67, 1
          %s147 = smul.addr %s146, 256
          %s148 = scalar_lea.vmem [#allocation3], %s147
          %s149 = smul.u32 16, %s17
          %s150 = smul.u32 4, %s16
          %s151 = smul.addr %s149, 64
          %s152 = sadd.s32 %s150, %s151
          %s153 = smul.addr %s152, 4
          %s154 = scalar_lea.vmem %s1, %s153
          // Predicated region
          $region25: #{generator_forward.11} parent=23 // pred_check
            _
          $region26: #{generator_forward.11} parent=23 // pred_check_branch
            %156 = sbr.rel (0) target = $region28
          $region27: #{generator_forward.11} parent=23 // pred_region
            // Predicated region
            $region29: #{generator_forward.11} parent=27 // pred_check
              _
            $region30: #{generator_forward.11} parent=27 // pred_check_branch
              %158 = sbr.rel (0) target = $region32
            $region31: #{generator_forward.11} parent=27 // pred_region
              loop: start=0, step=1, limit=1
              $region33: #{generator_forward.11} parent=31 // loop_pre_header
                _
              $region34: #{generator_forward.11} parent=31 // loop_header
                %s160 = sphi 0, %s164
                %p161 = scmp.ge.s32.totalorder %s160, 1
                %s165 = sphi %s154, %s154
                %s166 = sphi %s148, %s148
              $region35: #{generator_forward.11} parent=31 // loop_header_branch
                %163 = sbr.rel (%p161) target = $region39
              $region36: #{generator_forward.11} parent=31 // loop_body
                %v167 = vld [vmem:[%s165] sm:$0xff]
                %168 = vst [vmem:[%s166] sm:$0xff] %v167
                %v169 = vld [vmem:[%s165 + $0x8] sm:$0xff]
                %170 = vst [vmem:[%s166 + $0x8] sm:$0xff] %v169
                %v171 = vld [vmem:[%s165 + $0x100] sm:$0xff]
                %172 = vst [vmem:[%s166 + $0x10] sm:$0xff] %v171
                %v173 = vld [vmem:[%s165 + $0x108] sm:$0xff]
                %174 = vst [vmem:[%s166 + $0x18] sm:$0xff] %v173
                %v175 = vld [vmem:[%s165 + $0x200] sm:$0xff]
                %176 = vst [vmem:[%s166 + $0x20] sm:$0xff] %v175
                %v177 = vld [vmem:[%s165 + $0x208] sm:$0xff]
                %178 = vst [vmem:[%s166 + $0x28] sm:$0xff] %v177
                %v179 = vld [vmem:[%s165 + $0x300] sm:$0xff]
                %180 = vst [vmem:[%s166 + $0x30] sm:$0xff] %v179
                %v181 = vld [vmem:[%s165 + $0x308] sm:$0xff]
                %182 = vst [vmem:[%s166 + $0x38] sm:$0xff] %v181
                %v183 = vld [vmem:[%s165 + $0x400] sm:$0xff]
                %184 = vst [vmem:[%s166 + $0x40] sm:$0xff] %v183
                %v185 = vld [vmem:[%s165 + $0x408] sm:$0xff]
                %186 = vst [vmem:[%s166 + $0x48] sm:$0xff] %v185
                %v187 = vld [vmem:[%s165 + $0x500] sm:$0xff]
                %188 = vst [vmem:[%s166 + $0x50] sm:$0xff] %v187
                %v189 = vld [vmem:[%s165 + $0x508] sm:$0xff]
                %190 = vst [vmem:[%s166 + $0x58] sm:$0xff] %v189
                %v191 = vld [vmem:[%s165 + $0x600] sm:$0xff]
                %192 = vst [vmem:[%s166 + $0x60] sm:$0xff] %v191
                %v193 = vld [vmem:[%s165 + $0x608] sm:$0xff]
                %194 = vst [vmem:[%s166 + $0x68] sm:$0xff] %v193
                %v195 = vld [vmem:[%s165 + $0x700] sm:$0xff]
                %196 = vst [vmem:[%s166 + $0x70] sm:$0xff] %v195
                %v197 = vld [vmem:[%s165 + $0x708] sm:$0xff]
                %198 = vst [vmem:[%s166 + $0x78] sm:$0xff] %v197
                %v199 = vld [vmem:[%s165 + $0x800] sm:$0xff]
                %200 = vst [vmem:[%s166 + $0x80] sm:$0xff] %v199
                %v201 = vld [vmem:[%s165 + $0x808] sm:$0xff]
                %202 = vst [vmem:[%s166 + $0x88] sm:$0xff] %v201
                %v203 = vld [vmem:[%s165 + $0x900] sm:$0xff]
                %204 = vst [vmem:[%s166 + $0x90] sm:$0xff] %v203
                %v205 = vld [vmem:[%s165 + $0x908] sm:$0xff]
                %206 = vst [vmem:[%s166 + $0x98] sm:$0xff] %v205
                %v207 = vld [vmem:[%s165 + $0xa00] sm:$0xff]
                %208 = vst [vmem:[%s166 + $0xa0] sm:$0xff] %v207
                %v209 = vld [vmem:[%s165 + $0xa08] sm:$0xff]
                %210 = vst [vmem:[%s166 + $0xa8] sm:$0xff] %v209
                %v211 = vld [vmem:[%s165 + $0xb00] sm:$0xff]
                %212 = vst [vmem:[%s166 + $0xb0] sm:$0xff] %v211
                %v213 = vld [vmem:[%s165 + $0xb08] sm:$0xff]
                %214 = vst [vmem:[%s166 + $0xb8] sm:$0xff] %v213
                %v215 = vld [vmem:[%s165 + $0xc00] sm:$0xff]
                %216 = vst [vmem:[%s166 + $0xc0] sm:$0xff] %v215
                %v217 = vld [vmem:[%s165 + $0xc08] sm:$0xff]
                %218 = vst [vmem:[%s166 + $0xc8] sm:$0xff] %v217
                %v219 = vld [vmem:[%s165 + $0xd00] sm:$0xff]
                %220 = vst [vmem:[%s166 + $0xd0] sm:$0xff] %v219
                %v221 = vld [vmem:[%s165 + $0xd08] sm:$0xff]
                %222 = vst [vmem:[%s166 + $0xd8] sm:$0xff] %v221
                %v223 = vld [vmem:[%s165 + $0xe00] sm:$0xff]
                %224 = vst [vmem:[%s166 + $0xe0] sm:$0xff] %v223
                %v225 = vld [vmem:[%s165 + $0xe08] sm:$0xff]
                %226 = vst [vmem:[%s166 + $0xe8] sm:$0xff] %v225
                %v227 = vld [vmem:[%s165 + $0xf00] sm:$0xff]
                %228 = vst [vmem:[%s166 + $0xf0] sm:$0xff] %v227
                %v229 = vld [vmem:[%s165 + $0xf08] sm:$0xff]
                %230 = vst [vmem:[%s166 + $0xf8] sm:$0xff] %v229
              $region37: #{generator_forward.11} parent=31 // loop_footer
                %s164 = sadd.s32 1, %s160
              $region38: #{generator_forward.11} parent=31 // loop_footer_branch
                %159 = sbr.rel target = $region34
              $region39: #{generator_forward.11} parent=31 // loop_exit
                _
            $region32: #{generator_forward.11} parent=27 // pred_fallthru
              _
            // Predicated region
            $region40: #{generator_forward.11} parent=27 // pred_check
              _
            $region41: #{generator_forward.11} parent=27 // pred_check_branch
              %232 = sbr.rel target = $region43
            $region42: #{generator_forward.11} parent=27 // pred_region
              _
            $region43: #{generator_forward.11} parent=27 // pred_fallthru
              _
          $region28: #{generator_forward.11} parent=23 // pred_fallthru
            _
          %233 = vnop
        $region24: #{generator_forward.11} parent=19 // pred_fallthru
          _
      $region20: #{generator_forward.11} parent=5 // pred_fallthru
        _
      %p234 = scmp.le.s32.totalorder 1, %s8
      %p235 = scmp.lt.s32.totalorder %s8, 17
      %p236 = pnand %p234, %p235
      %p237 = pneg %p236
      // Predicated region
      $region44: #{generator_forward.11} parent=5 // pred_check
        _
      $region45: #{generator_forward.11} parent=5 // pred_check_branch
        %239 = sbr.rel (%p236) target = $region47
      $region46: #{generator_forward.11} parent=5 // pred_region
        %s240 = ssub.s32 %s8, 1
        %s241 = sand.u32 %s70, 1
        %s242 = sand.u32 %s70, 1
        %s243 = smul.addr %s242, 256
        %s244 = scalar_lea.vmem [#allocation3], %s243
        // Predicated region
        $region48: #{generator_forward.11} parent=46 // pred_check
          %p245 = pneg %p83
        $region49: #{generator_forward.11} parent=46 // pred_check_branch
          %247 = sbr.rel (%p245) target = $region51
        $region50: #{generator_forward.11} parent=46 // pred_region
          _
        $region51: #{generator_forward.11} parent=46 // pred_fallthru
          _
        %s248 = smul.u32 2, %s18
        %p249 = scmp.lt.s32.totalorder %s248, 1
        %s250 = scalar_select %p249, %s248, 1
        %p251 = scmp.lt.s32.totalorder %s20, 0
        %s252 = scalar_select %p251, %s20, 0
        %s253 = sadd.s32 %s252, %s250
        %s254 = smul.addr %s253, 4
        %s255 = scalar_lea.vmem %s0, %s254
        %p256 = pneg %p55
        %p257 = pneg %p52
        %s258 = sand.u32 %s70, 1
        %s259 = sand.u32 %s70, 1
        %s260 = smul.addr %s259, 256
        %s261 = scalar_lea.vmem [#allocation3], %s260
        %p262 = pneg %p83
        %p263 = pneg %p80
        %p264 = pneg %p111
        %p265 = pneg %p108
        %s266 = sand.u32 %s98, 1
        %s267 = sand.u32 %s98, 1
        %s268 = smul.addr %s267, 64
        %s269 = scalar_lea.vmem [#allocation4], %s268
        %s270 = smul.u32 2, %s18
        %p271 = scmp.lt.s32.totalorder %s270, 1
        %s272 = scalar_select %p271, %s270, 1
        %p273 = scmp.lt.s32.totalorder %s20, 0
        %s274 = scalar_select %p273, %s20, 0
        %s275 = sadd.s32 %s274, %s272
        %s276 = smul.addr %s275, 4
        %s277 = scalar_lea.vmem %s0, %s276
        %s278 = smul.u32 2, %s18
        %s279 = smul.u32 16, %s20
        %s280 = smul.u32 4, %s19
        %s281 = smul.u32 2, %s18
        %s282 = smul.u32 4, %s19
        %p283 = scmp.eq.s32.totalorder %s20, 0
        // Predicated region
        $region52: #{generator_forward.11} parent=46 // pred_check
          %p284 = pneg %p283
        $region53: #{generator_forward.11} parent=46 // pred_check_branch
          %286 = sbr.rel (%p284) target = $region55
        $region54: #{generator_forward.11} parent=46 // pred_region
          %287 = vst [vmem:[#allocation2] sm:$0xff] 0.0
          %288 = vst [vmem:[#allocation2 + $0x8] sm:$0xff] 0.0
          %289 = vst [vmem:[#allocation2 + $0x10] sm:$0xff] 0.0
          %290 = vst [vmem:[#allocation2 + $0x18] sm:$0xff] 0.0
          %291 = vst [vmem:[#allocation2 + $0x20] sm:$0xff] 0.0
          %292 = vst [vmem:[#allocation2 + $0x28] sm:$0xff] 0.0
          %293 = vst [vmem:[#allocation2 + $0x30] sm:$0xff] 0.0
          %294 = vst [vmem:[#allocation2 + $0x38] sm:$0xff] 0.0
        $region55: #{generator_forward.11} parent=46 // pred_fallthru
          _
        %v295 = vld [vmem:[#allocation2] sm:$0xff]
        %v296 = vld [vmem:[#allocation2 + $0x8] sm:$0xff]
        %v297 = vld [vmem:[#allocation2 + $0x10] sm:$0xff]
        %v298 = vld [vmem:[#allocation2 + $0x18] sm:$0xff]
        %v299 = vld [vmem:[#allocation2 + $0x20] sm:$0xff]
        %v300 = vld [vmem:[#allocation2 + $0x28] sm:$0xff]
        %v301 = vld [vmem:[#allocation2 + $0x30] sm:$0xff]
        %v302 = vld [vmem:[#allocation2 + $0x38] sm:$0xff]
        %v303 = vld [vmem:[%s277] sm:$0xf]
        %v304 = vld [vmem:[%s277 + $0x4] sm:$0xf]
        %v305 = vld [vmem:[%s244] sm:$0xff]
        %v306 = vld [vmem:[%s244 + $0x8] sm:$0xff]
        %v307 = vld [vmem:[%s244 + $0x10] sm:$0xff]
        %v308 = vld [vmem:[%s244 + $0x18] sm:$0xff]
        %v309 = vld [vmem:[%s244 + $0x20] sm:$0xff]
        %v310 = vld [vmem:[%s244 + $0x28] sm:$0xff]
        %v311 = vld [vmem:[%s244 + $0x30] sm:$0xff]
        %v312 = vld [vmem:[%s244 + $0x38] sm:$0xff]
        %v313 = vld [vmem:[%s244 + $0x40] sm:$0xff]
        %v314 = vld [vmem:[%s244 + $0x48] sm:$0xff]
        %v315 = vld [vmem:[%s244 + $0x50] sm:$0xff]
        %v316 = vld [vmem:[%s244 + $0x58] sm:$0xff]
        %v317 = vld [vmem:[%s244 + $0x60] sm:$0xff]
        %v318 = vld [vmem:[%s244 + $0x68] sm:$0xff]
        %v319 = vld [vmem:[%s244 + $0x70] sm:$0xff]
        %v320 = vld [vmem:[%s244 + $0x78] sm:$0xff]
        %v321 = vld [vmem:[%s244 + $0x80] sm:$0xff]
        %v322 = vld [vmem:[%s244 + $0x88] sm:$0xff]
        %v323 = vld [vmem:[%s244 + $0x90] sm:$0xff]
        %v324 = vld [vmem:[%s244 + $0x98] sm:$0xff]
        %v325 = vld [vmem:[%s244 + $0xa0] sm:$0xff]
        %v326 = vld [vmem:[%s244 + $0xa8] sm:$0xff]
        %v327 = vld [vmem:[%s244 + $0xb0] sm:$0xff]
        %v328 = vld [vmem:[%s244 + $0xb8] sm:$0xff]
        %v329 = vld [vmem:[%s244 + $0xc0] sm:$0xff]
        %v330 = vld [vmem:[%s244 + $0xc8] sm:$0xff]
        %v331 = vld [vmem:[%s244 + $0xd0] sm:$0xff]
        %v332 = vld [vmem:[%s244 + $0xd8] sm:$0xff]
        %v333 = vld [vmem:[%s244 + $0xe0] sm:$0xff]
        %v334 = vld [vmem:[%s244 + $0xe8] sm:$0xff]
        %v335 = vld [vmem:[%s244 + $0xf0] sm:$0xff]
        %v336 = vld [vmem:[%s244 + $0xf8] sm:$0xff]
        %v339 = vunpack.c.l.b16 %v303
        %v340 = vunpack.c.l.b16 %v304
        %v341 = vpack.c.b16 %v340, %v339
        %v375 = vunpack.c.l.b16 %v305
        %v376 = vunpack.c.h.b16 %v305
        %v377 = vunpack.c.l.b16 %v306
        %v378 = vunpack.c.h.b16 %v306
        %v379 = vunpack.c.l.b16 %v307
        %v380 = vunpack.c.h.b16 %v307
        %v381 = vunpack.c.l.b16 %v308
        %v382 = vunpack.c.h.b16 %v308
        %v383 = vunpack.c.l.b16 %v309
        %v384 = vunpack.c.h.b16 %v309
        %v385 = vunpack.c.l.b16 %v310
        %v386 = vunpack.c.h.b16 %v310
        %v387 = vunpack.c.l.b16 %v311
        %v388 = vunpack.c.h.b16 %v311
        %v389 = vunpack.c.l.b16 %v312
        %v390 = vunpack.c.h.b16 %v312
        %v391 = vunpack.c.l.b16 %v313
        %v392 = vunpack.c.h.b16 %v313
        %v393 = vunpack.c.l.b16 %v314
        %v394 = vunpack.c.h.b16 %v314
        %v395 = vunpack.c.l.b16 %v315
        %v396 = vunpack.c.h.b16 %v315
        %v397 = vunpack.c.l.b16 %v316
        %v398 = vunpack.c.h.b16 %v316
        %v399 = vunpack.c.l.b16 %v317
        %v400 = vunpack.c.h.b16 %v317
        %v401 = vunpack.c.l.b16 %v318
        %v402 = vunpack.c.h.b16 %v318
        %v403 = vunpack.c.l.b16 %v319
        %v404 = vunpack.c.h.b16 %v319
        %v405 = vunpack.c.l.b16 %v320
        %v406 = vunpack.c.h.b16 %v320
        %v407 = vunpack.c.l.b16 %v321
        %v408 = vunpack.c.h.b16 %v321
        %v409 = vunpack.c.l.b16 %v322
        %v410 = vunpack.c.h.b16 %v322
        %v411 = vunpack.c.l.b16 %v323
        %v412 = vunpack.c.h.b16 %v323
        %v413 = vunpack.c.l.b16 %v324
        %v414 = vunpack.c.h.b16 %v324
        %v415 = vunpack.c.l.b16 %v325
        %v416 = vunpack.c.h.b16 %v325
        %v417 = vunpack.c.l.b16 %v326
        %v418 = vunpack.c.h.b16 %v326
        %v419 = vunpack.c.l.b16 %v327
        %v420 = vunpack.c.h.b16 %v327
        %v421 = vunpack.c.l.b16 %v328
        %v422 = vunpack.c.h.b16 %v328
        %v423 = vunpack.c.l.b16 %v329
        %v424 = vunpack.c.h.b16 %v329
        %v425 = vunpack.c.l.b16 %v330
        %v426 = vunpack.c.h.b16 %v330
        %v427 = vunpack.c.l.b16 %v331
        %v428 = vunpack.c.h.b16 %v331
        %v429 = vunpack.c.l.b16 %v332
        %v430 = vunpack.c.h.b16 %v332
        %v431 = vunpack.c.l.b16 %v333
        %v432 = vunpack.c.h.b16 %v333
        %v433 = vunpack.c.l.b16 %v334
        %v434 = vunpack.c.h.b16 %v334
        %v435 = vunpack.c.l.b16 %v335
        %v436 = vunpack.c.h.b16 %v335
        %v437 = vunpack.c.l.b16 %v336
        %v438 = vunpack.c.h.b16 %v336
        %v439 = vpack.c.b16 %v379, %v375
        %v440 = vpack.c.b16 %v380, %v376
        %v441 = vpack.c.b16 %v381, %v377
        %v442 = vpack.c.b16 %v382, %v378
        %v443 = vpack.c.b16 %v387, %v383
        %v444 = vpack.c.b16 %v388, %v384
        %v445 = vpack.c.b16 %v389, %v385
        %v446 = vpack.c.b16 %v390, %v386
        %v447 = vpack.c.b16 %v395, %v391
        %v448 = vpack.c.b16 %v396, %v392
        %v449 = vpack.c.b16 %v397, %v393
        %v450 = vpack.c.b16 %v398, %v394
        %v451 = vpack.c.b16 %v403, %v399
        %v452 = vpack.c.b16 %v404, %v400
        %v453 = vpack.c.b16 %v405, %v401
        %v454 = vpack.c.b16 %v406, %v402
        %v455 = vpack.c.b16 %v411, %v407
        %v456 = vpack.c.b16 %v412, %v408
        %v457 = vpack.c.b16 %v413, %v409
        %v458 = vpack.c.b16 %v414, %v410
        %v459 = vpack.c.b16 %v419, %v415
        %v460 = vpack.c.b16 %v420, %v416
        %v461 = vpack.c.b16 %v421, %v417
        %v462 = vpack.c.b16 %v422, %v418
        %v463 = vpack.c.b16 %v427, %v423
        %v464 = vpack.c.b16 %v428, %v424
        %v465 = vpack.c.b16 %v429, %v425
        %v466 = vpack.c.b16 %v430, %v426
        %v467 = vpack.c.b16 %v435, %v431
        %v468 = vpack.c.b16 %v436, %v432
        %v469 = vpack.c.b16 %v437, %v433
        %v470 = vpack.c.b16 %v438, %v434
        %503 = vmatpush.bf16.msra.mxu0 %v467
        %504 = vmatpush.bf16.msra.mxu0 %v463
        %505 = vmatpush.bf16.msra.mxu0 %v459
        %506 = vmatpush.bf16.msra.mxu0 %v455
        %507 = vmatpush.bf16.msra.mxu0 %v451
        %508 = vmatpush.bf16.msra.mxu0 %v447
        %509 = vmatpush.bf16.msra.mxu0 %v443
        %510 = vmatpush.bf16.msra.mxu0 %v439
        %511 = vmatmul.bf16.gmra.mxu0 %v341
        %v512 = vpop.f32.mrf.mxu0
        %v513 = vadd.f32 0.0, %v512
        %v514 = vpop.f32.mrf.mxu0
        %v515 = vadd.f32 0.0, %v514
        %516 = vdwg.mxu0
        %517 = vmatpush.bf16.msra.mxu0 %v468
        %518 = vmatpush.bf16.msra.mxu0 %v464
        %519 = vmatpush.bf16.msra.mxu0 %v460
        %520 = vmatpush.bf16.msra.mxu0 %v456
        %521 = vmatpush.bf16.msra.mxu0 %v452
        %522 = vmatpush.bf16.msra.mxu0 %v448
        %523 = vmatpush.bf16.msra.mxu0 %v444
        %524 = vmatpush.bf16.msra.mxu0 %v440
        %525 = vmatmul.bf16.gmra.mxu0 %v341
        %v526 = vpop.f32.mrf.mxu0
        %v527 = vadd.f32 0.0, %v526
        %v528 = vpop.f32.mrf.mxu0
        %v529 = vadd.f32 0.0, %v528
        %530 = vdwg.mxu0
        %531 = vmatpush.bf16.msra.mxu0 %v469
        %532 = vmatpush.bf16.msra.mxu0 %v465
        %533 = vmatpush.bf16.msra.mxu0 %v461
        %534 = vmatpush.bf16.msra.mxu0 %v457
        %535 = vmatpush.bf16.msra.mxu0 %v453
        %536 = vmatpush.bf16.msra.mxu0 %v449
        %537 = vmatpush.bf16.msra.mxu0 %v445
        %538 = vmatpush.bf16.msra.mxu0 %v441
        %539 = vmatmul.bf16.gmra.mxu0 %v341
        %v540 = vpop.f32.mrf.mxu0
        %v541 = vadd.f32 0.0, %v540
        %v542 = vpop.f32.mrf.mxu0
        %v543 = vadd.f32 0.0, %v542
        %544 = vdwg.mxu0
        %545 = vmatpush.bf16.msra.mxu0 %v470
        %546 = vmatpush.bf16.msra.mxu0 %v466
        %547 = vmatpush.bf16.msra.mxu0 %v462
        %548 = vmatpush.bf16.msra.mxu0 %v458
        %549 = vmatpush.bf16.msra.mxu0 %v454
        %550 = vmatpush.bf16.msra.mxu0 %v450
        %551 = vmatpush.bf16.msra.mxu0 %v446
        %552 = vmatpush.bf16.msra.mxu0 %v442
        %553 = vmatmul.bf16.gmra.mxu0 %v341
        %v554 = vpop.f32.mrf.mxu0
        %v555 = vadd.f32 0.0, %v554
        %v556 = vpop.f32.mrf.mxu0
        %v557 = vadd.f32 0.0, %v556
        %558 = vdwg.mxu0
        %v559 = vadd.f32 %v295, %v513
        %v560 = vadd.f32 %v296, %v527
        %v561 = vadd.f32 %v297, %v541
        %v562 = vadd.f32 %v298, %v555
        %v563 = vadd.f32 %v299, %v515
        %v564 = vadd.f32 %v300, %v529
        %v565 = vadd.f32 %v301, %v543
        %v566 = vadd.f32 %v302, %v557
        %567 = vst [vmem:[#allocation2] sm:$0xff] %v559
        %568 = vst [vmem:[#allocation2 + $0x8] sm:$0xff] %v560
        %569 = vst [vmem:[#allocation2 + $0x10] sm:$0xff] %v561
        %570 = vst [vmem:[#allocation2 + $0x18] sm:$0xff] %v562
        %571 = vst [vmem:[#allocation2 + $0x20] sm:$0xff] %v563
        %572 = vst [vmem:[#allocation2 + $0x28] sm:$0xff] %v564
        %573 = vst [vmem:[#allocation2 + $0x30] sm:$0xff] %v565
        %574 = vst [vmem:[#allocation2 + $0x38] sm:$0xff] %v566
        // Predicated region
        $region56: #{generator_forward.11} parent=46 // pred_check
          %p575 = pneg %p283
        $region57: #{generator_forward.11} parent=46 // pred_check_branch
          %577 = sbr.rel (%p575) target = $region59
        $region58: #{generator_forward.11} parent=46 // pred_region
          %v578 = vld [vmem:[#allocation2] sm:$0xff]
          %v579 = vld [vmem:[#allocation2 + $0x8] sm:$0xff]
          %v580 = vld [vmem:[#allocation2 + $0x10] sm:$0xff]
          %v581 = vld [vmem:[#allocation2 + $0x18] sm:$0xff]
          %v582 = vld [vmem:[#allocation2 + $0x20] sm:$0xff]
          %v583 = vld [vmem:[#allocation2 + $0x28] sm:$0xff]
          %v584 = vld [vmem:[#allocation2 + $0x30] sm:$0xff]
          %v585 = vld [vmem:[#allocation2 + $0x38] sm:$0xff]
          %586 = vst [vmem:[%s269] sm:$0xff] %v578
          %587 = vst [vmem:[%s269 + $0x8] sm:$0xff] %v579
          %588 = vst [vmem:[%s269 + $0x10] sm:$0xff] %v580
          %589 = vst [vmem:[%s269 + $0x18] sm:$0xff] %v581
          %590 = vst [vmem:[%s269 + $0x20] sm:$0xff] %v582
          %591 = vst [vmem:[%s269 + $0x28] sm:$0xff] %v583
          %592 = vst [vmem:[%s269 + $0x30] sm:$0xff] %v584
          %593 = vst [vmem:[%s269 + $0x38] sm:$0xff] %v585
        $region59: #{generator_forward.11} parent=46 // pred_fallthru
          _
        %s594 = sand.u32 %s98, 1
        %s595 = sand.u32 %s98, 1
        %s596 = smul.addr %s595, 64
        %s597 = scalar_lea.vmem [#allocation4], %s596
        // Predicated region
        $region60: #{generator_forward.11} parent=46 // pred_check
          %p598 = pneg %p108
        $region61: #{generator_forward.11} parent=46 // pred_check_branch
          %600 = sbr.rel (%p598) target = $region63
        $region62: #{generator_forward.11} parent=46 // pred_region
          %s601 = smul.u32 2, %s18
          %s602 = smul.u32 4, %s19
          %s603 = smul.addr %s601, 64
          %s604 = sadd.s32 %s602, %s603
          %s605 = smul.addr %s604, 8
          %s606 = scalar_lea.vmem %s2, %s605
          // Predicated region
          $region64: #{generator_forward.11} parent=62 // pred_check
            _
          $region65: #{generator_forward.11} parent=62 // pred_check_branch
            %608 = sbr.rel (0) target = $region67
          $region66: #{generator_forward.11} parent=62 // pred_region
            // Predicated region
            $region68: #{generator_forward.11} parent=66 // pred_check
              _
            $region69: #{generator_forward.11} parent=66 // pred_check_branch
              %610 = sbr.rel (0) target = $region71
            $region70: #{generator_forward.11} parent=66 // pred_region
              loop: start=0, step=1, limit=1
              $region72: #{generator_forward.11} parent=70 // loop_pre_header
                _
              $region73: #{generator_forward.11} parent=70 // loop_header
                %s612 = sphi 0, %s616
                %p613 = scmp.ge.s32.totalorder %s612, 1
                %s617 = sphi %s597, %s597
                %s618 = sphi %s606, %s606
              $region74: #{generator_forward.11} parent=70 // loop_header_branch
                %615 = sbr.rel (%p613) target = $region78
              $region75: #{generator_forward.11} parent=70 // loop_body
                %v619 = vld [vmem:[%s617] sm:$0xff]
                %620 = vst [vmem:[%s618] sm:$0xff] %v619
                %v621 = vld [vmem:[%s617 + $0x8] sm:$0xff]
                %622 = vst [vmem:[%s618 + $0x8] sm:$0xff] %v621
                %v623 = vld [vmem:[%s617 + $0x10] sm:$0xff]
                %624 = vst [vmem:[%s618 + $0x10] sm:$0xff] %v623
                %v625 = vld [vmem:[%s617 + $0x18] sm:$0xff]
                %626 = vst [vmem:[%s618 + $0x18] sm:$0xff] %v625
                %v627 = vld [vmem:[%s617 + $0x20] sm:$0xff]
                %628 = vst [vmem:[%s618 + $0x200] sm:$0xff] %v627
                %v629 = vld [vmem:[%s617 + $0x28] sm:$0xff]
                %630 = vst [vmem:[%s618 + $0x208] sm:$0xff] %v629
                %v631 = vld [vmem:[%s617 + $0x30] sm:$0xff]
                %632 = vst [vmem:[%s618 + $0x210] sm:$0xff] %v631
                %v633 = vld [vmem:[%s617 + $0x38] sm:$0xff]
                %634 = vst [vmem:[%s618 + $0x218] sm:$0xff] %v633
              $region76: #{generator_forward.11} parent=70 // loop_footer
                %s616 = sadd.s32 1, %s612
              $region77: #{generator_forward.11} parent=70 // loop_footer_branch
                %611 = sbr.rel target = $region73
              $region78: #{generator_forward.11} parent=70 // loop_exit
                _
            $region71: #{generator_forward.11} parent=66 // pred_fallthru
              _
            // Predicated region
            $region79: #{generator_forward.11} parent=66 // pred_check
              _
            $region80: #{generator_forward.11} parent=66 // pred_check_branch
              %636 = sbr.rel target = $region82
            $region81: #{generator_forward.11} parent=66 // pred_region
              _
            $region82: #{generator_forward.11} parent=66 // pred_fallthru
              _
          $region67: #{generator_forward.11} parent=62 // pred_fallthru
            _
          %637 = vnop
        $region63: #{generator_forward.11} parent=46 // pred_fallthru
          _
      $region47: #{generator_forward.11} parent=5 // pred_fallthru
        _
      %p638 = scmp.le.s32.totalorder 2, %s8
      // Predicated region
      $region83: #{generator_forward.11} parent=5 // pred_check
        %p639 = pneg %p638
      $region84: #{generator_forward.11} parent=5 // pred_check_branch
        %641 = sbr.rel (%p639) target = $region86
      $region85: #{generator_forward.11} parent=5 // pred_region
        %s642 = ssub.s32 %s8, 2
        // Predicated region
        $region87: #{generator_forward.11} parent=85 // pred_check
          %p643 = pneg %p114
        $region88: #{generator_forward.11} parent=85 // pred_check_branch
          %645 = sbr.rel (%p643) target = $region90
        $region89: #{generator_forward.11} parent=85 // pred_region
          %s646 = sand.u32 %s99, 1
          %s647 = sand.u32 %s99, 1
          %s648 = smul.addr %s647, 64
          %s649 = scalar_lea.vmem [#allocation4], %s648
        $region90: #{generator_forward.11} parent=85 // pred_fallthru
          _
      $region86: #{generator_forward.11} parent=5 // pred_fallthru
        _
    $region6: #{generator_forward.11} parent=1 // loop_footer
      %s12 = sadd.s32 1, %s8
    $region7: #{generator_forward.11} parent=1 // loop_footer_branch
      %7 = sbr.rel target = $region3
    $region8: #{generator_forward.11} parent=1 // loop_exit
      _

// kernel: generator_forward.12
$region0: #{generator_forward.12}
  #allocation0 [shape = 'u32[]', space=smem, size = 0x4, offset = 0x4, fixed_abs, tag = 'smem constant byte address 0x4 - core index']
  #allocation1 [shape = 'u32[72,128]{1,0:T(1,128)}', space=vmem, size = 0x9000, scoped, tag = 'internal scratch']
  %s0 = inlined_call_operand.vmem [shape: f32[32,512], index: 0, kind: input, shape index: {}]
  %s1 = inlined_call_operand.vmem [shape: f32[2,512], index: 1, kind: output, shape index: {}]
  %s2 = sld [smem:[#allocation0]]
  $region18: #{generator_forward.12} parent=0
    _
  %s4 = ssub.s32 1, %s2
  %s5 = scalar_select 0, %s4, %s2
  // Predicated region
  $region2: #{generator_forward.12} parent=0 // pred_check
    _
  $region3: #{generator_forward.12} parent=0 // pred_check_branch
    %7 = sbr.rel (0) target = $region5
  $region4: #{generator_forward.12} parent=0 // pred_region
    _
  $region5: #{generator_forward.12} parent=0 // pred_fallthru
    _
  %p8 = scmp.eq.s32.totalorder 0, 0
  // Predicated region
  $region6: #{generator_forward.12} parent=0 // pred_check
    %p9 = pneg %p8
  $region7: #{generator_forward.12} parent=0 // pred_check_branch
    %11 = sbr.rel (%p9) target = $region9
  $region8: #{generator_forward.12} parent=0 // pred_region
    %12 = vst [vmem:[%s1] sm:$0xff] 0.0
  $region9: #{generator_forward.12} parent=0 // pred_fallthru
    _
  %v13 = vld [vmem:[%s0] sm:$0xff]
  %v14 = vld [vmem:[%s0 + $0x8] sm:$0xff]
  %v15 = vld [vmem:[%s0 + $0x10] sm:$0xff]
  %v16 = vld [vmem:[%s0 + $0x18] sm:$0xff]
  %v17 = vld [vmem:[%s0 + $0x20] sm:$0xff]
  %v18 = vld [vmem:[%s0 + $0x28] sm:$0xff]
  %v19 = vld [vmem:[%s0 + $0x30] sm:$0xff]
  %v20 = vld [vmem:[%s0 + $0x38] sm:$0xff]
  %v21 = vld [vmem:[%s0 + $0x40] sm:$0xff]
  %v22 = vld [vmem:[%s0 + $0x48] sm:$0xff]
  %v23 = vld [vmem:[%s0 + $0x50] sm:$0xff]
  %v24 = vld [vmem:[%s0 + $0x58] sm:$0xff]
  %v25 = vld [vmem:[%s0 + $0x60] sm:$0xff]
  %v26 = vld [vmem:[%s0 + $0x68] sm:$0xff]
  %v27 = vld [vmem:[%s0 + $0x70] sm:$0xff]
  %v28 = vld [vmem:[%s0 + $0x78] sm:$0xff]
  %v29 = vadd.f32 %v13, %v17
  %v30 = vadd.f32 %v29, %v21
  %v31 = vadd.f32 %v30, %v25
  %v32 = vrot.slane %v31, 4
  %v33 = vadd.f32 %v31, %v32
  %v34 = vrot.slane %v33, 2
  %v35 = vadd.f32 %v33, %v34
  %v36 = vrot.slane %v35, 1
  %v37 = vadd.f32 %v35, %v36
  %v38 = vadd.f32 %v14, %v18
  %v39 = vadd.f32 %v38, %v22
  %v40 = vadd.f32 %v39, %v26
  %v41 = vrot.slane %v40, 4
  %v42 = vadd.f32 %v40, %v41
  %v43 = vrot.slane %v42, 2
  %v44 = vadd.f32 %v42, %v43
  %v45 = vrot.slane %v44, 1
  %v46 = vadd.f32 %v44, %v45
  %v47 = vadd.f32 %v15, %v19
  %v48 = vadd.f32 %v47, %v23
  %v49 = vadd.f32 %v48, %v27
  %v50 = vrot.slane %v49, 4
  %v51 = vadd.f32 %v49, %v50
  %v52 = vrot.slane %v51, 2
  %v53 = vadd.f32 %v51, %v52
  %v54 = vrot.slane %v53, 1
  %v55 = vadd.f32 %v53, %v54
  %v56 = vadd.f32 %v16, %v20
  %v57 = vadd.f32 %v56, %v24
  %v58 = vadd.f32 %v57, %v28
  %v59 = vrot.slane %v58, 4
  %v60 = vadd.f32 %v58, %v59
  %v61 = vrot.slane %v60, 2
  %v62 = vadd.f32 %v60, %v61
  %v63 = vrot.slane %v62, 1
  %v64 = vadd.f32 %v62, %v63
  %v65 = vmul.f32 %v13, %v13
  %v66 = vmul.f32 %v14, %v14
  %v67 = vmul.f32 %v15, %v15
  %v68 = vmul.f32 %v16, %v16
  %v69 = vmul.f32 %v17, %v17
  %v70 = vmul.f32 %v18, %v18
  %v71 = vmul.f32 %v19, %v19
  %v72 = vmul.f32 %v20, %v20
  %v73 = vmul.f32 %v21, %v21
  %v74 = vmul.f32 %v22, %v22
  %v75 = vmul.f32 %v23, %v23
  %v76 = vmul.f32 %v24, %v24
  %v77 = vmul.f32 %v25, %v25
  %v78 = vmul.f32 %v26, %v26
  %v79 = vmul.f32 %v27, %v27
  %v80 = vmul.f32 %v28, %v28
  %v81 = vadd.f32 %v65, %v69
  %v82 = vadd.f32 %v81, %v73
  %v83 = vadd.f32 %v82, %v77
  %v84 = vrot.slane %v83, 4
  %v85 = vadd.f32 %v83, %v84
  %v86 = vrot.slane %v85, 2
  %v87 = vadd.f32 %v85, %v86
  %v88 = vrot.slane %v87, 1
  %v89 = vadd.f32 %v87, %v88
  %v90 = vadd.f32 %v66, %v70
  %v91 = vadd.f32 %v90, %v74
  %v92 = vadd.f32 %v91, %v78
  %v93 = vrot.slane %v92, 4
  %v94 = vadd.f32 %v92, %v93
  %v95 = vrot.slane %v94, 2
  %v96 = vadd.f32 %v94, %v95
  %v97 = vrot.slane %v96, 1
  %v98 = vadd.f32 %v96, %v97
  %v99 = vadd.f32 %v67, %v71
  %v100 = vadd.f32 %v99, %v75
  %v101 = vadd.f32 %v100, %v79
  %v102 = vrot.slane %v101, 4
  %v103 = vadd.f32 %v101, %v102
  %v104 = vrot.slane %v103, 2
  %v105 = vadd.f32 %v103, %v104
  %v106 = vrot.slane %v105, 1
  %v107 = vadd.f32 %v105, %v106
  %v108 = vadd.f32 %v68, %v72
  %v109 = vadd.f32 %v108, %v76
  %v110 = vadd.f32 %v109, %v80
  %v111 = vrot.slane %v110, 4
  %v112 = vadd.f32 %v110, %v111
  %v113 = vrot.slane %v112, 2
  %v114 = vadd.f32 %v112, %v113
  %v115 = vrot.slane %v114, 1
  %v116 = vadd.f32 %v114, %v115
  %v117 = vld [vmem:[%s1] sm:$0xff]
  %vm118 = vcmask 1040384
  %v119 = vsel %vm118, %v37, %v89
  %v120 = vsel %vm118, %v46, %v98
  %v121 = vsel %vm118, %v55, %v107
  %v122 = vsel %vm118, %v64, %v116
  %v127 = vrot.slane %v120, 6
  %v128 = vrot.slane %v121, 4
  %v129 = vrot.slane %v122, 2
  %vm130 = vcmask 1041408
  %v131 = vsel %vm130, %v119, %v127
  %vm132 = vcmask 1045508
  %v133 = vsel %vm132, %v128, %v129
  %vm134 = vcmask 1043456
  %v135 = vsel %vm134, %v131, %v133
  %v137 = vadd.f32 %v117, %v135
  %138 = vst [vmem:[%s1] sm:$0xff] %v137
  // Predicated region
  $region10: #{generator_forward.12} parent=0 // pred_check
    _
  $region11: #{generator_forward.12} parent=0 // pred_check_branch
    %140 = sbr.rel (0) target = $region13
  $region12: #{generator_forward.12} parent=0 // pred_region
    _
  $region13: #{generator_forward.12} parent=0 // pred_fallthru
    _
  // Predicated region
  $region14: #{generator_forward.12} parent=0 // pred_check
    _
  $region15: #{generator_forward.12} parent=0 // pred_check_branch
    %142 = sbr.rel (0) target = $region17
  $region16: #{generator_forward.12} parent=0 // pred_region
    _
  $region17: #{generator_forward.12} parent=0 // pred_fallthru
    _

// kernel: generator_forward.13
$region0: #{generator_forward.13}
  #allocation0 [shape = 'u32[]', space=smem, size = 0x4, offset = 0x4, fixed_abs, tag = 'smem constant byte address 0x4 - core index']
  #allocation1 [shape = 'u32[72,128]{1,0:T(1,128)}', space=vmem, size = 0x9000, scoped, tag = 'internal scratch']
  %s0 = inlined_call_operand.vmem [shape: f32[32,512], index: 0, kind: input, shape index: {}]
  %s1 = inlined_call_operand.vmem [shape: f32[2,512], index: 1, kind: input, shape index: {}]
  %s2 = inlined_call_operand.vmem [shape: bf16[32,512], index: 2, kind: output, shape index: {}]
  %s3 = sld [smem:[#allocation0]]
  $region18: #{generator_forward.13} parent=0
    _
  %s5 = ssub.s32 1, %s3
  %s6 = scalar_select 0, %s5, %s3
  // Predicated region
  $region2: #{generator_forward.13} parent=0 // pred_check
    _
  $region3: #{generator_forward.13} parent=0 // pred_check_branch
    %8 = sbr.rel (0) target = $region5
  $region4: #{generator_forward.13} parent=0 // pred_region
    _
  $region5: #{generator_forward.13} parent=0 // pred_fallthru
    _
  // Predicated region
  $region6: #{generator_forward.13} parent=0 // pred_check
    _
  $region7: #{generator_forward.13} parent=0 // pred_check_branch
    %10 = sbr.rel (0) target = $region9
  $region8: #{generator_forward.13} parent=0 // pred_region
    _
  $region9: #{generator_forward.13} parent=0 // pred_fallthru
    _
  %v11 = vld [vmem:[%s1] sm:$0xff]
  %v12 = vmul.f32 %v11, 0.03125
  %v13 = vmul.f32 %v12, %v12
  %v15 = vrot.slane %v13, 7
  %v17 = vsub.f32 %v12, %v15
  %v18 = vmax.f32 %v17, 0.0
  %v19 = vld [vmem:[%s0] sm:$0xff]
  %v20 = vld [vmem:[%s0 + $0x8] sm:$0xff]
  %v21 = vld [vmem:[%s0 + $0x10] sm:$0xff]
  %v22 = vld [vmem:[%s0 + $0x18] sm:$0xff]
  %v23 = vld [vmem:[%s0 + $0x20] sm:$0xff]
  %v24 = vld [vmem:[%s0 + $0x28] sm:$0xff]
  %v25 = vld [vmem:[%s0 + $0x30] sm:$0xff]
  %v26 = vld [vmem:[%s0 + $0x38] sm:$0xff]
  %v27 = vld [vmem:[%s0 + $0x40] sm:$0xff]
  %v28 = vld [vmem:[%s0 + $0x48] sm:$0xff]
  %v29 = vld [vmem:[%s0 + $0x50] sm:$0xff]
  %v30 = vld [vmem:[%s0 + $0x58] sm:$0xff]
  %v31 = vld [vmem:[%s0 + $0x60] sm:$0xff]
  %v32 = vld [vmem:[%s0 + $0x68] sm:$0xff]
  %v33 = vld [vmem:[%s0 + $0x70] sm:$0xff]
  %v34 = vld [vmem:[%s0 + $0x78] sm:$0xff]
  %v36 = vperm.slane %v12, 0
  %v37 = vperm.slane %v12, 2
  %v38 = vperm.slane %v12, 4
  %v39 = vperm.slane %v12, 6
  %v44 = vperm.slane %v36, 0
  %v45 = vperm.slane %v37, 0
  %v46 = vperm.slane %v38, 0
  %v47 = vperm.slane %v39, 0
  %v48 = vsub.f32 %v19, %v44
  %v49 = vsub.f32 %v20, %v45
  %v50 = vsub.f32 %v21, %v46
  %v51 = vsub.f32 %v22, %v47
  %v52 = vsub.f32 %v23, %v44
  %v53 = vsub.f32 %v24, %v45
  %v54 = vsub.f32 %v25, %v46
  %v55 = vsub.f32 %v26, %v47
  %v56 = vsub.f32 %v27, %v44
  %v57 = vsub.f32 %v28, %v45
  %v58 = vsub.f32 %v29, %v46
  %v59 = vsub.f32 %v30, %v47
  %v60 = vsub.f32 %v31, %v44
  %v61 = vsub.f32 %v32, %v45
  %v62 = vsub.f32 %v33, %v46
  %v63 = vsub.f32 %v34, %v47
  %v64 = vadd.f32 %v18, 1e-05
  %v65 = vrsqrt.pop %v64
  %v66 = vmul.f32 %v65, %v64
  %v67 = vmul.f32 %v66, %v65
  %v68 = vmul.f32 0.5, %v67
  %v69 = vsub.f32 1.5, %v68
  %v70 = vmul.f32 %v65, %v69
  %vm71 = vweird.f32 %v64
  %vm72 = vweird.f32 %v65
  %vm73 = vmor %vm71, %vm72
  %v74 = vsel %vm73, %v65, %v70
  %v76 = vperm.slane %v74, 1
  %v77 = vperm.slane %v74, 3
  %v78 = vperm.slane %v74, 5
  %v79 = vperm.slane %v74, 7
  %v84 = vperm.slane %v76, 1
  %v85 = vperm.slane %v77, 1
  %v86 = vperm.slane %v78, 1
  %v87 = vperm.slane %v79, 1
  %v88 = vmul.f32 %v48, %v84
  %v89 = vmul.f32 %v49, %v85
  %v90 = vmul.f32 %v50, %v86
  %v91 = vmul.f32 %v51, %v87
  %v92 = vmul.f32 %v52, %v84
  %v93 = vmul.f32 %v53, %v85
  %v94 = vmul.f32 %v54, %v86
  %v95 = vmul.f32 %v55, %v87
  %v96 = vmul.f32 %v56, %v84
  %v97 = vmul.f32 %v57, %v85
  %v98 = vmul.f32 %v58, %v86
  %v99 = vmul.f32 %v59, %v87
  %v100 = vmul.f32 %v60, %v84
  %v101 = vmul.f32 %v61, %v85
  %v102 = vmul.f32 %v62, %v86
  %v103 = vmul.f32 %v63, %v87
  %vm104 = vcmp.gt.f32.partialorder %v88, 0.0
  %vm105 = vcmp.gt.f32.partialorder %v89, 0.0
  %vm106 = vcmp.gt.f32.partialorder %v90, 0.0
  %vm107 = vcmp.gt.f32.partialorder %v91, 0.0
  %vm108 = vcmp.gt.f32.partialorder %v92, 0.0
  %vm109 = vcmp.gt.f32.partialorder %v93, 0.0
  %vm110 = vcmp.gt.f32.partialorder %v94, 0.0
  %vm111 = vcmp.gt.f32.partialorder %v95, 0.0
  %vm112 = vcmp.gt.f32.partialorder %v96, 0.0
  %vm113 = vcmp.gt.f32.partialorder %v97, 0.0
  %vm114 = vcmp.gt.f32.partialorder %v98, 0.0
  %vm115 = vcmp.gt.f32.partialorder %v99, 0.0
  %vm116 = vcmp.gt.f32.partialorder %v100, 0.0
  %vm117 = vcmp.gt.f32.partialorder %v101, 0.0
  %vm118 = vcmp.gt.f32.partialorder %v102, 0.0
  %vm119 = vcmp.gt.f32.partialorder %v103, 0.0
  %v120 = vmin.f32 %v88, 0.0
  %v121 = vmin.f32 %v89, 0.0
  %v122 = vmin.f32 %v90, 0.0
  %v123 = vmin.f32 %v91, 0.0
  %v124 = vmin.f32 %v92, 0.0
  %v125 = vmin.f32 %v93, 0.0
  %v126 = vmin.f32 %v94, 0.0
  %v127 = vmin.f32 %v95, 0.0
  %v128 = vmin.f32 %v96, 0.0
  %v129 = vmin.f32 %v97, 0.0
  %v130 = vmin.f32 %v98, 0.0
  %v131 = vmin.f32 %v99, 0.0
  %v132 = vmin.f32 %v100, 0.0
  %v133 = vmin.f32 %v101, 0.0
  %v134 = vmin.f32 %v102, 0.0
  %v135 = vmin.f32 %v103, 0.0
  %v136 = vmul.f32 %v120, 1.442695
  %v137 = vpow.pop %v136
  %v138 = vmul.f32 %v121, 1.442695
  %v139 = vpow.pop %v138
  %v140 = vmul.f32 %v122, 1.442695
  %v141 = vpow.pop %v140
  %v142 = vmul.f32 %v123, 1.442695
  %v143 = vpow.pop %v142
  %v144 = vmul.f32 %v124, 1.442695
  %v145 = vpow.pop %v144
  %v146 = vmul.f32 %v125, 1.442695
  %v147 = vpow.pop %v146
  %v148 = vmul.f32 %v126, 1.442695
  %v149 = vpow.pop %v148
  %v150 = vmul.f32 %v127, 1.442695
  %v151 = vpow.pop %v150
  %v152 = vmul.f32 %v128, 1.442695
  %v153 = vpow.pop %v152
  %v154 = vmul.f32 %v129, 1.442695
  %v155 = vpow.pop %v154
  %v156 = vmul.f32 %v130, 1.442695
  %v157 = vpow.pop %v156
  %v158 = vmul.f32 %v131, 1.442695
  %v159 = vpow.pop %v158
  %v160 = vmul.f32 %v132, 1.442695
  %v161 = vpow.pop %v160
  %v162 = vmul.f32 %v133, 1.442695
  %v163 = vpow.pop %v162
  %v164 = vmul.f32 %v134, 1.442695
  %v165 = vpow.pop %v164
  %v166 = vmul.f32 %v135, 1.442695
  %v167 = vpow.pop %v166
  %v168 = vsub.f32 %v137, 1.0
  %v169 = vsub.f32 %v139, 1.0
  %v170 = vsub.f32 %v141, 1.0
  %v171 = vsub.f32 %v143, 1.0
  %v172 = vsub.f32 %v145, 1.0
  %v173 = vsub.f32 %v147, 1.0
  %v174 = vsub.f32 %v149, 1.0
  %v175 = vsub.f32 %v151, 1.0
  %v176 = vsub.f32 %v153, 1.0
  %v177 = vsub.f32 %v155, 1.0
  %v178 = vsub.f32 %v157, 1.0
  %v179 = vsub.f32 %v159, 1.0
  %v180 = vsub.f32 %v161, 1.0
  %v181 = vsub.f32 %v163, 1.0
  %v182 = vsub.f32 %v165, 1.0
  %v183 = vsub.f32 %v167, 1.0
  %v184 = vsel %vm104, %v88, %v168
  %v185 = vsel %vm105, %v89, %v169
  %v186 = vsel %vm106, %v90, %v170
  %v187 = vsel %vm107, %v91, %v171
  %v188 = vsel %vm108, %v92, %v172
  %v189 = vsel %vm109, %v93, %v173
  %v190 = vsel %vm110, %v94, %v174
  %v191 = vsel %vm111, %v95, %v175
  %v192 = vsel %vm112, %v96, %v176
  %v193 = vsel %vm113, %v97, %v177
  %v194 = vsel %vm114, %v98, %v178
  %v195 = vsel %vm115, %v99, %v179
  %v196 = vsel %vm116, %v100, %v180
  %v197 = vsel %vm117, %v101, %v181
  %v198 = vsel %vm118, %v102, %v182
  %v199 = vsel %vm119, %v103, %v183
  %v200 = vpack.c.bf16 %v185, %v184
  %v201 = vpack.c.bf16 %v187, %v186
  %v202 = vpack.c.bf16 %v189, %v188
  %v203 = vpack.c.bf16 %v191, %v190
  %v204 = vpack.c.bf16 %v193, %v192
  %v205 = vpack.c.bf16 %v195, %v194
  %v206 = vpack.c.bf16 %v197, %v196
  %v207 = vpack.c.bf16 %v199, %v198
  %208 = vst [vmem:[%s2] sm:$0xff] %v200
  %209 = vst [vmem:[%s2 + $0x8] sm:$0xff] %v201
  %210 = vst [vmem:[%s2 + $0x10] sm:$0xff] %v202
  %211 = vst [vmem:[%s2 + $0x18] sm:$0xff] %v203
  %212 = vst [vmem:[%s2 + $0x20] sm:$0xff] %v204
  %213 = vst [vmem:[%s2 + $0x28] sm:$0xff] %v205
  %214 = vst [vmem:[%s2 + $0x30] sm:$0xff] %v206
  %215 = vst [vmem:[%s2 + $0x38] sm:$0xff] %v207
  // Predicated region
  $region10: #{generator_forward.13} parent=0 // pred_check
    _
  $region11: #{generator_forward.13} parent=0 // pred_check_branch
    %217 = sbr.rel (0) target = $region13
  $region12: #{generator_forward.13} parent=0 // pred_region
    _
  $region13: #{generator_forward.13} parent=0 // pred_fallthru
    _
  // Predicated region
  $region14: #{generator_forward.13} parent=0 // pred_check
    _
  $region15: #{generator_forward.13} parent=0 // pred_check_branch
    %219 = sbr.rel (0) target = $region17
  $region16: #{generator_forward.13} parent=0 // pred_region
    _
  $region17: #{generator_forward.13} parent=0 // pred_fallthru
    _

// kernel: generator_forward.14
$region0: #{generator_forward.14}
  #allocation0 [shape = 'u32[]', space=smem, size = 0x4, offset = 0x4, fixed_abs, tag = 'smem constant byte address 0x4 - core index']
  #allocation1 [shape = 'u32[72,128]{1,0:T(1,128)}', space=vmem, size = 0x9000, scoped, tag = 'internal scratch']
  #allocation2 [shape = 'f32[32,512]{1,0:T(8,128)}', space=vmem, size = 0x10000, scoped, tag = 'scratch operand']
  %s0 = inlined_call_operand.vmem [shape: bf16[32,512], index: 0, kind: input, shape index: {}]
  %s1 = inlined_call_operand.vmem [shape: bf16[512,4096], index: 1, kind: input, shape index: {}]
  %s2 = inlined_call_operand.vmem [shape: f32[32,4096], index: 2, kind: output, shape index: {}]
  %s3 = sld [smem:[#allocation0]]
  $region91: #{generator_forward.14} parent=0
    _
  %s5 = ssub.s32 1, %s3
  %s6 = scalar_select 0, %s5, %s3
  $region1: #{generator_forward.14} parent=0
    #allocation3 [shape = 'u8[1048576]{0}', space=vmem, size = 0x100000, scoped, tag = 'input window, operand 1']
    #allocation4 [shape = 'u8[131072]{0}', space=vmem, size = 0x20000, scoped, tag = 'output window, operand 0']
    loop: start=0, step=1, limit=10
    $region2: #{generator_forward.14} parent=1 // loop_pre_header
      _
    $region3: #{generator_forward.14} parent=1 // loop_header
      %s8 = sphi 0, %s12
      %p9 = scmp.ge.s32.totalorder %s8, 10
      %s15 = sphi 0, %s34
      %s16 = sphi 0, %s30
      %s17 = sphi 0, %s26
      %s18 = sphi 0, %s15
      %s19 = sphi 0, %s16
      %s20 = sphi 0, %s17
      %s21 = sphi 0, %s18
      %s22 = sphi 0, %s19
      %s23 = sphi 0, %s20
      %s39 = sphi 0, %s41
      %s42 = sphi 0, %s39
      %s43 = sphi 0, %s42
      %s59 = sphi 0, %s43
      %s67 = sphi 0, %s69
      %s70 = sphi 0, %s67
      %s71 = sphi 0, %s70
      %s87 = sphi 0, %s71
      %s95 = sphi 0, %s97
      %s98 = sphi 0, %s95
      %s99 = sphi 0, %s98
      %s115 = sphi 0, %s99
    $region4: #{generator_forward.14} parent=1 // loop_header_branch
      %11 = sbr.rel (%p9) target = $region8
    $region5: #{generator_forward.14} parent=1 // loop_body
      %s13 = ssub.s32 %s8, 1
      %s14 = ssub.s32 %s8, 2
      %s24 = sadd.s32 1, %s17
      %p25 = scmp.ge.s32.totalorder %s24, 1
      %s26 = scalar_select %p25, 0, %s24
      %s27 = sadd.s32 1, %s16
      %s28 = scalar_select %p25, %s27, %s16
      %p29 = scmp.ge.s32.totalorder %s28, 8
      %s30 = scalar_select %p29, 0, %s28
      %s31 = sadd.s32 1, %s15
      %s32 = scalar_select %p29, %s31, %s15
      %p33 = scmp.ge.s32.totalorder %s32, 1
      %s34 = scalar_select %p33, 0, %s32
      %s35 = ssub.s32 %s15, %s34
      %s36 = ssub.s32 %s17, %s26
      %s37 = sor.u32 %s35, %s36
      %p38 = scmp.eq.s32.totalorder %s37, 0
      %s40 = sadd.s32 %s39, 1
      %s41 = scalar_select %p38, %s39, %s40
      %p44 = pneg %p38
      %p45 = scmp.eq.s32.totalorder %s8, 7
      %p46 = por %p44, %p45
      %p47 = scmp.ne.s32.totalorder %s39, %s42
      %p48 = scmp.eq.s32.totalorder %s8, 0
      %p49 = por %p47, %p48
      %p50 = scmp.ne.s32.totalorder %s39, %s42
      %p51 = scmp.eq.s32.totalorder %s13, 7
      %p52 = por %p50, %p51
      %p53 = scmp.ne.s32.totalorder %s42, %s43
      %p54 = scmp.eq.s32.totalorder %s13, 0
      %p55 = por %p53, %p54
      %p56 = scmp.ne.s32.totalorder %s42, %s43
      %p57 = scmp.eq.s32.totalorder %s14, 7
      %p58 = por %p56, %p57
      %p60 = scmp.ne.s32.totalorder %s43, %s59
      %p61 = scmp.eq.s32.totalorder %s14, 0
      %p62 = por %p60, %p61
      %s63 = ssub.s32 %s17, %s26
      %s64 = ssub.s32 %s16, %s30
      %s65 = sor.u32 %s63, %s64
      %p66 = scmp.eq.s32.totalorder %s65, 0
      %s68 = sadd.s32 %s67, 1
      %s69 = scalar_select %p66, %s67, %s68
      %p72 = pneg %p66
      %p73 = scmp.eq.s32.totalorder %s8, 7
      %p74 = por %p72, %p73
      %p75 = scmp.ne.s32.totalorder %s67, %s70
      %p76 = scmp.eq.s32.totalorder %s8, 0
      %p77 = por %p75, %p76
      %p78 = scmp.ne.s32.totalorder %s67, %s70
      %p79 = scmp.eq.s32.totalorder %s13, 7
      %p80 = por %p78, %p79
      %p81 = scmp.ne.s32.totalorder %s70, %s71
      %p82 = scmp.eq.s32.totalorder %s13, 0
      %p83 = por %p81, %p82
      %p84 = scmp.ne.s32.totalorder %s70, %s71
      %p85 = scmp.eq.s32.totalorder %s14, 7
      %p86 = por %p84, %p85
      %p88 = scmp.ne.s32.totalorder %s71, %s87
      %p89 = scmp.eq.s32.totalorder %s14, 0
      %p90 = por %p88, %p89
      %s91 = ssub.s32 %s15, %s34
      %s92 = ssub.s32 %s16, %s30
      %s93 = sor.u32 %s91, %s92
      %p94 = scmp.eq.s32.totalorder %s93, 0
      %s96 = sadd.s32 %s95, 1
      %s97 = scalar_select %p94, %s95, %s96
      %p100 = pneg %p94
      %p101 = scmp.eq.s32.totalorder %s8, 7
      %p102 = por %p100, %p101
      %p103 = scmp.ne.s32.totalorder %s95, %s98
      %p104 = scmp.eq.s32.totalorder %s8, 0
      %p105 = por %p103, %p104
      %p106 = scmp.ne.s32.totalorder %s95, %s98
      %p107 = scmp.eq.s32.totalorder %s13, 7
      %p108 = por %p106, %p107
      %p109 = scmp.ne.s32.totalorder %s98, %s99
      %p110 = scmp.eq.s32.totalorder %s13, 0
      %p111 = por %p109, %p110
      %p112 = scmp.ne.s32.totalorder %s98, %s99
      %p113 = scmp.eq.s32.totalorder %s14, 7
      %p114 = por %p112, %p113
      %p116 = scmp.ne.s32.totalorder %s99, %s115
      %p117 = scmp.eq.s32.totalorder %s14, 0
      %p118 = por %p116, %p117
      %p119 = scmp.le.s32.totalorder 1, %s8
      %p120 = scmp.lt.s32.totalorder %s8, 9
      %p121 = pnand %p119, %p120
      %p122 = pneg %p121
      // Predicated region
      $region9: #{generator_forward.14} parent=5 // pred_check
        _
      $region10: #{generator_forward.14} parent=5 // pred_check_branch
        %124 = sbr.rel (%p121) target = $region12
      $region11: #{generator_forward.14} parent=5 // pred_region
        %s125 = ssub.s32 %s8, 1
        // Predicated region
        $region13: #{generator_forward.14} parent=11 // pred_check
          %p126 = pneg %p55
        $region14: #{generator_forward.14} parent=11 // pred_check_branch
          %128 = sbr.rel (%p126) target = $region16
        $region15: #{generator_forward.14} parent=11 // pred_region
          %s129 = smul.u32 4, %s18
          %s130 = smul.u32 4, %s20
          %p131 = scmp.lt.s32.totalorder %s129, 3
          %s132 = scalar_select %p131, %s129, 3
          %p133 = scmp.lt.s32.totalorder %s130, 3
          %s134 = scalar_select %p133, %s130, 3
          %s135 = smul.addr %s132, 4
          %s136 = sadd.s32 %s134, %s135
          %s137 = smul.addr %s136, 4
          %s138 = scalar_lea.vmem %s0, %s137
          %s139 = smul.u32 4, %s18
          %s140 = smul.u32 4, %s20
        $region16: #{generator_forward.14} parent=11 // pred_fallthru
          _
      $region12: #{generator_forward.14} parent=5 // pred_fallthru
        _
      %p141 = scmp.lt.s32.totalorder %s8, 8
      // Predicated region
      $region17: #{generator_forward.14} parent=5 // pred_check
        %p142 = pneg %p141
      $region18: #{generator_forward.14} parent=5 // pred_check_branch
        %144 = sbr.rel (%p142) target = $region20
      $region19: #{generator_forward.14} parent=5 // pred_region
        // Predicated region
        $region21: #{generator_forward.14} parent=19 // pred_check
          %p145 = pneg %p77
        $region22: #{generator_forward.14} parent=19 // pred_check_branch
          %147 = sbr.rel (%p145) target = $region24
        $region23: #{generator_forward.14} parent=19 // pred_region
          %s148 = sand.u32 %s67, 1
          %s149 = sand.u32 %s67, 1
          %s150 = smul.addr %s149, 1024
          %s151 = scalar_lea.vmem [#allocation3], %s150
          %s152 = smul.u32 64, %s17
          %s153 = smul.u32 4, %s16
          %s154 = smul.addr %s152, 32
          %s155 = sadd.s32 %s153, %s154
          %s156 = smul.addr %s155, 4
          %s157 = scalar_lea.vmem %s1, %s156
          // Predicated region
          $region25: #{generator_forward.14} parent=23 // pred_check
            _
          $region26: #{generator_forward.14} parent=23 // pred_check_branch
            %159 = sbr.rel (0) target = $region28
          $region27: #{generator_forward.14} parent=23 // pred_region
            // Predicated region
            $region29: #{generator_forward.14} parent=27 // pred_check
              _
            $region30: #{generator_forward.14} parent=27 // pred_check_branch
              %161 = sbr.rel (0) target = $region32
            $region31: #{generator_forward.14} parent=27 // pred_region
              loop: start=0, step=1, limit=1
              $region33: #{generator_forward.14} parent=31 // loop_pre_header
                _
              $region34: #{generator_forward.14} parent=31 // loop_header
                %s163 = sphi 0, %s167
                %p164 = scmp.ge.s32.totalorder %s163, 1
                %s168 = sphi %s157, %s157
                %s169 = sphi %s151, %s151
              $region35: #{generator_forward.14} parent=31 // loop_header_branch
                %166 = sbr.rel (%p164) target = $region39
              $region36: #{generator_forward.14} parent=31 // loop_body
                %v170 = vld [vmem:[%s168] sm:$0xff]
                %171 = vst [vmem:[%s169] sm:$0xff] %v170
                %v172 = vld [vmem:[%s168 + $0x8] sm:$0xff]
                %173 = vst [vmem:[%s169 + $0x8] sm:$0xff] %v172
                %v174 = vld [vmem:[%s168 + $0x80] sm:$0xff]
                %175 = vst [vmem:[%s169 + $0x10] sm:$0xff] %v174
                %v176 = vld [vmem:[%s168 + $0x88] sm:$0xff]
                %177 = vst [vmem:[%s169 + $0x18] sm:$0xff] %v176
                %v178 = vld [vmem:[%s168 + $0x100] sm:$0xff]
                %179 = vst [vmem:[%s169 + $0x20] sm:$0xff] %v178
                %v180 = vld [vmem:[%s168 + $0x108] sm:$0xff]
                %181 = vst [vmem:[%s169 + $0x28] sm:$0xff] %v180
                %v182 = vld [vmem:[%s168 + $0x180] sm:$0xff]
                %183 = vst [vmem:[%s169 + $0x30] sm:$0xff] %v182
                %v184 = vld [vmem:[%s168 + $0x188] sm:$0xff]
                %185 = vst [vmem:[%s169 + $0x38] sm:$0xff] %v184
                %v186 = vld [vmem:[%s168 + $0x200] sm:$0xff]
                %187 = vst [vmem:[%s169 + $0x40] sm:$0xff] %v186
                %v188 = vld [vmem:[%s168 + $0x208] sm:$0xff]
                %189 = vst [vmem:[%s169 + $0x48] sm:$0xff] %v188
                %v190 = vld [vmem:[%s168 + $0x280] sm:$0xff]
                %191 = vst [vmem:[%s169 + $0x50] sm:$0xff] %v190
                %v192 = vld [vmem:[%s168 + $0x288] sm:$0xff]
                %193 = vst [vmem:[%s169 + $0x58] sm:$0xff] %v192
                %v194 = vld [vmem:[%s168 + $0x300] sm:$0xff]
                %195 = vst [vmem:[%s169 + $0x60] sm:$0xff] %v194
                %v196 = vld [vmem:[%s168 + $0x308] sm:$0xff]
                %197 = vst [vmem:[%s169 + $0x68] sm:$0xff] %v196
                %v198 = vld [vmem:[%s168 + $0x380] sm:$0xff]
                %199 = vst [vmem:[%s169 + $0x70] sm:$0xff] %v198
                %v200 = vld [vmem:[%s168 + $0x388] sm:$0xff]
                %201 = vst [vmem:[%s169 + $0x78] sm:$0xff] %v200
                %v202 = vld [vmem:[%s168 + $0x400] sm:$0xff]
                %203 = vst [vmem:[%s169 + $0x80] sm:$0xff] %v202
                %v204 = vld [vmem:[%s168 + $0x408] sm:$0xff]
                %205 = vst [vmem:[%s169 + $0x88] sm:$0xff] %v204
                %v206 = vld [vmem:[%s168 + $0x480] sm:$0xff]
                %207 = vst [vmem:[%s169 + $0x90] sm:$0xff] %v206
                %v208 = vld [vmem:[%s168 + $0x488] sm:$0xff]
                %209 = vst [vmem:[%s169 + $0x98] sm:$0xff] %v208
                %v210 = vld [vmem:[%s168 + $0x500] sm:$0xff]
                %211 = vst [vmem:[%s169 + $0xa0] sm:$0xff] %v210
                %v212 = vld [vmem:[%s168 + $0x508] sm:$0xff]
                %213 = vst [vmem:[%s169 + $0xa8] sm:$0xff] %v212
                %v214 = vld [vmem:[%s168 + $0x580] sm:$0xff]
                %215 = vst [vmem:[%s169 + $0xb0] sm:$0xff] %v214
                %v216 = vld [vmem:[%s168 + $0x588] sm:$0xff]
                %217 = vst [vmem:[%s169 + $0xb8] sm:$0xff] %v216
                %v218 = vld [vmem:[%s168 + $0x600] sm:$0xff]
                %219 = vst [vmem:[%s169 + $0xc0] sm:$0xff] %v218
                %v220 = vld [vmem:[%s168 + $0x608] sm:$0xff]
                %221 = vst [vmem:[%s169 + $0xc8] sm:$0xff] %v220
                %v222 = vld [vmem:[%s168 + $0x680] sm:$0xff]
                %223 = vst [vmem:[%s169 + $0xd0] sm:$0xff] %v222
                %v224 = vld [vmem:[%s168 + $0x688] sm:$0xff]
                %225 = vst [vmem:[%s169 + $0xd8] sm:$0xff] %v224
                %v226 = vld [vmem:[%s168 + $0x700] sm:$0xff]
                %227 = vst [vmem:[%s169 + $0xe0] sm:$0xff] %v226
                %v228 = vld [vmem:[%s168 + $0x708] sm:$0xff]
                %229 = vst [vmem:[%s169 + $0xe8] sm:$0xff] %v228
                %v230 = vld [vmem:[%s168 + $0x780] sm:$0xff]
                %231 = vst [vmem:[%s169 + $0xf0] sm:$0xff] %v230
                %v232 = vld [vmem:[%s168 + $0x788] sm:$0xff]
                %233 = vst [vmem:[%s169 + $0xf8] sm:$0xff] %v232
                %v234 = vld [vmem:[%s168 + $0x800] sm:$0xff]
                %235 = vst [vmem:[%s169 + $0x100] sm:$0xff] %v234
                %v236 = vld [vmem:[%s168 + $0x808] sm:$0xff]
                %237 = vst [vmem:[%s169 + $0x108] sm:$0xff] %v236
                %v238 = vld [vmem:[%s168 + $0x880] sm:$0xff]
                %239 = vst [vmem:[%s169 + $0x110] sm:$0xff] %v238
                %v240 = vld [vmem:[%s168 + $0x888] sm:$0xff]
                %241 = vst [vmem:[%s169 + $0x118] sm:$0xff] %v240
                %v242 = vld [vmem:[%s168 + $0x900] sm:$0xff]
                %243 = vst [vmem:[%s169 + $0x120] sm:$0xff] %v242
                %v244 = vld [vmem:[%s168 + $0x908] sm:$0xff]
                %245 = vst [vmem:[%s169 + $0x128] sm:$0xff] %v244
                %v246 = vld [vmem:[%s168 + $0x980] sm:$0xff]
                %247 = vst [vmem:[%s169 + $0x130] sm:$0xff] %v246
                %v248 = vld [vmem:[%s168 + $0x988] sm:$0xff]
                %249 = vst [vmem:[%s169 + $0x138] sm:$0xff] %v248
                %v250 = vld [vmem:[%s168 + $0xa00] sm:$0xff]
                %251 = vst [vmem:[%s169 + $0x140] sm:$0xff] %v250
                %v252 = vld [vmem:[%s168 + $0xa08] sm:$0xff]
                %253 = vst [vmem:[%s169 + $0x148] sm:$0xff] %v252
                %v254 = vld [vmem:[%s168 + $0xa80] sm:$0xff]
                %255 = vst [vmem:[%s169 + $0x150] sm:$0xff] %v254
                %v256 = vld [vmem:[%s168 + $0xa88] sm:$0xff]
                %257 = vst [vmem:[%s169 + $0x158] sm:$0xff] %v256
                %v258 = vld [vmem:[%s168 + $0xb00] sm:$0xff]
                %259 = vst [vmem:[%s169 + $0x160] sm:$0xff] %v258
                %v260 = vld [vmem:[%s168 + $0xb08] sm:$0xff]
                %261 = vst [vmem:[%s169 + $0x168] sm:$0xff] %v260
                %v262 = vld [vmem:[%s168 + $0xb80] sm:$0xff]
                %263 = vst [vmem:[%s169 + $0x170] sm:$0xff] %v262
                %v264 = vld [vmem:[%s168 + $0xb88] sm:$0xff]
                %265 = vst [vmem:[%s169 + $0x178] sm:$0xff] %v264
                %v266 = vld [vmem:[%s168 + $0xc00] sm:$0xff]
                %267 = vst [vmem:[%s169 + $0x180] sm:$0xff] %v266
                %v268 = vld [vmem:[%s168 + $0xc08] sm:$0xff]
                %269 = vst [vmem:[%s169 + $0x188] sm:$0xff] %v268
                %v270 = vld [vmem:[%s168 + $0xc80] sm:$0xff]
                %271 = vst [vmem:[%s169 + $0x190] sm:$0xff] %v270
                %v272 = vld [vmem:[%s168 + $0xc88] sm:$0xff]
                %273 = vst [vmem:[%s169 + $0x198] sm:$0xff] %v272
                %v274 = vld [vmem:[%s168 + $0xd00] sm:$0xff]
                %275 = vst [vmem:[%s169 + $0x1a0] sm:$0xff] %v274
                %v276 = vld [vmem:[%s168 + $0xd08] sm:$0xff]
                %277 = vst [vmem:[%s169 + $0x1a8] sm:$0xff] %v276
                %v278 = vld [vmem:[%s168 + $0xd80] sm:$0xff]
                %279 = vst [vmem:[%s169 + $0x1b0] sm:$0xff] %v278
                %v280 = vld [vmem:[%s168 + $0xd88] sm:$0xff]
                %281 = vst [vmem:[%s169 + $0x1b8] sm:$0xff] %v280
                %v282 = vld [vmem:[%s168 + $0xe00] sm:$0xff]
                %283 = vst [vmem:[%s169 + $0x1c0] sm:$0xff] %v282
                %v284 = vld [vmem:[%s168 + $0xe08] sm:$0xff]
                %285 = vst [vmem:[%s169 + $0x1c8] sm:$0xff] %v284
                %v286 = vld [vmem:[%s168 + $0xe80] sm:$0xff]
                %287 = vst [vmem:[%s169 + $0x1d0] sm:$0xff] %v286
                %v288 = vld [vmem:[%s168 + $0xe88] sm:$0xff]
                %289 = vst [vmem:[%s169 + $0x1d8] sm:$0xff] %v288
                %v290 = vld [vmem:[%s168 + $0xf00] sm:$0xff]
                %291 = vst [vmem:[%s169 + $0x1e0] sm:$0xff] %v290
                %v292 = vld [vmem:[%s168 + $0xf08] sm:$0xff]
                %293 = vst [vmem:[%s169 + $0x1e8] sm:$0xff] %v292
                %v294 = vld [vmem:[%s168 + $0xf80] sm:$0xff]
                %295 = vst [vmem:[%s169 + $0x1f0] sm:$0xff] %v294
                %v296 = vld [vmem:[%s168 + $0xf88] sm:$0xff]
                %297 = vst [vmem:[%s169 + $0x1f8] sm:$0xff] %v296
                %v298 = vld [vmem:[%s168 + $0x1000] sm:$0xff]
                %299 = vst [vmem:[%s169 + $0x200] sm:$0xff] %v298
                %v300 = vld [vmem:[%s168 + $0x1008] sm:$0xff]
                %301 = vst [vmem:[%s169 + $0x208] sm:$0xff] %v300
                %v302 = vld [vmem:[%s168 + $0x1080] sm:$0xff]
                %303 = vst [vmem:[%s169 + $0x210] sm:$0xff] %v302
                %v304 = vld [vmem:[%s168 + $0x1088] sm:$0xff]
                %305 = vst [vmem:[%s169 + $0x218] sm:$0xff] %v304
                %v306 = vld [vmem:[%s168 + $0x1100] sm:$0xff]
                %307 = vst [vmem:[%s169 + $0x220] sm:$0xff] %v306
                %v308 = vld [vmem:[%s168 + $0x1108] sm:$0xff]
                %309 = vst [vmem:[%s169 + $0x228] sm:$0xff] %v308
                %v310 = vld [vmem:[%s168 + $0x1180] sm:$0xff]
                %311 = vst [vmem:[%s169 + $0x230] sm:$0xff] %v310
                %v312 = vld [vmem:[%s168 + $0x1188] sm:$0xff]
                %313 = vst [vmem:[%s169 + $0x238] sm:$0xff] %v312
                %v314 = vld [vmem:[%s168 + $0x1200] sm:$0xff]
                %315 = vst [vmem:[%s169 + $0x240] sm:$0xff] %v314
                %v316 = vld [vmem:[%s168 + $0x1208] sm:$0xff]
                %317 = vst [vmem:[%s169 + $0x248] sm:$0xff] %v316
                %v318 = vld [vmem:[%s168 + $0x1280] sm:$0xff]
                %319 = vst [vmem:[%s169 + $0x250] sm:$0xff] %v318
                %v320 = vld [vmem:[%s168 + $0x1288] sm:$0xff]
                %321 = vst [vmem:[%s169 + $0x258] sm:$0xff] %v320
                %v322 = vld [vmem:[%s168 + $0x1300] sm:$0xff]
                %323 = vst [vmem:[%s169 + $0x260] sm:$0xff] %v322
                %v324 = vld [vmem:[%s168 + $0x1308] sm:$0xff]
                %325 = vst [vmem:[%s169 + $0x268] sm:$0xff] %v324
                %v326 = vld [vmem:[%s168 + $0x1380] sm:$0xff]
                %327 = vst [vmem:[%s169 + $0x270] sm:$0xff] %v326
                %v328 = vld [vmem:[%s168 + $0x1388] sm:$0xff]
                %329 = vst [vmem:[%s169 + $0x278] sm:$0xff] %v328
                %v330 = vld [vmem:[%s168 + $0x1400] sm:$0xff]
                %331 = vst [vmem:[%s169 + $0x280] sm:$0xff] %v330
                %v332 = vld [vmem:[%s168 + $0x1408] sm:$0xff]
                %333 = vst [vmem:[%s169 + $0x288] sm:$0xff] %v332
                %v334 = vld [vmem:[%s168 + $0x1480] sm:$0xff]
                %335 = vst [vmem:[%s169 + $0x290] sm:$0xff] %v334
                %v336 = vld [vmem:[%s168 + $0x1488] sm:$0xff]
                %337 = vst [vmem:[%s169 + $0x298] sm:$0xff] %v336
                %v338 = vld [vmem:[%s168 + $0x1500] sm:$0xff]
                %339 = vst [vmem:[%s169 + $0x2a0] sm:$0xff] %v338
                %v340 = vld [vmem:[%s168 + $0x1508] sm:$0xff]
                %341 = vst [vmem:[%s169 + $0x2a8] sm:$0xff] %v340
                %v342 = vld [vmem:[%s168 + $0x1580] sm:$0xff]
                %343 = vst [vmem:[%s169 + $0x2b0] sm:$0xff] %v342
                %v344 = vld [vmem:[%s168 + $0x1588] sm:$0xff]
                %345 = vst [vmem:[%s169 + $0x2b8] sm:$0xff] %v344
                %v346 = vld [vmem:[%s168 + $0x1600] sm:$0xff]
                %347 = vst [vmem:[%s169 + $0x2c0] sm:$0xff] %v346
                %v348 = vld [vmem:[%s168 + $0x1608] sm:$0xff]
                %349 = vst [vmem:[%s169 + $0x2c8] sm:$0xff] %v348
                %v350 = vld [vmem:[%s168 + $0x1680] sm:$0xff]
                %351 = vst [vmem:[%s169 + $0x2d0] sm:$0xff] %v350
                %v352 = vld [vmem:[%s168 + $0x1688] sm:$0xff]
                %353 = vst [vmem:[%s169 + $0x2d8] sm:$0xff] %v352
                %v354 = vld [vmem:[%s168 + $0x1700] sm:$0xff]
                %355 = vst [vmem:[%s169 + $0x2e0] sm:$0xff] %v354
                %v356 = vld [vmem:[%s168 + $0x1708] sm:$0xff]
                %357 = vst [vmem:[%s169 + $0x2e8] sm:$0xff] %v356
                %v358 = vld [vmem:[%s168 + $0x1780] sm:$0xff]
                %359 = vst [vmem:[%s169 + $0x2f0] sm:$0xff] %v358
                %v360 = vld [vmem:[%s168 + $0x1788] sm:$0xff]
                %361 = vst [vmem:[%s169 + $0x2f8] sm:$0xff] %v360
                %v362 = vld [vmem:[%s168 + $0x1800] sm:$0xff]
                %363 = vst [vmem:[%s169 + $0x300] sm:$0xff] %v362
                %v364 = vld [vmem:[%s168 + $0x1808] sm:$0xff]
                %365 = vst [vmem:[%s169 + $0x308] sm:$0xff] %v364
                %v366 = vld [vmem:[%s168 + $0x1880] sm:$0xff]
                %367 = vst [vmem:[%s169 + $0x310] sm:$0xff] %v366
                %v368 = vld [vmem:[%s168 + $0x1888] sm:$0xff]
                %369 = vst [vmem:[%s169 + $0x318] sm:$0xff] %v368
                %v370 = vld [vmem:[%s168 + $0x1900] sm:$0xff]
                %371 = vst [vmem:[%s169 + $0x320] sm:$0xff] %v370
                %v372 = vld [vmem:[%s168 + $0x1908] sm:$0xff]
                %373 = vst [vmem:[%s169 + $0x328] sm:$0xff] %v372
                %v374 = vld [vmem:[%s168 + $0x1980] sm:$0xff]
                %375 = vst [vmem:[%s169 + $0x330] sm:$0xff] %v374
                %v376 = vld [vmem:[%s168 + $0x1988] sm:$0xff]
                %377 = vst [vmem:[%s169 + $0x338] sm:$0xff] %v376
                %v378 = vld [vmem:[%s168 + $0x1a00] sm:$0xff]
                %379 = vst [vmem:[%s169 + $0x340] sm:$0xff] %v378
                %v380 = vld [vmem:[%s168 + $0x1a08] sm:$0xff]
                %381 = vst [vmem:[%s169 + $0x348] sm:$0xff] %v380
                %v382 = vld [vmem:[%s168 + $0x1a80] sm:$0xff]
                %383 = vst [vmem:[%s169 + $0x350] sm:$0xff] %v382
                %v384 = vld [vmem:[%s168 + $0x1a88] sm:$0xff]
                %385 = vst [vmem:[%s169 + $0x358] sm:$0xff] %v384
                %v386 = vld [vmem:[%s168 + $0x1b00] sm:$0xff]
                %387 = vst [vmem:[%s169 + $0x360] sm:$0xff] %v386
                %v388 = vld [vmem:[%s168 + $0x1b08] sm:$0xff]
                %389 = vst [vmem:[%s169 + $0x368] sm:$0xff] %v388
                %v390 = vld [vmem:[%s168 + $0x1b80] sm:$0xff]
                %391 = vst [vmem:[%s169 + $0x370] sm:$0xff] %v390
                %v392 = vld [vmem:[%s168 + $0x1b88] sm:$0xff]
                %393 = vst [vmem:[%s169 + $0x378] sm:$0xff] %v392
                %v394 = vld [vmem:[%s168 + $0x1c00] sm:$0xff]
                %395 = vst [vmem:[%s169 + $0x380] sm:$0xff] %v394
                %v396 = vld [vmem:[%s168 + $0x1c08] sm:$0xff]
                %397 = vst [vmem:[%s169 + $0x388] sm:$0xff] %v396
                %v398 = vld [vmem:[%s168 + $0x1c80] sm:$0xff]
                %399 = vst [vmem:[%s169 + $0x390] sm:$0xff] %v398
                %v400 = vld [vmem:[%s168 + $0x1c88] sm:$0xff]
                %401 = vst [vmem:[%s169 + $0x398] sm:$0xff] %v400
                %v402 = vld [vmem:[%s168 + $0x1d00] sm:$0xff]
                %403 = vst [vmem:[%s169 + $0x3a0] sm:$0xff] %v402
                %v404 = vld [vmem:[%s168 + $0x1d08] sm:$0xff]
                %405 = vst [vmem:[%s169 + $0x3a8] sm:$0xff] %v404
                %v406 = vld [vmem:[%s168 + $0x1d80] sm:$0xff]
                %407 = vst [vmem:[%s169 + $0x3b0] sm:$0xff] %v406
                %v408 = vld [vmem:[%s168 + $0x1d88] sm:$0xff]
                %409 = vst [vmem:[%s169 + $0x3b8] sm:$0xff] %v408
                %v410 = vld [vmem:[%s168 + $0x1e00] sm:$0xff]
                %411 = vst [vmem:[%s169 + $0x3c0] sm:$0xff] %v410
                %v412 = vld [vmem:[%s168 + $0x1e08] sm:$0xff]
                %413 = vst [vmem:[%s169 + $0x3c8] sm:$0xff] %v412
                %v414 = vld [vmem:[%s168 + $0x1e80] sm:$0xff]
                %415 = vst [vmem:[%s169 + $0x3d0] sm:$0xff] %v414
                %v416 = vld [vmem:[%s168 + $0x1e88] sm:$0xff]
                %417 = vst [vmem:[%s169 + $0x3d8] sm:$0xff] %v416
                %v418 = vld [vmem:[%s168 + $0x1f00] sm:$0xff]
                %419 = vst [vmem:[%s169 + $0x3e0] sm:$0xff] %v418
                %v420 = vld [vmem:[%s168 + $0x1f08] sm:$0xff]
                %421 = vst [vmem:[%s169 + $0x3e8] sm:$0xff] %v420
                %v422 = vld [vmem:[%s168 + $0x1f80] sm:$0xff]
                %423 = vst [vmem:[%s169 + $0x3f0] sm:$0xff] %v422
                %v424 = vld [vmem:[%s168 + $0x1f88] sm:$0xff]
                %425 = vst [vmem:[%s169 + $0x3f8] sm:$0xff] %v424
              $region37: #{generator_forward.14} parent=31 // loop_footer
                %s167 = sadd.s32 1, %s163
              $region38: #{generator_forward.14} parent=31 // loop_footer_branch
                %162 = sbr.rel target = $region34
              $region39: #{generator_forward.14} parent=31 // loop_exit
                _
            $region32: #{generator_forward.14} parent=27 // pred_fallthru
              _
            // Predicated region
            $region40: #{generator_forward.14} parent=27 // pred_check
              _
            $region41: #{generator_forward.14} parent=27 // pred_check_branch
              %427 = sbr.rel target = $region43
            $region42: #{generator_forward.14} parent=27 // pred_region
              _
            $region43: #{generator_forward.14} parent=27 // pred_fallthru
              _
          $region28: #{generator_forward.14} parent=23 // pred_fallthru
            _
          %428 = vnop
        $region24: #{generator_forward.14} parent=19 // pred_fallthru
          _
      $region20: #{generator_forward.14} parent=5 // pred_fallthru
        _
      %p429 = scmp.le.s32.totalorder 1, %s8
      %p430 = scmp.lt.s32.totalorder %s8, 9
      %p431 = pnand %p429, %p430
      %p432 = pneg %p431
      // Predicated region
      $region44: #{generator_forward.14} parent=5 // pred_check
        _
      $region45: #{generator_forward.14} parent=5 // pred_check_branch
        %434 = sbr.rel (%p431) target = $region47
      $region46: #{generator_forward.14} parent=5 // pred_region
        %s435 = ssub.s32 %s8, 1
        %s436 = sand.u32 %s70, 1
        %s437 = sand.u32 %s70, 1
        %s438 = smul.addr %s437, 1024
        %s439 = scalar_lea.vmem [#allocation3], %s438
        // Predicated region
        $region48: #{generator_forward.14} parent=46 // pred_check
          %p440 = pneg %p83
        $region49: #{generator_forward.14} parent=46 // pred_check_branch
          %442 = sbr.rel (%p440) target = $region51
        $region50: #{generator_forward.14} parent=46 // pred_region
          _
        $region51: #{generator_forward.14} parent=46 // pred_fallthru
          _
        %s443 = smul.u32 4, %s18
        %s444 = smul.u32 4, %s20
        %p445 = scmp.lt.s32.totalorder %s443, 3
        %s446 = scalar_select %p445, %s443, 3
        %p447 = scmp.lt.s32.totalorder %s444, 3
        %s448 = scalar_select %p447, %s444, 3
        %s449 = smul.addr %s446, 4
        %s450 = sadd.s32 %s448, %s449
        %s451 = smul.addr %s450, 4
        %s452 = scalar_lea.vmem %s0, %s451
        %p453 = pneg %p55
        %p454 = pneg %p52
        %s455 = sand.u32 %s70, 1
        %s456 = sand.u32 %s70, 1
        %s457 = smul.addr %s456, 1024
        %s458 = scalar_lea.vmem [#allocation3], %s457
        %p459 = pneg %p83
        %p460 = pneg %p80
        %p461 = pneg %p111
        %p462 = pneg %p108
        %s463 = sand.u32 %s98, 1
        %s464 = sand.u32 %s98, 1
        %s465 = smul.addr %s464, 128
        %s466 = scalar_lea.vmem [#allocation4], %s465
        %s467 = smul.u32 4, %s18
        %s468 = smul.u32 4, %s20
        %p469 = scmp.lt.s32.totalorder %s467, 3
        %s470 = scalar_select %p469, %s467, 3
        %p471 = scmp.lt.s32.totalorder %s468, 3
        %s472 = scalar_select %p471, %s468, 3
        %s473 = smul.addr %s470, 4
        %s474 = sadd.s32 %s472, %s473
        %s475 = smul.addr %s474, 4
        %s476 = scalar_lea.vmem %s0, %s475
        %s477 = smul.u32 4, %s18
        %s478 = smul.u32 4, %s20
        %s479 = smul.u32 64, %s20
        %s480 = smul.u32 4, %s19
        %s481 = smul.u32 4, %s18
        %s482 = smul.u32 4, %s19
        %p483 = scmp.eq.s32.totalorder %s20, 0
        // Predicated region
        $region52: #{generator_forward.14} parent=46 // pred_check
          %p484 = pneg %p483
        $region53: #{generator_forward.14} parent=46 // pred_check_branch
          %486 = sbr.rel (%p484) target = $region55
        $region54: #{generator_forward.14} parent=46 // pred_region
          %487 = vst [vmem:[#allocation2] sm:$0xff] 0.0
          %488 = vst [vmem:[#allocation2 + $0x8] sm:$0xff] 0.0
          %489 = vst [vmem:[#allocation2 + $0x10] sm:$0xff] 0.0
          %490 = vst [vmem:[#allocation2 + $0x18] sm:$0xff] 0.0
          %491 = vst [vmem:[#allocation2 + $0x20] sm:$0xff] 0.0
          %492 = vst [vmem:[#allocation2 + $0x28] sm:$0xff] 0.0
          %493 = vst [vmem:[#allocation2 + $0x30] sm:$0xff] 0.0
          %494 = vst [vmem:[#allocation2 + $0x38] sm:$0xff] 0.0
          %495 = vst [vmem:[#allocation2 + $0x40] sm:$0xff] 0.0
          %496 = vst [vmem:[#allocation2 + $0x48] sm:$0xff] 0.0
          %497 = vst [vmem:[#allocation2 + $0x50] sm:$0xff] 0.0
          %498 = vst [vmem:[#allocation2 + $0x58] sm:$0xff] 0.0
          %499 = vst [vmem:[#allocation2 + $0x60] sm:$0xff] 0.0
          %500 = vst [vmem:[#allocation2 + $0x68] sm:$0xff] 0.0
          %501 = vst [vmem:[#allocation2 + $0x70] sm:$0xff] 0.0
          %502 = vst [vmem:[#allocation2 + $0x78] sm:$0xff] 0.0
        $region55: #{generator_forward.14} parent=46 // pred_fallthru
          _
        %v503 = vld [vmem:[#allocation2] sm:$0xff]
        %v504 = vld [vmem:[#allocation2 + $0x8] sm:$0xff]
        %v505 = vld [vmem:[#allocation2 + $0x10] sm:$0xff]
        %v506 = vld [vmem:[#allocation2 + $0x18] sm:$0xff]
        %v507 = vld [vmem:[#allocation2 + $0x20] sm:$0xff]
        %v508 = vld [vmem:[#allocation2 + $0x28] sm:$0xff]
        %v509 = vld [vmem:[#allocation2 + $0x30] sm:$0xff]
        %v510 = vld [vmem:[#allocation2 + $0x38] sm:$0xff]
        %v511 = vld [vmem:[#allocation2 + $0x40] sm:$0xff]
        %v512 = vld [vmem:[#allocation2 + $0x48] sm:$0xff]
        %v513 = vld [vmem:[#allocation2 + $0x50] sm:$0xff]
        %v514 = vld [vmem:[#allocation2 + $0x58] sm:$0xff]
        %v515 = vld [vmem:[#allocation2 + $0x60] sm:$0xff]
        %v516 = vld [vmem:[#allocation2 + $0x68] sm:$0xff]
        %v517 = vld [vmem:[#allocation2 + $0x70] sm:$0xff]
        %v518 = vld [vmem:[#allocation2 + $0x78] sm:$0xff]
        %v519 = vld [vmem:[%s476] sm:$0xff]
        %v520 = vld [vmem:[%s476 + $0x8] sm:$0xff]
        %v521 = vld [vmem:[%s476 + $0x10] sm:$0xff]
        %v522 = vld [vmem:[%s476 + $0x18] sm:$0xff]
        %v523 = vld [vmem:[%s476 + $0x20] sm:$0xff]
        %v524 = vld [vmem:[%s476 + $0x28] sm:$0xff]
        %v525 = vld [vmem:[%s476 + $0x30] sm:$0xff]
        %v526 = vld [vmem:[%s476 + $0x38] sm:$0xff]
        %v527 = vld [vmem:[%s439] sm:$0xff]
        %v528 = vld [vmem:[%s439 + $0x8] sm:$0xff]
        %v529 = vld [vmem:[%s439 + $0x10] sm:$0xff]
        %v530 = vld [vmem:[%s439 + $0x18] sm:$0xff]
        %v531 = vld [vmem:[%s439 + $0x20] sm:$0xff]
        %v532 = vld [vmem:[%s439 + $0x28] sm:$0xff]
        %v533 = vld [vmem:[%s439 + $0x30] sm:$0xff]
        %v534 = vld [vmem:[%s439 + $0x38] sm:$0xff]
        %v535 = vld [vmem:[%s439 + $0x40] sm:$0xff]
        %v536 = vld [vmem:[%s439 + $0x48] sm:$0xff]
        %v537 = vld [vmem:[%s439 + $0x50] sm:$0xff]
        %v538 = vld [vmem:[%s439 + $0x58] sm:$0xff]
        %v539 = vld [vmem:[%s439 + $0x60] sm:$0xff]
        %v540 = vld [vmem:[%s439 + $0x68] sm:$0xff]
        %v541 = vld [vmem:[%s439 + $0x70] sm:$0xff]
        %v542 = vld [vmem:[%s439 + $0x78] sm:$0xff]
        %v543 = vld [vmem:[%s439 + $0x80] sm:$0xff]
        %v544 = vld [vmem:[%s439 + $0x88] sm:$0xff]
        %v545 = vld [vmem:[%s439 + $0x90] sm:$0xff]
        %v546 = vld [vmem:[%s439 + $0x98] sm:$0xff]
        %v547 = vld [vmem:[%s439 + $0xa0] sm:$0xff]
        %v548 = vld [vmem:[%s439 + $0xa8] sm:$0xff]
        %v549 = vld [vmem:[%s439 + $0xb0] sm:$0xff]
        %v550 = vld [vmem:[%s439 + $0xb8] sm:$0xff]
        %v551 = vld [vmem:[%s439 + $0xc0] sm:$0xff]
        %v552 = vld [vmem:[%s439 + $0xc8] sm:$0xff]
        %v553 = vld [vmem:[%s439 + $0xd0] sm:$0xff]
        %v554 = vld [vmem:[%s439 + $0xd8] sm:$0xff]
        %v555 = vld [vmem:[%s439 + $0xe0] sm:$0xff]
        %v556 = vld [vmem:[%s439 + $0xe8] sm:$0xff]
        %v557 = vld [vmem:[%s439 + $0xf0] sm:$0xff]
        %v558 = vld [vmem:[%s439 + $0xf8] sm:$0xff]
        %v559 = vld [vmem:[%s439 + $0x100] sm:$0xff]
        %v560 = vld [vmem:[%s439 + $0x108] sm:$0xff]
        %v561 = vld [vmem:[%s439 + $0x110] sm:$0xff]
        %v562 = vld [vmem:[%s439 + $0x118] sm:$0xff]
        %v563 = vld [vmem:[%s439 + $0x120] sm:$0xff]
        %v564 = vld [vmem:[%s439 + $0x128] sm:$0xff]
        %v565 = vld [vmem:[%s439 + $0x130] sm:$0xff]
        %v566 = vld [vmem:[%s439 + $0x138] sm:$0xff]
        %v567 = vld [vmem:[%s439 + $0x140] sm:$0xff]
        %v568 = vld [vmem:[%s439 + $0x148] sm:$0xff]
        %v569 = vld [vmem:[%s439 + $0x150] sm:$0xff]
        %v570 = vld [vmem:[%s439 + $0x158] sm:$0xff]
        %v571 = vld [vmem:[%s439 + $0x160] sm:$0xff]
        %v572 = vld [vmem:[%s439 + $0x168] sm:$0xff]
        %v573 = vld [vmem:[%s439 + $0x170] sm:$0xff]
        %v574 = vld [vmem:[%s439 + $0x178] sm:$0xff]
        %v575 = vld [vmem:[%s439 + $0x180] sm:$0xff]
        %v576 = vld [vmem:[%s439 + $0x188] sm:$0xff]
        %v577 = vld [vmem:[%s439 + $0x190] sm:$0xff]
        %v578 = vld [vmem:[%s439 + $0x198] sm:$0xff]
        %v579 = vld [vmem:[%s439 + $0x1a0] sm:$0xff]
        %v580 = vld [vmem:[%s439 + $0x1a8] sm:$0xff]
        %v581 = vld [vmem:[%s439 + $0x1b0] sm:$0xff]
        %v582 = vld [vmem:[%s439 + $0x1b8] sm:$0xff]
        %v583 = vld [vmem:[%s439 + $0x1c0] sm:$0xff]
        %v584 = vld [vmem:[%s439 + $0x1c8] sm:$0xff]
        %v585 = vld [vmem:[%s439 + $0x1d0] sm:$0xff]
        %v586 = vld [vmem:[%s439 + $0x1d8] sm:$0xff]
        %v587 = vld [vmem:[%s439 + $0x1e0] sm:$0xff]
        %v588 = vld [vmem:[%s439 + $0x1e8] sm:$0xff]
        %v589 = vld [vmem:[%s439 + $0x1f0] sm:$0xff]
        %v590 = vld [vmem:[%s439 + $0x1f8] sm:$0xff]
        %v591 = vld [vmem:[%s439 + $0x200] sm:$0xff]
        %v592 = vld [vmem:[%s439 + $0x208] sm:$0xff]
        %v593 = vld [vmem:[%s439 + $0x210] sm:$0xff]
        %v594 = vld [vmem:[%s439 + $0x218] sm:$0xff]
        %v595 = vld [vmem:[%s439 + $0x220] sm:$0xff]
        %v596 = vld [vmem:[%s439 + $0x228] sm:$0xff]
        %v597 = vld [vmem:[%s439 + $0x230] sm:$0xff]
        %v598 = vld [vmem:[%s439 + $0x238] sm:$0xff]
        %v599 = vld [vmem:[%s439 + $0x240] sm:$0xff]
        %v600 = vld [vmem:[%s439 + $0x248] sm:$0xff]
        %v601 = vld [vmem:[%s439 + $0x250] sm:$0xff]
        %v602 = vld [vmem:[%s439 + $0x258] sm:$0xff]
        %v603 = vld [vmem:[%s439 + $0x260] sm:$0xff]
        %v604 = vld [vmem:[%s439 + $0x268] sm:$0xff]
        %v605 = vld [vmem:[%s439 + $0x270] sm:$0xff]
        %v606 = vld [vmem:[%s439 + $0x278] sm:$0xff]
        %v607 = vld [vmem:[%s439 + $0x280] sm:$0xff]
        %v608 = vld [vmem:[%s439 + $0x288] sm:$0xff]
        %v609 = vld [vmem:[%s439 + $0x290] sm:$0xff]
        %v610 = vld [vmem:[%s439 + $0x298] sm:$0xff]
        %v611 = vld [vmem:[%s439 + $0x2a0] sm:$0xff]
        %v612 = vld [vmem:[%s439 + $0x2a8] sm:$0xff]
        %v613 = vld [vmem:[%s439 + $0x2b0] sm:$0xff]
        %v614 = vld [vmem:[%s439 + $0x2b8] sm:$0xff]
        %v615 = vld [vmem:[%s439 + $0x2c0] sm:$0xff]
        %v616 = vld [vmem:[%s439 + $0x2c8] sm:$0xff]
        %v617 = vld [vmem:[%s439 + $0x2d0] sm:$0xff]
        %v618 = vld [vmem:[%s439 + $0x2d8] sm:$0xff]
        %v619 = vld [vmem:[%s439 + $0x2e0] sm:$0xff]
        %v620 = vld [vmem:[%s439 + $0x2e8] sm:$0xff]
        %v621 = vld [vmem:[%s439 + $0x2f0] sm:$0xff]
        %v622 = vld [vmem:[%s439 + $0x2f8] sm:$0xff]
        %v623 = vld [vmem:[%s439 + $0x300] sm:$0xff]
        %v624 = vld [vmem:[%s439 + $0x308] sm:$0xff]
        %v625 = vld [vmem:[%s439 + $0x310] sm:$0xff]
        %v626 = vld [vmem:[%s439 + $0x318] sm:$0xff]
        %v627 = vld [vmem:[%s439 + $0x320] sm:$0xff]
        %v628 = vld [vmem:[%s439 + $0x328] sm:$0xff]
        %v629 = vld [vmem:[%s439 + $0x330] sm:$0xff]
        %v630 = vld [vmem:[%s439 + $0x338] sm:$0xff]
        %v631 = vld [vmem:[%s439 + $0x340] sm:$0xff]
        %v632 = vld [vmem:[%s439 + $0x348] sm:$0xff]
        %v633 = vld [vmem:[%s439 + $0x350] sm:$0xff]
        %v634 = vld [vmem:[%s439 + $0x358] sm:$0xff]
        %v635 = vld [vmem:[%s439 + $0x360] sm:$0xff]
        %v636 = vld [vmem:[%s439 + $0x368] sm:$0xff]
        %v637 = vld [vmem:[%s439 + $0x370] sm:$0xff]
        %v638 = vld [vmem:[%s439 + $0x378] sm:$0xff]
        %v639 = vld [vmem:[%s439 + $0x380] sm:$0xff]
        %v640 = vld [vmem:[%s439 + $0x388] sm:$0xff]
        %v641 = vld [vmem:[%s439 + $0x390] sm:$0xff]
        %v642 = vld [vmem:[%s439 + $0x398] sm:$0xff]
        %v643 = vld [vmem:[%s439 + $0x3a0] sm:$0xff]
        %v644 = vld [vmem:[%s439 + $0x3a8] sm:$0xff]
        %v645 = vld [vmem:[%s439 + $0x3b0] sm:$0xff]
        %v646 = vld [vmem:[%s439 + $0x3b8] sm:$0xff]
        %v647 = vld [vmem:[%s439 + $0x3c0] sm:$0xff]
        %v648 = vld [vmem:[%s439 + $0x3c8] sm:$0xff]
        %v649 = vld [vmem:[%s439 + $0x3d0] sm:$0xff]
        %v650 = vld [vmem:[%s439 + $0x3d8] sm:$0xff]
        %v651 = vld [vmem:[%s439 + $0x3e0] sm:$0xff]
        %v652 = vld [vmem:[%s439 + $0x3e8] sm:$0xff]
        %v653 = vld [vmem:[%s439 + $0x3f0] sm:$0xff]
        %v654 = vld [vmem:[%s439 + $0x3f8] sm:$0xff]
        %v663 = vunpack.c.l.b16 %v519
        %v664 = vunpack.c.h.b16 %v519
        %v665 = vunpack.c.l.b16 %v520
        %v666 = vunpack.c.h.b16 %v520
        %v667 = vunpack.c.l.b16 %v521
        %v668 = vunpack.c.h.b16 %v521
        %v669 = vunpack.c.l.b16 %v522
        %v670 = vunpack.c.h.b16 %v522
        %v671 = vunpack.c.l.b16 %v523
        %v672 = vunpack.c.h.b16 %v523
        %v673 = vunpack.c.l.b16 %v524
        %v674 = vunpack.c.h.b16 %v524
        %v675 = vunpack.c.l.b16 %v525
        %v676 = vunpack.c.h.b16 %v525
        %v677 = vunpack.c.l.b16 %v526
        %v678 = vunpack.c.h.b16 %v526
        %v679 = vpack.c.b16 %v667, %v663
        %v680 = vpack.c.b16 %v668, %v664
        %v681 = vpack.c.b16 %v669, %v665
        %v682 = vpack.c.b16 %v670, %v666
        %v683 = vpack.c.b16 %v675, %v671
        %v684 = vpack.c.b16 %v676, %v672
        %v685 = vpack.c.b16 %v677, %v673
        %v686 = vpack.c.b16 %v678, %v674
        %v823 = vunpack.c.l.b16 %v527
        %v824 = vunpack.c.h.b16 %v527
        %v825 = vunpack.c.l.b16 %v528
        %v826 = vunpack.c.h.b16 %v528
        %v827 = vunpack.c.l.b16 %v529
        %v828 = vunpack.c.h.b16 %v529
        %v829 = vunpack.c.l.b16 %v530
        %v830 = vunpack.c.h.b16 %v530
        %v831 = vunpack.c.l.b16 %v531
        %v832 = vunpack.c.h.b16 %v531
        %v833 = vunpack.c.l.b16 %v532
        %v834 = vunpack.c.h.b16 %v532
        %v835 = vunpack.c.l.b16 %v533
        %v836 = vunpack.c.h.b16 %v533
        %v837 = vunpack.c.l.b16 %v534
        %v838 = vunpack.c.h.b16 %v534
        %v839 = vunpack.c.l.b16 %v535
        %v840 = vunpack.c.h.b16 %v535
        %v841 = vunpack.c.l.b16 %v536
        %v842 = vunpack.c.h.b16 %v536
        %v843 = vunpack.c.l.b16 %v537
        %v844 = vunpack.c.h.b16 %v537
        %v845 = vunpack.c.l.b16 %v538
        %v846 = vunpack.c.h.b16 %v538
        %v847 = vunpack.c.l.b16 %v539
        %v848 = vunpack.c.h.b16 %v539
        %v849 = vunpack.c.l.b16 %v540
        %v850 = vunpack.c.h.b16 %v540
        %v851 = vunpack.c.l.b16 %v541
        %v852 = vunpack.c.h.b16 %v541
        %v853 = vunpack.c.l.b16 %v542
        %v854 = vunpack.c.h.b16 %v542
        %v855 = vunpack.c.l.b16 %v543
        %v856 = vunpack.c.h.b16 %v543
        %v857 = vunpack.c.l.b16 %v544
        %v858 = vunpack.c.h.b16 %v544
        %v859 = vunpack.c.l.b16 %v545
        %v860 = vunpack.c.h.b16 %v545
        %v861 = vunpack.c.l.b16 %v546
        %v862 = vunpack.c.h.b16 %v546
        %v863 = vunpack.c.l.b16 %v547
        %v864 = vunpack.c.h.b16 %v547
        %v865 = vunpack.c.l.b16 %v548
        %v866 = vunpack.c.h.b16 %v548
        %v867 = vunpack.c.l.b16 %v549
        %v868 = vunpack.c.h.b16 %v549
        %v869 = vunpack.c.l.b16 %v550
        %v870 = vunpack.c.h.b16 %v550
        %v871 = vunpack.c.l.b16 %v551
        %v872 = vunpack.c.h.b16 %v551
        %v873 = vunpack.c.l.b16 %v552
        %v874 = vunpack.c.h.b16 %v552
        %v875 = vunpack.c.l.b16 %v553
        %v876 = vunpack.c.h.b16 %v553
        %v877 = vunpack.c.l.b16 %v554
        %v878 = vunpack.c.h.b16 %v554
        %v879 = vunpack.c.l.b16 %v555
        %v880 = vunpack.c.h.b16 %v555
        %v881 = vunpack.c.l.b16 %v556
        %v882 = vunpack.c.h.b16 %v556
        %v883 = vunpack.c.l.b16 %v557
        %v884 = vunpack.c.h.b16 %v557
        %v885 = vunpack.c.l.b16 %v558
        %v886 = vunpack.c.h.b16 %v558
        %v887 = vunpack.c.l.b16 %v559
        %v888 = vunpack.c.h.b16 %v559
        %v889 = vunpack.c.l.b16 %v560
        %v890 = vunpack.c.h.b16 %v560
        %v891 = vunpack.c.l.b16 %v561
        %v892 = vunpack.c.h.b16 %v561
        %v893 = vunpack.c.l.b16 %v562
        %v894 = vunpack.c.h.b16 %v562
        %v895 = vunpack.c.l.b16 %v563
        %v896 = vunpack.c.h.b16 %v563
        %v897 = vunpack.c.l.b16 %v564
        %v898 = vunpack.c.h.b16 %v564
        %v899 = vunpack.c.l.b16 %v565
        %v900 = vunpack.c.h.b16 %v565
        %v901 = vunpack.c.l.b16 %v566
        %v902 = vunpack.c.h.b16 %v566
        %v903 = vunpack.c.l.b16 %v567
        %v904 = vunpack.c.h.b16 %v567
        %v905 = vunpack.c.l.b16 %v568
        %v906 = vunpack.c.h.b16 %v568
        %v907 = vunpack.c.l.b16 %v569
        %v908 = vunpack.c.h.b16 %v569
        %v909 = vunpack.c.l.b16 %v570
        %v910 = vunpack.c.h.b16 %v570
        %v911 = vunpack.c.l.b16 %v571
        %v912 = vunpack.c.h.b16 %v571
        %v913 = vunpack.c.l.b16 %v572
        %v914 = vunpack.c.h.b16 %v572
        %v915 = vunpack.c.l.b16 %v573
        %v916 = vunpack.c.h.b16 %v573
        %v917 = vunpack.c.l.b16 %v574
        %v918 = vunpack.c.h.b16 %v574
        %v919 = vunpack.c.l.b16 %v575
        %v920 = vunpack.c.h.b16 %v575
        %v921 = vunpack.c.l.b16 %v576
        %v922 = vunpack.c.h.b16 %v576
        %v923 = vunpack.c.l.b16 %v577
        %v924 = vunpack.c.h.b16 %v577
        %v925 = vunpack.c.l.b16 %v578
        %v926 = vunpack.c.h.b16 %v578
        %v927 = vunpack.c.l.b16 %v579
        %v928 = vunpack.c.h.b16 %v579
        %v929 = vunpack.c.l.b16 %v580
        %v930 = vunpack.c.h.b16 %v580
        %v931 = vunpack.c.l.b16 %v581
        %v932 = vunpack.c.h.b16 %v581
        %v933 = vunpack.c.l.b16 %v582
        %v934 = vunpack.c.h.b16 %v582
        %v935 = vunpack.c.l.b16 %v583
        %v936 = vunpack.c.h.b16 %v583
        %v937 = vunpack.c.l.b16 %v584
        %v938 = vunpack.c.h.b16 %v584
        %v939 = vunpack.c.l.b16 %v585
        %v940 = vunpack.c.h.b16 %v585
        %v941 = vunpack.c.l.b16 %v586
        %v942 = vunpack.c.h.b16 %v586
        %v943 = vunpack.c.l.b16 %v587
        %v944 = vunpack.c.h.b16 %v587
        %v945 = vunpack.c.l.b16 %v588
        %v946 = vunpack.c.h.b16 %v588
        %v947 = vunpack.c.l.b16 %v589
        %v948 = vunpack.c.h.b16 %v589
        %v949 = vunpack.c.l.b16 %v590
        %v950 = vunpack.c.h.b16 %v590
        %v951 = vunpack.c.l.b16 %v591
        %v952 = vunpack.c.h.b16 %v591
        %v953 = vunpack.c.l.b16 %v592
        %v954 = vunpack.c.h.b16 %v592
        %v955 = vunpack.c.l.b16 %v593
        %v956 = vunpack.c.h.b16 %v593
        %v957 = vunpack.c.l.b16 %v594
        %v958 = vunpack.c.h.b16 %v594
        %v959 = vunpack.c.l.b16 %v595
        %v960 = vunpack.c.h.b16 %v595
        %v961 = vunpack.c.l.b16 %v596
        %v962 = vunpack.c.h.b16 %v596
        %v963 = vunpack.c.l.b16 %v597
        %v964 = vunpack.c.h.b16 %v597
        %v965 = vunpack.c.l.b16 %v598
        %v966 = vunpack.c.h.b16 %v598
        %v967 = vunpack.c.l.b16 %v599
        %v968 = vunpack.c.h.b16 %v599
        %v969 = vunpack.c.l.b16 %v600
        %v970 = vunpack.c.h.b16 %v600
        %v971 = vunpack.c.l.b16 %v601
        %v972 = vunpack.c.h.b16 %v601
        %v973 = vunpack.c.l.b16 %v602
        %v974 = vunpack.c.h.b16 %v602
        %v975 = vunpack.c.l.b16 %v603
        %v976 = vunpack.c.h.b16 %v603
        %v977 = vunpack.c.l.b16 %v604
        %v978 = vunpack.c.h.b16 %v604
        %v979 = vunpack.c.l.b16 %v605
        %v980 = vunpack.c.h.b16 %v605
        %v981 = vunpack.c.l.b16 %v606
        %v982 = vunpack.c.h.b16 %v606
        %v983 = vunpack.c.l.b16 %v607
        %v984 = vunpack.c.h.b16 %v607
        %v985 = vunpack.c.l.b16 %v608
        %v986 = vunpack.c.h.b16 %v608
        %v987 = vunpack.c.l.b16 %v609
        %v988 = vunpack.c.h.b16 %v609
        %v989 = vunpack.c.l.b16 %v610
        %v990 = vunpack.c.h.b16 %v610
        %v991 = vunpack.c.l.b16 %v611
        %v992 = vunpack.c.h.b16 %v611
        %v993 = vunpack.c.l.b16 %v612
        %v994 = vunpack.c.h.b16 %v612
        %v995 = vunpack.c.l.b16 %v613
        %v996 = vunpack.c.h.b16 %v613
        %v997 = vunpack.c.l.b16 %v614
        %v998 = vunpack.c.h.b16 %v614
        %v999 = vunpack.c.l.b16 %v615
        %v1000 = vunpack.c.h.b16 %v615
        %v1001 = vunpack.c.l.b16 %v616
        %v1002 = vunpack.c.h.b16 %v616
        %v1003 = vunpack.c.l.b16 %v617
        %v1004 = vunpack.c.h.b16 %v617
        %v1005 = vunpack.c.l.b16 %v618
        %v1006 = vunpack.c.h.b16 %v618
        %v1007 = vunpack.c.l.b16 %v619
        %v1008 = vunpack.c.h.b16 %v619
        %v1009 = vunpack.c.l.b16 %v620
        %v1010 = vunpack.c.h.b16 %v620
        %v1011 = vunpack.c.l.b16 %v621
        %v1012 = vunpack.c.h.b16 %v621
        %v1013 = vunpack.c.l.b16 %v622
        %v1014 = vunpack.c.h.b16 %v622
        %v1015 = vunpack.c.l.b16 %v623
        %v1016 = vunpack.c.h.b16 %v623
        %v1017 = vunpack.c.l.b16 %v624
        %v1018 = vunpack.c.h.b16 %v624
        %v1019 = vunpack.c.l.b16 %v625
        %v1020 = vunpack.c.h.b16 %v625
        %v1021 = vunpack.c.l.b16 %v626
        %v1022 = vunpack.c.h.b16 %v626
        %v1023 = vunpack.c.l.b16 %v627
        %v1024 = vunpack.c.h.b16 %v627
        %v1025 = vunpack.c.l.b16 %v628
        %v1026 = vunpack.c.h.b16 %v628
        %v1027 = vunpack.c.l.b16 %v629
        %v1028 = vunpack.c.h.b16 %v629
        %v1029 = vunpack.c.l.b16 %v630
        %v1030 = vunpack.c.h.b16 %v630
        %v1031 = vunpack.c.l.b16 %v631
        %v1032 = vunpack.c.h.b16 %v631
        %v1033 = vunpack.c.l.b16 %v632
        %v1034 = vunpack.c.h.b16 %v632
        %v1035 = vunpack.c.l.b16 %v633
        %v1036 = vunpack.c.h.b16 %v633
        %v1037 = vunpack.c.l.b16 %v634
        %v1038 = vunpack.c.h.b16 %v634
        %v1039 = vunpack.c.l.b16 %v635
        %v1040 = vunpack.c.h.b16 %v635
        %v1041 = vunpack.c.l.b16 %v636
        %v1042 = vunpack.c.h.b16 %v636
        %v1043 = vunpack.c.l.b16 %v637
        %v1044 = vunpack.c.h.b16 %v637
        %v1045 = vunpack.c.l.b16 %v638
        %v1046 = vunpack.c.h.b16 %v638
        %v1047 = vunpack.c.l.b16 %v639
        %v1048 = vunpack.c.h.b16 %v639
        %v1049 = vunpack.c.l.b16 %v640
        %v1050 = vunpack.c.h.b16 %v640
        %v1051 = vunpack.c.l.b16 %v641
        %v1052 = vunpack.c.h.b16 %v641
        %v1053 = vunpack.c.l.b16 %v642
        %v1054 = vunpack.c.h.b16 %v642
        %v1055 = vunpack.c.l.b16 %v643
        %v1056 = vunpack.c.h.b16 %v643
        %v1057 = vunpack.c.l.b16 %v644
        %v1058 = vunpack.c.h.b16 %v644
        %v1059 = vunpack.c.l.b16 %v645
        %v1060 = vunpack.c.h.b16 %v645
        %v1061 = vunpack.c.l.b16 %v646
        %v1062 = vunpack.c.h.b16 %v646
        %v1063 = vunpack.c.l.b16 %v647
        %v1064 = vunpack.c.h.b16 %v647
        %v1065 = vunpack.c.l.b16 %v648
        %v1066 = vunpack.c.h.b16 %v648
        %v1067 = vunpack.c.l.b16 %v649
        %v1068 = vunpack.c.h.b16 %v649
        %v1069 = vunpack.c.l.b16 %v650
        %v1070 = vunpack.c.h.b16 %v650
        %v1071 = vunpack.c.l.b16 %v651
        %v1072 = vunpack.c.h.b16 %v651
        %v1073 = vunpack.c.l.b16 %v652
        %v1074 = vunpack.c.h.b16 %v652
        %v1075 = vunpack.c.l.b16 %v653
        %v1076 = vunpack.c.h.b16 %v653
        %v1077 = vunpack.c.l.b16 %v654
        %v1078 = vunpack.c.h.b16 %v654
        %v1079 = vpack.c.b16 %v827, %v823
        %v1080 = vpack.c.b16 %v828, %v824
        %v1081 = vpack.c.b16 %v829, %v825
        %v1082 = vpack.c.b16 %v830, %v826
        %v1083 = vpack.c.b16 %v835, %v831
        %v1084 = vpack.c.b16 %v836, %v832
        %v1085 = vpack.c.b16 %v837, %v833
        %v1086 = vpack.c.b16 %v838, %v834
        %v1087 = vpack.c.b16 %v843, %v839
        %v1088 = vpack.c.b16 %v844, %v840
        %v1089 = vpack.c.b16 %v845, %v841
        %v1090 = vpack.c.b16 %v846, %v842
        %v1091 = vpack.c.b16 %v851, %v847
        %v1092 = vpack.c.b16 %v852, %v848
        %v1093 = vpack.c.b16 %v853, %v849
        %v1094 = vpack.c.b16 %v854, %v850
        %v1095 = vpack.c.b16 %v859, %v855
        %v1096 = vpack.c.b16 %v860, %v856
        %v1097 = vpack.c.b16 %v861, %v857
        %v1098 = vpack.c.b16 %v862, %v858
        %v1099 = vpack.c.b16 %v867, %v863
        %v1100 = vpack.c.b16 %v868, %v864
        %v1101 = vpack.c.b16 %v869, %v865
        %v1102 = vpack.c.b16 %v870, %v866
        %v1103 = vpack.c.b16 %v875, %v871
        %v1104 = vpack.c.b16 %v876, %v872
        %v1105 = vpack.c.b16 %v877, %v873
        %v1106 = vpack.c.b16 %v878, %v874
        %v1107 = vpack.c.b16 %v883, %v879
        %v1108 = vpack.c.b16 %v884, %v880
        %v1109 = vpack.c.b16 %v885, %v881
        %v1110 = vpack.c.b16 %v886, %v882
        %v1111 = vpack.c.b16 %v891, %v887
        %v1112 = vpack.c.b16 %v892, %v888
        %v1113 = vpack.c.b16 %v893, %v889
        %v1114 = vpack.c.b16 %v894, %v890
        %v1115 = vpack.c.b16 %v899, %v895
        %v1116 = vpack.c.b16 %v900, %v896
        %v1117 = vpack.c.b16 %v901, %v897
        %v1118 = vpack.c.b16 %v902, %v898
        %v1119 = vpack.c.b16 %v907, %v903
        %v1120 = vpack.c.b16 %v908, %v904
        %v1121 = vpack.c.b16 %v909, %v905
        %v1122 = vpack.c.b16 %v910, %v906
        %v1123 = vpack.c.b16 %v915, %v911
        %v1124 = vpack.c.b16 %v916, %v912
        %v1125 = vpack.c.b16 %v917, %v913
        %v1126 = vpack.c.b16 %v918, %v914
        %v1127 = vpack.c.b16 %v923, %v919
        %v1128 = vpack.c.b16 %v924, %v920
        %v1129 = vpack.c.b16 %v925, %v921
        %v1130 = vpack.c.b16 %v926, %v922
        %v1131 = vpack.c.b16 %v931, %v927
        %v1132 = vpack.c.b16 %v932, %v928
        %v1133 = vpack.c.b16 %v933, %v929
        %v1134 = vpack.c.b16 %v934, %v930
        %v1135 = vpack.c.b16 %v939, %v935
        %v1136 = vpack.c.b16 %v940, %v936
        %v1137 = vpack.c.b16 %v941, %v937
        %v1138 = vpack.c.b16 %v942, %v938
        %v1139 = vpack.c.b16 %v947, %v943
        %v1140 = vpack.c.b16 %v948, %v944
        %v1141 = vpack.c.b16 %v949, %v945
        %v1142 = vpack.c.b16 %v950, %v946
        %v1143 = vpack.c.b16 %v955, %v951
        %v1144 = vpack.c.b16 %v956, %v952
        %v1145 = vpack.c.b16 %v957, %v953
        %v1146 = vpack.c.b16 %v958, %v954
        %v1147 = vpack.c.b16 %v963, %v959
        %v1148 = vpack.c.b16 %v964, %v960
        %v1149 = vpack.c.b16 %v965, %v961
        %v1150 = vpack.c.b16 %v966, %v962
        %v1151 = vpack.c.b16 %v971, %v967
        %v1152 = vpack.c.b16 %v972, %v968
        %v1153 = vpack.c.b16 %v973, %v969
        %v1154 = vpack.c.b16 %v974, %v970
        %v1155 = vpack.c.b16 %v979, %v975
        %v1156 = vpack.c.b16 %v980, %v976
        %v1157 = vpack.c.b16 %v981, %v977
        %v1158 = vpack.c.b16 %v982, %v978
        %v1159 = vpack.c.b16 %v987, %v983
        %v1160 = vpack.c.b16 %v988, %v984
        %v1161 = vpack.c.b16 %v989, %v985
        %v1162 = vpack.c.b16 %v990, %v986
        %v1163 = vpack.c.b16 %v995, %v991
        %v1164 = vpack.c.b16 %v996, %v992
        %v1165 = vpack.c.b16 %v997, %v993
        %v1166 = vpack.c.b16 %v998, %v994
        %v1167 = vpack.c.b16 %v1003, %v999
        %v1168 = vpack.c.b16 %v1004, %v1000
        %v1169 = vpack.c.b16 %v1005, %v1001
        %v1170 = vpack.c.b16 %v1006, %v1002
        %v1171 = vpack.c.b16 %v1011, %v1007
        %v1172 = vpack.c.b16 %v1012, %v1008
        %v1173 = vpack.c.b16 %v1013, %v1009
        %v1174 = vpack.c.b16 %v1014, %v1010
        %v1175 = vpack.c.b16 %v1019, %v1015
        %v1176 = vpack.c.b16 %v1020, %v1016
        %v1177 = vpack.c.b16 %v1021, %v1017
        %v1178 = vpack.c.b16 %v1022, %v1018
        %v1179 = vpack.c.b16 %v1027, %v1023
        %v1180 = vpack.c.b16 %v1028, %v1024
        %v1181 = vpack.c.b16 %v1029, %v1025
        %v1182 = vpack.c.b16 %v1030, %v1026
        %v1183 = vpack.c.b16 %v1035, %v1031
        %v1184 = vpack.c.b16 %v1036, %v1032
        %v1185 = vpack.c.b16 %v1037, %v1033
        %v1186 = vpack.c.b16 %v1038, %v1034
        %v1187 = vpack.c.b16 %v1043, %v1039
        %v1188 = vpack.c.b16 %v1044, %v1040
        %v1189 = vpack.c.b16 %v1045, %v1041
        %v1190 = vpack.c.b16 %v1046, %v1042
        %v1191 = vpack.c.b16 %v1051, %v1047
        %v1192 = vpack.c.b16 %v1052, %v1048
        %v1193 = vpack.c.b16 %v1053, %v1049
        %v1194 = vpack.c.b16 %v1054, %v1050
        %v1195 = vpack.c.b16 %v1059, %v1055
        %v1196 = vpack.c.b16 %v1060, %v1056
        %v1197 = vpack.c.b16 %v1061, %v1057
        %v1198 = vpack.c.b16 %v1062, %v1058
        %v1199 = vpack.c.b16 %v1067, %v1063
        %v1200 = vpack.c.b16 %v1068, %v1064
        %v1201 = vpack.c.b16 %v1069, %v1065
        %v1202 = vpack.c.b16 %v1070, %v1066
        %v1203 = vpack.c.b16 %v1075, %v1071
        %v1204 = vpack.c.b16 %v1076, %v1072
        %v1205 = vpack.c.b16 %v1077, %v1073
        %v1206 = vpack.c.b16 %v1078, %v1074
        %1335 = vmatpush.bf16.msra.mxu0 %v1107
        %1336 = vmatpush.bf16.msra.mxu0 %v1103
        %1337 = vmatpush.bf16.msra.mxu0 %v1099
        %1338 = vmatpush.bf16.msra.mxu0 %v1095
        %1339 = vmatpush.bf16.msra.mxu0 %v1091
        %1340 = vmatpush.bf16.msra.mxu0 %v1087
        %1341 = vmatpush.bf16.msra.mxu0 %v1083
        %1342 = vmatpush.bf16.msra.mxu0 %v1079
        %1343 = vmatmul.bf16.gmra.mxu0 %v679
        %v1344 = vpop.f32.mrf.mxu0
        %v1345 = vadd.f32 0.0, %v1344
        %v1346 = vpop.f32.mrf.mxu0
        %v1347 = vadd.f32 0.0, %v1346
        %1348 = vmatmul.bf16.gmra.mxu0 %v683
        %v1349 = vpop.f32.mrf.mxu0
        %v1350 = vadd.f32 0.0, %v1349
        %v1351 = vpop.f32.mrf.mxu0
        %v1352 = vadd.f32 0.0, %v1351
        %1353 = vdwg.mxu0
        %1354 = vmatpush.bf16.msra.mxu0 %v1139
        %1355 = vmatpush.bf16.msra.mxu0 %v1135
        %1356 = vmatpush.bf16.msra.mxu0 %v1131
        %1357 = vmatpush.bf16.msra.mxu0 %v1127
        %1358 = vmatpush.bf16.msra.mxu0 %v1123
        %1359 = vmatpush.bf16.msra.mxu0 %v1119
        %1360 = vmatpush.bf16.msra.mxu0 %v1115
        %1361 = vmatpush.bf16.msra.mxu0 %v1111
        %1362 = vmatmul.bf16.gmra.mxu0 %v680
        %v1363 = vpop.f32.mrf.mxu0
        %v1364 = vadd.f32 %v1345, %v1363
        %v1365 = vpop.f32.mrf.mxu0
        %v1366 = vadd.f32 %v1347, %v1365
        %1367 = vmatmul.bf16.gmra.mxu0 %v684
        %v1368 = vpop.f32.mrf.mxu0
        %v1369 = vadd.f32 %v1350, %v1368
        %v1370 = vpop.f32.mrf.mxu0
        %v1371 = vadd.f32 %v1352, %v1370
        %1372 = vdwg.mxu0
        %1373 = vmatpush.bf16.msra.mxu0 %v1171
        %1374 = vmatpush.bf16.msra.mxu0 %v1167
        %1375 = vmatpush.bf16.msra.mxu0 %v1163
        %1376 = vmatpush.bf16.msra.mxu0 %v1159
        %1377 = vmatpush.bf16.msra.mxu0 %v1155
        %1378 = vmatpush.bf16.msra.mxu0 %v1151
        %1379 = vmatpush.bf16.msra.mxu0 %v1147
        %1380 = vmatpush.bf16.msra.mxu0 %v1143
        %1381 = vmatmul.bf16.gmra.mxu0 %v681
        %v1382 = vpop.f32.mrf.mxu0
        %v1383 = vadd.f32 %v1364, %v1382
        %v1384 = vpop.f32.mrf.mxu0
        %v1385 = vadd.f32 %v1366, %v1384
        %1386 = vmatmul.bf16.gmra.mxu0 %v685
        %v1387 = vpop.f32.mrf.mxu0
        %v1388 = vadd.f32 %v1369, %v1387
        %v1389 = vpop.f32.mrf.mxu0
        %v1390 = vadd.f32 %v1371, %v1389
        %1391 = vdwg.mxu0
        %1392 = vmatpush.bf16.msra.mxu0 %v1203
        %1393 = vmatpush.bf16.msra.mxu0 %v1199
        %1394 = vmatpush.bf16.msra.mxu0 %v1195
        %1395 = vmatpush.bf16.msra.mxu0 %v1191
        %1396 = vmatpush.bf16.msra.mxu0 %v1187
        %1397 = vmatpush.bf16.msra.mxu0 %v1183
        %1398 = vmatpush.bf16.msra.mxu0 %v1179
        %1399 = vmatpush.bf16.msra.mxu0 %v1175
        %1400 = vmatmul.bf16.gmra.mxu0 %v682
        %v1401 = vpop.f32.mrf.mxu0
        %v1402 = vadd.f32 %v1383, %v1401
        %v1403 = vpop.f32.mrf.mxu0
        %v1404 = vadd.f32 %v1385, %v1403
        %1405 = vmatmul.bf16.gmra.mxu0 %v686
        %v1406 = vpop.f32.mrf.mxu0
        %v1407 = vadd.f32 %v1388, %v1406
        %v1408 = vpop.f32.mrf.mxu0
        %v1409 = vadd.f32 %v1390, %v1408
        %1410 = vdwg.mxu0
        %1411 = vmatpush.bf16.msra.mxu0 %v1108
        %1412 = vmatpush.bf16.msra.mxu0 %v1104
        %1413 = vmatpush.bf16.msra.mxu0 %v1100
        %1414 = vmatpush.bf16.msra.mxu0 %v1096
        %1415 = vmatpush.bf16.msra.mxu0 %v1092
        %1416 = vmatpush.bf16.msra.mxu0 %v1088
        %1417 = vmatpush.bf16.msra.mxu0 %v1084
        %1418 = vmatpush.bf16.msra.mxu0 %v1080
        %1419 = vmatmul.bf16.gmra.mxu0 %v679
        %v1420 = vpop.f32.mrf.mxu0
        %v1421 = vadd.f32 0.0, %v1420
        %v1422 = vpop.f32.mrf.mxu0
        %v1423 = vadd.f32 0.0, %v1422
        %1424 = vmatmul.bf16.gmra.mxu0 %v683
        %v1425 = vpop.f32.mrf.mxu0
        %v1426 = vadd.f32 0.0, %v1425
        %v1427 = vpop.f32.mrf.mxu0
        %v1428 = vadd.f32 0.0, %v1427
        %1429 = vdwg.mxu0
        %1430 = vmatpush.bf16.msra.mxu0 %v1140
        %1431 = vmatpush.bf16.msra.mxu0 %v1136
        %1432 = vmatpush.bf16.msra.mxu0 %v1132
        %1433 = vmatpush.bf16.msra.mxu0 %v1128
        %1434 = vmatpush.bf16.msra.mxu0 %v1124
        %1435 = vmatpush.bf16.msra.mxu0 %v1120
        %1436 = vmatpush.bf16.msra.mxu0 %v1116
        %1437 = vmatpush.bf16.msra.mxu0 %v1112
        %1438 = vmatmul.bf16.gmra.mxu0 %v680
        %v1439 = vpop.f32.mrf.mxu0
        %v1440 = vadd.f32 %v1421, %v1439
        %v1441 = vpop.f32.mrf.mxu0
        %v1442 = vadd.f32 %v1423, %v1441
        %1443 = vmatmul.bf16.gmra.mxu0 %v684
        %v1444 = vpop.f32.mrf.mxu0
        %v1445 = vadd.f32 %v1426, %v1444
        %v1446 = vpop.f32.mrf.mxu0
        %v1447 = vadd.f32 %v1428, %v1446
        %1448 = vdwg.mxu0
        %1449 = vmatpush.bf16.msra.mxu0 %v1172
        %1450 = vmatpush.bf16.msra.mxu0 %v1168
        %1451 = vmatpush.bf16.msra.mxu0 %v1164
        %1452 = vmatpush.bf16.msra.mxu0 %v1160
        %1453 = vmatpush.bf16.msra.mxu0 %v1156
        %1454 = vmatpush.bf16.msra.mxu0 %v1152
        %1455 = vmatpush.bf16.msra.mxu0 %v1148
        %1456 = vmatpush.bf16.msra.mxu0 %v1144
        %1457 = vmatmul.bf16.gmra.mxu0 %v681
        %v1458 = vpop.f32.mrf.mxu0
        %v1459 = vadd.f32 %v1440, %v1458
        %v1460 = vpop.f32.mrf.mxu0
        %v1461 = vadd.f32 %v1442, %v1460
        %1462 = vmatmul.bf16.gmra.mxu0 %v685
        %v1463 = vpop.f32.mrf.mxu0
        %v1464 = vadd.f32 %v1445, %v1463
        %v1465 = vpop.f32.mrf.mxu0
        %v1466 = vadd.f32 %v1447, %v1465
        %1467 = vdwg.mxu0
        %1468 = vmatpush.bf16.msra.mxu0 %v1204
        %1469 = vmatpush.bf16.msra.mxu0 %v1200
        %1470 = vmatpush.bf16.msra.mxu0 %v1196
        %1471 = vmatpush.bf16.msra.mxu0 %v1192
        %1472 = vmatpush.bf16.msra.mxu0 %v1188
        %1473 = vmatpush.bf16.msra.mxu0 %v1184
        %1474 = vmatpush.bf16.msra.mxu0 %v1180
        %1475 = vmatpush.bf16.msra.mxu0 %v1176
        %1476 = vmatmul.bf16.gmra.mxu0 %v682
        %v1477 = vpop.f32.mrf.mxu0
        %v1478 = vadd.f32 %v1459, %v1477
        %v1479 = vpop.f32.mrf.mxu0
        %v1480 = vadd.f32 %v1461, %v1479
        %1481 = vmatmul.bf16.gmra.mxu0 %v686
        %v1482 = vpop.f32.mrf.mxu0
        %v1483 = vadd.f32 %v1464, %v1482
        %v1484 = vpop.f32.mrf.mxu0
        %v1485 = vadd.f32 %v1466, %v1484
        %1486 = vdwg.mxu0
        %1487 = vmatpush.bf16.msra.mxu0 %v1109
        %1488 = vmatpush.bf16.msra.mxu0 %v1105
        %1489 = vmatpush.bf16.msra.mxu0 %v1101
        %1490 = vmatpush.bf16.msra.mxu0 %v1097
        %1491 = vmatpush.bf16.msra.mxu0 %v1093
        %1492 = vmatpush.bf16.msra.mxu0 %v1089
        %1493 = vmatpush.bf16.msra.mxu0 %v1085
        %1494 = vmatpush.bf16.msra.mxu0 %v1081
        %1495 = vmatmul.bf16.gmra.mxu0 %v679
        %v1496 = vpop.f32.mrf.mxu0
        %v1497 = vadd.f32 0.0, %v1496
        %v1498 = vpop.f32.mrf.mxu0
        %v1499 = vadd.f32 0.0, %v1498
        %1500 = vmatmul.bf16.gmra.mxu0 %v683
        %v1501 = vpop.f32.mrf.mxu0
        %v1502 = vadd.f32 0.0, %v1501
        %v1503 = vpop.f32.mrf.mxu0
        %v1504 = vadd.f32 0.0, %v1503
        %1505 = vdwg.mxu0
        %1506 = vmatpush.bf16.msra.mxu0 %v1141
        %1507 = vmatpush.bf16.msra.mxu0 %v1137
        %1508 = vmatpush.bf16.msra.mxu0 %v1133
        %1509 = vmatpush.bf16.msra.mxu0 %v1129
        %1510 = vmatpush.bf16.msra.mxu0 %v1125
        %1511 = vmatpush.bf16.msra.mxu0 %v1121
        %1512 = vmatpush.bf16.msra.mxu0 %v1117
        %1513 = vmatpush.bf16.msra.mxu0 %v1113
        %1514 = vmatmul.bf16.gmra.mxu0 %v680
        %v1515 = vpop.f32.mrf.mxu0
        %v1516 = vadd.f32 %v1497, %v1515
        %v1517 = vpop.f32.mrf.mxu0
        %v1518 = vadd.f32 %v1499, %v1517
        %1519 = vmatmul.bf16.gmra.mxu0 %v684
        %v1520 = vpop.f32.mrf.mxu0
        %v1521 = vadd.f32 %v1502, %v1520
        %v1522 = vpop.f32.mrf.mxu0
        %v1523 = vadd.f32 %v1504, %v1522
        %1524 = vdwg.mxu0
        %1525 = vmatpush.bf16.msra.mxu0 %v1173
        %1526 = vmatpush.bf16.msra.mxu0 %v1169
        %1527 = vmatpush.bf16.msra.mxu0 %v1165
        %1528 = vmatpush.bf16.msra.mxu0 %v1161
        %1529 = vmatpush.bf16.msra.mxu0 %v1157
        %1530 = vmatpush.bf16.msra.mxu0 %v1153
        %1531 = vmatpush.bf16.msra.mxu0 %v1149
        %1532 = vmatpush.bf16.msra.mxu0 %v1145
        %1533 = vmatmul.bf16.gmra.mxu0 %v681
        %v1534 = vpop.f32.mrf.mxu0
        %v1535 = vadd.f32 %v1516, %v1534
        %v1536 = vpop.f32.mrf.mxu0
        %v1537 = vadd.f32 %v1518, %v1536
        %1538 = vmatmul.bf16.gmra.mxu0 %v685
        %v1539 = vpop.f32.mrf.mxu0
        %v1540 = vadd.f32 %v1521, %v1539
        %v1541 = vpop.f32.mrf.mxu0
        %v1542 = vadd.f32 %v1523, %v1541
        %1543 = vdwg.mxu0
        %1544 = vmatpush.bf16.msra.mxu0 %v1205
        %1545 = vmatpush.bf16.msra.mxu0 %v1201
        %1546 = vmatpush.bf16.msra.mxu0 %v1197
        %1547 = vmatpush.bf16.msra.mxu0 %v1193
        %1548 = vmatpush.bf16.msra.mxu0 %v1189
        %1549 = vmatpush.bf16.msra.mxu0 %v1185
        %1550 = vmatpush.bf16.msra.mxu0 %v1181
        %1551 = vmatpush.bf16.msra.mxu0 %v1177
        %1552 = vmatmul.bf16.gmra.mxu0 %v682
        %v1553 = vpop.f32.mrf.mxu0
        %v1554 = vadd.f32 %v1535, %v1553
        %v1555 = vpop.f32.mrf.mxu0
        %v1556 = vadd.f32 %v1537, %v1555
        %1557 = vmatmul.bf16.gmra.mxu0 %v686
        %v1558 = vpop.f32.mrf.mxu0
        %v1559 = vadd.f32 %v1540, %v1558
        %v1560 = vpop.f32.mrf.mxu0
        %v1561 = vadd.f32 %v1542, %v1560
        %1562 = vdwg.mxu0
        %1563 = vmatpush.bf16.msra.mxu0 %v1110
        %1564 = vmatpush.bf16.msra.mxu0 %v1106
        %1565 = vmatpush.bf16.msra.mxu0 %v1102
        %1566 = vmatpush.bf16.msra.mxu0 %v1098
        %1567 = vmatpush.bf16.msra.mxu0 %v1094
        %1568 = vmatpush.bf16.msra.mxu0 %v1090
        %1569 = vmatpush.bf16.msra.mxu0 %v1086
        %1570 = vmatpush.bf16.msra.mxu0 %v1082
        %1571 = vmatmul.bf16.gmra.mxu0 %v679
        %v1572 = vpop.f32.mrf.mxu0
        %v1573 = vadd.f32 0.0, %v1572
        %v1574 = vpop.f32.mrf.mxu0
        %v1575 = vadd.f32 0.0, %v1574
        %1576 = vmatmul.bf16.gmra.mxu0 %v683
        %v1577 = vpop.f32.mrf.mxu0
        %v1578 = vadd.f32 0.0, %v1577
        %v1579 = vpop.f32.mrf.mxu0
        %v1580 = vadd.f32 0.0, %v1579
        %1581 = vdwg.mxu0
        %1582 = vmatpush.bf16.msra.mxu0 %v1142
        %1583 = vmatpush.bf16.msra.mxu0 %v1138
        %1584 = vmatpush.bf16.msra.mxu0 %v1134
        %1585 = vmatpush.bf16.msra.mxu0 %v1130
        %1586 = vmatpush.bf16.msra.mxu0 %v1126
        %1587 = vmatpush.bf16.msra.mxu0 %v1122
        %1588 = vmatpush.bf16.msra.mxu0 %v1118
        %1589 = vmatpush.bf16.msra.mxu0 %v1114
        %1590 = vmatmul.bf16.gmra.mxu0 %v680
        %v1591 = vpop.f32.mrf.mxu0
        %v1592 = vadd.f32 %v1573, %v1591
        %v1593 = vpop.f32.mrf.mxu0
        %v1594 = vadd.f32 %v1575, %v1593
        %1595 = vmatmul.bf16.gmra.mxu0 %v684
        %v1596 = vpop.f32.mrf.mxu0
        %v1597 = vadd.f32 %v1578, %v1596
        %v1598 = vpop.f32.mrf.mxu0
        %v1599 = vadd.f32 %v1580, %v1598
        %1600 = vdwg.mxu0
        %1601 = vmatpush.bf16.msra.mxu0 %v1174
        %1602 = vmatpush.bf16.msra.mxu0 %v1170
        %1603 = vmatpush.bf16.msra.mxu0 %v1166
        %1604 = vmatpush.bf16.msra.mxu0 %v1162
        %1605 = vmatpush.bf16.msra.mxu0 %v1158
        %1606 = vmatpush.bf16.msra.mxu0 %v1154
        %1607 = vmatpush.bf16.msra.mxu0 %v1150
        %1608 = vmatpush.bf16.msra.mxu0 %v1146
        %1609 = vmatmul.bf16.gmra.mxu0 %v681
        %v1610 = vpop.f32.mrf.mxu0
        %v1611 = vadd.f32 %v1592, %v1610
        %v1612 = vpop.f32.mrf.mxu0
        %v1613 = vadd.f32 %v1594, %v1612
        %1614 = vmatmul.bf16.gmra.mxu0 %v685
        %v1615 = vpop.f32.mrf.mxu0
        %v1616 = vadd.f32 %v1597, %v1615
        %v1617 = vpop.f32.mrf.mxu0
        %v1618 = vadd.f32 %v1599, %v1617
        %1619 = vdwg.mxu0
        %1620 = vmatpush.bf16.msra.mxu0 %v1206
        %1621 = vmatpush.bf16.msra.mxu0 %v1202
        %1622 = vmatpush.bf16.msra.mxu0 %v1198
        %1623 = vmatpush.bf16.msra.mxu0 %v1194
        %1624 = vmatpush.bf16.msra.mxu0 %v1190
        %1625 = vmatpush.bf16.msra.mxu0 %v1186
        %1626 = vmatpush.bf16.msra.mxu0 %v1182
        %1627 = vmatpush.bf16.msra.mxu0 %v1178
        %1628 = vmatmul.bf16.gmra.mxu0 %v682
        %v1629 = vpop.f32.mrf.mxu0
        %v1630 = vadd.f32 %v1611, %v1629
        %v1631 = vpop.f32.mrf.mxu0
        %v1632 = vadd.f32 %v1613, %v1631
        %1633 = vmatmul.bf16.gmra.mxu0 %v686
        %v1634 = vpop.f32.mrf.mxu0
        %v1635 = vadd.f32 %v1616, %v1634
        %v1636 = vpop.f32.mrf.mxu0
        %v1637 = vadd.f32 %v1618, %v1636
        %1638 = vdwg.mxu0
        %v1639 = vadd.f32 %v503, %v1402
        %v1640 = vadd.f32 %v504, %v1478
        %v1641 = vadd.f32 %v505, %v1554
        %v1642 = vadd.f32 %v506, %v1630
        %v1643 = vadd.f32 %v507, %v1404
        %v1644 = vadd.f32 %v508, %v1480
        %v1645 = vadd.f32 %v509, %v1556
        %v1646 = vadd.f32 %v510, %v1632
        %v1647 = vadd.f32 %v511, %v1407
        %v1648 = vadd.f32 %v512, %v1483
        %v1649 = vadd.f32 %v513, %v1559
        %v1650 = vadd.f32 %v514, %v1635
        %v1651 = vadd.f32 %v515, %v1409
        %v1652 = vadd.f32 %v516, %v1485
        %v1653 = vadd.f32 %v517, %v1561
        %v1654 = vadd.f32 %v518, %v1637
        %1655 = vst [vmem:[#allocation2] sm:$0xff] %v1639
        %1656 = vst [vmem:[#allocation2 + $0x8] sm:$0xff] %v1640
        %1657 = vst [vmem:[#allocation2 + $0x10] sm:$0xff] %v1641
        %1658 = vst [vmem:[#allocation2 + $0x18] sm:$0xff] %v1642
        %1659 = vst [vmem:[#allocation2 + $0x20] sm:$0xff] %v1643
        %1660 = vst [vmem:[#allocation2 + $0x28] sm:$0xff] %v1644
        %1661 = vst [vmem:[#allocation2 + $0x30] sm:$0xff] %v1645
        %1662 = vst [vmem:[#allocation2 + $0x38] sm:$0xff] %v1646
        %1663 = vst [vmem:[#allocation2 + $0x40] sm:$0xff] %v1647
        %1664 = vst [vmem:[#allocation2 + $0x48] sm:$0xff] %v1648
        %1665 = vst [vmem:[#allocation2 + $0x50] sm:$0xff] %v1649
        %1666 = vst [vmem:[#allocation2 + $0x58] sm:$0xff] %v1650
        %1667 = vst [vmem:[#allocation2 + $0x60] sm:$0xff] %v1651
        %1668 = vst [vmem:[#allocation2 + $0x68] sm:$0xff] %v1652
        %1669 = vst [vmem:[#allocation2 + $0x70] sm:$0xff] %v1653
        %1670 = vst [vmem:[#allocation2 + $0x78] sm:$0xff] %v1654
        // Predicated region
        $region56: #{generator_forward.14} parent=46 // pred_check
          %p1671 = pneg %p483
        $region57: #{generator_forward.14} parent=46 // pred_check_branch
          %1673 = sbr.rel (%p1671) target = $region59
        $region58: #{generator_forward.14} parent=46 // pred_region
          %v1674 = vld [vmem:[#allocation2] sm:$0xff]
          %v1675 = vld [vmem:[#allocation2 + $0x8] sm:$0xff]
          %v1676 = vld [vmem:[#allocation2 + $0x10] sm:$0xff]
          %v1677 = vld [vmem:[#allocation2 + $0x18] sm:$0xff]
          %v1678 = vld [vmem:[#allocation2 + $0x20] sm:$0xff]
          %v1679 = vld [vmem:[#allocation2 + $0x28] sm:$0xff]
          %v1680 = vld [vmem:[#allocation2 + $0x30] sm:$0xff]
          %v1681 = vld [vmem:[#allocation2 + $0x38] sm:$0xff]
          %v1682 = vld [vmem:[#allocation2 + $0x40] sm:$0xff]
          %v1683 = vld [vmem:[#allocation2 + $0x48] sm:$0xff]
          %v1684 = vld [vmem:[#allocation2 + $0x50] sm:$0xff]
          %v1685 = vld [vmem:[#allocation2 + $0x58] sm:$0xff]
          %v1686 = vld [vmem:[#allocation2 + $0x60] sm:$0xff]
          %v1687 = vld [vmem:[#allocation2 + $0x68] sm:$0xff]
          %v1688 = vld [vmem:[#allocation2 + $0x70] sm:$0xff]
          %v1689 = vld [vmem:[#allocation2 + $0x78] sm:$0xff]
          %1690 = vst [vmem:[%s466] sm:$0xff] %v1674
          %1691 = vst [vmem:[%s466 + $0x8] sm:$0xff] %v1675
          %1692 = vst [vmem:[%s466 + $0x10] sm:$0xff] %v1676
          %1693 = vst [vmem:[%s466 + $0x18] sm:$0xff] %v1677
          %1694 = vst [vmem:[%s466 + $0x20] sm:$0xff] %v1678
          %1695 = vst [vmem:[%s466 + $0x28] sm:$0xff] %v1679
          %1696 = vst [vmem:[%s466 + $0x30] sm:$0xff] %v1680
          %1697 = vst [vmem:[%s466 + $0x38] sm:$0xff] %v1681
          %1698 = vst [vmem:[%s466 + $0x40] sm:$0xff] %v1682
          %1699 = vst [vmem:[%s466 + $0x48] sm:$0xff] %v1683
          %1700 = vst [vmem:[%s466 + $0x50] sm:$0xff] %v1684
          %1701 = vst [vmem:[%s466 + $0x58] sm:$0xff] %v1685
          %1702 = vst [vmem:[%s466 + $0x60] sm:$0xff] %v1686
          %1703 = vst [vmem:[%s466 + $0x68] sm:$0xff] %v1687
          %1704 = vst [vmem:[%s466 + $0x70] sm:$0xff] %v1688
          %1705 = vst [vmem:[%s466 + $0x78] sm:$0xff] %v1689
        $region59: #{generator_forward.14} parent=46 // pred_fallthru
          _
        %s1706 = sand.u32 %s98, 1
        %s1707 = sand.u32 %s98, 1
        %s1708 = smul.addr %s1707, 128
        %s1709 = scalar_lea.vmem [#allocation4], %s1708
        // Predicated region
        $region60: #{generator_forward.14} parent=46 // pred_check
          %p1710 = pneg %p108
        $region61: #{generator_forward.14} parent=46 // pred_check_branch
          %1712 = sbr.rel (%p1710) target = $region63
        $region62: #{generator_forward.14} parent=46 // pred_region
          %s1713 = smul.u32 4, %s18
          %s1714 = smul.u32 4, %s19
          %s1715 = smul.addr %s1713, 32
          %s1716 = sadd.s32 %s1714, %s1715
          %s1717 = smul.addr %s1716, 8
          %s1718 = scalar_lea.vmem %s2, %s1717
          // Predicated region
          $region64: #{generator_forward.14} parent=62 // pred_check
            _
          $region65: #{generator_forward.14} parent=62 // pred_check_branch
            %1720 = sbr.rel (0) target = $region67
          $region66: #{generator_forward.14} parent=62 // pred_region
            // Predicated region
            $region68: #{generator_forward.14} parent=66 // pred_check
              _
            $region69: #{generator_forward.14} parent=66 // pred_check_branch
              %1722 = sbr.rel (0) target = $region71
            $region70: #{generator_forward.14} parent=66 // pred_region
              loop: start=0, step=1, limit=1
              $region72: #{generator_forward.14} parent=70 // loop_pre_header
                _
              $region73: #{generator_forward.14} parent=70 // loop_header
                %s1724 = sphi 0, %s1728
                %p1725 = scmp.ge.s32.totalorder %s1724, 1
                %s1729 = sphi %s1709, %s1709
                %s1730 = sphi %s1718, %s1718
              $region74: #{generator_forward.14} parent=70 // loop_header_branch
                %1727 = sbr.rel (%p1725) target = $region78
              $region75: #{generator_forward.14} parent=70 // loop_body
                %v1731 = vld [vmem:[%s1729] sm:$0xff]
                %1732 = vst [vmem:[%s1730] sm:$0xff] %v1731
                %v1733 = vld [vmem:[%s1729 + $0x8] sm:$0xff]
                %1734 = vst [vmem:[%s1730 + $0x8] sm:$0xff] %v1733
                %v1735 = vld [vmem:[%s1729 + $0x10] sm:$0xff]
                %1736 = vst [vmem:[%s1730 + $0x10] sm:$0xff] %v1735
                %v1737 = vld [vmem:[%s1729 + $0x18] sm:$0xff]
                %1738 = vst [vmem:[%s1730 + $0x18] sm:$0xff] %v1737
                %v1739 = vld [vmem:[%s1729 + $0x20] sm:$0xff]
                %1740 = vst [vmem:[%s1730 + $0x100] sm:$0xff] %v1739
                %v1741 = vld [vmem:[%s1729 + $0x28] sm:$0xff]
                %1742 = vst [vmem:[%s1730 + $0x108] sm:$0xff] %v1741
                %v1743 = vld [vmem:[%s1729 + $0x30] sm:$0xff]
                %1744 = vst [vmem:[%s1730 + $0x110] sm:$0xff] %v1743
                %v1745 = vld [vmem:[%s1729 + $0x38] sm:$0xff]
                %1746 = vst [vmem:[%s1730 + $0x118] sm:$0xff] %v1745
                %v1747 = vld [vmem:[%s1729 + $0x40] sm:$0xff]
                %1748 = vst [vmem:[%s1730 + $0x200] sm:$0xff] %v1747
                %v1749 = vld [vmem:[%s1729 + $0x48] sm:$0xff]
                %1750 = vst [vmem:[%s1730 + $0x208] sm:$0xff] %v1749
                %v1751 = vld [vmem:[%s1729 + $0x50] sm:$0xff]
                %1752 = vst [vmem:[%s1730 + $0x210] sm:$0xff] %v1751
                %v1753 = vld [vmem:[%s1729 + $0x58] sm:$0xff]
                %1754 = vst [vmem:[%s1730 + $0x218] sm:$0xff] %v1753
                %v1755 = vld [vmem:[%s1729 + $0x60] sm:$0xff]
                %1756 = vst [vmem:[%s1730 + $0x300] sm:$0xff] %v1755
                %v1757 = vld [vmem:[%s1729 + $0x68] sm:$0xff]
                %1758 = vst [vmem:[%s1730 + $0x308] sm:$0xff] %v1757
                %v1759 = vld [vmem:[%s1729 + $0x70] sm:$0xff]
                %1760 = vst [vmem:[%s1730 + $0x310] sm:$0xff] %v1759
                %v1761 = vld [vmem:[%s1729 + $0x78] sm:$0xff]
                %1762 = vst [vmem:[%s1730 + $0x318] sm:$0xff] %v1761
              $region76: #{generator_forward.14} parent=70 // loop_footer
                %s1728 = sadd.s32 1, %s1724
              $region77: #{generator_forward.14} parent=70 // loop_footer_branch
                %1723 = sbr.rel target = $region73
              $region78: #{generator_forward.14} parent=70 // loop_exit
                _
            $region71: #{generator_forward.14} parent=66 // pred_fallthru
              _
            // Predicated region
            $region79: #{generator_forward.14} parent=66 // pred_check
              _
            $region80: #{generator_forward.14} parent=66 // pred_check_branch
              %1764 = sbr.rel target = $region82
            $region81: #{generator_forward.14} parent=66 // pred_region
              _
            $region82: #{generator_forward.14} parent=66 // pred_fallthru
              _
          $region67: #{generator_forward.14} parent=62 // pred_fallthru
            _
          %1765 = vnop
        $region63: #{generator_forward.14} parent=46 // pred_fallthru
          _
      $region47: #{generator_forward.14} parent=5 // pred_fallthru
        _
      %p1766 = scmp.le.s32.totalorder 2, %s8
      // Predicated region
      $region83: #{generator_forward.14} parent=5 // pred_check
        %p1767 = pneg %p1766
      $region84: #{generator_forward.14} parent=5 // pred_check_branch
        %1769 = sbr.rel (%p1767) target = $region86
      $region85: #{generator_forward.14} parent=5 // pred_region
        %s1770 = ssub.s32 %s8, 2
        // Predicated region
        $region87: #{generator_forward.14} parent=85 // pred_check
          %p1771 = pneg %p114
        $region88: #{generator_forward.14} parent=85 // pred_check_branch
          %1773 = sbr.rel (%p1771) target = $region90
        $region89: #{generator_forward.14} parent=85 // pred_region
          %s1774 = sand.u32 %s99, 1
          %s1775 = sand.u32 %s99, 1
          %s1776 = smul.addr %s1775, 128
          %s1777 = scalar_lea.vmem [#allocation4], %s1776
        $region90: #{generator_forward.14} parent=85 // pred_fallthru
          _
      $region86: #{generator_forward.14} parent=5 // pred_fallthru
        _
    $region6: #{generator_forward.14} parent=1 // loop_footer
      %s12 = sadd.s32 1, %s8
    $region7: #{generator_forward.14} parent=1 // loop_footer_branch
      %7 = sbr.rel target = $region3
    $region8: #{generator_forward.14} parent=1 // loop_exit
      _

// kernel: generator_forward.16
$region0: #{generator_forward.16}
  #allocation0 [shape = 'u32[]', space=smem, size = 0x4, offset = 0x4, fixed_abs, tag = 'smem constant byte address 0x4 - core index']
  #allocation1 [shape = 'u32[72,128]{1,0:T(1,128)}', space=vmem, size = 0x9000, scoped, tag = 'internal scratch']
  %s0 = inlined_call_operand.vmem [shape: f32[128,256], index: 0, kind: input, shape index: {}]
  %s1 = inlined_call_operand.vmem [shape: f32[2,256], index: 1, kind: input, shape index: {}]
  %s2 = inlined_call_operand.vmem [shape: bf16[128,256], index: 2, kind: output, shape index: {}]
  %s3 = sld [smem:[#allocation0]]
  $region18: #{generator_forward.16} parent=0
    _
  %s5 = ssub.s32 1, %s3
  %s6 = scalar_select 0, %s5, %s3
  // Predicated region
  $region2: #{generator_forward.16} parent=0 // pred_check
    _
  $region3: #{generator_forward.16} parent=0 // pred_check_branch
    %8 = sbr.rel (0) target = $region5
  $region4: #{generator_forward.16} parent=0 // pred_region
    _
  $region5: #{generator_forward.16} parent=0 // pred_fallthru
    _
  // Predicated region
  $region6: #{generator_forward.16} parent=0 // pred_check
    _
  $region7: #{generator_forward.16} parent=0 // pred_check_branch
    %10 = sbr.rel (0) target = $region9
  $region8: #{generator_forward.16} parent=0 // pred_region
    _
  $region9: #{generator_forward.16} parent=0 // pred_fallthru
    _
  %v11 = vld [vmem:[%s1] sm:$0xf]
  %v12 = vmul.f32 %v11, 0.0078125
  %v13 = vmul.f32 %v12, %v12
  %v15 = vrot.slane %v13, 7
  %v17 = vsub.f32 %v12, %v15
  %v18 = vmax.f32 %v17, 0.0
  %v19 = vld [vmem:[%s0] sm:$0xff]
  %v20 = vld [vmem:[%s0 + $0x8] sm:$0xff]
  %v21 = vld [vmem:[%s0 + $0x10] sm:$0xff]
  %v22 = vld [vmem:[%s0 + $0x18] sm:$0xff]
  %v23 = vld [vmem:[%s0 + $0x20] sm:$0xff]
  %v24 = vld [vmem:[%s0 + $0x28] sm:$0xff]
  %v25 = vld [vmem:[%s0 + $0x30] sm:$0xff]
  %v26 = vld [vmem:[%s0 + $0x38] sm:$0xff]
  %v27 = vld [vmem:[%s0 + $0x40] sm:$0xff]
  %v28 = vld [vmem:[%s0 + $0x48] sm:$0xff]
  %v29 = vld [vmem:[%s0 + $0x50] sm:$0xff]
  %v30 = vld [vmem:[%s0 + $0x58] sm:$0xff]
  %v31 = vld [vmem:[%s0 + $0x60] sm:$0xff]
  %v32 = vld [vmem:[%s0 + $0x68] sm:$0xff]
  %v33 = vld [vmem:[%s0 + $0x70] sm:$0xff]
  %v34 = vld [vmem:[%s0 + $0x78] sm:$0xff]
  %v35 = vld [vmem:[%s0 + $0x80] sm:$0xff]
  %v36 = vld [vmem:[%s0 + $0x88] sm:$0xff]
  %v37 = vld [vmem:[%s0 + $0x90] sm:$0xff]
  %v38 = vld [vmem:[%s0 + $0x98] sm:$0xff]
  %v39 = vld [vmem:[%s0 + $0xa0] sm:$0xff]
  %v40 = vld [vmem:[%s0 + $0xa8] sm:$0xff]
  %v41 = vld [vmem:[%s0 + $0xb0] sm:$0xff]
  %v42 = vld [vmem:[%s0 + $0xb8] sm:$0xff]
  %v43 = vld [vmem:[%s0 + $0xc0] sm:$0xff]
  %v44 = vld [vmem:[%s0 + $0xc8] sm:$0xff]
  %v45 = vld [vmem:[%s0 + $0xd0] sm:$0xff]
  %v46 = vld [vmem:[%s0 + $0xd8] sm:$0xff]
  %v47 = vld [vmem:[%s0 + $0xe0] sm:$0xff]
  %v48 = vld [vmem:[%s0 + $0xe8] sm:$0xff]
  %v49 = vld [vmem:[%s0 + $0xf0] sm:$0xff]
  %v50 = vld [vmem:[%s0 + $0xf8] sm:$0xff]
  %v52 = vperm.slane %v12, 0
  %v53 = vperm.slane %v12, 2
  %v56 = vperm.slane %v52, 0
  %v57 = vperm.slane %v53, 0
  %v58 = vsub.f32 %v19, %v56
  %v59 = vsub.f32 %v20, %v57
  %v60 = vsub.f32 %v21, %v56
  %v61 = vsub.f32 %v22, %v57
  %v62 = vsub.f32 %v23, %v56
  %v63 = vsub.f32 %v24, %v57
  %v64 = vsub.f32 %v25, %v56
  %v65 = vsub.f32 %v26, %v57
  %v66 = vsub.f32 %v27, %v56
  %v67 = vsub.f32 %v28, %v57
  %v68 = vsub.f32 %v29, %v56
  %v69 = vsub.f32 %v30, %v57
  %v70 = vsub.f32 %v31, %v56
  %v71 = vsub.f32 %v32, %v57
  %v72 = vsub.f32 %v33, %v56
  %v73 = vsub.f32 %v34, %v57
  %v74 = vsub.f32 %v35, %v56
  %v75 = vsub.f32 %v36, %v57
  %v76 = vsub.f32 %v37, %v56
  %v77 = vsub.f32 %v38, %v57
  %v78 = vsub.f32 %v39, %v56
  %v79 = vsub.f32 %v40, %v57
  %v80 = vsub.f32 %v41, %v56
  %v81 = vsub.f32 %v42, %v57
  %v82 = vsub.f32 %v43, %v56
  %v83 = vsub.f32 %v44, %v57
  %v84 = vsub.f32 %v45, %v56
  %v85 = vsub.f32 %v46, %v57
  %v86 = vsub.f32 %v47, %v56
  %v87 = vsub.f32 %v48, %v57
  %v88 = vsub.f32 %v49, %v56
  %v89 = vsub.f32 %v50, %v57
  %v90 = vadd.f32 %v18, 1e-05
  %v91 = vrsqrt.pop %v90
  %v92 = vmul.f32 %v91, %v90
  %v93 = vmul.f32 %v92, %v91
  %v94 = vmul.f32 0.5, %v93
  %v95 = vsub.f32 1.5, %v94
  %v96 = vmul.f32 %v91, %v95
  %vm97 = vweird.f32 %v90
  %vm98 = vweird.f32 %v91
  %vm99 = vmor %vm97, %vm98
  %v100 = vsel %vm99, %v91, %v96
  %v102 = vperm.slane %v100, 1
  %v103 = vperm.slane %v100, 3
  %v106 = vperm.slane %v102, 1
  %v107 = vperm.slane %v103, 1
  %v108 = vmul.f32 %v58, %v106
  %v109 = vmul.f32 %v59, %v107
  %v110 = vmul.f32 %v60, %v106
  %v111 = vmul.f32 %v61, %v107
  %v112 = vmul.f32 %v62, %v106
  %v113 = vmul.f32 %v63, %v107
  %v114 = vmul.f32 %v64, %v106
  %v115 = vmul.f32 %v65, %v107
  %v116 = vmul.f32 %v66, %v106
  %v117 = vmul.f32 %v67, %v107
  %v118 = vmul.f32 %v68, %v106
  %v119 = vmul.f32 %v69, %v107
  %v120 = vmul.f32 %v70, %v106
  %v121 = vmul.f32 %v71, %v107
  %v122 = vmul.f32 %v72, %v106
  %v123 = vmul.f32 %v73, %v107
  %v124 = vmul.f32 %v74, %v106
  %v125 = vmul.f32 %v75, %v107
  %v126 = vmul.f32 %v76, %v106
  %v127 = vmul.f32 %v77, %v107
  %v128 = vmul.f32 %v78, %v106
  %v129 = vmul.f32 %v79, %v107
  %v130 = vmul.f32 %v80, %v106
  %v131 = vmul.f32 %v81, %v107
  %v132 = vmul.f32 %v82, %v106
  %v133 = vmul.f32 %v83, %v107
  %v134 = vmul.f32 %v84, %v106
  %v135 = vmul.f32 %v85, %v107
  %v136 = vmul.f32 %v86, %v106
  %v137 = vmul.f32 %v87, %v107
  %v138 = vmul.f32 %v88, %v106
  %v139 = vmul.f32 %v89, %v107
  %vm140 = vcmp.gt.f32.partialorder %v108, 0.0
  %vm141 = vcmp.gt.f32.partialorder %v109, 0.0
  %vm142 = vcmp.gt.f32.partialorder %v110, 0.0
  %vm143 = vcmp.gt.f32.partialorder %v111, 0.0
  %vm144 = vcmp.gt.f32.partialorder %v112, 0.0
  %vm145 = vcmp.gt.f32.partialorder %v113, 0.0
  %vm146 = vcmp.gt.f32.partialorder %v114, 0.0
  %vm147 = vcmp.gt.f32.partialorder %v115, 0.0
  %vm148 = vcmp.gt.f32.partialorder %v116, 0.0
  %vm149 = vcmp.gt.f32.partialorder %v117, 0.0
  %vm150 = vcmp.gt.f32.partialorder %v118, 0.0
  %vm151 = vcmp.gt.f32.partialorder %v119, 0.0
  %vm152 = vcmp.gt.f32.partialorder %v120, 0.0
  %vm153 = vcmp.gt.f32.partialorder %v121, 0.0
  %vm154 = vcmp.gt.f32.partialorder %v122, 0.0
  %vm155 = vcmp.gt.f32.partialorder %v123, 0.0
  %vm156 = vcmp.gt.f32.partialorder %v124, 0.0
  %vm157 = vcmp.gt.f32.partialorder %v125, 0.0
  %vm158 = vcmp.gt.f32.partialorder %v126, 0.0
  %vm159 = vcmp.gt.f32.partialorder %v127, 0.0
  %vm160 = vcmp.gt.f32.partialorder %v128, 0.0
  %vm161 = vcmp.gt.f32.partialorder %v129, 0.0
  %vm162 = vcmp.gt.f32.partialorder %v130, 0.0
  %vm163 = vcmp.gt.f32.partialorder %v131, 0.0
  %vm164 = vcmp.gt.f32.partialorder %v132, 0.0
  %vm165 = vcmp.gt.f32.partialorder %v133, 0.0
  %vm166 = vcmp.gt.f32.partialorder %v134, 0.0
  %vm167 = vcmp.gt.f32.partialorder %v135, 0.0
  %vm168 = vcmp.gt.f32.partialorder %v136, 0.0
  %vm169 = vcmp.gt.f32.partialorder %v137, 0.0
  %vm170 = vcmp.gt.f32.partialorder %v138, 0.0
  %vm171 = vcmp.gt.f32.partialorder %v139, 0.0
  %v172 = vmin.f32 %v108, 0.0
  %v173 = vmin.f32 %v109, 0.0
  %v174 = vmin.f32 %v110, 0.0
  %v175 = vmin.f32 %v111, 0.0
  %v176 = vmin.f32 %v112, 0.0
  %v177 = vmin.f32 %v113, 0.0
  %v178 = vmin.f32 %v114, 0.0
  %v179 = vmin.f32 %v115, 0.0
  %v180 = vmin.f32 %v116, 0.0
  %v181 = vmin.f32 %v117, 0.0
  %v182 = vmin.f32 %v118, 0.0
  %v183 = vmin.f32 %v119, 0.0
  %v184 = vmin.f32 %v120, 0.0
  %v185 = vmin.f32 %v121, 0.0
  %v186 = vmin.f32 %v122, 0.0
  %v187 = vmin.f32 %v123, 0.0
  %v188 = vmin.f32 %v124, 0.0
  %v189 = vmin.f32 %v125, 0.0
  %v190 = vmin.f32 %v126, 0.0
  %v191 = vmin.f32 %v127, 0.0
  %v192 = vmin.f32 %v128, 0.0
  %v193 = vmin.f32 %v129, 0.0
  %v194 = vmin.f32 %v130, 0.0
  %v195 = vmin.f32 %v131, 0.0
  %v196 = vmin.f32 %v132, 0.0
  %v197 = vmin.f32 %v133, 0.0
  %v198 = vmin.f32 %v134, 0.0
  %v199 = vmin.f32 %v135, 0.0
  %v200 = vmin.f32 %v136, 0.0
  %v201 = vmin.f32 %v137, 0.0
  %v202 = vmin.f32 %v138, 0.0
  %v203 = vmin.f32 %v139, 0.0
  %v204 = vmul.f32 %v172, 1.442695
  %v205 = vpow.pop %v204
  %v206 = vmul.f32 %v173, 1.442695
  %v207 = vpow.pop %v206
  %v208 = vmul.f32 %v174, 1.442695
  %v209 = vpow.pop %v208
  %v210 = vmul.f32 %v175, 1.442695
  %v211 = vpow.pop %v210
  %v212 = vmul.f32 %v176, 1.442695
  %v213 = vpow.pop %v212
  %v214 = vmul.f32 %v177, 1.442695
  %v215 = vpow.pop %v214
  %v216 = vmul.f32 %v178, 1.442695
  %v217 = vpow.pop %v216
  %v218 = vmul.f32 %v179, 1.442695
  %v219 = vpow.pop %v218
  %v220 = vmul.f32 %v180, 1.442695
  %v221 = vpow.pop %v220
  %v222 = vmul.f32 %v181, 1.442695
  %v223 = vpow.pop %v222
  %v224 = vmul.f32 %v182, 1.442695
  %v225 = vpow.pop %v224
  %v226 = vmul.f32 %v183, 1.442695
  %v227 = vpow.pop %v226
  %v228 = vmul.f32 %v184, 1.442695
  %v229 = vpow.pop %v228
  %v230 = vmul.f32 %v185, 1.442695
  %v231 = vpow.pop %v230
  %v232 = vmul.f32 %v186, 1.442695
  %v233 = vpow.pop %v232
  %v234 = vmul.f32 %v187, 1.442695
  %v235 = vpow.pop %v234
  %v236 = vmul.f32 %v188, 1.442695
  %v237 = vpow.pop %v236
  %v238 = vmul.f32 %v189, 1.442695
  %v239 = vpow.pop %v238
  %v240 = vmul.f32 %v190, 1.442695
  %v241 = vpow.pop %v240
  %v242 = vmul.f32 %v191, 1.442695
  %v243 = vpow.pop %v242
  %v244 = vmul.f32 %v192, 1.442695
  %v245 = vpow.pop %v244
  %v246 = vmul.f32 %v193, 1.442695
  %v247 = vpow.pop %v246
  %v248 = vmul.f32 %v194, 1.442695
  %v249 = vpow.pop %v248
  %v250 = vmul.f32 %v195, 1.442695
  %v251 = vpow.pop %v250
  %v252 = vmul.f32 %v196, 1.442695
  %v253 = vpow.pop %v252
  %v254 = vmul.f32 %v197, 1.442695
  %v255 = vpow.pop %v254
  %v256 = vmul.f32 %v198, 1.442695
  %v257 = vpow.pop %v256
  %v258 = vmul.f32 %v199, 1.442695
  %v259 = vpow.pop %v258
  %v260 = vmul.f32 %v200, 1.442695
  %v261 = vpow.pop %v260
  %v262 = vmul.f32 %v201, 1.442695
  %v263 = vpow.pop %v262
  %v264 = vmul.f32 %v202, 1.442695
  %v265 = vpow.pop %v264
  %v266 = vmul.f32 %v203, 1.442695
  %v267 = vpow.pop %v266
  %v268 = vsub.f32 %v205, 1.0
  %v269 = vsub.f32 %v207, 1.0
  %v270 = vsub.f32 %v209, 1.0
  %v271 = vsub.f32 %v211, 1.0
  %v272 = vsub.f32 %v213, 1.0
  %v273 = vsub.f32 %v215, 1.0
  %v274 = vsub.f32 %v217, 1.0
  %v275 = vsub.f32 %v219, 1.0
  %v276 = vsub.f32 %v221, 1.0
  %v277 = vsub.f32 %v223, 1.0
  %v278 = vsub.f32 %v225, 1.0
  %v279 = vsub.f32 %v227, 1.0
  %v280 = vsub.f32 %v229, 1.0
  %v281 = vsub.f32 %v231, 1.0
  %v282 = vsub.f32 %v233, 1.0
  %v283 = vsub.f32 %v235, 1.0
  %v284 = vsub.f32 %v237, 1.0
  %v285 = vsub.f32 %v239, 1.0
  %v286 = vsub.f32 %v241, 1.0
  %v287 = vsub.f32 %v243, 1.0
  %v288 = vsub.f32 %v245, 1.0
  %v289 = vsub.f32 %v247, 1.0
  %v290 = vsub.f32 %v249, 1.0
  %v291 = vsub.f32 %v251, 1.0
  %v292 = vsub.f32 %v253, 1.0
  %v293 = vsub.f32 %v255, 1.0
  %v294 = vsub.f32 %v257, 1.0
  %v295 = vsub.f32 %v259, 1.0
  %v296 = vsub.f32 %v261, 1.0
  %v297 = vsub.f32 %v263, 1.0
  %v298 = vsub.f32 %v265, 1.0
  %v299 = vsub.f32 %v267, 1.0
  %v300 = vsel %vm140, %v108, %v268
  %v301 = vsel %vm141, %v109, %v269
  %v302 = vsel %vm142, %v110, %v270
  %v303 = vsel %vm143, %v111, %v271
  %v304 = vsel %vm144, %v112, %v272
  %v305 = vsel %vm145, %v113, %v273
  %v306 = vsel %vm146, %v114, %v274
  %v307 = vsel %vm147, %v115, %v275
  %v308 = vsel %vm148, %v116, %v276
  %v309 = vsel %vm149, %v117, %v277
  %v310 = vsel %vm150, %v118, %v278
  %v311 = vsel %vm151, %v119, %v279
  %v312 = vsel %vm152, %v120, %v280
  %v313 = vsel %vm153, %v121, %v281
  %v314 = vsel %vm154, %v122, %v282
  %v315 = vsel %vm155, %v123, %v283
  %v316 = vsel %vm156, %v124, %v284
  %v317 = vsel %vm157, %v125, %v285
  %v318 = vsel %vm158, %v126, %v286
  %v319 = vsel %vm159, %v127, %v287
  %v320 = vsel %vm160, %v128, %v288
  %v321 = vsel %vm161, %v129, %v289
  %v322 = vsel %vm162, %v130, %v290
  %v323 = vsel %vm163, %v131, %v291
  %v324 = vsel %vm164, %v132, %v292
  %v325 = vsel %vm165, %v133, %v293
  %v326 = vsel %vm166, %v134, %v294
  %v327 = vsel %vm167, %v135, %v295
  %v328 = vsel %vm168, %v136, %v296
  %v329 = vsel %vm169, %v137, %v297
  %v330 = vsel %vm170, %v138, %v298
  %v331 = vsel %vm171, %v139, %v299
  %v332 = vpack.c.bf16 %v301, %v300
  %v333 = vpack.c.bf16 %v303, %v302
  %v334 = vpack.c.bf16 %v305, %v304
  %v335 = vpack.c.bf16 %v307, %v306
  %v336 = vpack.c.bf16 %v309, %v308
  %v337 = vpack.c.bf16 %v311, %v310
  %v338 = vpack.c.bf16 %v313, %v312
  %v339 = vpack.c.bf16 %v315, %v314
  %v340 = vpack.c.bf16 %v317, %v316
  %v341 = vpack.c.bf16 %v319, %v318
  %v342 = vpack.c.bf16 %v321, %v320
  %v343 = vpack.c.bf16 %v323, %v322
  %v344 = vpack.c.bf16 %v325, %v324
  %v345 = vpack.c.bf16 %v327, %v326
  %v346 = vpack.c.bf16 %v329, %v328
  %v347 = vpack.c.bf16 %v331, %v330
  %348 = vst [vmem:[%s2] sm:$0xff] %v332
  %349 = vst [vmem:[%s2 + $0x8] sm:$0xff] %v333
  %350 = vst [vmem:[%s2 + $0x10] sm:$0xff] %v334
  %351 = vst [vmem:[%s2 + $0x18] sm:$0xff] %v335
  %352 = vst [vmem:[%s2 + $0x20] sm:$0xff] %v336
  %353 = vst [vmem:[%s2 + $0x28] sm:$0xff] %v337
  %354 = vst [vmem:[%s2 + $0x30] sm:$0xff] %v338
  %355 = vst [vmem:[%s2 + $0x38] sm:$0xff] %v339
  %356 = vst [vmem:[%s2 + $0x40] sm:$0xff] %v340
  %357 = vst [vmem:[%s2 + $0x48] sm:$0xff] %v341
  %358 = vst [vmem:[%s2 + $0x50] sm:$0xff] %v342
  %359 = vst [vmem:[%s2 + $0x58] sm:$0xff] %v343
  %360 = vst [vmem:[%s2 + $0x60] sm:$0xff] %v344
  %361 = vst [vmem:[%s2 + $0x68] sm:$0xff] %v345
  %362 = vst [vmem:[%s2 + $0x70] sm:$0xff] %v346
  %363 = vst [vmem:[%s2 + $0x78] sm:$0xff] %v347
  // Predicated region
  $region10: #{generator_forward.16} parent=0 // pred_check
    _
  $region11: #{generator_forward.16} parent=0 // pred_check_branch
    %365 = sbr.rel (0) target = $region13
  $region12: #{generator_forward.16} parent=0 // pred_region
    _
  $region13: #{generator_forward.16} parent=0 // pred_fallthru
    _
  // Predicated region
  $region14: #{generator_forward.16} parent=0 // pred_check
    _
  $region15: #{generator_forward.16} parent=0 // pred_check_branch
    %367 = sbr.rel (0) target = $region17
  $region16: #{generator_forward.16} parent=0 // pred_region
    _
  $region17: #{generator_forward.16} parent=0 // pred_fallthru
    _

// kernel: generator_forward.15
$region0: #{generator_forward.15}
  #allocation0 [shape = 'u32[]', space=smem, size = 0x4, offset = 0x4, fixed_abs, tag = 'smem constant byte address 0x4 - core index']
  #allocation1 [shape = 'u32[72,128]{1,0:T(1,128)}', space=vmem, size = 0x9000, scoped, tag = 'internal scratch']
  %s0 = inlined_call_operand.vmem [shape: f32[128,256], index: 0, kind: input, shape index: {}]
  %s1 = inlined_call_operand.vmem [shape: f32[2,256], index: 1, kind: output, shape index: {}]
  %s2 = sld [smem:[#allocation0]]
  $region18: #{generator_forward.15} parent=0
    _
  %s4 = ssub.s32 1, %s2
  %s5 = scalar_select 0, %s4, %s2
  // Predicated region
  $region2: #{generator_forward.15} parent=0 // pred_check
    _
  $region3: #{generator_forward.15} parent=0 // pred_check_branch
    %7 = sbr.rel (0) target = $region5
  $region4: #{generator_forward.15} parent=0 // pred_region
    _
  $region5: #{generator_forward.15} parent=0 // pred_fallthru
    _
  %p8 = scmp.eq.s32.totalorder 0, 0
  // Predicated region
  $region6: #{generator_forward.15} parent=0 // pred_check
    %p9 = pneg %p8
  $region7: #{generator_forward.15} parent=0 // pred_check_branch
    %11 = sbr.rel (%p9) target = $region9
  $region8: #{generator_forward.15} parent=0 // pred_region
    %12 = vst [vmem:[%s1] sm:$0xf] 0.0
  $region9: #{generator_forward.15} parent=0 // pred_fallthru
    _
  %v13 = vld [vmem:[%s0] sm:$0xff]
  %v14 = vld [vmem:[%s0 + $0x8] sm:$0xff]
  %v15 = vld [vmem:[%s0 + $0x10] sm:$0xff]
  %v16 = vld [vmem:[%s0 + $0x18] sm:$0xff]
  %v17 = vld [vmem:[%s0 + $0x20] sm:$0xff]
  %v18 = vld [vmem:[%s0 + $0x28] sm:$0xff]
  %v19 = vld [vmem:[%s0 + $0x30] sm:$0xff]
  %v20 = vld [vmem:[%s0 + $0x38] sm:$0xff]
  %v21 = vld [vmem:[%s0 + $0x40] sm:$0xff]
  %v22 = vld [vmem:[%s0 + $0x48] sm:$0xff]
  %v23 = vld [vmem:[%s0 + $0x50] sm:$0xff]
  %v24 = vld [vmem:[%s0 + $0x58] sm:$0xff]
  %v25 = vld [vmem:[%s0 + $0x60] sm:$0xff]
  %v26 = vld [vmem:[%s0 + $0x68] sm:$0xff]
  %v27 = vld [vmem:[%s0 + $0x70] sm:$0xff]
  %v28 = vld [vmem:[%s0 + $0x78] sm:$0xff]
  %v29 = vld [vmem:[%s0 + $0x80] sm:$0xff]
  %v30 = vld [vmem:[%s0 + $0x88] sm:$0xff]
  %v31 = vld [vmem:[%s0 + $0x90] sm:$0xff]
  %v32 = vld [vmem:[%s0 + $0x98] sm:$0xff]
  %v33 = vld [vmem:[%s0 + $0xa0] sm:$0xff]
  %v34 = vld [vmem:[%s0 + $0xa8] sm:$0xff]
  %v35 = vld [vmem:[%s0 + $0xb0] sm:$0xff]
  %v36 = vld [vmem:[%s0 + $0xb8] sm:$0xff]
  %v37 = vld [vmem:[%s0 + $0xc0] sm:$0xff]
  %v38 = vld [vmem:[%s0 + $0xc8] sm:$0xff]
  %v39 = vld [vmem:[%s0 + $0xd0] sm:$0xff]
  %v40 = vld [vmem:[%s0 + $0xd8] sm:$0xff]
  %v41 = vld [vmem:[%s0 + $0xe0] sm:$0xff]
  %v42 = vld [vmem:[%s0 + $0xe8] sm:$0xff]
  %v43 = vld [vmem:[%s0 + $0xf0] sm:$0xff]
  %v44 = vld [vmem:[%s0 + $0xf8] sm:$0xff]
  %v45 = vadd.f32 %v13, %v15
  %v46 = vadd.f32 %v45, %v17
  %v47 = vadd.f32 %v46, %v19
  %v48 = vadd.f32 %v47, %v21
  %v49 = vadd.f32 %v48, %v23
  %v50 = vadd.f32 %v49, %v25
  %v51 = vadd.f32 %v50, %v27
  %v52 = vadd.f32 %v51, %v29
  %v53 = vadd.f32 %v52, %v31
  %v54 = vadd.f32 %v53, %v33
  %v55 = vadd.f32 %v54, %v35
  %v56 = vadd.f32 %v55, %v37
  %v57 = vadd.f32 %v56, %v39
  %v58 = vadd.f32 %v57, %v41
  %v59 = vadd.f32 %v58, %v43
  %v60 = vrot.slane %v59, 4
  %v61 = vadd.f32 %v59, %v60
  %v62 = vrot.slane %v61, 2
  %v63 = vadd.f32 %v61, %v62
  %v64 = vrot.slane %v63, 1
  %v65 = vadd.f32 %v63, %v64
  %v66 = vadd.f32 %v14, %v16
  %v67 = vadd.f32 %v66, %v18
  %v68 = vadd.f32 %v67, %v20
  %v69 = vadd.f32 %v68, %v22
  %v70 = vadd.f32 %v69, %v24
  %v71 = vadd.f32 %v70, %v26
  %v72 = vadd.f32 %v71, %v28
  %v73 = vadd.f32 %v72, %v30
  %v74 = vadd.f32 %v73, %v32
  %v75 = vadd.f32 %v74, %v34
  %v76 = vadd.f32 %v75, %v36
  %v77 = vadd.f32 %v76, %v38
  %v78 = vadd.f32 %v77, %v40
  %v79 = vadd.f32 %v78, %v42
  %v80 = vadd.f32 %v79, %v44
  %v81 = vrot.slane %v80, 4
  %v82 = vadd.f32 %v80, %v81
  %v83 = vrot.slane %v82, 2
  %v84 = vadd.f32 %v82, %v83
  %v85 = vrot.slane %v84, 1
  %v86 = vadd.f32 %v84, %v85
  %v87 = vmul.f32 %v13, %v13
  %v88 = vmul.f32 %v14, %v14
  %v89 = vmul.f32 %v15, %v15
  %v90 = vmul.f32 %v16, %v16
  %v91 = vmul.f32 %v17, %v17
  %v92 = vmul.f32 %v18, %v18
  %v93 = vmul.f32 %v19, %v19
  %v94 = vmul.f32 %v20, %v20
  %v95 = vmul.f32 %v21, %v21
  %v96 = vmul.f32 %v22, %v22
  %v97 = vmul.f32 %v23, %v23
  %v98 = vmul.f32 %v24, %v24
  %v99 = vmul.f32 %v25, %v25
  %v100 = vmul.f32 %v26, %v26
  %v101 = vmul.f32 %v27, %v27
  %v102 = vmul.f32 %v28, %v28
  %v103 = vmul.f32 %v29, %v29
  %v104 = vmul.f32 %v30, %v30
  %v105 = vmul.f32 %v31, %v31
  %v106 = vmul.f32 %v32, %v32
  %v107 = vmul.f32 %v33, %v33
  %v108 = vmul.f32 %v34, %v34
  %v109 = vmul.f32 %v35, %v35
  %v110 = vmul.f32 %v36, %v36
  %v111 = vmul.f32 %v37, %v37
  %v112 = vmul.f32 %v38, %v38
  %v113 = vmul.f32 %v39, %v39
  %v114 = vmul.f32 %v40, %v40
  %v115 = vmul.f32 %v41, %v41
  %v116 = vmul.f32 %v42, %v42
  %v117 = vmul.f32 %v43, %v43
  %v118 = vmul.f32 %v44, %v44
  %v119 = vadd.f32 %v87, %v89
  %v120 = vadd.f32 %v119, %v91
  %v121 = vadd.f32 %v120, %v93
  %v122 = vadd.f32 %v121, %v95
  %v123 = vadd.f32 %v122, %v97
  %v124 = vadd.f32 %v123, %v99
  %v125 = vadd.f32 %v124, %v101
  %v126 = vadd.f32 %v125, %v103
  %v127 = vadd.f32 %v126, %v105
  %v128 = vadd.f32 %v127, %v107
  %v129 = vadd.f32 %v128, %v109
  %v130 = vadd.f32 %v129, %v111
  %v131 = vadd.f32 %v130, %v113
  %v132 = vadd.f32 %v131, %v115
  %v133 = vadd.f32 %v132, %v117
  %v134 = vrot.slane %v133, 4
  %v135 = vadd.f32 %v133, %v134
  %v136 = vrot.slane %v135, 2
  %v137 = vadd.f32 %v135, %v136
  %v138 = vrot.slane %v137, 1
  %v139 = vadd.f32 %v137, %v138
  %v140 = vadd.f32 %v88, %v90
  %v141 = vadd.f32 %v140, %v92
  %v142 = vadd.f32 %v141, %v94
  %v143 = vadd.f32 %v142, %v96
  %v144 = vadd.f32 %v143, %v98
  %v145 = vadd.f32 %v144, %v100
  %v146 = vadd.f32 %v145, %v102
  %v147 = vadd.f32 %v146, %v104
  %v148 = vadd.f32 %v147, %v106
  %v149 = vadd.f32 %v148, %v108
  %v150 = vadd.f32 %v149, %v110
  %v151 = vadd.f32 %v150, %v112
  %v152 = vadd.f32 %v151, %v114
  %v153 = vadd.f32 %v152, %v116
  %v154 = vadd.f32 %v153, %v118
  %v155 = vrot.slane %v154, 4
  %v156 = vadd.f32 %v154, %v155
  %v157 = vrot.slane %v156, 2
  %v158 = vadd.f32 %v156, %v157
  %v159 = vrot.slane %v158, 1
  %v160 = vadd.f32 %v158, %v159
  %v161 = vld [vmem:[%s1] sm:$0xf]
  %vm162 = vcmask 1040384
  %v163 = vsel %vm162, %v65, %v139
  %v164 = vsel %vm162, %v86, %v160
  %v167 = vrot.slane %v164, 6
  %vm168 = vcmask 1041408
  %v169 = vsel %vm168, %v163, %v167
  %v171 = vadd.f32 %v161, %v169
  %172 = vst [vmem:[%s1] sm:$0xf] %v171
  // Predicated region
  $region10: #{generator_forward.15} parent=0 // pred_check
    _
  $region11: #{generator_forward.15} parent=0 // pred_check_branch
    %174 = sbr.rel (0) target = $region13
  $region12: #{generator_forward.15} parent=0 // pred_region
    _
  $region13: #{generator_forward.15} parent=0 // pred_fallthru
    _
  // Predicated region
  $region14: #{generator_forward.15} parent=0 // pred_check
    _
  $region15: #{generator_forward.15} parent=0 // pred_check_branch
    %176 = sbr.rel (0) target = $region17
  $region16: #{generator_forward.15} parent=0 // pred_region
    _
  $region17: #{generator_forward.15} parent=0 // pred_fallthru
    _

// kernel: generator_forward.17
$region0: #{generator_forward.17}
  #allocation0 [shape = 'u32[]', space=smem, size = 0x4, offset = 0x4, fixed_abs, tag = 'smem constant byte address 0x4 - core index']
  #allocation1 [shape = 'u32[72,128]{1,0:T(1,128)}', space=vmem, size = 0x9000, scoped, tag = 'internal scratch']
  #allocation2 [shape = 'f32[128,512]{1,0:T(8,128)}', space=vmem, size = 0x40000, scoped, tag = 'scratch operand']
  %s0 = inlined_call_operand.vmem [shape: bf16[128,256], index: 0, kind: input, shape index: {}]
  %s1 = inlined_call_operand.vmem [shape: bf16[256,2048], index: 1, kind: input, shape index: {}]
  %s2 = inlined_call_operand.vmem [shape: f32[128,2048], index: 2, kind: output, shape index: {}]
  %s3 = sld [smem:[#allocation0]]
  $region91: #{generator_forward.17} parent=0
    _
  %s5 = ssub.s32 1, %s3
  %s6 = scalar_select 0, %s5, %s3
  $region1: #{generator_forward.17} parent=0
    #allocation3 [shape = 'u8[524288]{0}', space=vmem, size = 0x80000, scoped, tag = 'input window, operand 1']
    #allocation4 [shape = 'u8[524288]{0}', space=vmem, size = 0x80000, scoped, tag = 'output window, operand 0']
    loop: start=0, step=1, limit=6
    $region2: #{generator_forward.17} parent=1 // loop_pre_header
      _
    $region3: #{generator_forward.17} parent=1 // loop_header
      %s8 = sphi 0, %s12
      %p9 = scmp.ge.s32.totalorder %s8, 6
      %s15 = sphi 0, %s34
      %s16 = sphi 0, %s30
      %s17 = sphi 0, %s26
      %s18 = sphi 0, %s15
      %s19 = sphi 0, %s16
      %s20 = sphi 0, %s17
      %s21 = sphi 0, %s18
      %s22 = sphi 0, %s19
      %s23 = sphi 0, %s20
      %s39 = sphi 0, %s41
      %s42 = sphi 0, %s39
      %s43 = sphi 0, %s42
      %s59 = sphi 0, %s43
      %s67 = sphi 0, %s69
      %s70 = sphi 0, %s67
      %s71 = sphi 0, %s70
      %s87 = sphi 0, %s71
      %s95 = sphi 0, %s97
      %s98 = sphi 0, %s95
      %s99 = sphi 0, %s98
      %s115 = sphi 0, %s99
    $region4: #{generator_forward.17} parent=1 // loop_header_branch
      %11 = sbr.rel (%p9) target = $region8
    $region5: #{generator_forward.17} parent=1 // loop_body
      %s13 = ssub.s32 %s8, 1
      %s14 = ssub.s32 %s8, 2
      %s24 = sadd.s32 1, %s17
      %p25 = scmp.ge.s32.totalorder %s24, 1
      %s26 = scalar_select %p25, 0, %s24
      %s27 = sadd.s32 1, %s16
      %s28 = scalar_select %p25, %s27, %s16
      %p29 = scmp.ge.s32.totalorder %s28, 4
      %s30 = scalar_select %p29, 0, %s28
      %s31 = sadd.s32 1, %s15
      %s32 = scalar_select %p29, %s31, %s15
      %p33 = scmp.ge.s32.totalorder %s32, 1
      %s34 = scalar_select %p33, 0, %s32
      %s35 = ssub.s32 %s15, %s34
      %s36 = ssub.s32 %s17, %s26
      %s37 = sor.u32 %s35, %s36
      %p38 = scmp.eq.s32.totalorder %s37, 0
      %s40 = sadd.s32 %s39, 1
      %s41 = scalar_select %p38, %s39, %s40
      %p44 = pneg %p38
      %p45 = scmp.eq.s32.totalorder %s8, 3
      %p46 = por %p44, %p45
      %p47 = scmp.ne.s32.totalorder %s39, %s42
      %p48 = scmp.eq.s32.totalorder %s8, 0
      %p49 = por %p47, %p48
      %p50 = scmp.ne.s32.totalorder %s39, %s42
      %p51 = scmp.eq.s32.totalorder %s13, 3
      %p52 = por %p50, %p51
      %p53 = scmp.ne.s32.totalorder %s42, %s43
      %p54 = scmp.eq.s32.totalorder %s13, 0
      %p55 = por %p53, %p54
      %p56 = scmp.ne.s32.totalorder %s42, %s43
      %p57 = scmp.eq.s32.totalorder %s14, 3
      %p58 = por %p56, %p57
      %p60 = scmp.ne.s32.totalorder %s43, %s59
      %p61 = scmp.eq.s32.totalorder %s14, 0
      %p62 = por %p60, %p61
      %s63 = ssub.s32 %s17, %s26
      %s64 = ssub.s32 %s16, %s30
      %s65 = sor.u32 %s63, %s64
      %p66 = scmp.eq.s32.totalorder %s65, 0
      %s68 = sadd.s32 %s67, 1
      %s69 = scalar_select %p66, %s67, %s68
      %p72 = pneg %p66
      %p73 = scmp.eq.s32.totalorder %s8, 3
      %p74 = por %p72, %p73
      %p75 = scmp.ne.s32.totalorder %s67, %s70
      %p76 = scmp.eq.s32.totalorder %s8, 0
      %p77 = por %p75, %p76
      %p78 = scmp.ne.s32.totalorder %s67, %s70
      %p79 = scmp.eq.s32.totalorder %s13, 3
      %p80 = por %p78, %p79
      %p81 = scmp.ne.s32.totalorder %s70, %s71
      %p82 = scmp.eq.s32.totalorder %s13, 0
      %p83 = por %p81, %p82
      %p84 = scmp.ne.s32.totalorder %s70, %s71
      %p85 = scmp.eq.s32.totalorder %s14, 3
      %p86 = por %p84, %p85
      %p88 = scmp.ne.s32.totalorder %s71, %s87
      %p89 = scmp.eq.s32.totalorder %s14, 0
      %p90 = por %p88, %p89
      %s91 = ssub.s32 %s15, %s34
      %s92 = ssub.s32 %s16, %s30
      %s93 = sor.u32 %s91, %s92
      %p94 = scmp.eq.s32.totalorder %s93, 0
      %s96 = sadd.s32 %s95, 1
      %s97 = scalar_select %p94, %s95, %s96
      %p100 = pneg %p94
      %p101 = scmp.eq.s32.totalorder %s8, 3
      %p102 = por %p100, %p101
      %p103 = scmp.ne.s32.totalorder %s95, %s98
      %p104 = scmp.eq.s32.totalorder %s8, 0
      %p105 = por %p103, %p104
      %p106 = scmp.ne.s32.totalorder %s95, %s98
      %p107 = scmp.eq.s32.totalorder %s13, 3
      %p108 = por %p106, %p107
      %p109 = scmp.ne.s32.totalorder %s98, %s99
      %p110 = scmp.eq.s32.totalorder %s13, 0
      %p111 = por %p109, %p110
      %p112 = scmp.ne.s32.totalorder %s98, %s99
      %p113 = scmp.eq.s32.totalorder %s14, 3
      %p114 = por %p112, %p113
      %p116 = scmp.ne.s32.totalorder %s99, %s115
      %p117 = scmp.eq.s32.totalorder %s14, 0
      %p118 = por %p116, %p117
      %p119 = scmp.le.s32.totalorder 1, %s8
      %p120 = scmp.lt.s32.totalorder %s8, 5
      %p121 = pnand %p119, %p120
      %p122 = pneg %p121
      // Predicated region
      $region9: #{generator_forward.17} parent=5 // pred_check
        _
      $region10: #{generator_forward.17} parent=5 // pred_check_branch
        %124 = sbr.rel (%p121) target = $region12
      $region11: #{generator_forward.17} parent=5 // pred_region
        %s125 = ssub.s32 %s8, 1
        // Predicated region
        $region13: #{generator_forward.17} parent=11 // pred_check
          %p126 = pneg %p55
        $region14: #{generator_forward.17} parent=11 // pred_check_branch
          %128 = sbr.rel (%p126) target = $region16
        $region15: #{generator_forward.17} parent=11 // pred_region
          %s129 = smul.u32 16, %s18
          %s130 = smul.u32 2, %s20
          %p131 = scmp.lt.s32.totalorder %s129, 15
          %s132 = scalar_select %p131, %s129, 15
          %p133 = scmp.lt.s32.totalorder %s130, 1
          %s134 = scalar_select %p133, %s130, 1
          %s135 = smul.addr %s132, 2
          %s136 = sadd.s32 %s134, %s135
          %s137 = smul.addr %s136, 4
          %s138 = scalar_lea.vmem %s0, %s137
          %s139 = smul.u32 16, %s18
          %s140 = smul.u32 2, %s20
        $region16: #{generator_forward.17} parent=11 // pred_fallthru
          _
      $region12: #{generator_forward.17} parent=5 // pred_fallthru
        _
      %p141 = scmp.lt.s32.totalorder %s8, 4
      // Predicated region
      $region17: #{generator_forward.17} parent=5 // pred_check
        %p142 = pneg %p141
      $region18: #{generator_forward.17} parent=5 // pred_check_branch
        %144 = sbr.rel (%p142) target = $region20
      $region19: #{generator_forward.17} parent=5 // pred_region
        // Predicated region
        $region21: #{generator_forward.17} parent=19 // pred_check
          %p145 = pneg %p77
        $region22: #{generator_forward.17} parent=19 // pred_check_branch
          %147 = sbr.rel (%p145) target = $region24
        $region23: #{generator_forward.17} parent=19 // pred_region
          %s148 = sand.u32 %s67, 1
          %s149 = sand.u32 %s67, 1
          %s150 = smul.addr %s149, 512
          %s151 = scalar_lea.vmem [#allocation3], %s150
          %s152 = smul.u32 32, %s17
          %s153 = smul.u32 4, %s16
          %s154 = smul.addr %s152, 16
          %s155 = sadd.s32 %s153, %s154
          %s156 = smul.addr %s155, 4
          %s157 = scalar_lea.vmem %s1, %s156
          // Predicated region
          $region25: #{generator_forward.17} parent=23 // pred_check
            _
          $region26: #{generator_forward.17} parent=23 // pred_check_branch
            %159 = sbr.rel (0) target = $region28
          $region27: #{generator_forward.17} parent=23 // pred_region
            // Predicated region
            $region29: #{generator_forward.17} parent=27 // pred_check
              _
            $region30: #{generator_forward.17} parent=27 // pred_check_branch
              %161 = sbr.rel (0) target = $region32
            $region31: #{generator_forward.17} parent=27 // pred_region
              loop: start=0, step=1, limit=1
              $region33: #{generator_forward.17} parent=31 // loop_pre_header
                _
              $region34: #{generator_forward.17} parent=31 // loop_header
                %s163 = sphi 0, %s167
                %p164 = scmp.ge.s32.totalorder %s163, 1
                %s168 = sphi %s157, %s157
                %s169 = sphi %s151, %s151
              $region35: #{generator_forward.17} parent=31 // loop_header_branch
                %166 = sbr.rel (%p164) target = $region39
              $region36: #{generator_forward.17} parent=31 // loop_body
                %v170 = vld [vmem:[%s168] sm:$0xff]
                %171 = vst [vmem:[%s169] sm:$0xff] %v170
                %v172 = vld [vmem:[%s168 + $0x8] sm:$0xff]
                %173 = vst [vmem:[%s169 + $0x8] sm:$0xff] %v172
                %v174 = vld [vmem:[%s168 + $0x40] sm:$0xff]
                %175 = vst [vmem:[%s169 + $0x10] sm:$0xff] %v174
                %v176 = vld [vmem:[%s168 + $0x48] sm:$0xff]
                %177 = vst [vmem:[%s169 + $0x18] sm:$0xff] %v176
                %v178 = vld [vmem:[%s168 + $0x80] sm:$0xff]
                %179 = vst [vmem:[%s169 + $0x20] sm:$0xff] %v178
                %v180 = vld [vmem:[%s168 + $0x88] sm:$0xff]
                %181 = vst [vmem:[%s169 + $0x28] sm:$0xff] %v180
                %v182 = vld [vmem:[%s168 + $0xc0] sm:$0xff]
                %183 = vst [vmem:[%s169 + $0x30] sm:$0xff] %v182
                %v184 = vld [vmem:[%s168 + $0xc8] sm:$0xff]
                %185 = vst [vmem:[%s169 + $0x38] sm:$0xff] %v184
                %v186 = vld [vmem:[%s168 + $0x100] sm:$0xff]
                %187 = vst [vmem:[%s169 + $0x40] sm:$0xff] %v186
                %v188 = vld [vmem:[%s168 + $0x108] sm:$0xff]
                %189 = vst [vmem:[%s169 + $0x48] sm:$0xff] %v188
                %v190 = vld [vmem:[%s168 + $0x140] sm:$0xff]
                %191 = vst [vmem:[%s169 + $0x50] sm:$0xff] %v190
                %v192 = vld [vmem:[%s168 + $0x148] sm:$0xff]
                %193 = vst [vmem:[%s169 + $0x58] sm:$0xff] %v192
                %v194 = vld [vmem:[%s168 + $0x180] sm:$0xff]
                %195 = vst [vmem:[%s169 + $0x60] sm:$0xff] %v194
                %v196 = vld [vmem:[%s168 + $0x188] sm:$0xff]
                %197 = vst [vmem:[%s169 + $0x68] sm:$0xff] %v196
                %v198 = vld [vmem:[%s168 + $0x1c0] sm:$0xff]
                %199 = vst [vmem:[%s169 + $0x70] sm:$0xff] %v198
                %v200 = vld [vmem:[%s168 + $0x1c8] sm:$0xff]
                %201 = vst [vmem:[%s169 + $0x78] sm:$0xff] %v200
                %v202 = vld [vmem:[%s168 + $0x200] sm:$0xff]
                %203 = vst [vmem:[%s169 + $0x80] sm:$0xff] %v202
                %v204 = vld [vmem:[%s168 + $0x208] sm:$0xff]
                %205 = vst [vmem:[%s169 + $0x88] sm:$0xff] %v204
                %v206 = vld [vmem:[%s168 + $0x240] sm:$0xff]
                %207 = vst [vmem:[%s169 + $0x90] sm:$0xff] %v206
                %v208 = vld [vmem:[%s168 + $0x248] sm:$0xff]
                %209 = vst [vmem:[%s169 + $0x98] sm:$0xff] %v208
                %v210 = vld [vmem:[%s168 + $0x280] sm:$0xff]
                %211 = vst [vmem:[%s169 + $0xa0] sm:$0xff] %v210
                %v212 = vld [vmem:[%s168 + $0x288] sm:$0xff]
                %213 = vst [vmem:[%s169 + $0xa8] sm:$0xff] %v212
                %v214 = vld [vmem:[%s168 + $0x2c0] sm:$0xff]
                %215 = vst [vmem:[%s169 + $0xb0] sm:$0xff] %v214
                %v216 = vld [vmem:[%s168 + $0x2c8] sm:$0xff]
                %217 = vst [vmem:[%s169 + $0xb8] sm:$0xff] %v216
                %v218 = vld [vmem:[%s168 + $0x300] sm:$0xff]
                %219 = vst [vmem:[%s169 + $0xc0] sm:$0xff] %v218
                %v220 = vld [vmem:[%s168 + $0x308] sm:$0xff]
                %221 = vst [vmem:[%s169 + $0xc8] sm:$0xff] %v220
                %v222 = vld [vmem:[%s168 + $0x340] sm:$0xff]
                %223 = vst [vmem:[%s169 + $0xd0] sm:$0xff] %v222
                %v224 = vld [vmem:[%s168 + $0x348] sm:$0xff]
                %225 = vst [vmem:[%s169 + $0xd8] sm:$0xff] %v224
                %v226 = vld [vmem:[%s168 + $0x380] sm:$0xff]
                %227 = vst [vmem:[%s169 + $0xe0] sm:$0xff] %v226
                %v228 = vld [vmem:[%s168 + $0x388] sm:$0xff]
                %229 = vst [vmem:[%s169 + $0xe8] sm:$0xff] %v228
                %v230 = vld [vmem:[%s168 + $0x3c0] sm:$0xff]
                %231 = vst [vmem:[%s169 + $0xf0] sm:$0xff] %v230
                %v232 = vld [vmem:[%s168 + $0x3c8] sm:$0xff]
                %233 = vst [vmem:[%s169 + $0xf8] sm:$0xff] %v232
                %v234 = vld [vmem:[%s168 + $0x400] sm:$0xff]
                %235 = vst [vmem:[%s169 + $0x100] sm:$0xff] %v234
                %v236 = vld [vmem:[%s168 + $0x408] sm:$0xff]
                %237 = vst [vmem:[%s169 + $0x108] sm:$0xff] %v236
                %v238 = vld [vmem:[%s168 + $0x440] sm:$0xff]
                %239 = vst [vmem:[%s169 + $0x110] sm:$0xff] %v238
                %v240 = vld [vmem:[%s168 + $0x448] sm:$0xff]
                %241 = vst [vmem:[%s169 + $0x118] sm:$0xff] %v240
                %v242 = vld [vmem:[%s168 + $0x480] sm:$0xff]
                %243 = vst [vmem:[%s169 + $0x120] sm:$0xff] %v242
                %v244 = vld [vmem:[%s168 + $0x488] sm:$0xff]
                %245 = vst [vmem:[%s169 + $0x128] sm:$0xff] %v244
                %v246 = vld [vmem:[%s168 + $0x4c0] sm:$0xff]
                %247 = vst [vmem:[%s169 + $0x130] sm:$0xff] %v246
                %v248 = vld [vmem:[%s168 + $0x4c8] sm:$0xff]
                %249 = vst [vmem:[%s169 + $0x138] sm:$0xff] %v248
                %v250 = vld [vmem:[%s168 + $0x500] sm:$0xff]
                %251 = vst [vmem:[%s169 + $0x140] sm:$0xff] %v250
                %v252 = vld [vmem:[%s168 + $0x508] sm:$0xff]
                %253 = vst [vmem:[%s169 + $0x148] sm:$0xff] %v252
                %v254 = vld [vmem:[%s168 + $0x540] sm:$0xff]
                %255 = vst [vmem:[%s169 + $0x150] sm:$0xff] %v254
                %v256 = vld [vmem:[%s168 + $0x548] sm:$0xff]
                %257 = vst [vmem:[%s169 + $0x158] sm:$0xff] %v256
                %v258 = vld [vmem:[%s168 + $0x580] sm:$0xff]
                %259 = vst [vmem:[%s169 + $0x160] sm:$0xff] %v258
                %v260 = vld [vmem:[%s168 + $0x588] sm:$0xff]
                %261 = vst [vmem:[%s169 + $0x168] sm:$0xff] %v260
                %v262 = vld [vmem:[%s168 + $0x5c0] sm:$0xff]
                %263 = vst [vmem:[%s169 + $0x170] sm:$0xff] %v262
                %v264 = vld [vmem:[%s168 + $0x5c8] sm:$0xff]
                %265 = vst [vmem:[%s169 + $0x178] sm:$0xff] %v264
                %v266 = vld [vmem:[%s168 + $0x600] sm:$0xff]
                %267 = vst [vmem:[%s169 + $0x180] sm:$0xff] %v266
                %v268 = vld [vmem:[%s168 + $0x608] sm:$0xff]
                %269 = vst [vmem:[%s169 + $0x188] sm:$0xff] %v268
                %v270 = vld [vmem:[%s168 + $0x640] sm:$0xff]
                %271 = vst [vmem:[%s169 + $0x190] sm:$0xff] %v270
                %v272 = vld [vmem:[%s168 + $0x648] sm:$0xff]
                %273 = vst [vmem:[%s169 + $0x198] sm:$0xff] %v272
                %v274 = vld [vmem:[%s168 + $0x680] sm:$0xff]
                %275 = vst [vmem:[%s169 + $0x1a0] sm:$0xff] %v274
                %v276 = vld [vmem:[%s168 + $0x688] sm:$0xff]
                %277 = vst [vmem:[%s169 + $0x1a8] sm:$0xff] %v276
                %v278 = vld [vmem:[%s168 + $0x6c0] sm:$0xff]
                %279 = vst [vmem:[%s169 + $0x1b0] sm:$0xff] %v278
                %v280 = vld [vmem:[%s168 + $0x6c8] sm:$0xff]
                %281 = vst [vmem:[%s169 + $0x1b8] sm:$0xff] %v280
                %v282 = vld [vmem:[%s168 + $0x700] sm:$0xff]
                %283 = vst [vmem:[%s169 + $0x1c0] sm:$0xff] %v282
                %v284 = vld [vmem:[%s168 + $0x708] sm:$0xff]
                %285 = vst [vmem:[%s169 + $0x1c8] sm:$0xff] %v284
                %v286 = vld [vmem:[%s168 + $0x740] sm:$0xff]
                %287 = vst [vmem:[%s169 + $0x1d0] sm:$0xff] %v286
                %v288 = vld [vmem:[%s168 + $0x748] sm:$0xff]
                %289 = vst [vmem:[%s169 + $0x1d8] sm:$0xff] %v288
                %v290 = vld [vmem:[%s168 + $0x780] sm:$0xff]
                %291 = vst [vmem:[%s169 + $0x1e0] sm:$0xff] %v290
                %v292 = vld [vmem:[%s168 + $0x788] sm:$0xff]
                %293 = vst [vmem:[%s169 + $0x1e8] sm:$0xff] %v292
                %v294 = vld [vmem:[%s168 + $0x7c0] sm:$0xff]
                %295 = vst [vmem:[%s169 + $0x1f0] sm:$0xff] %v294
                %v296 = vld [vmem:[%s168 + $0x7c8] sm:$0xff]
                %297 = vst [vmem:[%s169 + $0x1f8] sm:$0xff] %v296
              $region37: #{generator_forward.17} parent=31 // loop_footer
                %s167 = sadd.s32 1, %s163
              $region38: #{generator_forward.17} parent=31 // loop_footer_branch
                %162 = sbr.rel target = $region34
              $region39: #{generator_forward.17} parent=31 // loop_exit
                _
            $region32: #{generator_forward.17} parent=27 // pred_fallthru
              _
            // Predicated region
            $region40: #{generator_forward.17} parent=27 // pred_check
              _
            $region41: #{generator_forward.17} parent=27 // pred_check_branch
              %299 = sbr.rel target = $region43
            $region42: #{generator_forward.17} parent=27 // pred_region
              _
            $region43: #{generator_forward.17} parent=27 // pred_fallthru
              _
          $region28: #{generator_forward.17} parent=23 // pred_fallthru
            _
          %300 = vnop
        $region24: #{generator_forward.17} parent=19 // pred_fallthru
          _
      $region20: #{generator_forward.17} parent=5 // pred_fallthru
        _
      %p301 = scmp.le.s32.totalorder 1, %s8
      %p302 = scmp.lt.s32.totalorder %s8, 5
      %p303 = pnand %p301, %p302
      %p304 = pneg %p303
      // Predicated region
      $region44: #{generator_forward.17} parent=5 // pred_check
        _
      $region45: #{generator_forward.17} parent=5 // pred_check_branch
        %306 = sbr.rel (%p303) target = $region47
      $region46: #{generator_forward.17} parent=5 // pred_region
        %s307 = ssub.s32 %s8, 1
        %s308 = sand.u32 %s70, 1
        %s309 = sand.u32 %s70, 1
        %s310 = smul.addr %s309, 512
        %s311 = scalar_lea.vmem [#allocation3], %s310
        // Predicated region
        $region48: #{generator_forward.17} parent=46 // pred_check
          %p312 = pneg %p83
        $region49: #{generator_forward.17} parent=46 // pred_check_branch
          %314 = sbr.rel (%p312) target = $region51
        $region50: #{generator_forward.17} parent=46 // pred_region
          _
        $region51: #{generator_forward.17} parent=46 // pred_fallthru
          _
        %s315 = smul.u32 16, %s18
        %s316 = smul.u32 2, %s20
        %p317 = scmp.lt.s32.totalorder %s315, 15
        %s318 = scalar_select %p317, %s315, 15
        %p319 = scmp.lt.s32.totalorder %s316, 1
        %s320 = scalar_select %p319, %s316, 1
        %s321 = smul.addr %s318, 2
        %s322 = sadd.s32 %s320, %s321
        %s323 = smul.addr %s322, 4
        %s324 = scalar_lea.vmem %s0, %s323
        %p325 = pneg %p55
        %p326 = pneg %p52
        %s327 = sand.u32 %s70, 1
        %s328 = sand.u32 %s70, 1
        %s329 = smul.addr %s328, 512
        %s330 = scalar_lea.vmem [#allocation3], %s329
        %p331 = pneg %p83
        %p332 = pneg %p80
        %p333 = pneg %p111
        %p334 = pneg %p108
        %s335 = sand.u32 %s98, 1
        %s336 = sand.u32 %s98, 1
        %s337 = smul.addr %s336, 512
        %s338 = scalar_lea.vmem [#allocation4], %s337
        %s339 = smul.u32 16, %s18
        %s340 = smul.u32 2, %s20
        %p341 = scmp.lt.s32.totalorder %s339, 15
        %s342 = scalar_select %p341, %s339, 15
        %p343 = scmp.lt.s32.totalorder %s340, 1
        %s344 = scalar_select %p343, %s340, 1
        %s345 = smul.addr %s342, 2
        %s346 = sadd.s32 %s344, %s345
        %s347 = smul.addr %s346, 4
        %s348 = scalar_lea.vmem %s0, %s347
        %s349 = smul.u32 16, %s18
        %s350 = smul.u32 2, %s20
        %s351 = smul.u32 32, %s20
        %s352 = smul.u32 4, %s19
        %s353 = smul.u32 16, %s18
        %s354 = smul.u32 4, %s19
        %p355 = scmp.eq.s32.totalorder %s20, 0
        // Predicated region
        $region52: #{generator_forward.17} parent=46 // pred_check
          %p356 = pneg %p355
        $region53: #{generator_forward.17} parent=46 // pred_check_branch
          %358 = sbr.rel (%p356) target = $region55
        $region54: #{generator_forward.17} parent=46 // pred_region
          %359 = vst [vmem:[#allocation2] sm:$0xff] 0.0
          %360 = vst [vmem:[#allocation2 + $0x8] sm:$0xff] 0.0
          %361 = vst [vmem:[#allocation2 + $0x10] sm:$0xff] 0.0
          %362 = vst [vmem:[#allocation2 + $0x18] sm:$0xff] 0.0
          %363 = vst [vmem:[#allocation2 + $0x20] sm:$0xff] 0.0
          %364 = vst [vmem:[#allocation2 + $0x28] sm:$0xff] 0.0
          %365 = vst [vmem:[#allocation2 + $0x30] sm:$0xff] 0.0
          %366 = vst [vmem:[#allocation2 + $0x38] sm:$0xff] 0.0
          %367 = vst [vmem:[#allocation2 + $0x40] sm:$0xff] 0.0
          %368 = vst [vmem:[#allocation2 + $0x48] sm:$0xff] 0.0
          %369 = vst [vmem:[#allocation2 + $0x50] sm:$0xff] 0.0
          %370 = vst [vmem:[#allocation2 + $0x58] sm:$0xff] 0.0
          %371 = vst [vmem:[#allocation2 + $0x60] sm:$0xff] 0.0
          %372 = vst [vmem:[#allocation2 + $0x68] sm:$0xff] 0.0
          %373 = vst [vmem:[#allocation2 + $0x70] sm:$0xff] 0.0
          %374 = vst [vmem:[#allocation2 + $0x78] sm:$0xff] 0.0
          %375 = vst [vmem:[#allocation2 + $0x80] sm:$0xff] 0.0
          %376 = vst [vmem:[#allocation2 + $0x88] sm:$0xff] 0.0
          %377 = vst [vmem:[#allocation2 + $0x90] sm:$0xff] 0.0
          %378 = vst [vmem:[#allocation2 + $0x98] sm:$0xff] 0.0
          %379 = vst [vmem:[#allocation2 + $0xa0] sm:$0xff] 0.0
          %380 = vst [vmem:[#allocation2 + $0xa8] sm:$0xff] 0.0
          %381 = vst [vmem:[#allocation2 + $0xb0] sm:$0xff] 0.0
          %382 = vst [vmem:[#allocation2 + $0xb8] sm:$0xff] 0.0
          %383 = vst [vmem:[#allocation2 + $0xc0] sm:$0xff] 0.0
          %384 = vst [vmem:[#allocation2 + $0xc8] sm:$0xff] 0.0
          %385 = vst [vmem:[#allocation2 + $0xd0] sm:$0xff] 0.0
          %386 = vst [vmem:[#allocation2 + $0xd8] sm:$0xff] 0.0
          %387 = vst [vmem:[#allocation2 + $0xe0] sm:$0xff] 0.0
          %388 = vst [vmem:[#allocation2 + $0xe8] sm:$0xff] 0.0
          %389 = vst [vmem:[#allocation2 + $0xf0] sm:$0xff] 0.0
          %390 = vst [vmem:[#allocation2 + $0xf8] sm:$0xff] 0.0
          %391 = vst [vmem:[#allocation2 + $0x100] sm:$0xff] 0.0
          %392 = vst [vmem:[#allocation2 + $0x108] sm:$0xff] 0.0
          %393 = vst [vmem:[#allocation2 + $0x110] sm:$0xff] 0.0
          %394 = vst [vmem:[#allocation2 + $0x118] sm:$0xff] 0.0
          %395 = vst [vmem:[#allocation2 + $0x120] sm:$0xff] 0.0
          %396 = vst [vmem:[#allocation2 + $0x128] sm:$0xff] 0.0
          %397 = vst [vmem:[#allocation2 + $0x130] sm:$0xff] 0.0
          %398 = vst [vmem:[#allocation2 + $0x138] sm:$0xff] 0.0
          %399 = vst [vmem:[#allocation2 + $0x140] sm:$0xff] 0.0
          %400 = vst [vmem:[#allocation2 + $0x148] sm:$0xff] 0.0
          %401 = vst [vmem:[#allocation2 + $0x150] sm:$0xff] 0.0
          %402 = vst [vmem:[#allocation2 + $0x158] sm:$0xff] 0.0
          %403 = vst [vmem:[#allocation2 + $0x160] sm:$0xff] 0.0
          %404 = vst [vmem:[#allocation2 + $0x168] sm:$0xff] 0.0
          %405 = vst [vmem:[#allocation2 + $0x170] sm:$0xff] 0.0
          %406 = vst [vmem:[#allocation2 + $0x178] sm:$0xff] 0.0
          %407 = vst [vmem:[#allocation2 + $0x180] sm:$0xff] 0.0
          %408 = vst [vmem:[#allocation2 + $0x188] sm:$0xff] 0.0
          %409 = vst [vmem:[#allocation2 + $0x190] sm:$0xff] 0.0
          %410 = vst [vmem:[#allocation2 + $0x198] sm:$0xff] 0.0
          %411 = vst [vmem:[#allocation2 + $0x1a0] sm:$0xff] 0.0
          %412 = vst [vmem:[#allocation2 + $0x1a8] sm:$0xff] 0.0
          %413 = vst [vmem:[#allocation2 + $0x1b0] sm:$0xff] 0.0
          %414 = vst [vmem:[#allocation2 + $0x1b8] sm:$0xff] 0.0
          %415 = vst [vmem:[#allocation2 + $0x1c0] sm:$0xff] 0.0
          %416 = vst [vmem:[#allocation2 + $0x1c8] sm:$0xff] 0.0
          %417 = vst [vmem:[#allocation2 + $0x1d0] sm:$0xff] 0.0
          %418 = vst [vmem:[#allocation2 + $0x1d8] sm:$0xff] 0.0
          %419 = vst [vmem:[#allocation2 + $0x1e0] sm:$0xff] 0.0
          %420 = vst [vmem:[#allocation2 + $0x1e8] sm:$0xff] 0.0
          %421 = vst [vmem:[#allocation2 + $0x1f0] sm:$0xff] 0.0
          %422 = vst [vmem:[#allocation2 + $0x1f8] sm:$0xff] 0.0
        $region55: #{generator_forward.17} parent=46 // pred_fallthru
          _
        %v423 = vld [vmem:[#allocation2] sm:$0xff]
        %v424 = vld [vmem:[#allocation2 + $0x8] sm:$0xff]
        %v425 = vld [vmem:[#allocation2 + $0x10] sm:$0xff]
        %v426 = vld [vmem:[#allocation2 + $0x18] sm:$0xff]
        %v427 = vld [vmem:[#allocation2 + $0x20] sm:$0xff]
        %v428 = vld [vmem:[#allocation2 + $0x28] sm:$0xff]
        %v429 = vld [vmem:[#allocation2 + $0x30] sm:$0xff]
        %v430 = vld [vmem:[#allocation2 + $0x38] sm:$0xff]
        %v431 = vld [vmem:[#allocation2 + $0x40] sm:$0xff]
        %v432 = vld [vmem:[#allocation2 + $0x48] sm:$0xff]
        %v433 = vld [vmem:[#allocation2 + $0x50] sm:$0xff]
        %v434 = vld [vmem:[#allocation2 + $0x58] sm:$0xff]
        %v435 = vld [vmem:[#allocation2 + $0x60] sm:$0xff]
        %v436 = vld [vmem:[#allocation2 + $0x68] sm:$0xff]
        %v437 = vld [vmem:[#allocation2 + $0x70] sm:$0xff]
        %v438 = vld [vmem:[#allocation2 + $0x78] sm:$0xff]
        %v439 = vld [vmem:[#allocation2 + $0x80] sm:$0xff]
        %v440 = vld [vmem:[#allocation2 + $0x88] sm:$0xff]
        %v441 = vld [vmem:[#allocation2 + $0x90] sm:$0xff]
        %v442 = vld [vmem:[#allocation2 + $0x98] sm:$0xff]
        %v443 = vld [vmem:[#allocation2 + $0xa0] sm:$0xff]
        %v444 = vld [vmem:[#allocation2 + $0xa8] sm:$0xff]
        %v445 = vld [vmem:[#allocation2 + $0xb0] sm:$0xff]
        %v446 = vld [vmem:[#allocation2 + $0xb8] sm:$0xff]
        %v447 = vld [vmem:[#allocation2 + $0xc0] sm:$0xff]
        %v448 = vld [vmem:[#allocation2 + $0xc8] sm:$0xff]
        %v449 = vld [vmem:[#allocation2 + $0xd0] sm:$0xff]
        %v450 = vld [vmem:[#allocation2 + $0xd8] sm:$0xff]
        %v451 = vld [vmem:[#allocation2 + $0xe0] sm:$0xff]
        %v452 = vld [vmem:[#allocation2 + $0xe8] sm:$0xff]
        %v453 = vld [vmem:[#allocation2 + $0xf0] sm:$0xff]
        %v454 = vld [vmem:[#allocation2 + $0xf8] sm:$0xff]
        %v455 = vld [vmem:[#allocation2 + $0x100] sm:$0xff]
        %v456 = vld [vmem:[#allocation2 + $0x108] sm:$0xff]
        %v457 = vld [vmem:[#allocation2 + $0x110] sm:$0xff]
        %v458 = vld [vmem:[#allocation2 + $0x118] sm:$0xff]
        %v459 = vld [vmem:[#allocation2 + $0x120] sm:$0xff]
        %v460 = vld [vmem:[#allocation2 + $0x128] sm:$0xff]
        %v461 = vld [vmem:[#allocation2 + $0x130] sm:$0xff]
        %v462 = vld [vmem:[#allocation2 + $0x138] sm:$0xff]
        %v463 = vld [vmem:[#allocation2 + $0x140] sm:$0xff]
        %v464 = vld [vmem:[#allocation2 + $0x148] sm:$0xff]
        %v465 = vld [vmem:[#allocation2 + $0x150] sm:$0xff]
        %v466 = vld [vmem:[#allocation2 + $0x158] sm:$0xff]
        %v467 = vld [vmem:[#allocation2 + $0x160] sm:$0xff]
        %v468 = vld [vmem:[#allocation2 + $0x168] sm:$0xff]
        %v469 = vld [vmem:[#allocation2 + $0x170] sm:$0xff]
        %v470 = vld [vmem:[#allocation2 + $0x178] sm:$0xff]
        %v471 = vld [vmem:[#allocation2 + $0x180] sm:$0xff]
        %v472 = vld [vmem:[#allocation2 + $0x188] sm:$0xff]
        %v473 = vld [vmem:[#allocation2 + $0x190] sm:$0xff]
        %v474 = vld [vmem:[#allocation2 + $0x198] sm:$0xff]
        %v475 = vld [vmem:[#allocation2 + $0x1a0] sm:$0xff]
        %v476 = vld [vmem:[#allocation2 + $0x1a8] sm:$0xff]
        %v477 = vld [vmem:[#allocation2 + $0x1b0] sm:$0xff]
        %v478 = vld [vmem:[#allocation2 + $0x1b8] sm:$0xff]
        %v479 = vld [vmem:[#allocation2 + $0x1c0] sm:$0xff]
        %v480 = vld [vmem:[#allocation2 + $0x1c8] sm:$0xff]
        %v481 = vld [vmem:[#allocation2 + $0x1d0] sm:$0xff]
        %v482 = vld [vmem:[#allocation2 + $0x1d8] sm:$0xff]
        %v483 = vld [vmem:[#allocation2 + $0x1e0] sm:$0xff]
        %v484 = vld [vmem:[#allocation2 + $0x1e8] sm:$0xff]
        %v485 = vld [vmem:[#allocation2 + $0x1f0] sm:$0xff]
        %v486 = vld [vmem:[#allocation2 + $0x1f8] sm:$0xff]
        %v487 = vld [vmem:[%s348] sm:$0xff]
        %v488 = vld [vmem:[%s348 + $0x8] sm:$0xff]
        %v489 = vld [vmem:[%s348 + $0x10] sm:$0xff]
        %v490 = vld [vmem:[%s348 + $0x18] sm:$0xff]
        %v491 = vld [vmem:[%s348 + $0x20] sm:$0xff]
        %v492 = vld [vmem:[%s348 + $0x28] sm:$0xff]
        %v493 = vld [vmem:[%s348 + $0x30] sm:$0xff]
        %v494 = vld [vmem:[%s348 + $0x38] sm:$0xff]
        %v495 = vld [vmem:[%s348 + $0x40] sm:$0xff]
        %v496 = vld [vmem:[%s348 + $0x48] sm:$0xff]
        %v497 = vld [vmem:[%s348 + $0x50] sm:$0xff]
        %v498 = vld [vmem:[%s348 + $0x58] sm:$0xff]
        %v499 = vld [vmem:[%s348 + $0x60] sm:$0xff]
        %v500 = vld [vmem:[%s348 + $0x68] sm:$0xff]
        %v501 = vld [vmem:[%s348 + $0x70] sm:$0xff]
        %v502 = vld [vmem:[%s348 + $0x78] sm:$0xff]
        %v503 = vld [vmem:[%s311] sm:$0xff]
        %v504 = vld [vmem:[%s311 + $0x8] sm:$0xff]
        %v505 = vld [vmem:[%s311 + $0x10] sm:$0xff]
        %v506 = vld [vmem:[%s311 + $0x18] sm:$0xff]
        %v507 = vld [vmem:[%s311 + $0x20] sm:$0xff]
        %v508 = vld [vmem:[%s311 + $0x28] sm:$0xff]
        %v509 = vld [vmem:[%s311 + $0x30] sm:$0xff]
        %v510 = vld [vmem:[%s311 + $0x38] sm:$0xff]
        %v511 = vld [vmem:[%s311 + $0x40] sm:$0xff]
        %v512 = vld [vmem:[%s311 + $0x48] sm:$0xff]
        %v513 = vld [vmem:[%s311 + $0x50] sm:$0xff]
        %v514 = vld [vmem:[%s311 + $0x58] sm:$0xff]
        %v515 = vld [vmem:[%s311 + $0x60] sm:$0xff]
        %v516 = vld [vmem:[%s311 + $0x68] sm:$0xff]
        %v517 = vld [vmem:[%s311 + $0x70] sm:$0xff]
        %v518 = vld [vmem:[%s311 + $0x78] sm:$0xff]
        %v519 = vld [vmem:[%s311 + $0x80] sm:$0xff]
        %v520 = vld [vmem:[%s311 + $0x88] sm:$0xff]
        %v521 = vld [vmem:[%s311 + $0x90] sm:$0xff]
        %v522 = vld [vmem:[%s311 + $0x98] sm:$0xff]
        %v523 = vld [vmem:[%s311 + $0xa0] sm:$0xff]
        %v524 = vld [vmem:[%s311 + $0xa8] sm:$0xff]
        %v525 = vld [vmem:[%s311 + $0xb0] sm:$0xff]
        %v526 = vld [vmem:[%s311 + $0xb8] sm:$0xff]
        %v527 = vld [vmem:[%s311 + $0xc0] sm:$0xff]
        %v528 = vld [vmem:[%s311 + $0xc8] sm:$0xff]
        %v529 = vld [vmem:[%s311 + $0xd0] sm:$0xff]
        %v530 = vld [vmem:[%s311 + $0xd8] sm:$0xff]
        %v531 = vld [vmem:[%s311 + $0xe0] sm:$0xff]
        %v532 = vld [vmem:[%s311 + $0xe8] sm:$0xff]
        %v533 = vld [vmem:[%s311 + $0xf0] sm:$0xff]
        %v534 = vld [vmem:[%s311 + $0xf8] sm:$0xff]
        %v535 = vld [vmem:[%s311 + $0x100] sm:$0xff]
        %v536 = vld [vmem:[%s311 + $0x108] sm:$0xff]
        %v537 = vld [vmem:[%s311 + $0x110] sm:$0xff]
        %v538 = vld [vmem:[%s311 + $0x118] sm:$0xff]
        %v539 = vld [vmem:[%s311 + $0x120] sm:$0xff]
        %v540 = vld [vmem:[%s311 + $0x128] sm:$0xff]
        %v541 = vld [vmem:[%s311 + $0x130] sm:$0xff]
        %v542 = vld [vmem:[%s311 + $0x138] sm:$0xff]
        %v543 = vld [vmem:[%s311 + $0x140] sm:$0xff]
        %v544 = vld [vmem:[%s311 + $0x148] sm:$0xff]
        %v545 = vld [vmem:[%s311 + $0x150] sm:$0xff]
        %v546 = vld [vmem:[%s311 + $0x158] sm:$0xff]
        %v547 = vld [vmem:[%s311 + $0x160] sm:$0xff]
        %v548 = vld [vmem:[%s311 + $0x168] sm:$0xff]
        %v549 = vld [vmem:[%s311 + $0x170] sm:$0xff]
        %v550 = vld [vmem:[%s311 + $0x178] sm:$0xff]
        %v551 = vld [vmem:[%s311 + $0x180] sm:$0xff]
        %v552 = vld [vmem:[%s311 + $0x188] sm:$0xff]
        %v553 = vld [vmem:[%s311 + $0x190] sm:$0xff]
        %v554 = vld [vmem:[%s311 + $0x198] sm:$0xff]
        %v555 = vld [vmem:[%s311 + $0x1a0] sm:$0xff]
        %v556 = vld [vmem:[%s311 + $0x1a8] sm:$0xff]
        %v557 = vld [vmem:[%s311 + $0x1b0] sm:$0xff]
        %v558 = vld [vmem:[%s311 + $0x1b8] sm:$0xff]
        %v559 = vld [vmem:[%s311 + $0x1c0] sm:$0xff]
        %v560 = vld [vmem:[%s311 + $0x1c8] sm:$0xff]
        %v561 = vld [vmem:[%s311 + $0x1d0] sm:$0xff]
        %v562 = vld [vmem:[%s311 + $0x1d8] sm:$0xff]
        %v563 = vld [vmem:[%s311 + $0x1e0] sm:$0xff]
        %v564 = vld [vmem:[%s311 + $0x1e8] sm:$0xff]
        %v565 = vld [vmem:[%s311 + $0x1f0] sm:$0xff]
        %v566 = vld [vmem:[%s311 + $0x1f8] sm:$0xff]
        %v583 = vunpack.c.l.b16 %v487
        %v584 = vunpack.c.h.b16 %v487
        %v585 = vunpack.c.l.b16 %v488
        %v586 = vunpack.c.h.b16 %v488
        %v587 = vunpack.c.l.b16 %v489
        %v588 = vunpack.c.h.b16 %v489
        %v589 = vunpack.c.l.b16 %v490
        %v590 = vunpack.c.h.b16 %v490
        %v591 = vunpack.c.l.b16 %v491
        %v592 = vunpack.c.h.b16 %v491
        %v593 = vunpack.c.l.b16 %v492
        %v594 = vunpack.c.h.b16 %v492
        %v595 = vunpack.c.l.b16 %v493
        %v596 = vunpack.c.h.b16 %v493
        %v597 = vunpack.c.l.b16 %v494
        %v598 = vunpack.c.h.b16 %v494
        %v599 = vunpack.c.l.b16 %v495
        %v600 = vunpack.c.h.b16 %v495
        %v601 = vunpack.c.l.b16 %v496
        %v602 = vunpack.c.h.b16 %v496
        %v603 = vunpack.c.l.b16 %v497
        %v604 = vunpack.c.h.b16 %v497
        %v605 = vunpack.c.l.b16 %v498
        %v606 = vunpack.c.h.b16 %v498
        %v607 = vunpack.c.l.b16 %v499
        %v608 = vunpack.c.h.b16 %v499
        %v609 = vunpack.c.l.b16 %v500
        %v610 = vunpack.c.h.b16 %v500
        %v611 = vunpack.c.l.b16 %v501
        %v612 = vunpack.c.h.b16 %v501
        %v613 = vunpack.c.l.b16 %v502
        %v614 = vunpack.c.h.b16 %v502
        %v615 = vpack.c.b16 %v585, %v583
        %v616 = vpack.c.b16 %v586, %v584
        %v617 = vpack.c.b16 %v589, %v587
        %v618 = vpack.c.b16 %v590, %v588
        %v619 = vpack.c.b16 %v593, %v591
        %v620 = vpack.c.b16 %v594, %v592
        %v621 = vpack.c.b16 %v597, %v595
        %v622 = vpack.c.b16 %v598, %v596
        %v623 = vpack.c.b16 %v601, %v599
        %v624 = vpack.c.b16 %v602, %v600
        %v625 = vpack.c.b16 %v605, %v603
        %v626 = vpack.c.b16 %v606, %v604
        %v627 = vpack.c.b16 %v609, %v607
        %v628 = vpack.c.b16 %v610, %v608
        %v629 = vpack.c.b16 %v613, %v611
        %v630 = vpack.c.b16 %v614, %v612
        %v711 = vunpack.c.l.b16 %v503
        %v712 = vunpack.c.h.b16 %v503
        %v713 = vunpack.c.l.b16 %v504
        %v714 = vunpack.c.h.b16 %v504
        %v715 = vunpack.c.l.b16 %v505
        %v716 = vunpack.c.h.b16 %v505
        %v717 = vunpack.c.l.b16 %v506
        %v718 = vunpack.c.h.b16 %v506
        %v719 = vunpack.c.l.b16 %v507
        %v720 = vunpack.c.h.b16 %v507
        %v721 = vunpack.c.l.b16 %v508
        %v722 = vunpack.c.h.b16 %v508
        %v723 = vunpack.c.l.b16 %v509
        %v724 = vunpack.c.h.b16 %v509
        %v725 = vunpack.c.l.b16 %v510
        %v726 = vunpack.c.h.b16 %v510
        %v727 = vunpack.c.l.b16 %v511
        %v728 = vunpack.c.h.b16 %v511
        %v729 = vunpack.c.l.b16 %v512
        %v730 = vunpack.c.h.b16 %v512
        %v731 = vunpack.c.l.b16 %v513
        %v732 = vunpack.c.h.b16 %v513
        %v733 = vunpack.c.l.b16 %v514
        %v734 = vunpack.c.h.b16 %v514
        %v735 = vunpack.c.l.b16 %v515
        %v736 = vunpack.c.h.b16 %v515
        %v737 = vunpack.c.l.b16 %v516
        %v738 = vunpack.c.h.b16 %v516
        %v739 = vunpack.c.l.b16 %v517
        %v740 = vunpack.c.h.b16 %v517
        %v741 = vunpack.c.l.b16 %v518
        %v742 = vunpack.c.h.b16 %v518
        %v743 = vunpack.c.l.b16 %v519
        %v744 = vunpack.c.h.b16 %v519
        %v745 = vunpack.c.l.b16 %v520
        %v746 = vunpack.c.h.b16 %v520
        %v747 = vunpack.c.l.b16 %v521
        %v748 = vunpack.c.h.b16 %v521
        %v749 = vunpack.c.l.b16 %v522
        %v750 = vunpack.c.h.b16 %v522
        %v751 = vunpack.c.l.b16 %v523
        %v752 = vunpack.c.h.b16 %v523
        %v753 = vunpack.c.l.b16 %v524
        %v754 = vunpack.c.h.b16 %v524
        %v755 = vunpack.c.l.b16 %v525
        %v756 = vunpack.c.h.b16 %v525
        %v757 = vunpack.c.l.b16 %v526
        %v758 = vunpack.c.h.b16 %v526
        %v759 = vunpack.c.l.b16 %v527
        %v760 = vunpack.c.h.b16 %v527
        %v761 = vunpack.c.l.b16 %v528
        %v762 = vunpack.c.h.b16 %v528
        %v763 = vunpack.c.l.b16 %v529
        %v764 = vunpack.c.h.b16 %v529
        %v765 = vunpack.c.l.b16 %v530
        %v766 = vunpack.c.h.b16 %v530
        %v767 = vunpack.c.l.b16 %v531
        %v768 = vunpack.c.h.b16 %v531
        %v769 = vunpack.c.l.b16 %v532
        %v770 = vunpack.c.h.b16 %v532
        %v771 = vunpack.c.l.b16 %v533
        %v772 = vunpack.c.h.b16 %v533
        %v773 = vunpack.c.l.b16 %v534
        %v774 = vunpack.c.h.b16 %v534
        %v775 = vunpack.c.l.b16 %v535
        %v776 = vunpack.c.h.b16 %v535
        %v777 = vunpack.c.l.b16 %v536
        %v778 = vunpack.c.h.b16 %v536
        %v779 = vunpack.c.l.b16 %v537
        %v780 = vunpack.c.h.b16 %v537
        %v781 = vunpack.c.l.b16 %v538
        %v782 = vunpack.c.h.b16 %v538
        %v783 = vunpack.c.l.b16 %v539
        %v784 = vunpack.c.h.b16 %v539
        %v785 = vunpack.c.l.b16 %v540
        %v786 = vunpack.c.h.b16 %v540
        %v787 = vunpack.c.l.b16 %v541
        %v788 = vunpack.c.h.b16 %v541
        %v789 = vunpack.c.l.b16 %v542
        %v790 = vunpack.c.h.b16 %v542
        %v791 = vunpack.c.l.b16 %v543
        %v792 = vunpack.c.h.b16 %v543
        %v793 = vunpack.c.l.b16 %v544
        %v794 = vunpack.c.h.b16 %v544
        %v795 = vunpack.c.l.b16 %v545
        %v796 = vunpack.c.h.b16 %v545
        %v797 = vunpack.c.l.b16 %v546
        %v798 = vunpack.c.h.b16 %v546
        %v799 = vunpack.c.l.b16 %v547
        %v800 = vunpack.c.h.b16 %v547
        %v801 = vunpack.c.l.b16 %v548
        %v802 = vunpack.c.h.b16 %v548
        %v803 = vunpack.c.l.b16 %v549
        %v804 = vunpack.c.h.b16 %v549
        %v805 = vunpack.c.l.b16 %v550
        %v806 = vunpack.c.h.b16 %v550
        %v807 = vunpack.c.l.b16 %v551
        %v808 = vunpack.c.h.b16 %v551
        %v809 = vunpack.c.l.b16 %v552
        %v810 = vunpack.c.h.b16 %v552
        %v811 = vunpack.c.l.b16 %v553
        %v812 = vunpack.c.h.b16 %v553
        %v813 = vunpack.c.l.b16 %v554
        %v814 = vunpack.c.h.b16 %v554
        %v815 = vunpack.c.l.b16 %v555
        %v816 = vunpack.c.h.b16 %v555
        %v817 = vunpack.c.l.b16 %v556
        %v818 = vunpack.c.h.b16 %v556
        %v819 = vunpack.c.l.b16 %v557
        %v820 = vunpack.c.h.b16 %v557
        %v821 = vunpack.c.l.b16 %v558
        %v822 = vunpack.c.h.b16 %v558
        %v823 = vunpack.c.l.b16 %v559
        %v824 = vunpack.c.h.b16 %v559
        %v825 = vunpack.c.l.b16 %v560
        %v826 = vunpack.c.h.b16 %v560
        %v827 = vunpack.c.l.b16 %v561
        %v828 = vunpack.c.h.b16 %v561
        %v829 = vunpack.c.l.b16 %v562
        %v830 = vunpack.c.h.b16 %v562
        %v831 = vunpack.c.l.b16 %v563
        %v832 = vunpack.c.h.b16 %v563
        %v833 = vunpack.c.l.b16 %v564
        %v834 = vunpack.c.h.b16 %v564
        %v835 = vunpack.c.l.b16 %v565
        %v836 = vunpack.c.h.b16 %v565
        %v837 = vunpack.c.l.b16 %v566
        %v838 = vunpack.c.h.b16 %v566
        %v839 = vpack.c.b16 %v715, %v711
        %v840 = vpack.c.b16 %v716, %v712
        %v841 = vpack.c.b16 %v717, %v713
        %v842 = vpack.c.b16 %v718, %v714
        %v843 = vpack.c.b16 %v723, %v719
        %v844 = vpack.c.b16 %v724, %v720
        %v845 = vpack.c.b16 %v725, %v721
        %v846 = vpack.c.b16 %v726, %v722
        %v847 = vpack.c.b16 %v731, %v727
        %v848 = vpack.c.b16 %v732, %v728
        %v849 = vpack.c.b16 %v733, %v729
        %v850 = vpack.c.b16 %v734, %v730
        %v851 = vpack.c.b16 %v739, %v735
        %v852 = vpack.c.b16 %v740, %v736
        %v853 = vpack.c.b16 %v741, %v737
        %v854 = vpack.c.b16 %v742, %v738
        %v855 = vpack.c.b16 %v747, %v743
        %v856 = vpack.c.b16 %v748, %v744
        %v857 = vpack.c.b16 %v749, %v745
        %v858 = vpack.c.b16 %v750, %v746
        %v859 = vpack.c.b16 %v755, %v751
        %v860 = vpack.c.b16 %v756, %v752
        %v861 = vpack.c.b16 %v757, %v753
        %v862 = vpack.c.b16 %v758, %v754
        %v863 = vpack.c.b16 %v763, %v759
        %v864 = vpack.c.b16 %v764, %v760
        %v865 = vpack.c.b16 %v765, %v761
        %v866 = vpack.c.b16 %v766, %v762
        %v867 = vpack.c.b16 %v771, %v767
        %v868 = vpack.c.b16 %v772, %v768
        %v869 = vpack.c.b16 %v773, %v769
        %v870 = vpack.c.b16 %v774, %v770
        %v871 = vpack.c.b16 %v779, %v775
        %v872 = vpack.c.b16 %v780, %v776
        %v873 = vpack.c.b16 %v781, %v777
        %v874 = vpack.c.b16 %v782, %v778
        %v875 = vpack.c.b16 %v787, %v783
        %v876 = vpack.c.b16 %v788, %v784
        %v877 = vpack.c.b16 %v789, %v785
        %v878 = vpack.c.b16 %v790, %v786
        %v879 = vpack.c.b16 %v795, %v791
        %v880 = vpack.c.b16 %v796, %v792
        %v881 = vpack.c.b16 %v797, %v793
        %v882 = vpack.c.b16 %v798, %v794
        %v883 = vpack.c.b16 %v803, %v799
        %v884 = vpack.c.b16 %v804, %v800
        %v885 = vpack.c.b16 %v805, %v801
        %v886 = vpack.c.b16 %v806, %v802
        %v887 = vpack.c.b16 %v811, %v807
        %v888 = vpack.c.b16 %v812, %v808
        %v889 = vpack.c.b16 %v813, %v809
        %v890 = vpack.c.b16 %v814, %v810
        %v891 = vpack.c.b16 %v819, %v815
        %v892 = vpack.c.b16 %v820, %v816
        %v893 = vpack.c.b16 %v821, %v817
        %v894 = vpack.c.b16 %v822, %v818
        %v895 = vpack.c.b16 %v827, %v823
        %v896 = vpack.c.b16 %v828, %v824
        %v897 = vpack.c.b16 %v829, %v825
        %v898 = vpack.c.b16 %v830, %v826
        %v899 = vpack.c.b16 %v835, %v831
        %v900 = vpack.c.b16 %v836, %v832
        %v901 = vpack.c.b16 %v837, %v833
        %v902 = vpack.c.b16 %v838, %v834
        %967 = vmatpush.bf16.msra.mxu0 %v867
        %968 = vmatpush.bf16.msra.mxu0 %v863
        %969 = vmatpush.bf16.msra.mxu0 %v859
        %970 = vmatpush.bf16.msra.mxu0 %v855
        %971 = vmatpush.bf16.msra.mxu0 %v851
        %972 = vmatpush.bf16.msra.mxu0 %v847
        %973 = vmatpush.bf16.msra.mxu0 %v843
        %974 = vmatpush.bf16.msra.mxu0 %v839
        %975 = vmatmul.bf16.gmra.mxu0 %v615
        %v976 = vpop.f32.mrf.mxu0
        %v977 = vadd.f32 0.0, %v976
        %v978 = vpop.f32.mrf.mxu0
        %v979 = vadd.f32 0.0, %v978
        %980 = vmatmul.bf16.gmra.mxu0 %v617
        %v981 = vpop.f32.mrf.mxu0
        %v982 = vadd.f32 0.0, %v981
        %v983 = vpop.f32.mrf.mxu0
        %v984 = vadd.f32 0.0, %v983
        %985 = vmatmul.bf16.gmra.mxu0 %v619
        %v986 = vpop.f32.mrf.mxu0
        %v987 = vadd.f32 0.0, %v986
        %v988 = vpop.f32.mrf.mxu0
        %v989 = vadd.f32 0.0, %v988
        %990 = vmatmul.bf16.gmra.mxu0 %v621
        %v991 = vpop.f32.mrf.mxu0
        %v992 = vadd.f32 0.0, %v991
        %v993 = vpop.f32.mrf.mxu0
        %v994 = vadd.f32 0.0, %v993
        %995 = vmatmul.bf16.gmra.mxu0 %v623
        %v996 = vpop.f32.mrf.mxu0
        %v997 = vadd.f32 0.0, %v996
        %v998 = vpop.f32.mrf.mxu0
        %v999 = vadd.f32 0.0, %v998
        %1000 = vmatmul.bf16.gmra.mxu0 %v625
        %v1001 = vpop.f32.mrf.mxu0
        %v1002 = vadd.f32 0.0, %v1001
        %v1003 = vpop.f32.mrf.mxu0
        %v1004 = vadd.f32 0.0, %v1003
        %1005 = vmatmul.bf16.gmra.mxu0 %v627
        %v1006 = vpop.f32.mrf.mxu0
        %v1007 = vadd.f32 0.0, %v1006
        %v1008 = vpop.f32.mrf.mxu0
        %v1009 = vadd.f32 0.0, %v1008
        %1010 = vmatmul.bf16.gmra.mxu0 %v629
        %v1011 = vpop.f32.mrf.mxu0
        %v1012 = vadd.f32 0.0, %v1011
        %v1013 = vpop.f32.mrf.mxu0
        %v1014 = vadd.f32 0.0, %v1013
        %1015 = vdwg.mxu0
        %1016 = vmatpush.bf16.msra.mxu0 %v899
        %1017 = vmatpush.bf16.msra.mxu0 %v895
        %1018 = vmatpush.bf16.msra.mxu0 %v891
        %1019 = vmatpush.bf16.msra.mxu0 %v887
        %1020 = vmatpush.bf16.msra.mxu0 %v883
        %1021 = vmatpush.bf16.msra.mxu0 %v879
        %1022 = vmatpush.bf16.msra.mxu0 %v875
        %1023 = vmatpush.bf16.msra.mxu0 %v871
        %1024 = vmatmul.bf16.gmra.mxu0 %v616
        %v1025 = vpop.f32.mrf.mxu0
        %v1026 = vadd.f32 %v977, %v1025
        %v1027 = vpop.f32.mrf.mxu0
        %v1028 = vadd.f32 %v979, %v1027
        %1029 = vmatmul.bf16.gmra.mxu0 %v618
        %v1030 = vpop.f32.mrf.mxu0
        %v1031 = vadd.f32 %v982, %v1030
        %v1032 = vpop.f32.mrf.mxu0
        %v1033 = vadd.f32 %v984, %v1032
        %1034 = vmatmul.bf16.gmra.mxu0 %v620
        %v1035 = vpop.f32.mrf.mxu0
        %v1036 = vadd.f32 %v987, %v1035
        %v1037 = vpop.f32.mrf.mxu0
        %v1038 = vadd.f32 %v989, %v1037
        %1039 = vmatmul.bf16.gmra.mxu0 %v622
        %v1040 = vpop.f32.mrf.mxu0
        %v1041 = vadd.f32 %v992, %v1040
        %v1042 = vpop.f32.mrf.mxu0
        %v1043 = vadd.f32 %v994, %v1042
        %1044 = vmatmul.bf16.gmra.mxu0 %v624
        %v1045 = vpop.f32.mrf.mxu0
        %v1046 = vadd.f32 %v997, %v1045
        %v1047 = vpop.f32.mrf.mxu0
        %v1048 = vadd.f32 %v999, %v1047
        %1049 = vmatmul.bf16.gmra.mxu0 %v626
        %v1050 = vpop.f32.mrf.mxu0
        %v1051 = vadd.f32 %v1002, %v1050
        %v1052 = vpop.f32.mrf.mxu0
        %v1053 = vadd.f32 %v1004, %v1052
        %1054 = vmatmul.bf16.gmra.mxu0 %v628
        %v1055 = vpop.f32.mrf.mxu0
        %v1056 = vadd.f32 %v1007, %v1055
        %v1057 = vpop.f32.mrf.mxu0
        %v1058 = vadd.f32 %v1009, %v1057
        %1059 = vmatmul.bf16.gmra.mxu0 %v630
        %v1060 = vpop.f32.mrf.mxu0
        %v1061 = vadd.f32 %v1012, %v1060
        %v1062 = vpop.f32.mrf.mxu0
        %v1063 = vadd.f32 %v1014, %v1062
        %1064 = vdwg.mxu0
        %1065 = vmatpush.bf16.msra.mxu0 %v868
        %1066 = vmatpush.bf16.msra.mxu0 %v864
        %1067 = vmatpush.bf16.msra.mxu0 %v860
        %1068 = vmatpush.bf16.msra.mxu0 %v856
        %1069 = vmatpush.bf16.msra.mxu0 %v852
        %1070 = vmatpush.bf16.msra.mxu0 %v848
        %1071 = vmatpush.bf16.msra.mxu0 %v844
        %1072 = vmatpush.bf16.msra.mxu0 %v840
        %1073 = vmatmul.bf16.gmra.mxu0 %v615
        %v1074 = vpop.f32.mrf.mxu0
        %v1075 = vadd.f32 0.0, %v1074
        %v1076 = vpop.f32.mrf.mxu0
        %v1077 = vadd.f32 0.0, %v1076
        %1078 = vmatmul.bf16.gmra.mxu0 %v617
        %v1079 = vpop.f32.mrf.mxu0
        %v1080 = vadd.f32 0.0, %v1079
        %v1081 = vpop.f32.mrf.mxu0
        %v1082 = vadd.f32 0.0, %v1081
        %1083 = vmatmul.bf16.gmra.mxu0 %v619
        %v1084 = vpop.f32.mrf.mxu0
        %v1085 = vadd.f32 0.0, %v1084
        %v1086 = vpop.f32.mrf.mxu0
        %v1087 = vadd.f32 0.0, %v1086
        %1088 = vmatmul.bf16.gmra.mxu0 %v621
        %v1089 = vpop.f32.mrf.mxu0
        %v1090 = vadd.f32 0.0, %v1089
        %v1091 = vpop.f32.mrf.mxu0
        %v1092 = vadd.f32 0.0, %v1091
        %1093 = vmatmul.bf16.gmra.mxu0 %v623
        %v1094 = vpop.f32.mrf.mxu0
        %v1095 = vadd.f32 0.0, %v1094
        %v1096 = vpop.f32.mrf.mxu0
        %v1097 = vadd.f32 0.0, %v1096
        %1098 = vmatmul.bf16.gmra.mxu0 %v625
        %v1099 = vpop.f32.mrf.mxu0
        %v1100 = vadd.f32 0.0, %v1099
        %v1101 = vpop.f32.mrf.mxu0
        %v1102 = vadd.f32 0.0, %v1101
        %1103 = vmatmul.bf16.gmra.mxu0 %v627
        %v1104 = vpop.f32.mrf.mxu0
        %v1105 = vadd.f32 0.0, %v1104
        %v1106 = vpop.f32.mrf.mxu0
        %v1107 = vadd.f32 0.0, %v1106
        %1108 = vmatmul.bf16.gmra.mxu0 %v629
        %v1109 = vpop.f32.mrf.mxu0
        %v1110 = vadd.f32 0.0, %v1109
        %v1111 = vpop.f32.mrf.mxu0
        %v1112 = vadd.f32 0.0, %v1111
        %1113 = vdwg.mxu0
        %1114 = vmatpush.bf16.msra.mxu0 %v900
        %1115 = vmatpush.bf16.msra.mxu0 %v896
        %1116 = vmatpush.bf16.msra.mxu0 %v892
        %1117 = vmatpush.bf16.msra.mxu0 %v888
        %1118 = vmatpush.bf16.msra.mxu0 %v884
        %1119 = vmatpush.bf16.msra.mxu0 %v880
        %1120 = vmatpush.bf16.msra.mxu0 %v876
        %1121 = vmatpush.bf16.msra.mxu0 %v872
        %1122 = vmatmul.bf16.gmra.mxu0 %v616
        %v1123 = vpop.f32.mrf.mxu0
        %v1124 = vadd.f32 %v1075, %v1123
        %v1125 = vpop.f32.mrf.mxu0
        %v1126 = vadd.f32 %v1077, %v1125
        %1127 = vmatmul.bf16.gmra.mxu0 %v618
        %v1128 = vpop.f32.mrf.mxu0
        %v1129 = vadd.f32 %v1080, %v1128
        %v1130 = vpop.f32.mrf.mxu0
        %v1131 = vadd.f32 %v1082, %v1130
        %1132 = vmatmul.bf16.gmra.mxu0 %v620
        %v1133 = vpop.f32.mrf.mxu0
        %v1134 = vadd.f32 %v1085, %v1133
        %v1135 = vpop.f32.mrf.mxu0
        %v1136 = vadd.f32 %v1087, %v1135
        %1137 = vmatmul.bf16.gmra.mxu0 %v622
        %v1138 = vpop.f32.mrf.mxu0
        %v1139 = vadd.f32 %v1090, %v1138
        %v1140 = vpop.f32.mrf.mxu0
        %v1141 = vadd.f32 %v1092, %v1140
        %1142 = vmatmul.bf16.gmra.mxu0 %v624
        %v1143 = vpop.f32.mrf.mxu0
        %v1144 = vadd.f32 %v1095, %v1143
        %v1145 = vpop.f32.mrf.mxu0
        %v1146 = vadd.f32 %v1097, %v1145
        %1147 = vmatmul.bf16.gmra.mxu0 %v626
        %v1148 = vpop.f32.mrf.mxu0
        %v1149 = vadd.f32 %v1100, %v1148
        %v1150 = vpop.f32.mrf.mxu0
        %v1151 = vadd.f32 %v1102, %v1150
        %1152 = vmatmul.bf16.gmra.mxu0 %v628
        %v1153 = vpop.f32.mrf.mxu0
        %v1154 = vadd.f32 %v1105, %v1153
        %v1155 = vpop.f32.mrf.mxu0
        %v1156 = vadd.f32 %v1107, %v1155
        %1157 = vmatmul.bf16.gmra.mxu0 %v630
        %v1158 = vpop.f32.mrf.mxu0
        %v1159 = vadd.f32 %v1110, %v1158
        %v1160 = vpop.f32.mrf.mxu0
        %v1161 = vadd.f32 %v1112, %v1160
        %1162 = vdwg.mxu0
        %1163 = vmatpush.bf16.msra.mxu0 %v869
        %1164 = vmatpush.bf16.msra.mxu0 %v865
        %1165 = vmatpush.bf16.msra.mxu0 %v861
        %1166 = vmatpush.bf16.msra.mxu0 %v857
        %1167 = vmatpush.bf16.msra.mxu0 %v853
        %1168 = vmatpush.bf16.msra.mxu0 %v849
        %1169 = vmatpush.bf16.msra.mxu0 %v845
        %1170 = vmatpush.bf16.msra.mxu0 %v841
        %1171 = vmatmul.bf16.gmra.mxu0 %v615
        %v1172 = vpop.f32.mrf.mxu0
        %v1173 = vadd.f32 0.0, %v1172
        %v1174 = vpop.f32.mrf.mxu0
        %v1175 = vadd.f32 0.0, %v1174
        %1176 = vmatmul.bf16.gmra.mxu0 %v617
        %v1177 = vpop.f32.mrf.mxu0
        %v1178 = vadd.f32 0.0, %v1177
        %v1179 = vpop.f32.mrf.mxu0
        %v1180 = vadd.f32 0.0, %v1179
        %1181 = vmatmul.bf16.gmra.mxu0 %v619
        %v1182 = vpop.f32.mrf.mxu0
        %v1183 = vadd.f32 0.0, %v1182
        %v1184 = vpop.f32.mrf.mxu0
        %v1185 = vadd.f32 0.0, %v1184
        %1186 = vmatmul.bf16.gmra.mxu0 %v621
        %v1187 = vpop.f32.mrf.mxu0
        %v1188 = vadd.f32 0.0, %v1187
        %v1189 = vpop.f32.mrf.mxu0
        %v1190 = vadd.f32 0.0, %v1189
        %1191 = vmatmul.bf16.gmra.mxu0 %v623
        %v1192 = vpop.f32.mrf.mxu0
        %v1193 = vadd.f32 0.0, %v1192
        %v1194 = vpop.f32.mrf.mxu0
        %v1195 = vadd.f32 0.0, %v1194
        %1196 = vmatmul.bf16.gmra.mxu0 %v625
        %v1197 = vpop.f32.mrf.mxu0
        %v1198 = vadd.f32 0.0, %v1197
        %v1199 = vpop.f32.mrf.mxu0
        %v1200 = vadd.f32 0.0, %v1199
        %1201 = vmatmul.bf16.gmra.mxu0 %v627
        %v1202 = vpop.f32.mrf.mxu0
        %v1203 = vadd.f32 0.0, %v1202
        %v1204 = vpop.f32.mrf.mxu0
        %v1205 = vadd.f32 0.0, %v1204
        %1206 = vmatmul.bf16.gmra.mxu0 %v629
        %v1207 = vpop.f32.mrf.mxu0
        %v1208 = vadd.f32 0.0, %v1207
        %v1209 = vpop.f32.mrf.mxu0
        %v1210 = vadd.f32 0.0, %v1209
        %1211 = vdwg.mxu0
        %1212 = vmatpush.bf16.msra.mxu0 %v901
        %1213 = vmatpush.bf16.msra.mxu0 %v897
        %1214 = vmatpush.bf16.msra.mxu0 %v893
        %1215 = vmatpush.bf16.msra.mxu0 %v889
        %1216 = vmatpush.bf16.msra.mxu0 %v885
        %1217 = vmatpush.bf16.msra.mxu0 %v881
        %1218 = vmatpush.bf16.msra.mxu0 %v877
        %1219 = vmatpush.bf16.msra.mxu0 %v873
        %1220 = vmatmul.bf16.gmra.mxu0 %v616
        %v1221 = vpop.f32.mrf.mxu0
        %v1222 = vadd.f32 %v1173, %v1221
        %v1223 = vpop.f32.mrf.mxu0
        %v1224 = vadd.f32 %v1175, %v1223
        %1225 = vmatmul.bf16.gmra.mxu0 %v618
        %v1226 = vpop.f32.mrf.mxu0
        %v1227 = vadd.f32 %v1178, %v1226
        %v1228 = vpop.f32.mrf.mxu0
        %v1229 = vadd.f32 %v1180, %v1228
        %1230 = vmatmul.bf16.gmra.mxu0 %v620
        %v1231 = vpop.f32.mrf.mxu0
        %v1232 = vadd.f32 %v1183, %v1231
        %v1233 = vpop.f32.mrf.mxu0
        %v1234 = vadd.f32 %v1185, %v1233
        %1235 = vmatmul.bf16.gmra.mxu0 %v622
        %v1236 = vpop.f32.mrf.mxu0
        %v1237 = vadd.f32 %v1188, %v1236
        %v1238 = vpop.f32.mrf.mxu0
        %v1239 = vadd.f32 %v1190, %v1238
        %1240 = vmatmul.bf16.gmra.mxu0 %v624
        %v1241 = vpop.f32.mrf.mxu0
        %v1242 = vadd.f32 %v1193, %v1241
        %v1243 = vpop.f32.mrf.mxu0
        %v1244 = vadd.f32 %v1195, %v1243
        %1245 = vmatmul.bf16.gmra.mxu0 %v626
        %v1246 = vpop.f32.mrf.mxu0
        %v1247 = vadd.f32 %v1198, %v1246
        %v1248 = vpop.f32.mrf.mxu0
        %v1249 = vadd.f32 %v1200, %v1248
        %1250 = vmatmul.bf16.gmra.mxu0 %v628
        %v1251 = vpop.f32.mrf.mxu0
        %v1252 = vadd.f32 %v1203, %v1251
        %v1253 = vpop.f32.mrf.mxu0
        %v1254 = vadd.f32 %v1205, %v1253
        %1255 = vmatmul.bf16.gmra.mxu0 %v630
        %v1256 = vpop.f32.mrf.mxu0
        %v1257 = vadd.f32 %v1208, %v1256
        %v1258 = vpop.f32.mrf.mxu0
        %v1259 = vadd.f32 %v1210, %v1258
        %1260 = vdwg.mxu0
        %1261 = vmatpush.bf16.msra.mxu0 %v870
        %1262 = vmatpush.bf16.msra.mxu0 %v866
        %1263 = vmatpush.bf16.msra.mxu0 %v862
        %1264 = vmatpush.bf16.msra.mxu0 %v858
        %1265 = vmatpush.bf16.msra.mxu0 %v854
        %1266 = vmatpush.bf16.msra.mxu0 %v850
        %1267 = vmatpush.bf16.msra.mxu0 %v846
        %1268 = vmatpush.bf16.msra.mxu0 %v842
        %1269 = vmatmul.bf16.gmra.mxu0 %v615
        %v1270 = vpop.f32.mrf.mxu0
        %v1271 = vadd.f32 0.0, %v1270
        %v1272 = vpop.f32.mrf.mxu0
        %v1273 = vadd.f32 0.0, %v1272
        %1274 = vmatmul.bf16.gmra.mxu0 %v617
        %v1275 = vpop.f32.mrf.mxu0
        %v1276 = vadd.f32 0.0, %v1275
        %v1277 = vpop.f32.mrf.mxu0
        %v1278 = vadd.f32 0.0, %v1277
        %1279 = vmatmul.bf16.gmra.mxu0 %v619
        %v1280 = vpop.f32.mrf.mxu0
        %v1281 = vadd.f32 0.0, %v1280
        %v1282 = vpop.f32.mrf.mxu0
        %v1283 = vadd.f32 0.0, %v1282
        %1284 = vmatmul.bf16.gmra.mxu0 %v621
        %v1285 = vpop.f32.mrf.mxu0
        %v1286 = vadd.f32 0.0, %v1285
        %v1287 = vpop.f32.mrf.mxu0
        %v1288 = vadd.f32 0.0, %v1287
        %1289 = vmatmul.bf16.gmra.mxu0 %v623
        %v1290 = vpop.f32.mrf.mxu0
        %v1291 = vadd.f32 0.0, %v1290
        %v1292 = vpop.f32.mrf.mxu0
        %v1293 = vadd.f32 0.0, %v1292
        %1294 = vmatmul.bf16.gmra.mxu0 %v625
        %v1295 = vpop.f32.mrf.mxu0
        %v1296 = vadd.f32 0.0, %v1295
        %v1297 = vpop.f32.mrf.mxu0
        %v1298 = vadd.f32 0.0, %v1297
        %1299 = vmatmul.bf16.gmra.mxu0 %v627
        %v1300 = vpop.f32.mrf.mxu0
        %v1301 = vadd.f32 0.0, %v1300
        %v1302 = vpop.f32.mrf.mxu0
        %v1303 = vadd.f32 0.0, %v1302
        %1304 = vmatmul.bf16.gmra.mxu0 %v629
        %v1305 = vpop.f32.mrf.mxu0
        %v1306 = vadd.f32 0.0, %v1305
        %v1307 = vpop.f32.mrf.mxu0
        %v1308 = vadd.f32 0.0, %v1307
        %1309 = vdwg.mxu0
        %1310 = vmatpush.bf16.msra.mxu0 %v902
        %1311 = vmatpush.bf16.msra.mxu0 %v898
        %1312 = vmatpush.bf16.msra.mxu0 %v894
        %1313 = vmatpush.bf16.msra.mxu0 %v890
        %1314 = vmatpush.bf16.msra.mxu0 %v886
        %1315 = vmatpush.bf16.msra.mxu0 %v882
        %1316 = vmatpush.bf16.msra.mxu0 %v878
        %1317 = vmatpush.bf16.msra.mxu0 %v874
        %1318 = vmatmul.bf16.gmra.mxu0 %v616
        %v1319 = vpop.f32.mrf.mxu0
        %v1320 = vadd.f32 %v1271, %v1319
        %v1321 = vpop.f32.mrf.mxu0
        %v1322 = vadd.f32 %v1273, %v1321
        %1323 = vmatmul.bf16.gmra.mxu0 %v618
        %v1324 = vpop.f32.mrf.mxu0
        %v1325 = vadd.f32 %v1276, %v1324
        %v1326 = vpop.f32.mrf.mxu0
        %v1327 = vadd.f32 %v1278, %v1326
        %1328 = vmatmul.bf16.gmra.mxu0 %v620
        %v1329 = vpop.f32.mrf.mxu0
        %v1330 = vadd.f32 %v1281, %v1329
        %v1331 = vpop.f32.mrf.mxu0
        %v1332 = vadd.f32 %v1283, %v1331
        %1333 = vmatmul.bf16.gmra.mxu0 %v622
        %v1334 = vpop.f32.mrf.mxu0
        %v1335 = vadd.f32 %v1286, %v1334
        %v1336 = vpop.f32.mrf.mxu0
        %v1337 = vadd.f32 %v1288, %v1336
        %1338 = vmatmul.bf16.gmra.mxu0 %v624
        %v1339 = vpop.f32.mrf.mxu0
        %v1340 = vadd.f32 %v1291, %v1339
        %v1341 = vpop.f32.mrf.mxu0
        %v1342 = vadd.f32 %v1293, %v1341
        %1343 = vmatmul.bf16.gmra.mxu0 %v626
        %v1344 = vpop.f32.mrf.mxu0
        %v1345 = vadd.f32 %v1296, %v1344
        %v1346 = vpop.f32.mrf.mxu0
        %v1347 = vadd.f32 %v1298, %v1346
        %1348 = vmatmul.bf16.gmra.mxu0 %v628
        %v1349 = vpop.f32.mrf.mxu0
        %v1350 = vadd.f32 %v1301, %v1349
        %v1351 = vpop.f32.mrf.mxu0
        %v1352 = vadd.f32 %v1303, %v1351
        %1353 = vmatmul.bf16.gmra.mxu0 %v630
        %v1354 = vpop.f32.mrf.mxu0
        %v1355 = vadd.f32 %v1306, %v1354
        %v1356 = vpop.f32.mrf.mxu0
        %v1357 = vadd.f32 %v1308, %v1356
        %1358 = vdwg.mxu0
        %v1359 = vadd.f32 %v423, %v1026
        %v1360 = vadd.f32 %v424, %v1124
        %v1361 = vadd.f32 %v425, %v1222
        %v1362 = vadd.f32 %v426, %v1320
        %v1363 = vadd.f32 %v427, %v1028
        %v1364 = vadd.f32 %v428, %v1126
        %v1365 = vadd.f32 %v429, %v1224
        %v1366 = vadd.f32 %v430, %v1322
        %v1367 = vadd.f32 %v431, %v1031
        %v1368 = vadd.f32 %v432, %v1129
        %v1369 = vadd.f32 %v433, %v1227
        %v1370 = vadd.f32 %v434, %v1325
        %v1371 = vadd.f32 %v435, %v1033
        %v1372 = vadd.f32 %v436, %v1131
        %v1373 = vadd.f32 %v437, %v1229
        %v1374 = vadd.f32 %v438, %v1327
        %v1375 = vadd.f32 %v439, %v1036
        %v1376 = vadd.f32 %v440, %v1134
        %v1377 = vadd.f32 %v441, %v1232
        %v1378 = vadd.f32 %v442, %v1330
        %v1379 = vadd.f32 %v443, %v1038
        %v1380 = vadd.f32 %v444, %v1136
        %v1381 = vadd.f32 %v445, %v1234
        %v1382 = vadd.f32 %v446, %v1332
        %v1383 = vadd.f32 %v447, %v1041
        %v1384 = vadd.f32 %v448, %v1139
        %v1385 = vadd.f32 %v449, %v1237
        %v1386 = vadd.f32 %v450, %v1335
        %v1387 = vadd.f32 %v451, %v1043
        %v1388 = vadd.f32 %v452, %v1141
        %v1389 = vadd.f32 %v453, %v1239
        %v1390 = vadd.f32 %v454, %v1337
        %v1391 = vadd.f32 %v455, %v1046
        %v1392 = vadd.f32 %v456, %v1144
        %v1393 = vadd.f32 %v457, %v1242
        %v1394 = vadd.f32 %v458, %v1340
        %v1395 = vadd.f32 %v459, %v1048
        %v1396 = vadd.f32 %v460, %v1146
        %v1397 = vadd.f32 %v461, %v1244
        %v1398 = vadd.f32 %v462, %v1342
        %v1399 = vadd.f32 %v463, %v1051
        %v1400 = vadd.f32 %v464, %v1149
        %v1401 = vadd.f32 %v465, %v1247
        %v1402 = vadd.f32 %v466, %v1345
        %v1403 = vadd.f32 %v467, %v1053
        %v1404 = vadd.f32 %v468, %v1151
        %v1405 = vadd.f32 %v469, %v1249
        %v1406 = vadd.f32 %v470, %v1347
        %v1407 = vadd.f32 %v471, %v1056
        %v1408 = vadd.f32 %v472, %v1154
        %v1409 = vadd.f32 %v473, %v1252
        %v1410 = vadd.f32 %v474, %v1350
        %v1411 = vadd.f32 %v475, %v1058
        %v1412 = vadd.f32 %v476, %v1156
        %v1413 = vadd.f32 %v477, %v1254
        %v1414 = vadd.f32 %v478, %v1352
        %v1415 = vadd.f32 %v479, %v1061
        %v1416 = vadd.f32 %v480, %v1159
        %v1417 = vadd.f32 %v481, %v1257
        %v1418 = vadd.f32 %v482, %v1355
        %v1419 = vadd.f32 %v483, %v1063
        %v1420 = vadd.f32 %v484, %v1161
        %v1421 = vadd.f32 %v485, %v1259
        %v1422 = vadd.f32 %v486, %v1357
        %1423 = vst [vmem:[#allocation2] sm:$0xff] %v1359
        %1424 = vst [vmem:[#allocation2 + $0x8] sm:$0xff] %v1360
        %1425 = vst [vmem:[#allocation2 + $0x10] sm:$0xff] %v1361
        %1426 = vst [vmem:[#allocation2 + $0x18] sm:$0xff] %v1362
        %1427 = vst [vmem:[#allocation2 + $0x20] sm:$0xff] %v1363
        %1428 = vst [vmem:[#allocation2 + $0x28] sm:$0xff] %v1364
        %1429 = vst [vmem:[#allocation2 + $0x30] sm:$0xff] %v1365
        %1430 = vst [vmem:[#allocation2 + $0x38] sm:$0xff] %v1366
        %1431 = vst [vmem:[#allocation2 + $0x40] sm:$0xff] %v1367
        %1432 = vst [vmem:[#allocation2 + $0x48] sm:$0xff] %v1368
        %1433 = vst [vmem:[#allocation2 + $0x50] sm:$0xff] %v1369
        %1434 = vst [vmem:[#allocation2 + $0x58] sm:$0xff] %v1370
        %1435 = vst [vmem:[#allocation2 + $0x60] sm:$0xff] %v1371
        %1436 = vst [vmem:[#allocation2 + $0x68] sm:$0xff] %v1372
        %1437 = vst [vmem:[#allocation2 + $0x70] sm:$0xff] %v1373
        %1438 = vst [vmem:[#allocation2 + $0x78] sm:$0xff] %v1374
        %1439 = vst [vmem:[#allocation2 + $0x80] sm:$0xff] %v1375
        %1440 = vst [vmem:[#allocation2 + $0x88] sm:$0xff] %v1376
        %1441 = vst [vmem:[#allocation2 + $0x90] sm:$0xff] %v1377
        %1442 = vst [vmem:[#allocation2 + $0x98] sm:$0xff] %v1378
        %1443 = vst [vmem:[#allocation2 + $0xa0] sm:$0xff] %v1379
        %1444 = vst [vmem:[#allocation2 + $0xa8] sm:$0xff] %v1380
        %1445 = vst [vmem:[#allocation2 + $0xb0] sm:$0xff] %v1381
        %1446 = vst [vmem:[#allocation2 + $0xb8] sm:$0xff] %v1382
        %1447 = vst [vmem:[#allocation2 + $0xc0] sm:$0xff] %v1383
        %1448 = vst [vmem:[#allocation2 + $0xc8] sm:$0xff] %v1384
        %1449 = vst [vmem:[#allocation2 + $0xd0] sm:$0xff] %v1385
        %1450 = vst [vmem:[#allocation2 + $0xd8] sm:$0xff] %v1386
        %1451 = vst [vmem:[#allocation2 + $0xe0] sm:$0xff] %v1387
        %1452 = vst [vmem:[#allocation2 + $0xe8] sm:$0xff] %v1388
        %1453 = vst [vmem:[#allocation2 + $0xf0] sm:$0xff] %v1389
        %1454 = vst [vmem:[#allocation2 + $0xf8] sm:$0xff] %v1390
        %1455 = vst [vmem:[#allocation2 + $0x100] sm:$0xff] %v1391
        %1456 = vst [vmem:[#allocation2 + $0x108] sm:$0xff] %v1392
        %1457 = vst [vmem:[#allocation2 + $0x110] sm:$0xff] %v1393
        %1458 = vst [vmem:[#allocation2 + $0x118] sm:$0xff] %v1394
        %1459 = vst [vmem:[#allocation2 + $0x120] sm:$0xff] %v1395
        %1460 = vst [vmem:[#allocation2 + $0x128] sm:$0xff] %v1396
        %1461 = vst [vmem:[#allocation2 + $0x130] sm:$0xff] %v1397
        %1462 = vst [vmem:[#allocation2 + $0x138] sm:$0xff] %v1398
        %1463 = vst [vmem:[#allocation2 + $0x140] sm:$0xff] %v1399
        %1464 = vst [vmem:[#allocation2 + $0x148] sm:$0xff] %v1400
        %1465 = vst [vmem:[#allocation2 + $0x150] sm:$0xff] %v1401
        %1466 = vst [vmem:[#allocation2 + $0x158] sm:$0xff] %v1402
        %1467 = vst [vmem:[#allocation2 + $0x160] sm:$0xff] %v1403
        %1468 = vst [vmem:[#allocation2 + $0x168] sm:$0xff] %v1404
        %1469 = vst [vmem:[#allocation2 + $0x170] sm:$0xff] %v1405
        %1470 = vst [vmem:[#allocation2 + $0x178] sm:$0xff] %v1406
        %1471 = vst [vmem:[#allocation2 + $0x180] sm:$0xff] %v1407
        %1472 = vst [vmem:[#allocation2 + $0x188] sm:$0xff] %v1408
        %1473 = vst [vmem:[#allocation2 + $0x190] sm:$0xff] %v1409
        %1474 = vst [vmem:[#allocation2 + $0x198] sm:$0xff] %v1410
        %1475 = vst [vmem:[#allocation2 + $0x1a0] sm:$0xff] %v1411
        %1476 = vst [vmem:[#allocation2 + $0x1a8] sm:$0xff] %v1412
        %1477 = vst [vmem:[#allocation2 + $0x1b0] sm:$0xff] %v1413
        %1478 = vst [vmem:[#allocation2 + $0x1b8] sm:$0xff] %v1414
        %1479 = vst [vmem:[#allocation2 + $0x1c0] sm:$0xff] %v1415
        %1480 = vst [vmem:[#allocation2 + $0x1c8] sm:$0xff] %v1416
        %1481 = vst [vmem:[#allocation2 + $0x1d0] sm:$0xff] %v1417
        %1482 = vst [vmem:[#allocation2 + $0x1d8] sm:$0xff] %v1418
        %1483 = vst [vmem:[#allocation2 + $0x1e0] sm:$0xff] %v1419
        %1484 = vst [vmem:[#allocation2 + $0x1e8] sm:$0xff] %v1420
        %1485 = vst [vmem:[#allocation2 + $0x1f0] sm:$0xff] %v1421
        %1486 = vst [vmem:[#allocation2 + $0x1f8] sm:$0xff] %v1422
        // Predicated region
        $region56: #{generator_forward.17} parent=46 // pred_check
          %p1487 = pneg %p355
        $region57: #{generator_forward.17} parent=46 // pred_check_branch
          %1489 = sbr.rel (%p1487) target = $region59
        $region58: #{generator_forward.17} parent=46 // pred_region
          %v1490 = vld [vmem:[#allocation2] sm:$0xff]
          %v1491 = vld [vmem:[#allocation2 + $0x8] sm:$0xff]
          %v1492 = vld [vmem:[#allocation2 + $0x10] sm:$0xff]
          %v1493 = vld [vmem:[#allocation2 + $0x18] sm:$0xff]
          %v1494 = vld [vmem:[#allocation2 + $0x20] sm:$0xff]
          %v1495 = vld [vmem:[#allocation2 + $0x28] sm:$0xff]
          %v1496 = vld [vmem:[#allocation2 + $0x30] sm:$0xff]
          %v1497 = vld [vmem:[#allocation2 + $0x38] sm:$0xff]
          %v1498 = vld [vmem:[#allocation2 + $0x40] sm:$0xff]
          %v1499 = vld [vmem:[#allocation2 + $0x48] sm:$0xff]
          %v1500 = vld [vmem:[#allocation2 + $0x50] sm:$0xff]
          %v1501 = vld [vmem:[#allocation2 + $0x58] sm:$0xff]
          %v1502 = vld [vmem:[#allocation2 + $0x60] sm:$0xff]
          %v1503 = vld [vmem:[#allocation2 + $0x68] sm:$0xff]
          %v1504 = vld [vmem:[#allocation2 + $0x70] sm:$0xff]
          %v1505 = vld [vmem:[#allocation2 + $0x78] sm:$0xff]
          %v1506 = vld [vmem:[#allocation2 + $0x80] sm:$0xff]
          %v1507 = vld [vmem:[#allocation2 + $0x88] sm:$0xff]
          %v1508 = vld [vmem:[#allocation2 + $0x90] sm:$0xff]
          %v1509 = vld [vmem:[#allocation2 + $0x98] sm:$0xff]
          %v1510 = vld [vmem:[#allocation2 + $0xa0] sm:$0xff]
          %v1511 = vld [vmem:[#allocation2 + $0xa8] sm:$0xff]
          %v1512 = vld [vmem:[#allocation2 + $0xb0] sm:$0xff]
          %v1513 = vld [vmem:[#allocation2 + $0xb8] sm:$0xff]
          %v1514 = vld [vmem:[#allocation2 + $0xc0] sm:$0xff]
          %v1515 = vld [vmem:[#allocation2 + $0xc8] sm:$0xff]
          %v1516 = vld [vmem:[#allocation2 + $0xd0] sm:$0xff]
          %v1517 = vld [vmem:[#allocation2 + $0xd8] sm:$0xff]
          %v1518 = vld [vmem:[#allocation2 + $0xe0] sm:$0xff]
          %v1519 = vld [vmem:[#allocation2 + $0xe8] sm:$0xff]
          %v1520 = vld [vmem:[#allocation2 + $0xf0] sm:$0xff]
          %v1521 = vld [vmem:[#allocation2 + $0xf8] sm:$0xff]
          %v1522 = vld [vmem:[#allocation2 + $0x100] sm:$0xff]
          %v1523 = vld [vmem:[#allocation2 + $0x108] sm:$0xff]
          %v1524 = vld [vmem:[#allocation2 + $0x110] sm:$0xff]
          %v1525 = vld [vmem:[#allocation2 + $0x118] sm:$0xff]
          %v1526 = vld [vmem:[#allocation2 + $0x120] sm:$0xff]
          %v1527 = vld [vmem:[#allocation2 + $0x128] sm:$0xff]
          %v1528 = vld [vmem:[#allocation2 + $0x130] sm:$0xff]
          %v1529 = vld [vmem:[#allocation2 + $0x138] sm:$0xff]
          %v1530 = vld [vmem:[#allocation2 + $0x140] sm:$0xff]
          %v1531 = vld [vmem:[#allocation2 + $0x148] sm:$0xff]
          %v1532 = vld [vmem:[#allocation2 + $0x150] sm:$0xff]
          %v1533 = vld [vmem:[#allocation2 + $0x158] sm:$0xff]
          %v1534 = vld [vmem:[#allocation2 + $0x160] sm:$0xff]
          %v1535 = vld [vmem:[#allocation2 + $0x168] sm:$0xff]
          %v1536 = vld [vmem:[#allocation2 + $0x170] sm:$0xff]
          %v1537 = vld [vmem:[#allocation2 + $0x178] sm:$0xff]
          %v1538 = vld [vmem:[#allocation2 + $0x180] sm:$0xff]
          %v1539 = vld [vmem:[#allocation2 + $0x188] sm:$0xff]
          %v1540 = vld [vmem:[#allocation2 + $0x190] sm:$0xff]
          %v1541 = vld [vmem:[#allocation2 + $0x198] sm:$0xff]
          %v1542 = vld [vmem:[#allocation2 + $0x1a0] sm:$0xff]
          %v1543 = vld [vmem:[#allocation2 + $0x1a8] sm:$0xff]
          %v1544 = vld [vmem:[#allocation2 + $0x1b0] sm:$0xff]
          %v1545 = vld [vmem:[#allocation2 + $0x1b8] sm:$0xff]
          %v1546 = vld [vmem:[#allocation2 + $0x1c0] sm:$0xff]
          %v1547 = vld [vmem:[#allocation2 + $0x1c8] sm:$0xff]
          %v1548 = vld [vmem:[#allocation2 + $0x1d0] sm:$0xff]
          %v1549 = vld [vmem:[#allocation2 + $0x1d8] sm:$0xff]
          %v1550 = vld [vmem:[#allocation2 + $0x1e0] sm:$0xff]
          %v1551 = vld [vmem:[#allocation2 + $0x1e8] sm:$0xff]
          %v1552 = vld [vmem:[#allocation2 + $0x1f0] sm:$0xff]
          %v1553 = vld [vmem:[#allocation2 + $0x1f8] sm:$0xff]
          %1554 = vst [vmem:[%s338] sm:$0xff] %v1490
          %1555 = vst [vmem:[%s338 + $0x8] sm:$0xff] %v1491
          %1556 = vst [vmem:[%s338 + $0x10] sm:$0xff] %v1492
          %1557 = vst [vmem:[%s338 + $0x18] sm:$0xff] %v1493
          %1558 = vst [vmem:[%s338 + $0x20] sm:$0xff] %v1494
          %1559 = vst [vmem:[%s338 + $0x28] sm:$0xff] %v1495
          %1560 = vst [vmem:[%s338 + $0x30] sm:$0xff] %v1496
          %1561 = vst [vmem:[%s338 + $0x38] sm:$0xff] %v1497
          %1562 = vst [vmem:[%s338 + $0x40] sm:$0xff] %v1498
          %1563 = vst [vmem:[%s338 + $0x48] sm:$0xff] %v1499
          %1564 = vst [vmem:[%s338 + $0x50] sm:$0xff] %v1500
          %1565 = vst [vmem:[%s338 + $0x58] sm:$0xff] %v1501
          %1566 = vst [vmem:[%s338 + $0x60] sm:$0xff] %v1502
          %1567 = vst [vmem:[%s338 + $0x68] sm:$0xff] %v1503
          %1568 = vst [vmem:[%s338 + $0x70] sm:$0xff] %v1504
          %1569 = vst [vmem:[%s338 + $0x78] sm:$0xff] %v1505
          %1570 = vst [vmem:[%s338 + $0x80] sm:$0xff] %v1506
          %1571 = vst [vmem:[%s338 + $0x88] sm:$0xff] %v1507
          %1572 = vst [vmem:[%s338 + $0x90] sm:$0xff] %v1508
          %1573 = vst [vmem:[%s338 + $0x98] sm:$0xff] %v1509
          %1574 = vst [vmem:[%s338 + $0xa0] sm:$0xff] %v1510
          %1575 = vst [vmem:[%s338 + $0xa8] sm:$0xff] %v1511
          %1576 = vst [vmem:[%s338 + $0xb0] sm:$0xff] %v1512
          %1577 = vst [vmem:[%s338 + $0xb8] sm:$0xff] %v1513
          %1578 = vst [vmem:[%s338 + $0xc0] sm:$0xff] %v1514
          %1579 = vst [vmem:[%s338 + $0xc8] sm:$0xff] %v1515
          %1580 = vst [vmem:[%s338 + $0xd0] sm:$0xff] %v1516
          %1581 = vst [vmem:[%s338 + $0xd8] sm:$0xff] %v1517
          %1582 = vst [vmem:[%s338 + $0xe0] sm:$0xff] %v1518
          %1583 = vst [vmem:[%s338 + $0xe8] sm:$0xff] %v1519
          %1584 = vst [vmem:[%s338 + $0xf0] sm:$0xff] %v1520
          %1585 = vst [vmem:[%s338 + $0xf8] sm:$0xff] %v1521
          %1586 = vst [vmem:[%s338 + $0x100] sm:$0xff] %v1522
          %1587 = vst [vmem:[%s338 + $0x108] sm:$0xff] %v1523
          %1588 = vst [vmem:[%s338 + $0x110] sm:$0xff] %v1524
          %1589 = vst [vmem:[%s338 + $0x118] sm:$0xff] %v1525
          %1590 = vst [vmem:[%s338 + $0x120] sm:$0xff] %v1526
          %1591 = vst [vmem:[%s338 + $0x128] sm:$0xff] %v1527
          %1592 = vst [vmem:[%s338 + $0x130] sm:$0xff] %v1528
          %1593 = vst [vmem:[%s338 + $0x138] sm:$0xff] %v1529
          %1594 = vst [vmem:[%s338 + $0x140] sm:$0xff] %v1530
          %1595 = vst [vmem:[%s338 + $0x148] sm:$0xff] %v1531
          %1596 = vst [vmem:[%s338 + $0x150] sm:$0xff] %v1532
          %1597 = vst [vmem:[%s338 + $0x158] sm:$0xff] %v1533
          %1598 = vst [vmem:[%s338 + $0x160] sm:$0xff] %v1534
          %1599 = vst [vmem:[%s338 + $0x168] sm:$0xff] %v1535
          %1600 = vst [vmem:[%s338 + $0x170] sm:$0xff] %v1536
          %1601 = vst [vmem:[%s338 + $0x178] sm:$0xff] %v1537
          %1602 = vst [vmem:[%s338 + $0x180] sm:$0xff] %v1538
          %1603 = vst [vmem:[%s338 + $0x188] sm:$0xff] %v1539
          %1604 = vst [vmem:[%s338 + $0x190] sm:$0xff] %v1540
          %1605 = vst [vmem:[%s338 + $0x198] sm:$0xff] %v1541
          %1606 = vst [vmem:[%s338 + $0x1a0] sm:$0xff] %v1542
          %1607 = vst [vmem:[%s338 + $0x1a8] sm:$0xff] %v1543
          %1608 = vst [vmem:[%s338 + $0x1b0] sm:$0xff] %v1544
          %1609 = vst [vmem:[%s338 + $0x1b8] sm:$0xff] %v1545
          %1610 = vst [vmem:[%s338 + $0x1c0] sm:$0xff] %v1546
          %1611 = vst [vmem:[%s338 + $0x1c8] sm:$0xff] %v1547
          %1612 = vst [vmem:[%s338 + $0x1d0] sm:$0xff] %v1548
          %1613 = vst [vmem:[%s338 + $0x1d8] sm:$0xff] %v1549
          %1614 = vst [vmem:[%s338 + $0x1e0] sm:$0xff] %v1550
          %1615 = vst [vmem:[%s338 + $0x1e8] sm:$0xff] %v1551
          %1616 = vst [vmem:[%s338 + $0x1f0] sm:$0xff] %v1552
          %1617 = vst [vmem:[%s338 + $0x1f8] sm:$0xff] %v1553
        $region59: #{generator_forward.17} parent=46 // pred_fallthru
          _
        %s1618 = sand.u32 %s98, 1
        %s1619 = sand.u32 %s98, 1
        %s1620 = smul.addr %s1619, 512
        %s1621 = scalar_lea.vmem [#allocation4], %s1620
        // Predicated region
        $region60: #{generator_forward.17} parent=46 // pred_check
          %p1622 = pneg %p108
        $region61: #{generator_forward.17} parent=46 // pred_check_branch
          %1624 = sbr.rel (%p1622) target = $region63
        $region62: #{generator_forward.17} parent=46 // pred_region
          %s1625 = smul.u32 16, %s18
          %s1626 = smul.u32 4, %s19
          %s1627 = smul.addr %s1625, 16
          %s1628 = sadd.s32 %s1626, %s1627
          %s1629 = smul.addr %s1628, 8
          %s1630 = scalar_lea.vmem %s2, %s1629
          // Predicated region
          $region64: #{generator_forward.17} parent=62 // pred_check
            _
          $region65: #{generator_forward.17} parent=62 // pred_check_branch
            %1632 = sbr.rel (0) target = $region67
          $region66: #{generator_forward.17} parent=62 // pred_region
            // Predicated region
            $region68: #{generator_forward.17} parent=66 // pred_check
              _
            $region69: #{generator_forward.17} parent=66 // pred_check_branch
              %1634 = sbr.rel (0) target = $region71
            $region70: #{generator_forward.17} parent=66 // pred_region
              loop: start=0, step=1, limit=1
              $region72: #{generator_forward.17} parent=70 // loop_pre_header
                _
              $region73: #{generator_forward.17} parent=70 // loop_header
                %s1636 = sphi 0, %s1640
                %p1637 = scmp.ge.s32.totalorder %s1636, 1
                %s1641 = sphi %s1621, %s1621
                %s1642 = sphi %s1630, %s1630
              $region74: #{generator_forward.17} parent=70 // loop_header_branch
                %1639 = sbr.rel (%p1637) target = $region78
              $region75: #{generator_forward.17} parent=70 // loop_body
                %v1643 = vld [vmem:[%s1641] sm:$0xff]
                %1644 = vst [vmem:[%s1642] sm:$0xff] %v1643
                %v1645 = vld [vmem:[%s1641 + $0x8] sm:$0xff]
                %1646 = vst [vmem:[%s1642 + $0x8] sm:$0xff] %v1645
                %v1647 = vld [vmem:[%s1641 + $0x10] sm:$0xff]
                %1648 = vst [vmem:[%s1642 + $0x10] sm:$0xff] %v1647
                %v1649 = vld [vmem:[%s1641 + $0x18] sm:$0xff]
                %1650 = vst [vmem:[%s1642 + $0x18] sm:$0xff] %v1649
                %v1651 = vld [vmem:[%s1641 + $0x20] sm:$0xff]
                %1652 = vst [vmem:[%s1642 + $0x80] sm:$0xff] %v1651
                %v1653 = vld [vmem:[%s1641 + $0x28] sm:$0xff]
                %1654 = vst [vmem:[%s1642 + $0x88] sm:$0xff] %v1653
                %v1655 = vld [vmem:[%s1641 + $0x30] sm:$0xff]
                %1656 = vst [vmem:[%s1642 + $0x90] sm:$0xff] %v1655
                %v1657 = vld [vmem:[%s1641 + $0x38] sm:$0xff]
                %1658 = vst [vmem:[%s1642 + $0x98] sm:$0xff] %v1657
                %v1659 = vld [vmem:[%s1641 + $0x40] sm:$0xff]
                %1660 = vst [vmem:[%s1642 + $0x100] sm:$0xff] %v1659
                %v1661 = vld [vmem:[%s1641 + $0x48] sm:$0xff]
                %1662 = vst [vmem:[%s1642 + $0x108] sm:$0xff] %v1661
                %v1663 = vld [vmem:[%s1641 + $0x50] sm:$0xff]
                %1664 = vst [vmem:[%s1642 + $0x110] sm:$0xff] %v1663
                %v1665 = vld [vmem:[%s1641 + $0x58] sm:$0xff]
                %1666 = vst [vmem:[%s1642 + $0x118] sm:$0xff] %v1665
                %v1667 = vld [vmem:[%s1641 + $0x60] sm:$0xff]
                %1668 = vst [vmem:[%s1642 + $0x180] sm:$0xff] %v1667
                %v1669 = vld [vmem:[%s1641 + $0x68] sm:$0xff]
                %1670 = vst [vmem:[%s1642 + $0x188] sm:$0xff] %v1669
                %v1671 = vld [vmem:[%s1641 + $0x70] sm:$0xff]
                %1672 = vst [vmem:[%s1642 + $0x190] sm:$0xff] %v1671
                %v1673 = vld [vmem:[%s1641 + $0x78] sm:$0xff]
                %1674 = vst [vmem:[%s1642 + $0x198] sm:$0xff] %v1673
                %v1675 = vld [vmem:[%s1641 + $0x80] sm:$0xff]
                %1676 = vst [vmem:[%s1642 + $0x200] sm:$0xff] %v1675
                %v1677 = vld [vmem:[%s1641 + $0x88] sm:$0xff]
                %1678 = vst [vmem:[%s1642 + $0x208] sm:$0xff] %v1677
                %v1679 = vld [vmem:[%s1641 + $0x90] sm:$0xff]
                %1680 = vst [vmem:[%s1642 + $0x210] sm:$0xff] %v1679
                %v1681 = vld [vmem:[%s1641 + $0x98] sm:$0xff]
                %1682 = vst [vmem:[%s1642 + $0x218] sm:$0xff] %v1681
                %v1683 = vld [vmem:[%s1641 + $0xa0] sm:$0xff]
                %1684 = vst [vmem:[%s1642 + $0x280] sm:$0xff] %v1683
                %v1685 = vld [vmem:[%s1641 + $0xa8] sm:$0xff]
                %1686 = vst [vmem:[%s1642 + $0x288] sm:$0xff] %v1685
                %v1687 = vld [vmem:[%s1641 + $0xb0] sm:$0xff]
                %1688 = vst [vmem:[%s1642 + $0x290] sm:$0xff] %v1687
                %v1689 = vld [vmem:[%s1641 + $0xb8] sm:$0xff]
                %1690 = vst [vmem:[%s1642 + $0x298] sm:$0xff] %v1689
                %v1691 = vld [vmem:[%s1641 + $0xc0] sm:$0xff]
                %1692 = vst [vmem:[%s1642 + $0x300] sm:$0xff] %v1691
                %v1693 = vld [vmem:[%s1641 + $0xc8] sm:$0xff]
                %1694 = vst [vmem:[%s1642 + $0x308] sm:$0xff] %v1693
                %v1695 = vld [vmem:[%s1641 + $0xd0] sm:$0xff]
                %1696 = vst [vmem:[%s1642 + $0x310] sm:$0xff] %v1695
                %v1697 = vld [vmem:[%s1641 + $0xd8] sm:$0xff]
                %1698 = vst [vmem:[%s1642 + $0x318] sm:$0xff] %v1697
                %v1699 = vld [vmem:[%s1641 + $0xe0] sm:$0xff]
                %1700 = vst [vmem:[%s1642 + $0x380] sm:$0xff] %v1699
                %v1701 = vld [vmem:[%s1641 + $0xe8] sm:$0xff]
                %1702 = vst [vmem:[%s1642 + $0x388] sm:$0xff] %v1701
                %v1703 = vld [vmem:[%s1641 + $0xf0] sm:$0xff]
                %1704 = vst [vmem:[%s1642 + $0x390] sm:$0xff] %v1703
                %v1705 = vld [vmem:[%s1641 + $0xf8] sm:$0xff]
                %1706 = vst [vmem:[%s1642 + $0x398] sm:$0xff] %v1705
                %v1707 = vld [vmem:[%s1641 + $0x100] sm:$0xff]
                %1708 = vst [vmem:[%s1642 + $0x400] sm:$0xff] %v1707
                %v1709 = vld [vmem:[%s1641 + $0x108] sm:$0xff]
                %1710 = vst [vmem:[%s1642 + $0x408] sm:$0xff] %v1709
                %v1711 = vld [vmem:[%s1641 + $0x110] sm:$0xff]
                %1712 = vst [vmem:[%s1642 + $0x410] sm:$0xff] %v1711
                %v1713 = vld [vmem:[%s1641 + $0x118] sm:$0xff]
                %1714 = vst [vmem:[%s1642 + $0x418] sm:$0xff] %v1713
                %v1715 = vld [vmem:[%s1641 + $0x120] sm:$0xff]
                %1716 = vst [vmem:[%s1642 + $0x480] sm:$0xff] %v1715
                %v1717 = vld [vmem:[%s1641 + $0x128] sm:$0xff]
                %1718 = vst [vmem:[%s1642 + $0x488] sm:$0xff] %v1717
                %v1719 = vld [vmem:[%s1641 + $0x130] sm:$0xff]
                %1720 = vst [vmem:[%s1642 + $0x490] sm:$0xff] %v1719
                %v1721 = vld [vmem:[%s1641 + $0x138] sm:$0xff]
                %1722 = vst [vmem:[%s1642 + $0x498] sm:$0xff] %v1721
                %v1723 = vld [vmem:[%s1641 + $0x140] sm:$0xff]
                %1724 = vst [vmem:[%s1642 + $0x500] sm:$0xff] %v1723
                %v1725 = vld [vmem:[%s1641 + $0x148] sm:$0xff]
                %1726 = vst [vmem:[%s1642 + $0x508] sm:$0xff] %v1725
                %v1727 = vld [vmem:[%s1641 + $0x150] sm:$0xff]
                %1728 = vst [vmem:[%s1642 + $0x510] sm:$0xff] %v1727
                %v1729 = vld [vmem:[%s1641 + $0x158] sm:$0xff]
                %1730 = vst [vmem:[%s1642 + $0x518] sm:$0xff] %v1729
                %v1731 = vld [vmem:[%s1641 + $0x160] sm:$0xff]
                %1732 = vst [vmem:[%s1642 + $0x580] sm:$0xff] %v1731
                %v1733 = vld [vmem:[%s1641 + $0x168] sm:$0xff]
                %1734 = vst [vmem:[%s1642 + $0x588] sm:$0xff] %v1733
                %v1735 = vld [vmem:[%s1641 + $0x170] sm:$0xff]
                %1736 = vst [vmem:[%s1642 + $0x590] sm:$0xff] %v1735
                %v1737 = vld [vmem:[%s1641 + $0x178] sm:$0xff]
                %1738 = vst [vmem:[%s1642 + $0x598] sm:$0xff] %v1737
                %v1739 = vld [vmem:[%s1641 + $0x180] sm:$0xff]
                %1740 = vst [vmem:[%s1642 + $0x600] sm:$0xff] %v1739
                %v1741 = vld [vmem:[%s1641 + $0x188] sm:$0xff]
                %1742 = vst [vmem:[%s1642 + $0x608] sm:$0xff] %v1741
                %v1743 = vld [vmem:[%s1641 + $0x190] sm:$0xff]
                %1744 = vst [vmem:[%s1642 + $0x610] sm:$0xff] %v1743
                %v1745 = vld [vmem:[%s1641 + $0x198] sm:$0xff]
                %1746 = vst [vmem:[%s1642 + $0x618] sm:$0xff] %v1745
                %v1747 = vld [vmem:[%s1641 + $0x1a0] sm:$0xff]
                %1748 = vst [vmem:[%s1642 + $0x680] sm:$0xff] %v1747
                %v1749 = vld [vmem:[%s1641 + $0x1a8] sm:$0xff]
                %1750 = vst [vmem:[%s1642 + $0x688] sm:$0xff] %v1749
                %v1751 = vld [vmem:[%s1641 + $0x1b0] sm:$0xff]
                %1752 = vst [vmem:[%s1642 + $0x690] sm:$0xff] %v1751
                %v1753 = vld [vmem:[%s1641 + $0x1b8] sm:$0xff]
                %1754 = vst [vmem:[%s1642 + $0x698] sm:$0xff] %v1753
                %v1755 = vld [vmem:[%s1641 + $0x1c0] sm:$0xff]
                %1756 = vst [vmem:[%s1642 + $0x700] sm:$0xff] %v1755
                %v1757 = vld [vmem:[%s1641 + $0x1c8] sm:$0xff]
                %1758 = vst [vmem:[%s1642 + $0x708] sm:$0xff] %v1757
                %v1759 = vld [vmem:[%s1641 + $0x1d0] sm:$0xff]
                %1760 = vst [vmem:[%s1642 + $0x710] sm:$0xff] %v1759
                %v1761 = vld [vmem:[%s1641 + $0x1d8] sm:$0xff]
                %1762 = vst [vmem:[%s1642 + $0x718] sm:$0xff] %v1761
                %v1763 = vld [vmem:[%s1641 + $0x1e0] sm:$0xff]
                %1764 = vst [vmem:[%s1642 + $0x780] sm:$0xff] %v1763
                %v1765 = vld [vmem:[%s1641 + $0x1e8] sm:$0xff]
                %1766 = vst [vmem:[%s1642 + $0x788] sm:$0xff] %v1765
                %v1767 = vld [vmem:[%s1641 + $0x1f0] sm:$0xff]
                %1768 = vst [vmem:[%s1642 + $0x790] sm:$0xff] %v1767
                %v1769 = vld [vmem:[%s1641 + $0x1f8] sm:$0xff]
                %1770 = vst [vmem:[%s1642 + $0x798] sm:$0xff] %v1769
              $region76: #{generator_forward.17} parent=70 // loop_footer
                %s1640 = sadd.s32 1, %s1636
              $region77: #{generator_forward.17} parent=70 // loop_footer_branch
                %1635 = sbr.rel target = $region73
              $region78: #{generator_forward.17} parent=70 // loop_exit
                _
            $region71: #{generator_forward.17} parent=66 // pred_fallthru
              _
            // Predicated region
            $region79: #{generator_forward.17} parent=66 // pred_check
              _
            $region80: #{generator_forward.17} parent=66 // pred_check_branch
              %1772 = sbr.rel target = $region82
            $region81: #{generator_forward.17} parent=66 // pred_region
              _
            $region82: #{generator_forward.17} parent=66 // pred_fallthru
              _
          $region67: #{generator_forward.17} parent=62 // pred_fallthru
            _
          %1773 = vnop
        $region63: #{generator_forward.17} parent=46 // pred_fallthru
          _
      $region47: #{generator_forward.17} parent=5 // pred_fallthru
        _
      %p1774 = scmp.le.s32.totalorder 2, %s8
      // Predicated region
      $region83: #{generator_forward.17} parent=5 // pred_check
        %p1775 = pneg %p1774
      $region84: #{generator_forward.17} parent=5 // pred_check_branch
        %1777 = sbr.rel (%p1775) target = $region86
      $region85: #{generator_forward.17} parent=5 // pred_region
        %s1778 = ssub.s32 %s8, 2
        // Predicated region
        $region87: #{generator_forward.17} parent=85 // pred_check
          %p1779 = pneg %p114
        $region88: #{generator_forward.17} parent=85 // pred_check_branch
          %1781 = sbr.rel (%p1779) target = $region90
        $region89: #{generator_forward.17} parent=85 // pred_region
          %s1782 = sand.u32 %s99, 1
          %s1783 = sand.u32 %s99, 1
          %s1784 = smul.addr %s1783, 512
          %s1785 = scalar_lea.vmem [#allocation4], %s1784
        $region90: #{generator_forward.17} parent=85 // pred_fallthru
          _
      $region86: #{generator_forward.17} parent=5 // pred_fallthru
        _
    $region6: #{generator_forward.17} parent=1 // loop_footer
      %s12 = sadd.s32 1, %s8
    $region7: #{generator_forward.17} parent=1 // loop_footer_branch
      %7 = sbr.rel target = $region3
    $region8: #{generator_forward.17} parent=1 // loop_exit
      _

// kernel: generator_forward.18
$region0: #{generator_forward.18}
  #allocation0 [shape = 'u32[]', space=smem, size = 0x4, offset = 0x4, fixed_abs, tag = 'smem constant byte address 0x4 - core index']
  #allocation1 [shape = 'u32[72,128]{1,0:T(1,128)}', space=vmem, size = 0x9000, scoped, tag = 'internal scratch']
  %s0 = inlined_call_operand.vmem [shape: f32[512,128], index: 0, kind: input, shape index: {}]
  %s1 = inlined_call_operand.vmem [shape: f32[2,128], index: 1, kind: output, shape index: {}]
  %s2 = sld [smem:[#allocation0]]
  $region41: #{generator_forward.18} parent=0
    _
  %s4 = ssub.s32 1, %s2
  %s5 = scalar_select 0, %s4, %s2
  loop: start=0, step=1, limit=4
  $region2: #{generator_forward.18} parent=0 // loop_pre_header
    _
  $region3: #{generator_forward.18} parent=0 // loop_header
    %s7 = sphi 0, %s11
    %p8 = scmp.ge.s32.totalorder %s7, 4
    %s17 = sphi 0, %s19
    %s20 = sphi 0, %s17
    %s21 = sphi 0, %s20
    %s37 = sphi 0, %s21
    %s41 = sphi 0, %s41
    %s43 = sphi 0, %s41
    %s44 = sphi 0, %s43
    %s58 = sphi 0, %s44
  $region4: #{generator_forward.18} parent=0 // loop_header_branch
    %10 = sbr.rel (%p8) target = $region8
  $region5: #{generator_forward.18} parent=0 // loop_body
    %s12 = ssub.s32 %s7, 1
    %s13 = ssub.s32 %s7, 2
    %s14 = sadd.s32 %s7, 1
    %s15 = ssub.s32 %s7, %s14
    %p16 = scmp.eq.s32.totalorder %s15, 0
    %s18 = sadd.s32 %s17, 1
    %s19 = scalar_select %p16, %s17, %s18
    %p22 = pneg %p16
    %p23 = scmp.eq.s32.totalorder %s7, 1
    %p24 = por %p22, %p23
    %p25 = scmp.ne.s32.totalorder %s17, %s20
    %p26 = scmp.eq.s32.totalorder %s7, 0
    %p27 = por %p25, %p26
    %p28 = scmp.ne.s32.totalorder %s17, %s20
    %p29 = scmp.eq.s32.totalorder %s12, 1
    %p30 = por %p28, %p29
    %p31 = scmp.ne.s32.totalorder %s20, %s21
    %p32 = scmp.eq.s32.totalorder %s12, 0
    %p33 = por %p31, %p32
    %p34 = scmp.ne.s32.totalorder %s20, %s21
    %p35 = scmp.eq.s32.totalorder %s13, 1
    %p36 = por %p34, %p35
    %p38 = scmp.ne.s32.totalorder %s21, %s37
    %p39 = scmp.eq.s32.totalorder %s13, 0
    %p40 = por %p38, %p39
    %s42 = sadd.s32 %s41, 1
    %p45 = scmp.eq.s32.totalorder %s7, 1
    %p46 = scmp.ne.s32.totalorder %s41, %s43
    %p47 = scmp.eq.s32.totalorder %s7, 0
    %p48 = por %p46, %p47
    %p49 = scmp.ne.s32.totalorder %s41, %s43
    %p50 = scmp.eq.s32.totalorder %s12, 1
    %p51 = por %p49, %p50
    %p52 = scmp.ne.s32.totalorder %s43, %s44
    %p53 = scmp.eq.s32.totalorder %s12, 0
    %p54 = por %p52, %p53
    %p55 = scmp.ne.s32.totalorder %s43, %s44
    %p56 = scmp.eq.s32.totalorder %s13, 1
    %p57 = por %p55, %p56
    %p59 = scmp.ne.s32.totalorder %s44, %s58
    %p60 = scmp.eq.s32.totalorder %s13, 0
    %p61 = por %p59, %p60
    %p62 = scmp.le.s32.totalorder 1, %s7
    %p63 = scmp.lt.s32.totalorder %s7, 3
    %p64 = pnand %p62, %p63
    %p65 = pneg %p64
    // Predicated region
    $region9: #{generator_forward.18} parent=5 // pred_check
      _
    $region10: #{generator_forward.18} parent=5 // pred_check_branch
      %67 = sbr.rel (%p64) target = $region12
    $region11: #{generator_forward.18} parent=5 // pred_region
      %s68 = ssub.s32 %s7, 1
    $region12: #{generator_forward.18} parent=5 // pred_fallthru
      _
    %p69 = scmp.lt.s32.totalorder %s7, 2
    // Predicated region
    $region13: #{generator_forward.18} parent=5 // pred_check
      %p70 = pneg %p69
    $region14: #{generator_forward.18} parent=5 // pred_check_branch
      %72 = sbr.rel (%p70) target = $region16
    $region15: #{generator_forward.18} parent=5 // pred_region
      // Predicated region
      $region17: #{generator_forward.18} parent=15 // pred_check
        %p73 = pneg %p27
      $region18: #{generator_forward.18} parent=15 // pred_check_branch
        %75 = sbr.rel (%p73) target = $region20
      $region19: #{generator_forward.18} parent=15 // pred_region
        %s76 = smul.u32 32, %s7
        %p77 = scmp.lt.s32.totalorder %s76, 63
        %s78 = scalar_select %p77, %s76, 63
        %s79 = smul.addr %s78, 8
        %s80 = scalar_lea.vmem %s0, %s79
        %s81 = smul.u32 32, %s7
      $region20: #{generator_forward.18} parent=15 // pred_fallthru
        _
    $region16: #{generator_forward.18} parent=5 // pred_fallthru
      _
    %p82 = scmp.le.s32.totalorder 1, %s7
    %p83 = scmp.lt.s32.totalorder %s7, 3
    %p84 = pnand %p82, %p83
    %p85 = pneg %p84
    // Predicated region
    $region21: #{generator_forward.18} parent=5 // pred_check
      _
    $region22: #{generator_forward.18} parent=5 // pred_check_branch
      %87 = sbr.rel (%p84) target = $region24
    $region23: #{generator_forward.18} parent=5 // pred_region
      %s88 = ssub.s32 %s7, 1
      %s89 = smul.u32 32, %s12
      %p90 = scmp.lt.s32.totalorder %s89, 63
      %s91 = scalar_select %p90, %s89, 63
      %s92 = smul.addr %s91, 8
      %s93 = scalar_lea.vmem %s0, %s92
      %p94 = pneg %p33
      %p95 = pneg %p30
      %p96 = pneg %p54
      %p97 = pneg %p51
      %s98 = smul.u32 32, %s12
      %p99 = scmp.lt.s32.totalorder %s98, 63
      %s100 = scalar_select %p99, %s98, 63
      %s101 = smul.addr %s100, 8
      %s102 = scalar_lea.vmem %s0, %s101
      %s103 = smul.u32 32, %s12
      %p104 = scmp.eq.s32.totalorder %s12, 0
      // Predicated region
      $region25: #{generator_forward.18} parent=23 // pred_check
        %p105 = pneg %p104
      $region26: #{generator_forward.18} parent=23 // pred_check_branch
        %107 = sbr.rel (%p105) target = $region28
      $region27: #{generator_forward.18} parent=23 // pred_region
        %108 = vst [vmem:[%s1] sm:$0x3] 0.0
      $region28: #{generator_forward.18} parent=23 // pred_fallthru
        _
      %v109 = vld [vmem:[%s102] sm:$0xff]
      %v110 = vld [vmem:[%s102 + $0x8] sm:$0xff]
      %v111 = vld [vmem:[%s102 + $0x10] sm:$0xff]
      %v112 = vld [vmem:[%s102 + $0x18] sm:$0xff]
      %v113 = vld [vmem:[%s102 + $0x20] sm:$0xff]
      %v114 = vld [vmem:[%s102 + $0x28] sm:$0xff]
      %v115 = vld [vmem:[%s102 + $0x30] sm:$0xff]
      %v116 = vld [vmem:[%s102 + $0x38] sm:$0xff]
      %v117 = vld [vmem:[%s102 + $0x40] sm:$0xff]
      %v118 = vld [vmem:[%s102 + $0x48] sm:$0xff]
      %v119 = vld [vmem:[%s102 + $0x50] sm:$0xff]
      %v120 = vld [vmem:[%s102 + $0x58] sm:$0xff]
      %v121 = vld [vmem:[%s102 + $0x60] sm:$0xff]
      %v122 = vld [vmem:[%s102 + $0x68] sm:$0xff]
      %v123 = vld [vmem:[%s102 + $0x70] sm:$0xff]
      %v124 = vld [vmem:[%s102 + $0x78] sm:$0xff]
      %v125 = vld [vmem:[%s102 + $0x80] sm:$0xff]
      %v126 = vld [vmem:[%s102 + $0x88] sm:$0xff]
      %v127 = vld [vmem:[%s102 + $0x90] sm:$0xff]
      %v128 = vld [vmem:[%s102 + $0x98] sm:$0xff]
      %v129 = vld [vmem:[%s102 + $0xa0] sm:$0xff]
      %v130 = vld [vmem:[%s102 + $0xa8] sm:$0xff]
      %v131 = vld [vmem:[%s102 + $0xb0] sm:$0xff]
      %v132 = vld [vmem:[%s102 + $0xb8] sm:$0xff]
      %v133 = vld [vmem:[%s102 + $0xc0] sm:$0xff]
      %v134 = vld [vmem:[%s102 + $0xc8] sm:$0xff]
      %v135 = vld [vmem:[%s102 + $0xd0] sm:$0xff]
      %v136 = vld [vmem:[%s102 + $0xd8] sm:$0xff]
      %v137 = vld [vmem:[%s102 + $0xe0] sm:$0xff]
      %v138 = vld [vmem:[%s102 + $0xe8] sm:$0xff]
      %v139 = vld [vmem:[%s102 + $0xf0] sm:$0xff]
      %v140 = vld [vmem:[%s102 + $0xf8] sm:$0xff]
      %v141 = vadd.f32 %v109, %v110
      %v142 = vadd.f32 %v141, %v111
      %v143 = vadd.f32 %v142, %v112
      %v144 = vadd.f32 %v143, %v113
      %v145 = vadd.f32 %v144, %v114
      %v146 = vadd.f32 %v145, %v115
      %v147 = vadd.f32 %v146, %v116
      %v148 = vadd.f32 %v147, %v117
      %v149 = vadd.f32 %v148, %v118
      %v150 = vadd.f32 %v149, %v119
      %v151 = vadd.f32 %v150, %v120
      %v152 = vadd.f32 %v151, %v121
      %v153 = vadd.f32 %v152, %v122
      %v154 = vadd.f32 %v153, %v123
      %v155 = vadd.f32 %v154, %v124
      %v156 = vadd.f32 %v155, %v125
      %v157 = vadd.f32 %v156, %v126
      %v158 = vadd.f32 %v157, %v127
      %v159 = vadd.f32 %v158, %v128
      %v160 = vadd.f32 %v159, %v129
      %v161 = vadd.f32 %v160, %v130
      %v162 = vadd.f32 %v161, %v131
      %v163 = vadd.f32 %v162, %v132
      %v164 = vadd.f32 %v163, %v133
      %v165 = vadd.f32 %v164, %v134
      %v166 = vadd.f32 %v165, %v135
      %v167 = vadd.f32 %v166, %v136
      %v168 = vadd.f32 %v167, %v137
      %v169 = vadd.f32 %v168, %v138
      %v170 = vadd.f32 %v169, %v139
      %v171 = vadd.f32 %v170, %v140
      %v172 = vrot.slane %v171, 4
      %v173 = vadd.f32 %v171, %v172
      %v174 = vrot.slane %v173, 2
      %v175 = vadd.f32 %v173, %v174
      %v176 = vrot.slane %v175, 1
      %v177 = vadd.f32 %v175, %v176
      %v178 = vmul.f32 %v109, %v109
      %v179 = vmul.f32 %v110, %v110
      %v180 = vmul.f32 %v111, %v111
      %v181 = vmul.f32 %v112, %v112
      %v182 = vmul.f32 %v113, %v113
      %v183 = vmul.f32 %v114, %v114
      %v184 = vmul.f32 %v115, %v115
      %v185 = vmul.f32 %v116, %v116
      %v186 = vmul.f32 %v117, %v117
      %v187 = vmul.f32 %v118, %v118
      %v188 = vmul.f32 %v119, %v119
      %v189 = vmul.f32 %v120, %v120
      %v190 = vmul.f32 %v121, %v121
      %v191 = vmul.f32 %v122, %v122
      %v192 = vmul.f32 %v123, %v123
      %v193 = vmul.f32 %v124, %v124
      %v194 = vmul.f32 %v125, %v125
      %v195 = vmul.f32 %v126, %v126
      %v196 = vmul.f32 %v127, %v127
      %v197 = vmul.f32 %v128, %v128
      %v198 = vmul.f32 %v129, %v129
      %v199 = vmul.f32 %v130, %v130
      %v200 = vmul.f32 %v131, %v131
      %v201 = vmul.f32 %v132, %v132
      %v202 = vmul.f32 %v133, %v133
      %v203 = vmul.f32 %v134, %v134
      %v204 = vmul.f32 %v135, %v135
      %v205 = vmul.f32 %v136, %v136
      %v206 = vmul.f32 %v137, %v137
      %v207 = vmul.f32 %v138, %v138
      %v208 = vmul.f32 %v139, %v139
      %v209 = vmul.f32 %v140, %v140
      %v210 = vadd.f32 %v178, %v179
      %v211 = vadd.f32 %v210, %v180
      %v212 = vadd.f32 %v211, %v181
      %v213 = vadd.f32 %v212, %v182
      %v214 = vadd.f32 %v213, %v183
      %v215 = vadd.f32 %v214, %v184
      %v216 = vadd.f32 %v215, %v185
      %v217 = vadd.f32 %v216, %v186
      %v218 = vadd.f32 %v217, %v187
      %v219 = vadd.f32 %v218, %v188
      %v220 = vadd.f32 %v219, %v189
      %v221 = vadd.f32 %v220, %v190
      %v222 = vadd.f32 %v221, %v191
      %v223 = vadd.f32 %v222, %v192
      %v224 = vadd.f32 %v223, %v193
      %v225 = vadd.f32 %v224, %v194
      %v226 = vadd.f32 %v225, %v195
      %v227 = vadd.f32 %v226, %v196
      %v228 = vadd.f32 %v227, %v197
      %v229 = vadd.f32 %v228, %v198
      %v230 = vadd.f32 %v229, %v199
      %v231 = vadd.f32 %v230, %v200
      %v232 = vadd.f32 %v231, %v201
      %v233 = vadd.f32 %v232, %v202
      %v234 = vadd.f32 %v233, %v203
      %v235 = vadd.f32 %v234, %v204
      %v236 = vadd.f32 %v235, %v205
      %v237 = vadd.f32 %v236, %v206
      %v238 = vadd.f32 %v237, %v207
      %v239 = vadd.f32 %v238, %v208
      %v240 = vadd.f32 %v239, %v209
      %v241 = vrot.slane %v240, 4
      %v242 = vadd.f32 %v240, %v241
      %v243 = vrot.slane %v242, 2
      %v244 = vadd.f32 %v242, %v243
      %v245 = vrot.slane %v244, 1
      %v246 = vadd.f32 %v244, %v245
      %v247 = vld [vmem:[%s1] sm:$0x3]
      %vm248 = vcmask 1040384
      %v249 = vsel %vm248, %v177, %v246
      %v250 = vadd.f32 %v247, %v249
      %251 = vst [vmem:[%s1] sm:$0x3] %v250
      // Predicated region
      $region29: #{generator_forward.18} parent=23 // pred_check
        %p252 = pneg %p51
      $region30: #{generator_forward.18} parent=23 // pred_check_branch
        %254 = sbr.rel (%p252) target = $region32
      $region31: #{generator_forward.18} parent=23 // pred_region
        _
      $region32: #{generator_forward.18} parent=23 // pred_fallthru
        _
      // Predicated region
      $region33: #{generator_forward.18} parent=23 // pred_check
        %p255 = pneg %p51
      $region34: #{generator_forward.18} parent=23 // pred_check_branch
        %257 = sbr.rel (%p255) target = $region36
      $region35: #{generator_forward.18} parent=23 // pred_region
        _
      $region36: #{generator_forward.18} parent=23 // pred_fallthru
        _
    $region24: #{generator_forward.18} parent=5 // pred_fallthru
      _
    %p258 = scmp.le.s32.totalorder 2, %s7
    // Predicated region
    $region37: #{generator_forward.18} parent=5 // pred_check
      %p259 = pneg %p258
    $region38: #{generator_forward.18} parent=5 // pred_check_branch
      %261 = sbr.rel (%p259) target = $region40
    $region39: #{generator_forward.18} parent=5 // pred_region
      %s262 = ssub.s32 %s7, 2
    $region40: #{generator_forward.18} parent=5 // pred_fallthru
      _
  $region6: #{generator_forward.18} parent=0 // loop_footer
    %s11 = sadd.s32 1, %s7
  $region7: #{generator_forward.18} parent=0 // loop_footer_branch
    %6 = sbr.rel target = $region3
  $region8: #{generator_forward.18} parent=0 // loop_exit
    _

// kernel: generator_forward.20
$region0: #{generator_forward.20}
  #allocation0 [shape = 'u32[]', space=smem, size = 0x4, offset = 0x4, fixed_abs, tag = 'smem constant byte address 0x4 - core index']
  #allocation1 [shape = 'u32[72,128]{1,0:T(1,128)}', space=vmem, size = 0x9000, scoped, tag = 'internal scratch']
  #allocation2 [shape = 'f32[128,128]{1,0:T(8,128)}', space=vmem, size = 0x10000, scoped, tag = 'scratch operand']
  %s0 = inlined_call_operand.vmem [shape: bf16[512,128], index: 0, kind: input, shape index: {}]
  %s1 = inlined_call_operand.vmem [shape: bf16[128,128], index: 1, kind: input, shape index: {}]
  %s2 = inlined_call_operand.vmem [shape: f32[512,128], index: 2, kind: output, shape index: {}]
  %s3 = sld [smem:[#allocation0]]
  $region49: #{generator_forward.20} parent=0
    _
  %s5 = ssub.s32 1, %s3
  %s6 = scalar_select 0, %s5, %s3
  loop: start=0, step=1, limit=6
  $region2: #{generator_forward.20} parent=0 // loop_pre_header
    _
  $region3: #{generator_forward.20} parent=0 // loop_header
    %s8 = sphi 0, %s12
    %p9 = scmp.ge.s32.totalorder %s8, 6
    %s15 = sphi 0, %s34
    %s16 = sphi 0, %s30
    %s17 = sphi 0, %s26
    %s18 = sphi 0, %s15
    %s19 = sphi 0, %s16
    %s20 = sphi 0, %s17
    %s21 = sphi 0, %s18
    %s22 = sphi 0, %s19
    %s23 = sphi 0, %s20
    %s39 = sphi 0, %s41
    %s42 = sphi 0, %s39
    %s43 = sphi 0, %s42
    %s59 = sphi 0, %s43
    %s67 = sphi 0, %s69
    %s70 = sphi 0, %s67
    %s71 = sphi 0, %s70
    %s87 = sphi 0, %s71
    %s95 = sphi 0, %s97
    %s98 = sphi 0, %s95
    %s99 = sphi 0, %s98
    %s115 = sphi 0, %s99
  $region4: #{generator_forward.20} parent=0 // loop_header_branch
    %11 = sbr.rel (%p9) target = $region8
  $region5: #{generator_forward.20} parent=0 // loop_body
    %s13 = ssub.s32 %s8, 1
    %s14 = ssub.s32 %s8, 2
    %s24 = sadd.s32 1, %s17
    %p25 = scmp.ge.s32.totalorder %s24, 1
    %s26 = scalar_select %p25, 0, %s24
    %s27 = sadd.s32 1, %s16
    %s28 = scalar_select %p25, %s27, %s16
    %p29 = scmp.ge.s32.totalorder %s28, 1
    %s30 = scalar_select %p29, 0, %s28
    %s31 = sadd.s32 1, %s15
    %s32 = scalar_select %p29, %s31, %s15
    %p33 = scmp.ge.s32.totalorder %s32, 4
    %s34 = scalar_select %p33, 0, %s32
    %s35 = ssub.s32 %s15, %s34
    %s36 = ssub.s32 %s17, %s26
    %s37 = sor.u32 %s35, %s36
    %p38 = scmp.eq.s32.totalorder %s37, 0
    %s40 = sadd.s32 %s39, 1
    %s41 = scalar_select %p38, %s39, %s40
    %p44 = pneg %p38
    %p45 = scmp.eq.s32.totalorder %s8, 3
    %p46 = por %p44, %p45
    %p47 = scmp.ne.s32.totalorder %s39, %s42
    %p48 = scmp.eq.s32.totalorder %s8, 0
    %p49 = por %p47, %p48
    %p50 = scmp.ne.s32.totalorder %s39, %s42
    %p51 = scmp.eq.s32.totalorder %s13, 3
    %p52 = por %p50, %p51
    %p53 = scmp.ne.s32.totalorder %s42, %s43
    %p54 = scmp.eq.s32.totalorder %s13, 0
    %p55 = por %p53, %p54
    %p56 = scmp.ne.s32.totalorder %s42, %s43
    %p57 = scmp.eq.s32.totalorder %s14, 3
    %p58 = por %p56, %p57
    %p60 = scmp.ne.s32.totalorder %s43, %s59
    %p61 = scmp.eq.s32.totalorder %s14, 0
    %p62 = por %p60, %p61
    %s63 = ssub.s32 %s17, %s26
    %s64 = ssub.s32 %s16, %s30
    %s65 = sor.u32 %s63, %s64
    %p66 = scmp.eq.s32.totalorder %s65, 0
    %s68 = sadd.s32 %s67, 1
    %s69 = scalar_select %p66, %s67, %s68
    %p72 = pneg %p66
    %p73 = scmp.eq.s32.totalorder %s8, 3
    %p74 = por %p72, %p73
    %p75 = scmp.ne.s32.totalorder %s67, %s70
    %p76 = scmp.eq.s32.totalorder %s8, 0
    %p77 = por %p75, %p76
    %p78 = scmp.ne.s32.totalorder %s67, %s70
    %p79 = scmp.eq.s32.totalorder %s13, 3
    %p80 = por %p78, %p79
    %p81 = scmp.ne.s32.totalorder %s70, %s71
    %p82 = scmp.eq.s32.totalorder %s13, 0
    %p83 = por %p81, %p82
    %p84 = scmp.ne.s32.totalorder %s70, %s71
    %p85 = scmp.eq.s32.totalorder %s14, 3
    %p86 = por %p84, %p85
    %p88 = scmp.ne.s32.totalorder %s71, %s87
    %p89 = scmp.eq.s32.totalorder %s14, 0
    %p90 = por %p88, %p89
    %s91 = ssub.s32 %s15, %s34
    %s92 = ssub.s32 %s16, %s30
    %s93 = sor.u32 %s91, %s92
    %p94 = scmp.eq.s32.totalorder %s93, 0
    %s96 = sadd.s32 %s95, 1
    %s97 = scalar_select %p94, %s95, %s96
    %p100 = pneg %p94
    %p101 = scmp.eq.s32.totalorder %s8, 3
    %p102 = por %p100, %p101
    %p103 = scmp.ne.s32.totalorder %s95, %s98
    %p104 = scmp.eq.s32.totalorder %s8, 0
    %p105 = por %p103, %p104
    %p106 = scmp.ne.s32.totalorder %s95, %s98
    %p107 = scmp.eq.s32.totalorder %s13, 3
    %p108 = por %p106, %p107
    %p109 = scmp.ne.s32.totalorder %s98, %s99
    %p110 = scmp.eq.s32.totalorder %s13, 0
    %p111 = por %p109, %p110
    %p112 = scmp.ne.s32.totalorder %s98, %s99
    %p113 = scmp.eq.s32.totalorder %s14, 3
    %p114 = por %p112, %p113
    %p116 = scmp.ne.s32.totalorder %s99, %s115
    %p117 = scmp.eq.s32.totalorder %s14, 0
    %p118 = por %p116, %p117
    %p119 = scmp.le.s32.totalorder 1, %s8
    %p120 = scmp.lt.s32.totalorder %s8, 5
    %p121 = pnand %p119, %p120
    %p122 = pneg %p121
    // Predicated region
    $region9: #{generator_forward.20} parent=5 // pred_check
      _
    $region10: #{generator_forward.20} parent=5 // pred_check_branch
      %124 = sbr.rel (%p121) target = $region12
    $region11: #{generator_forward.20} parent=5 // pred_region
      %s125 = ssub.s32 %s8, 1
      // Predicated region
      $region13: #{generator_forward.20} parent=11 // pred_check
        %p126 = pneg %p83
      $region14: #{generator_forward.20} parent=11 // pred_check_branch
        %128 = sbr.rel (%p126) target = $region16
      $region15: #{generator_forward.20} parent=11 // pred_region
        %s129 = smul.u32 16, %s20
        %p130 = scmp.lt.s32.totalorder %s129, 15
        %s131 = scalar_select %p130, %s129, 15
        %p132 = scmp.lt.s32.totalorder %s19, 0
        %s133 = scalar_select %p132, %s19, 0
        %s134 = sadd.s32 %s133, %s131
        %s135 = smul.addr %s134, 4
        %s136 = scalar_lea.vmem %s1, %s135
        %s137 = smul.u32 16, %s20
      $region16: #{generator_forward.20} parent=11 // pred_fallthru
        _
    $region12: #{generator_forward.20} parent=5 // pred_fallthru
      _
    %p138 = scmp.lt.s32.totalorder %s8, 4
    // Predicated region
    $region17: #{generator_forward.20} parent=5 // pred_check
      %p139 = pneg %p138
    $region18: #{generator_forward.20} parent=5 // pred_check_branch
      %141 = sbr.rel (%p139) target = $region20
    $region19: #{generator_forward.20} parent=5 // pred_region
      // Predicated region
      $region21: #{generator_forward.20} parent=19 // pred_check
        %p142 = pneg %p49
      $region22: #{generator_forward.20} parent=19 // pred_check_branch
        %144 = sbr.rel (%p142) target = $region24
      $region23: #{generator_forward.20} parent=19 // pred_region
        %s145 = smul.u32 16, %s15
        %p146 = scmp.lt.s32.totalorder %s145, 63
        %s147 = scalar_select %p146, %s145, 63
        %p148 = scmp.lt.s32.totalorder %s17, 0
        %s149 = scalar_select %p148, %s17, 0
        %s150 = sadd.s32 %s149, %s147
        %s151 = smul.addr %s150, 4
        %s152 = scalar_lea.vmem %s0, %s151
        %s153 = smul.u32 16, %s15
      $region24: #{generator_forward.20} parent=19 // pred_fallthru
        _
    $region20: #{generator_forward.20} parent=5 // pred_fallthru
      _
    %p154 = scmp.le.s32.totalorder 1, %s8
    %p155 = scmp.lt.s32.totalorder %s8, 5
    %p156 = pnand %p154, %p155
    %p157 = pneg %p156
    // Predicated region
    $region25: #{generator_forward.20} parent=5 // pred_check
      _
    $region26: #{generator_forward.20} parent=5 // pred_check_branch
      %159 = sbr.rel (%p156) target = $region28
    $region27: #{generator_forward.20} parent=5 // pred_region
      %s160 = ssub.s32 %s8, 1
      %s161 = smul.u32 16, %s18
      %p162 = scmp.lt.s32.totalorder %s161, 63
      %s163 = scalar_select %p162, %s161, 63
      %p164 = scmp.lt.s32.totalorder %s20, 0
      %s165 = scalar_select %p164, %s20, 0
      %s166 = sadd.s32 %s165, %s163
      %s167 = smul.addr %s166, 4
      %s168 = scalar_lea.vmem %s0, %s167
      %p169 = pneg %p55
      %p170 = pneg %p52
      %s171 = smul.u32 16, %s20
      %p172 = scmp.lt.s32.totalorder %s171, 15
      %s173 = scalar_select %p172, %s171, 15
      %p174 = scmp.lt.s32.totalorder %s19, 0
      %s175 = scalar_select %p174, %s19, 0
      %s176 = sadd.s32 %s175, %s173
      %s177 = smul.addr %s176, 4
      %s178 = scalar_lea.vmem %s1, %s177
      %p179 = pneg %p83
      %p180 = pneg %p80
      %p181 = pneg %p111
      %p182 = pneg %p108
      %s183 = smul.u32 16, %s18
      %p184 = scmp.lt.s32.totalorder %s183, 63
      %s185 = scalar_select %p184, %s183, 63
      %p186 = scmp.lt.s32.totalorder %s19, 0
      %s187 = scalar_select %p186, %s19, 0
      %s188 = sadd.s32 %s187, %s185
      %s189 = smul.addr %s188, 8
      %s190 = scalar_lea.vmem %s2, %s189
      %s191 = smul.u32 16, %s18
      %p192 = scmp.lt.s32.totalorder %s191, 63
      %s193 = scalar_select %p192, %s191, 63
      %p194 = scmp.lt.s32.totalorder %s20, 0
      %s195 = scalar_select %p194, %s20, 0
      %s196 = sadd.s32 %s195, %s193
      %s197 = smul.addr %s196, 4
      %s198 = scalar_lea.vmem %s0, %s197
      %s199 = smul.u32 16, %s18
      %s200 = smul.u32 16, %s20
      %p201 = scmp.lt.s32.totalorder %s200, 15
      %s202 = scalar_select %p201, %s200, 15
      %p203 = scmp.lt.s32.totalorder %s19, 0
      %s204 = scalar_select %p203, %s19, 0
      %s205 = sadd.s32 %s204, %s202
      %s206 = smul.addr %s205, 4
      %s207 = scalar_lea.vmem %s1, %s206
      %s208 = smul.u32 16, %s20
      %s209 = smul.u32 16, %s18
      %p210 = scmp.lt.s32.totalorder %s209, 63
      %s211 = scalar_select %p210, %s209, 63
      %p212 = scmp.lt.s32.totalorder %s19, 0
      %s213 = scalar_select %p212, %s19, 0
      %s214 = sadd.s32 %s213, %s211
      %s215 = smul.addr %s214, 8
      %s216 = scalar_lea.vmem %s2, %s215
      %s217 = smul.u32 16, %s18
      %p218 = scmp.eq.s32.totalorder %s20, 0
      // Predicated region
      $region29: #{generator_forward.20} parent=27 // pred_check
        %p219 = pneg %p218
      $region30: #{generator_forward.20} parent=27 // pred_check_branch
        %221 = sbr.rel (%p219) target = $region32
      $region31: #{generator_forward.20} parent=27 // pred_region
        %222 = vst [vmem:[#allocation2] sm:$0xff] 0.0
        %223 = vst [vmem:[#allocation2 + $0x8] sm:$0xff] 0.0
        %224 = vst [vmem:[#allocation2 + $0x10] sm:$0xff] 0.0
        %225 = vst [vmem:[#allocation2 + $0x18] sm:$0xff] 0.0
        %226 = vst [vmem:[#allocation2 + $0x20] sm:$0xff] 0.0
        %227 = vst [vmem:[#allocation2 + $0x28] sm:$0xff] 0.0
        %228 = vst [vmem:[#allocation2 + $0x30] sm:$0xff] 0.0
        %229 = vst [vmem:[#allocation2 + $0x38] sm:$0xff] 0.0
        %230 = vst [vmem:[#allocation2 + $0x40] sm:$0xff] 0.0
        %231 = vst [vmem:[#allocation2 + $0x48] sm:$0xff] 0.0
        %232 = vst [vmem:[#allocation2 + $0x50] sm:$0xff] 0.0
        %233 = vst [vmem:[#allocation2 + $0x58] sm:$0xff] 0.0
        %234 = vst [vmem:[#allocation2 + $0x60] sm:$0xff] 0.0
        %235 = vst [vmem:[#allocation2 + $0x68] sm:$0xff] 0.0
        %236 = vst [vmem:[#allocation2 + $0x70] sm:$0xff] 0.0
        %237 = vst [vmem:[#allocation2 + $0x78] sm:$0xff] 0.0
      $region32: #{generator_forward.20} parent=27 // pred_fallthru
        _
      %v238 = vld [vmem:[#allocation2] sm:$0xff]
      %v239 = vld [vmem:[#allocation2 + $0x8] sm:$0xff]
      %v240 = vld [vmem:[#allocation2 + $0x10] sm:$0xff]
      %v241 = vld [vmem:[#allocation2 + $0x18] sm:$0xff]
      %v242 = vld [vmem:[#allocation2 + $0x20] sm:$0xff]
      %v243 = vld [vmem:[#allocation2 + $0x28] sm:$0xff]
      %v244 = vld [vmem:[#allocation2 + $0x30] sm:$0xff]
      %v245 = vld [vmem:[#allocation2 + $0x38] sm:$0xff]
      %v246 = vld [vmem:[#allocation2 + $0x40] sm:$0xff]
      %v247 = vld [vmem:[#allocation2 + $0x48] sm:$0xff]
      %v248 = vld [vmem:[#allocation2 + $0x50] sm:$0xff]
      %v249 = vld [vmem:[#allocation2 + $0x58] sm:$0xff]
      %v250 = vld [vmem:[#allocation2 + $0x60] sm:$0xff]
      %v251 = vld [vmem:[#allocation2 + $0x68] sm:$0xff]
      %v252 = vld [vmem:[#allocation2 + $0x70] sm:$0xff]
      %v253 = vld [vmem:[#allocation2 + $0x78] sm:$0xff]
      %v254 = vld [vmem:[%s198] sm:$0xf]
      %v255 = vld [vmem:[%s198 + $0x4] sm:$0xf]
      %v256 = vld [vmem:[%s198 + $0x8] sm:$0xf]
      %v257 = vld [vmem:[%s198 + $0xc] sm:$0xf]
      %v258 = vld [vmem:[%s198 + $0x10] sm:$0xf]
      %v259 = vld [vmem:[%s198 + $0x14] sm:$0xf]
      %v260 = vld [vmem:[%s198 + $0x18] sm:$0xf]
      %v261 = vld [vmem:[%s198 + $0x1c] sm:$0xf]
      %v262 = vld [vmem:[%s198 + $0x20] sm:$0xf]
      %v263 = vld [vmem:[%s198 + $0x24] sm:$0xf]
      %v264 = vld [vmem:[%s198 + $0x28] sm:$0xf]
      %v265 = vld [vmem:[%s198 + $0x2c] sm:$0xf]
      %v266 = vld [vmem:[%s198 + $0x30] sm:$0xf]
      %v267 = vld [vmem:[%s198 + $0x34] sm:$0xf]
      %v268 = vld [vmem:[%s198 + $0x38] sm:$0xf]
      %v269 = vld [vmem:[%s198 + $0x3c] sm:$0xf]
      %v270 = vld [vmem:[%s207] sm:$0xf]
      %v271 = vld [vmem:[%s207 + $0x4] sm:$0xf]
      %v272 = vld [vmem:[%s207 + $0x8] sm:$0xf]
      %v273 = vld [vmem:[%s207 + $0xc] sm:$0xf]
      %v274 = vld [vmem:[%s207 + $0x10] sm:$0xf]
      %v275 = vld [vmem:[%s207 + $0x14] sm:$0xf]
      %v276 = vld [vmem:[%s207 + $0x18] sm:$0xf]
      %v277 = vld [vmem:[%s207 + $0x1c] sm:$0xf]
      %v278 = vld [vmem:[%s207 + $0x20] sm:$0xf]
      %v279 = vld [vmem:[%s207 + $0x24] sm:$0xf]
      %v280 = vld [vmem:[%s207 + $0x28] sm:$0xf]
      %v281 = vld [vmem:[%s207 + $0x2c] sm:$0xf]
      %v282 = vld [vmem:[%s207 + $0x30] sm:$0xf]
      %v283 = vld [vmem:[%s207 + $0x34] sm:$0xf]
      %v284 = vld [vmem:[%s207 + $0x38] sm:$0xf]
      %v285 = vld [vmem:[%s207 + $0x3c] sm:$0xf]
      %v302 = vunpack.c.l.b16 %v254
      %v303 = vunpack.c.l.b16 %v255
      %v304 = vunpack.c.l.b16 %v256
      %v305 = vunpack.c.l.b16 %v257
      %v306 = vunpack.c.l.b16 %v258
      %v307 = vunpack.c.l.b16 %v259
      %v308 = vunpack.c.l.b16 %v260
      %v309 = vunpack.c.l.b16 %v261
      %v310 = vunpack.c.l.b16 %v262
      %v311 = vunpack.c.l.b16 %v263
      %v312 = vunpack.c.l.b16 %v264
      %v313 = vunpack.c.l.b16 %v265
      %v314 = vunpack.c.l.b16 %v266
      %v315 = vunpack.c.l.b16 %v267
      %v316 = vunpack.c.l.b16 %v268
      %v317 = vunpack.c.l.b16 %v269
      %v318 = vpack.c.b16 %v303, %v302
      %v319 = vpack.c.b16 %v305, %v304
      %v320 = vpack.c.b16 %v307, %v306
      %v321 = vpack.c.b16 %v309, %v308
      %v322 = vpack.c.b16 %v311, %v310
      %v323 = vpack.c.b16 %v313, %v312
      %v324 = vpack.c.b16 %v315, %v314
      %v325 = vpack.c.b16 %v317, %v316
      %v350 = vunpack.c.l.b16 %v270
      %v351 = vunpack.c.l.b16 %v271
      %v352 = vunpack.c.l.b16 %v272
      %v353 = vunpack.c.l.b16 %v273
      %v354 = vunpack.c.l.b16 %v274
      %v355 = vunpack.c.l.b16 %v275
      %v356 = vunpack.c.l.b16 %v276
      %v357 = vunpack.c.l.b16 %v277
      %v358 = vunpack.c.l.b16 %v278
      %v359 = vunpack.c.l.b16 %v279
      %v360 = vunpack.c.l.b16 %v280
      %v361 = vunpack.c.l.b16 %v281
      %v362 = vunpack.c.l.b16 %v282
      %v363 = vunpack.c.l.b16 %v283
      %v364 = vunpack.c.l.b16 %v284
      %v365 = vunpack.c.l.b16 %v285
      %v366 = vpack.c.b16 %v351, %v350
      %v367 = vpack.c.b16 %v353, %v352
      %v368 = vpack.c.b16 %v355, %v354
      %v369 = vpack.c.b16 %v357, %v356
      %v370 = vpack.c.b16 %v359, %v358
      %v371 = vpack.c.b16 %v361, %v360
      %v372 = vpack.c.b16 %v363, %v362
      %v373 = vpack.c.b16 %v365, %v364
      %382 = vmatpush.bf16.msra.mxu0 %v373
      %383 = vmatpush.bf16.msra.mxu0 %v372
      %384 = vmatpush.bf16.msra.mxu0 %v371
      %385 = vmatpush.bf16.msra.mxu0 %v370
      %386 = vmatpush.bf16.msra.mxu0 %v369
      %387 = vmatpush.bf16.msra.mxu0 %v368
      %388 = vmatpush.bf16.msra.mxu0 %v367
      %389 = vmatpush.bf16.msra.mxu0 %v366
      %390 = vmatmul.bf16.gmra.mxu0 %v318
      %v391 = vpop.f32.mrf.mxu0
      %v392 = vadd.f32 0.0, %v391
      %v393 = vpop.f32.mrf.mxu0
      %v394 = vadd.f32 0.0, %v393
      %395 = vmatmul.bf16.gmra.mxu0 %v319
      %v396 = vpop.f32.mrf.mxu0
      %v397 = vadd.f32 0.0, %v396
      %v398 = vpop.f32.mrf.mxu0
      %v399 = vadd.f32 0.0, %v398
      %400 = vmatmul.bf16.gmra.mxu0 %v320
      %v401 = vpop.f32.mrf.mxu0
      %v402 = vadd.f32 0.0, %v401
      %v403 = vpop.f32.mrf.mxu0
      %v404 = vadd.f32 0.0, %v403
      %405 = vmatmul.bf16.gmra.mxu0 %v321
      %v406 = vpop.f32.mrf.mxu0
      %v407 = vadd.f32 0.0, %v406
      %v408 = vpop.f32.mrf.mxu0
      %v409 = vadd.f32 0.0, %v408
      %410 = vmatmul.bf16.gmra.mxu0 %v322
      %v411 = vpop.f32.mrf.mxu0
      %v412 = vadd.f32 0.0, %v411
      %v413 = vpop.f32.mrf.mxu0
      %v414 = vadd.f32 0.0, %v413
      %415 = vmatmul.bf16.gmra.mxu0 %v323
      %v416 = vpop.f32.mrf.mxu0
      %v417 = vadd.f32 0.0, %v416
      %v418 = vpop.f32.mrf.mxu0
      %v419 = vadd.f32 0.0, %v418
      %420 = vmatmul.bf16.gmra.mxu0 %v324
      %v421 = vpop.f32.mrf.mxu0
      %v422 = vadd.f32 0.0, %v421
      %v423 = vpop.f32.mrf.mxu0
      %v424 = vadd.f32 0.0, %v423
      %425 = vmatmul.bf16.gmra.mxu0 %v325
      %v426 = vpop.f32.mrf.mxu0
      %v427 = vadd.f32 0.0, %v426
      %v428 = vpop.f32.mrf.mxu0
      %v429 = vadd.f32 0.0, %v428
      %430 = vdwg.mxu0
      %v431 = vadd.f32 %v238, %v392
      %v432 = vadd.f32 %v239, %v394
      %v433 = vadd.f32 %v240, %v397
      %v434 = vadd.f32 %v241, %v399
      %v435 = vadd.f32 %v242, %v402
      %v436 = vadd.f32 %v243, %v404
      %v437 = vadd.f32 %v244, %v407
      %v438 = vadd.f32 %v245, %v409
      %v439 = vadd.f32 %v246, %v412
      %v440 = vadd.f32 %v247, %v414
      %v441 = vadd.f32 %v248, %v417
      %v442 = vadd.f32 %v249, %v419
      %v443 = vadd.f32 %v250, %v422
      %v444 = vadd.f32 %v251, %v424
      %v445 = vadd.f32 %v252, %v427
      %v446 = vadd.f32 %v253, %v429
      %447 = vst [vmem:[#allocation2] sm:$0xff] %v431
      %448 = vst [vmem:[#allocation2 + $0x8] sm:$0xff] %v432
      %449 = vst [vmem:[#allocation2 + $0x10] sm:$0xff] %v433
      %450 = vst [vmem:[#allocation2 + $0x18] sm:$0xff] %v434
      %451 = vst [vmem:[#allocation2 + $0x20] sm:$0xff] %v435
      %452 = vst [vmem:[#allocation2 + $0x28] sm:$0xff] %v436
      %453 = vst [vmem:[#allocation2 + $0x30] sm:$0xff] %v437
      %454 = vst [vmem:[#allocation2 + $0x38] sm:$0xff] %v438
      %455 = vst [vmem:[#allocation2 + $0x40] sm:$0xff] %v439
      %456 = vst [vmem:[#allocation2 + $0x48] sm:$0xff] %v440
      %457 = vst [vmem:[#allocation2 + $0x50] sm:$0xff] %v441
      %458 = vst [vmem:[#allocation2 + $0x58] sm:$0xff] %v442
      %459 = vst [vmem:[#allocation2 + $0x60] sm:$0xff] %v443
      %460 = vst [vmem:[#allocation2 + $0x68] sm:$0xff] %v444
      %461 = vst [vmem:[#allocation2 + $0x70] sm:$0xff] %v445
      %462 = vst [vmem:[#allocation2 + $0x78] sm:$0xff] %v446
      // Predicated region
      $region33: #{generator_forward.20} parent=27 // pred_check
        %p463 = pneg %p218
      $region34: #{generator_forward.20} parent=27 // pred_check_branch
        %465 = sbr.rel (%p463) target = $region36
      $region35: #{generator_forward.20} parent=27 // pred_region
        %v466 = vld [vmem:[#allocation2] sm:$0xff]
        %v467 = vld [vmem:[#allocation2 + $0x8] sm:$0xff]
        %v468 = vld [vmem:[#allocation2 + $0x10] sm:$0xff]
        %v469 = vld [vmem:[#allocation2 + $0x18] sm:$0xff]
        %v470 = vld [vmem:[#allocation2 + $0x20] sm:$0xff]
        %v471 = vld [vmem:[#allocation2 + $0x28] sm:$0xff]
        %v472 = vld [vmem:[#allocation2 + $0x30] sm:$0xff]
        %v473 = vld [vmem:[#allocation2 + $0x38] sm:$0xff]
        %v474 = vld [vmem:[#allocation2 + $0x40] sm:$0xff]
        %v475 = vld [vmem:[#allocation2 + $0x48] sm:$0xff]
        %v476 = vld [vmem:[#allocation2 + $0x50] sm:$0xff]
        %v477 = vld [vmem:[#allocation2 + $0x58] sm:$0xff]
        %v478 = vld [vmem:[#allocation2 + $0x60] sm:$0xff]
        %v479 = vld [vmem:[#allocation2 + $0x68] sm:$0xff]
        %v480 = vld [vmem:[#allocation2 + $0x70] sm:$0xff]
        %v481 = vld [vmem:[#allocation2 + $0x78] sm:$0xff]
        %482 = vst [vmem:[%s216] sm:$0xff] %v466
        %483 = vst [vmem:[%s216 + $0x8] sm:$0xff] %v467
        %484 = vst [vmem:[%s216 + $0x10] sm:$0xff] %v468
        %485 = vst [vmem:[%s216 + $0x18] sm:$0xff] %v469
        %486 = vst [vmem:[%s216 + $0x20] sm:$0xff] %v470
        %487 = vst [vmem:[%s216 + $0x28] sm:$0xff] %v471
        %488 = vst [vmem:[%s216 + $0x30] sm:$0xff] %v472
        %489 = vst [vmem:[%s216 + $0x38] sm:$0xff] %v473
        %490 = vst [vmem:[%s216 + $0x40] sm:$0xff] %v474
        %491 = vst [vmem:[%s216 + $0x48] sm:$0xff] %v475
        %492 = vst [vmem:[%s216 + $0x50] sm:$0xff] %v476
        %493 = vst [vmem:[%s216 + $0x58] sm:$0xff] %v477
        %494 = vst [vmem:[%s216 + $0x60] sm:$0xff] %v478
        %495 = vst [vmem:[%s216 + $0x68] sm:$0xff] %v479
        %496 = vst [vmem:[%s216 + $0x70] sm:$0xff] %v480
        %497 = vst [vmem:[%s216 + $0x78] sm:$0xff] %v481
      $region36: #{generator_forward.20} parent=27 // pred_fallthru
        _
      %s498 = smul.u32 16, %s18
      %p499 = scmp.lt.s32.totalorder %s498, 63
      %s500 = scalar_select %p499, %s498, 63
      %p501 = scmp.lt.s32.totalorder %s19, 0
      %s502 = scalar_select %p501, %s19, 0
      %s503 = sadd.s32 %s502, %s500
      %s504 = smul.addr %s503, 8
      %s505 = scalar_lea.vmem %s2, %s504
      // Predicated region
      $region37: #{generator_forward.20} parent=27 // pred_check
        %p506 = pneg %p108
      $region38: #{generator_forward.20} parent=27 // pred_check_branch
        %508 = sbr.rel (%p506) target = $region40
      $region39: #{generator_forward.20} parent=27 // pred_region
        %s509 = smul.u32 16, %s18
      $region40: #{generator_forward.20} parent=27 // pred_fallthru
        _
    $region28: #{generator_forward.20} parent=5 // pred_fallthru
      _
    %p510 = scmp.le.s32.totalorder 2, %s8
    // Predicated region
    $region41: #{generator_forward.20} parent=5 // pred_check
      %p511 = pneg %p510
    $region42: #{generator_forward.20} parent=5 // pred_check_branch
      %513 = sbr.rel (%p511) target = $region44
    $region43: #{generator_forward.20} parent=5 // pred_region
      %s514 = ssub.s32 %s8, 2
      // Predicated region
      $region45: #{generator_forward.20} parent=43 // pred_check
        %p515 = pneg %p114
      $region46: #{generator_forward.20} parent=43 // pred_check_branch
        %517 = sbr.rel (%p515) target = $region48
      $region47: #{generator_forward.20} parent=43 // pred_region
        %s518 = smul.u32 16, %s21
        %p519 = scmp.lt.s32.totalorder %s518, 63
        %s520 = scalar_select %p519, %s518, 63
        %p521 = scmp.lt.s32.totalorder %s22, 0
        %s522 = scalar_select %p521, %s22, 0
        %s523 = sadd.s32 %s522, %s520
        %s524 = smul.addr %s523, 8
        %s525 = scalar_lea.vmem %s2, %s524
      $region48: #{generator_forward.20} parent=43 // pred_fallthru
        _
    $region44: #{generator_forward.20} parent=5 // pred_fallthru
      _
  $region6: #{generator_forward.20} parent=0 // loop_footer
    %s12 = sadd.s32 1, %s8
  $region7: #{generator_forward.20} parent=0 // loop_footer_branch
    %7 = sbr.rel target = $region3
  $region8: #{generator_forward.20} parent=0 // loop_exit
    _

// kernel: generator_forward.19
$region0: #{generator_forward.19}
  #allocation0 [shape = 'u32[]', space=smem, size = 0x4, offset = 0x4, fixed_abs, tag = 'smem constant byte address 0x4 - core index']
  #allocation1 [shape = 'u32[72,128]{1,0:T(1,128)}', space=vmem, size = 0x9000, scoped, tag = 'internal scratch']
  %s0 = inlined_call_operand.vmem [shape: f32[512,128], index: 0, kind: input, shape index: {}]
  %s1 = inlined_call_operand.vmem [shape: f32[2,128], index: 1, kind: input, shape index: {}]
  %s2 = inlined_call_operand.vmem [shape: bf16[512,128], index: 2, kind: output, shape index: {}]
  %s3 = sld [smem:[#allocation0]]
  $region41: #{generator_forward.19} parent=0
    _
  %s5 = ssub.s32 1, %s3
  %s6 = scalar_select 0, %s5, %s3
  loop: start=0, step=1, limit=4
  $region2: #{generator_forward.19} parent=0 // loop_pre_header
    _
  $region3: #{generator_forward.19} parent=0 // loop_header
    %s8 = sphi 0, %s12
    %p9 = scmp.ge.s32.totalorder %s8, 4
    %s18 = sphi 0, %s20
    %s21 = sphi 0, %s18
    %s22 = sphi 0, %s21
    %s38 = sphi 0, %s22
    %s42 = sphi 0, %s42
    %s44 = sphi 0, %s42
    %s45 = sphi 0, %s44
    %s59 = sphi 0, %s45
    %s65 = sphi 0, %s67
    %s68 = sphi 0, %s65
    %s69 = sphi 0, %s68
    %s85 = sphi 0, %s69
  $region4: #{generator_forward.19} parent=0 // loop_header_branch
    %11 = sbr.rel (%p9) target = $region8
  $region5: #{generator_forward.19} parent=0 // loop_body
    %s13 = ssub.s32 %s8, 1
    %s14 = ssub.s32 %s8, 2
    %s15 = sadd.s32 %s8, 1
    %s16 = ssub.s32 %s8, %s15
    %p17 = scmp.eq.s32.totalorder %s16, 0
    %s19 = sadd.s32 %s18, 1
    %s20 = scalar_select %p17, %s18, %s19
    %p23 = pneg %p17
    %p24 = scmp.eq.s32.totalorder %s8, 1
    %p25 = por %p23, %p24
    %p26 = scmp.ne.s32.totalorder %s18, %s21
    %p27 = scmp.eq.s32.totalorder %s8, 0
    %p28 = por %p26, %p27
    %p29 = scmp.ne.s32.totalorder %s18, %s21
    %p30 = scmp.eq.s32.totalorder %s13, 1
    %p31 = por %p29, %p30
    %p32 = scmp.ne.s32.totalorder %s21, %s22
    %p33 = scmp.eq.s32.totalorder %s13, 0
    %p34 = por %p32, %p33
    %p35 = scmp.ne.s32.totalorder %s21, %s22
    %p36 = scmp.eq.s32.totalorder %s14, 1
    %p37 = por %p35, %p36
    %p39 = scmp.ne.s32.totalorder %s22, %s38
    %p40 = scmp.eq.s32.totalorder %s14, 0
    %p41 = por %p39, %p40
    %s43 = sadd.s32 %s42, 1
    %p46 = scmp.eq.s32.totalorder %s8, 1
    %p47 = scmp.ne.s32.totalorder %s42, %s44
    %p48 = scmp.eq.s32.totalorder %s8, 0
    %p49 = por %p47, %p48
    %p50 = scmp.ne.s32.totalorder %s42, %s44
    %p51 = scmp.eq.s32.totalorder %s13, 1
    %p52 = por %p50, %p51
    %p53 = scmp.ne.s32.totalorder %s44, %s45
    %p54 = scmp.eq.s32.totalorder %s13, 0
    %p55 = por %p53, %p54
    %p56 = scmp.ne.s32.totalorder %s44, %s45
    %p57 = scmp.eq.s32.totalorder %s14, 1
    %p58 = por %p56, %p57
    %p60 = scmp.ne.s32.totalorder %s45, %s59
    %p61 = scmp.eq.s32.totalorder %s14, 0
    %p62 = por %p60, %p61
    %s63 = ssub.s32 %s8, %s15
    %p64 = scmp.eq.s32.totalorder %s63, 0
    %s66 = sadd.s32 %s65, 1
    %s67 = scalar_select %p64, %s65, %s66
    %p70 = pneg %p64
    %p71 = scmp.eq.s32.totalorder %s8, 1
    %p72 = por %p70, %p71
    %p73 = scmp.ne.s32.totalorder %s65, %s68
    %p74 = scmp.eq.s32.totalorder %s8, 0
    %p75 = por %p73, %p74
    %p76 = scmp.ne.s32.totalorder %s65, %s68
    %p77 = scmp.eq.s32.totalorder %s13, 1
    %p78 = por %p76, %p77
    %p79 = scmp.ne.s32.totalorder %s68, %s69
    %p80 = scmp.eq.s32.totalorder %s13, 0
    %p81 = por %p79, %p80
    %p82 = scmp.ne.s32.totalorder %s68, %s69
    %p83 = scmp.eq.s32.totalorder %s14, 1
    %p84 = por %p82, %p83
    %p86 = scmp.ne.s32.totalorder %s69, %s85
    %p87 = scmp.eq.s32.totalorder %s14, 0
    %p88 = por %p86, %p87
    %p89 = scmp.le.s32.totalorder 1, %s8
    %p90 = scmp.lt.s32.totalorder %s8, 3
    %p91 = pnand %p89, %p90
    %p92 = pneg %p91
    // Predicated region
    $region9: #{generator_forward.19} parent=5 // pred_check
      _
    $region10: #{generator_forward.19} parent=5 // pred_check_branch
      %94 = sbr.rel (%p91) target = $region12
    $region11: #{generator_forward.19} parent=5 // pred_region
      %s95 = ssub.s32 %s8, 1
      // Predicated region
      $region13: #{generator_forward.19} parent=11 // pred_check
        %p96 = pneg %p55
      $region14: #{generator_forward.19} parent=11 // pred_check_branch
        %98 = sbr.rel (%p96) target = $region16
      $region15: #{generator_forward.19} parent=11 // pred_region
        _
      $region16: #{generator_forward.19} parent=11 // pred_fallthru
        _
    $region12: #{generator_forward.19} parent=5 // pred_fallthru
      _
    %p99 = scmp.lt.s32.totalorder %s8, 2
    // Predicated region
    $region17: #{generator_forward.19} parent=5 // pred_check
      %p100 = pneg %p99
    $region18: #{generator_forward.19} parent=5 // pred_check_branch
      %102 = sbr.rel (%p100) target = $region20
    $region19: #{generator_forward.19} parent=5 // pred_region
      // Predicated region
      $region21: #{generator_forward.19} parent=19 // pred_check
        %p103 = pneg %p28
      $region22: #{generator_forward.19} parent=19 // pred_check_branch
        %105 = sbr.rel (%p103) target = $region24
      $region23: #{generator_forward.19} parent=19 // pred_region
        %s106 = smul.u32 32, %s8
        %p107 = scmp.lt.s32.totalorder %s106, 63
        %s108 = scalar_select %p107, %s106, 63
        %s109 = smul.addr %s108, 8
        %s110 = scalar_lea.vmem %s0, %s109
        %s111 = smul.u32 32, %s8
      $region24: #{generator_forward.19} parent=19 // pred_fallthru
        _
    $region20: #{generator_forward.19} parent=5 // pred_fallthru
      _
    %p112 = scmp.le.s32.totalorder 1, %s8
    %p113 = scmp.lt.s32.totalorder %s8, 3
    %p114 = pnand %p112, %p113
    %p115 = pneg %p114
    // Predicated region
    $region25: #{generator_forward.19} parent=5 // pred_check
      _
    $region26: #{generator_forward.19} parent=5 // pred_check_branch
      %117 = sbr.rel (%p114) target = $region28
    $region27: #{generator_forward.19} parent=5 // pred_region
      %s118 = ssub.s32 %s8, 1
      %s119 = smul.u32 32, %s13
      %p120 = scmp.lt.s32.totalorder %s119, 63
      %s121 = scalar_select %p120, %s119, 63
      %s122 = smul.addr %s121, 8
      %s123 = scalar_lea.vmem %s0, %s122
      %p124 = pneg %p34
      %p125 = pneg %p31
      %p126 = pneg %p55
      %p127 = pneg %p52
      %p128 = pneg %p81
      %p129 = pneg %p78
      %s130 = smul.u32 32, %s13
      %p131 = scmp.lt.s32.totalorder %s130, 63
      %s132 = scalar_select %p131, %s130, 63
      %s133 = smul.addr %s132, 4
      %s134 = scalar_lea.vmem %s2, %s133
      %s135 = smul.u32 32, %s13
      %p136 = scmp.lt.s32.totalorder %s135, 63
      %s137 = scalar_select %p136, %s135, 63
      %s138 = smul.addr %s137, 8
      %s139 = scalar_lea.vmem %s0, %s138
      %s140 = smul.u32 32, %s13
      %s141 = smul.u32 32, %s13
      %p142 = scmp.lt.s32.totalorder %s141, 63
      %s143 = scalar_select %p142, %s141, 63
      %s144 = smul.addr %s143, 4
      %s145 = scalar_lea.vmem %s2, %s144
      %s146 = smul.u32 32, %s13
      %v147 = vld [vmem:[%s1] sm:$0x3]
      %v148 = vmul.f32 %v147, 0.001953125
      %v149 = vmul.f32 %v148, %v148
      %v151 = vrot.slane %v149, 7
      %v153 = vsub.f32 %v148, %v151
      %v154 = vmax.f32 %v153, 0.0
      %v155 = vld [vmem:[%s139] sm:$0xff]
      %v156 = vld [vmem:[%s139 + $0x8] sm:$0xff]
      %v157 = vld [vmem:[%s139 + $0x10] sm:$0xff]
      %v158 = vld [vmem:[%s139 + $0x18] sm:$0xff]
      %v159 = vld [vmem:[%s139 + $0x20] sm:$0xff]
      %v160 = vld [vmem:[%s139 + $0x28] sm:$0xff]
      %v161 = vld [vmem:[%s139 + $0x30] sm:$0xff]
      %v162 = vld [vmem:[%s139 + $0x38] sm:$0xff]
      %v163 = vld [vmem:[%s139 + $0x40] sm:$0xff]
      %v164 = vld [vmem:[%s139 + $0x48] sm:$0xff]
      %v165 = vld [vmem:[%s139 + $0x50] sm:$0xff]
      %v166 = vld [vmem:[%s139 + $0x58] sm:$0xff]
      %v167 = vld [vmem:[%s139 + $0x60] sm:$0xff]
      %v168 = vld [vmem:[%s139 + $0x68] sm:$0xff]
      %v169 = vld [vmem:[%s139 + $0x70] sm:$0xff]
      %v170 = vld [vmem:[%s139 + $0x78] sm:$0xff]
      %v171 = vld [vmem:[%s139 + $0x80] sm:$0xff]
      %v172 = vld [vmem:[%s139 + $0x88] sm:$0xff]
      %v173 = vld [vmem:[%s139 + $0x90] sm:$0xff]
      %v174 = vld [vmem:[%s139 + $0x98] sm:$0xff]
      %v175 = vld [vmem:[%s139 + $0xa0] sm:$0xff]
      %v176 = vld [vmem:[%s139 + $0xa8] sm:$0xff]
      %v177 = vld [vmem:[%s139 + $0xb0] sm:$0xff]
      %v178 = vld [vmem:[%s139 + $0xb8] sm:$0xff]
      %v179 = vld [vmem:[%s139 + $0xc0] sm:$0xff]
      %v180 = vld [vmem:[%s139 + $0xc8] sm:$0xff]
      %v181 = vld [vmem:[%s139 + $0xd0] sm:$0xff]
      %v182 = vld [vmem:[%s139 + $0xd8] sm:$0xff]
      %v183 = vld [vmem:[%s139 + $0xe0] sm:$0xff]
      %v184 = vld [vmem:[%s139 + $0xe8] sm:$0xff]
      %v185 = vld [vmem:[%s139 + $0xf0] sm:$0xff]
      %v186 = vld [vmem:[%s139 + $0xf8] sm:$0xff]
      %v187 = vperm.slane %v148, 0
      %v188 = vsub.f32 %v155, %v187
      %v189 = vsub.f32 %v156, %v187
      %v190 = vsub.f32 %v157, %v187
      %v191 = vsub.f32 %v158, %v187
      %v192 = vsub.f32 %v159, %v187
      %v193 = vsub.f32 %v160, %v187
      %v194 = vsub.f32 %v161, %v187
      %v195 = vsub.f32 %v162, %v187
      %v196 = vsub.f32 %v163, %v187
      %v197 = vsub.f32 %v164, %v187
      %v198 = vsub.f32 %v165, %v187
      %v199 = vsub.f32 %v166, %v187
      %v200 = vsub.f32 %v167, %v187
      %v201 = vsub.f32 %v168, %v187
      %v202 = vsub.f32 %v169, %v187
      %v203 = vsub.f32 %v170, %v187
      %v204 = vsub.f32 %v171, %v187
      %v205 = vsub.f32 %v172, %v187
      %v206 = vsub.f32 %v173, %v187
      %v207 = vsub.f32 %v174, %v187
      %v208 = vsub.f32 %v175, %v187
      %v209 = vsub.f32 %v176, %v187
      %v210 = vsub.f32 %v177, %v187
      %v211 = vsub.f32 %v178, %v187
      %v212 = vsub.f32 %v179, %v187
      %v213 = vsub.f32 %v180, %v187
      %v214 = vsub.f32 %v181, %v187
      %v215 = vsub.f32 %v182, %v187
      %v216 = vsub.f32 %v183, %v187
      %v217 = vsub.f32 %v184, %v187
      %v218 = vsub.f32 %v185, %v187
      %v219 = vsub.f32 %v186, %v187
      %v220 = vadd.f32 %v154, 1e-05
      %v221 = vrsqrt.pop %v220
      %v222 = vmul.f32 %v221, %v220
      %v223 = vmul.f32 %v222, %v221
      %v224 = vmul.f32 0.5, %v223
      %v225 = vsub.f32 1.5, %v224
      %v226 = vmul.f32 %v221, %v225
      %vm227 = vweird.f32 %v220
      %vm228 = vweird.f32 %v221
      %vm229 = vmor %vm227, %vm228
      %v230 = vsel %vm229, %v221, %v226
      %v231 = vperm.slane %v230, 1
      %v232 = vmul.f32 %v188, %v231
      %v233 = vmul.f32 %v189, %v231
      %v234 = vmul.f32 %v190, %v231
      %v235 = vmul.f32 %v191, %v231
      %v236 = vmul.f32 %v192, %v231
      %v237 = vmul.f32 %v193, %v231
      %v238 = vmul.f32 %v194, %v231
      %v239 = vmul.f32 %v195, %v231
      %v240 = vmul.f32 %v196, %v231
      %v241 = vmul.f32 %v197, %v231
      %v242 = vmul.f32 %v198, %v231
      %v243 = vmul.f32 %v199, %v231
      %v244 = vmul.f32 %v200, %v231
      %v245 = vmul.f32 %v201, %v231
      %v246 = vmul.f32 %v202, %v231
      %v247 = vmul.f32 %v203, %v231
      %v248 = vmul.f32 %v204, %v231
      %v249 = vmul.f32 %v205, %v231
      %v250 = vmul.f32 %v206, %v231
      %v251 = vmul.f32 %v207, %v231
      %v252 = vmul.f32 %v208, %v231
      %v253 = vmul.f32 %v209, %v231
      %v254 = vmul.f32 %v210, %v231
      %v255 = vmul.f32 %v211, %v231
      %v256 = vmul.f32 %v212, %v231
      %v257 = vmul.f32 %v213, %v231
      %v258 = vmul.f32 %v214, %v231
      %v259 = vmul.f32 %v215, %v231
      %v260 = vmul.f32 %v216, %v231
      %v261 = vmul.f32 %v217, %v231
      %v262 = vmul.f32 %v218, %v231
      %v263 = vmul.f32 %v219, %v231
      %vm264 = vcmp.gt.f32.partialorder %v232, 0.0
      %vm265 = vcmp.gt.f32.partialorder %v233, 0.0
      %vm266 = vcmp.gt.f32.partialorder %v234, 0.0
      %vm267 = vcmp.gt.f32.partialorder %v235, 0.0
      %vm268 = vcmp.gt.f32.partialorder %v236, 0.0
      %vm269 = vcmp.gt.f32.partialorder %v237, 0.0
      %vm270 = vcmp.gt.f32.partialorder %v238, 0.0
      %vm271 = vcmp.gt.f32.partialorder %v239, 0.0
      %vm272 = vcmp.gt.f32.partialorder %v240, 0.0
      %vm273 = vcmp.gt.f32.partialorder %v241, 0.0
      %vm274 = vcmp.gt.f32.partialorder %v242, 0.0
      %vm275 = vcmp.gt.f32.partialorder %v243, 0.0
      %vm276 = vcmp.gt.f32.partialorder %v244, 0.0
      %vm277 = vcmp.gt.f32.partialorder %v245, 0.0
      %vm278 = vcmp.gt.f32.partialorder %v246, 0.0
      %vm279 = vcmp.gt.f32.partialorder %v247, 0.0
      %vm280 = vcmp.gt.f32.partialorder %v248, 0.0
      %vm281 = vcmp.gt.f32.partialorder %v249, 0.0
      %vm282 = vcmp.gt.f32.partialorder %v250, 0.0
      %vm283 = vcmp.gt.f32.partialorder %v251, 0.0
      %vm284 = vcmp.gt.f32.partialorder %v252, 0.0
      %vm285 = vcmp.gt.f32.partialorder %v253, 0.0
      %vm286 = vcmp.gt.f32.partialorder %v254, 0.0
      %vm287 = vcmp.gt.f32.partialorder %v255, 0.0
      %vm288 = vcmp.gt.f32.partialorder %v256, 0.0
      %vm289 = vcmp.gt.f32.partialorder %v257, 0.0
      %vm290 = vcmp.gt.f32.partialorder %v258, 0.0
      %vm291 = vcmp.gt.f32.partialorder %v259, 0.0
      %vm292 = vcmp.gt.f32.partialorder %v260, 0.0
      %vm293 = vcmp.gt.f32.partialorder %v261, 0.0
      %vm294 = vcmp.gt.f32.partialorder %v262, 0.0
      %vm295 = vcmp.gt.f32.partialorder %v263, 0.0
      %v296 = vmin.f32 %v232, 0.0
      %v297 = vmin.f32 %v233, 0.0
      %v298 = vmin.f32 %v234, 0.0
      %v299 = vmin.f32 %v235, 0.0
      %v300 = vmin.f32 %v236, 0.0
      %v301 = vmin.f32 %v237, 0.0
      %v302 = vmin.f32 %v238, 0.0
      %v303 = vmin.f32 %v239, 0.0
      %v304 = vmin.f32 %v240, 0.0
      %v305 = vmin.f32 %v241, 0.0
      %v306 = vmin.f32 %v242, 0.0
      %v307 = vmin.f32 %v243, 0.0
      %v308 = vmin.f32 %v244, 0.0
      %v309 = vmin.f32 %v245, 0.0
      %v310 = vmin.f32 %v246, 0.0
      %v311 = vmin.f32 %v247, 0.0
      %v312 = vmin.f32 %v248, 0.0
      %v313 = vmin.f32 %v249, 0.0
      %v314 = vmin.f32 %v250, 0.0
      %v315 = vmin.f32 %v251, 0.0
      %v316 = vmin.f32 %v252, 0.0
      %v317 = vmin.f32 %v253, 0.0
      %v318 = vmin.f32 %v254, 0.0
      %v319 = vmin.f32 %v255, 0.0
      %v320 = vmin.f32 %v256, 0.0
      %v321 = vmin.f32 %v257, 0.0
      %v322 = vmin.f32 %v258, 0.0
      %v323 = vmin.f32 %v259, 0.0
      %v324 = vmin.f32 %v260, 0.0
      %v325 = vmin.f32 %v261, 0.0
      %v326 = vmin.f32 %v262, 0.0
      %v327 = vmin.f32 %v263, 0.0
      %v328 = vmul.f32 %v296, 1.442695
      %v329 = vpow.pop %v328
      %v330 = vmul.f32 %v297, 1.442695
      %v331 = vpow.pop %v330
      %v332 = vmul.f32 %v298, 1.442695
      %v333 = vpow.pop %v332
      %v334 = vmul.f32 %v299, 1.442695
      %v335 = vpow.pop %v334
      %v336 = vmul.f32 %v300, 1.442695
      %v337 = vpow.pop %v336
      %v338 = vmul.f32 %v301, 1.442695
      %v339 = vpow.pop %v338
      %v340 = vmul.f32 %v302, 1.442695
      %v341 = vpow.pop %v340
      %v342 = vmul.f32 %v303, 1.442695
      %v343 = vpow.pop %v342
      %v344 = vmul.f32 %v304, 1.442695
      %v345 = vpow.pop %v344
      %v346 = vmul.f32 %v305, 1.442695
      %v347 = vpow.pop %v346
      %v348 = vmul.f32 %v306, 1.442695
      %v349 = vpow.pop %v348
      %v350 = vmul.f32 %v307, 1.442695
      %v351 = vpow.pop %v350
      %v352 = vmul.f32 %v308, 1.442695
      %v353 = vpow.pop %v352
      %v354 = vmul.f32 %v309, 1.442695
      %v355 = vpow.pop %v354
      %v356 = vmul.f32 %v310, 1.442695
      %v357 = vpow.pop %v356
      %v358 = vmul.f32 %v311, 1.442695
      %v359 = vpow.pop %v358
      %v360 = vmul.f32 %v312, 1.442695
      %v361 = vpow.pop %v360
      %v362 = vmul.f32 %v313, 1.442695
      %v363 = vpow.pop %v362
      %v364 = vmul.f32 %v314, 1.442695
      %v365 = vpow.pop %v364
      %v366 = vmul.f32 %v315, 1.442695
      %v367 = vpow.pop %v366
      %v368 = vmul.f32 %v316, 1.442695
      %v369 = vpow.pop %v368
      %v370 = vmul.f32 %v317, 1.442695
      %v371 = vpow.pop %v370
      %v372 = vmul.f32 %v318, 1.442695
      %v373 = vpow.pop %v372
      %v374 = vmul.f32 %v319, 1.442695
      %v375 = vpow.pop %v374
      %v376 = vmul.f32 %v320, 1.442695
      %v377 = vpow.pop %v376
      %v378 = vmul.f32 %v321, 1.442695
      %v379 = vpow.pop %v378
      %v380 = vmul.f32 %v322, 1.442695
      %v381 = vpow.pop %v380
      %v382 = vmul.f32 %v323, 1.442695
      %v383 = vpow.pop %v382
      %v384 = vmul.f32 %v324, 1.442695
      %v385 = vpow.pop %v384
      %v386 = vmul.f32 %v325, 1.442695
      %v387 = vpow.pop %v386
      %v388 = vmul.f32 %v326, 1.442695
      %v389 = vpow.pop %v388
      %v390 = vmul.f32 %v327, 1.442695
      %v391 = vpow.pop %v390
      %v392 = vsub.f32 %v329, 1.0
      %v393 = vsub.f32 %v331, 1.0
      %v394 = vsub.f32 %v333, 1.0
      %v395 = vsub.f32 %v335, 1.0
      %v396 = vsub.f32 %v337, 1.0
      %v397 = vsub.f32 %v339, 1.0
      %v398 = vsub.f32 %v341, 1.0
      %v399 = vsub.f32 %v343, 1.0
      %v400 = vsub.f32 %v345, 1.0
      %v401 = vsub.f32 %v347, 1.0
      %v402 = vsub.f32 %v349, 1.0
      %v403 = vsub.f32 %v351, 1.0
      %v404 = vsub.f32 %v353, 1.0
      %v405 = vsub.f32 %v355, 1.0
      %v406 = vsub.f32 %v357, 1.0
      %v407 = vsub.f32 %v359, 1.0
      %v408 = vsub.f32 %v361, 1.0
      %v409 = vsub.f32 %v363, 1.0
      %v410 = vsub.f32 %v365, 1.0
      %v411 = vsub.f32 %v367, 1.0
      %v412 = vsub.f32 %v369, 1.0
      %v413 = vsub.f32 %v371, 1.0
      %v414 = vsub.f32 %v373, 1.0
      %v415 = vsub.f32 %v375, 1.0
      %v416 = vsub.f32 %v377, 1.0
      %v417 = vsub.f32 %v379, 1.0
      %v418 = vsub.f32 %v381, 1.0
      %v419 = vsub.f32 %v383, 1.0
      %v420 = vsub.f32 %v385, 1.0
      %v421 = vsub.f32 %v387, 1.0
      %v422 = vsub.f32 %v389, 1.0
      %v423 = vsub.f32 %v391, 1.0
      %v424 = vsel %vm264, %v232, %v392
      %v425 = vsel %vm265, %v233, %v393
      %v426 = vsel %vm266, %v234, %v394
      %v427 = vsel %vm267, %v235, %v395
      %v428 = vsel %vm268, %v236, %v396
      %v429 = vsel %vm269, %v237, %v397
      %v430 = vsel %vm270, %v238, %v398
      %v431 = vsel %vm271, %v239, %v399
      %v432 = vsel %vm272, %v240, %v400
      %v433 = vsel %vm273, %v241, %v401
      %v434 = vsel %vm274, %v242, %v402
      %v435 = vsel %vm275, %v243, %v403
      %v436 = vsel %vm276, %v244, %v404
      %v437 = vsel %vm277, %v245, %v405
      %v438 = vsel %vm278, %v246, %v406
      %v439 = vsel %vm279, %v247, %v407
      %v440 = vsel %vm280, %v248, %v408
      %v441 = vsel %vm281, %v249, %v409
      %v442 = vsel %vm282, %v250, %v410
      %v443 = vsel %vm283, %v251, %v411
      %v444 = vsel %vm284, %v252, %v412
      %v445 = vsel %vm285, %v253, %v413
      %v446 = vsel %vm286, %v254, %v414
      %v447 = vsel %vm287, %v255, %v415
      %v448 = vsel %vm288, %v256, %v416
      %v449 = vsel %vm289, %v257, %v417
      %v450 = vsel %vm290, %v258, %v418
      %v451 = vsel %vm291, %v259, %v419
      %v452 = vsel %vm292, %v260, %v420
      %v453 = vsel %vm293, %v261, %v421
      %v454 = vsel %vm294, %v262, %v422
      %v455 = vsel %vm295, %v263, %v423
      %v456 = vpack.c.bf16 %v424, %v424
      %v457 = vpack.c.bf16 %v425, %v425
      %v458 = vpack.c.bf16 %v426, %v426
      %v459 = vpack.c.bf16 %v427, %v427
      %v460 = vpack.c.bf16 %v428, %v428
      %v461 = vpack.c.bf16 %v429, %v429
      %v462 = vpack.c.bf16 %v430, %v430
      %v463 = vpack.c.bf16 %v431, %v431
      %v464 = vpack.c.bf16 %v432, %v432
      %v465 = vpack.c.bf16 %v433, %v433
      %v466 = vpack.c.bf16 %v434, %v434
      %v467 = vpack.c.bf16 %v435, %v435
      %v468 = vpack.c.bf16 %v436, %v436
      %v469 = vpack.c.bf16 %v437, %v437
      %v470 = vpack.c.bf16 %v438, %v438
      %v471 = vpack.c.bf16 %v439, %v439
      %v472 = vpack.c.bf16 %v440, %v440
      %v473 = vpack.c.bf16 %v441, %v441
      %v474 = vpack.c.bf16 %v442, %v442
      %v475 = vpack.c.bf16 %v443, %v443
      %v476 = vpack.c.bf16 %v444, %v444
      %v477 = vpack.c.bf16 %v445, %v445
      %v478 = vpack.c.bf16 %v446, %v446
      %v479 = vpack.c.bf16 %v447, %v447
      %v480 = vpack.c.bf16 %v448, %v448
      %v481 = vpack.c.bf16 %v449, %v449
      %v482 = vpack.c.bf16 %v450, %v450
      %v483 = vpack.c.bf16 %v451, %v451
      %v484 = vpack.c.bf16 %v452, %v452
      %v485 = vpack.c.bf16 %v453, %v453
      %v486 = vpack.c.bf16 %v454, %v454
      %v487 = vpack.c.bf16 %v455, %v455
      %488 = vst [vmem:[%s145] sm:$0xf] %v456
      %489 = vst [vmem:[%s145 + $0x4] sm:$0xf] %v457
      %490 = vst [vmem:[%s145 + $0x8] sm:$0xf] %v458
      %491 = vst [vmem:[%s145 + $0xc] sm:$0xf] %v459
      %492 = vst [vmem:[%s145 + $0x10] sm:$0xf] %v460
      %493 = vst [vmem:[%s145 + $0x14] sm:$0xf] %v461
      %494 = vst [vmem:[%s145 + $0x18] sm:$0xf] %v462
      %495 = vst [vmem:[%s145 + $0x1c] sm:$0xf] %v463
      %496 = vst [vmem:[%s145 + $0x20] sm:$0xf] %v464
      %497 = vst [vmem:[%s145 + $0x24] sm:$0xf] %v465
      %498 = vst [vmem:[%s145 + $0x28] sm:$0xf] %v466
      %499 = vst [vmem:[%s145 + $0x2c] sm:$0xf] %v467
      %500 = vst [vmem:[%s145 + $0x30] sm:$0xf] %v468
      %501 = vst [vmem:[%s145 + $0x34] sm:$0xf] %v469
      %502 = vst [vmem:[%s145 + $0x38] sm:$0xf] %v470
      %503 = vst [vmem:[%s145 + $0x3c] sm:$0xf] %v471
      %504 = vst [vmem:[%s145 + $0x40] sm:$0xf] %v472
      %505 = vst [vmem:[%s145 + $0x44] sm:$0xf] %v473
      %506 = vst [vmem:[%s145 + $0x48] sm:$0xf] %v474
      %507 = vst [vmem:[%s145 + $0x4c] sm:$0xf] %v475
      %508 = vst [vmem:[%s145 + $0x50] sm:$0xf] %v476
      %509 = vst [vmem:[%s145 + $0x54] sm:$0xf] %v477
      %510 = vst [vmem:[%s145 + $0x58] sm:$0xf] %v478
      %511 = vst [vmem:[%s145 + $0x5c] sm:$0xf] %v479
      %512 = vst [vmem:[%s145 + $0x60] sm:$0xf] %v480
      %513 = vst [vmem:[%s145 + $0x64] sm:$0xf] %v481
      %514 = vst [vmem:[%s145 + $0x68] sm:$0xf] %v482
      %515 = vst [vmem:[%s145 + $0x6c] sm:$0xf] %v483
      %516 = vst [vmem:[%s145 + $0x70] sm:$0xf] %v484
      %517 = vst [vmem:[%s145 + $0x74] sm:$0xf] %v485
      %518 = vst [vmem:[%s145 + $0x78] sm:$0xf] %v486
      %519 = vst [vmem:[%s145 + $0x7c] sm:$0xf] %v487
      %s520 = smul.u32 32, %s13
      %p521 = scmp.lt.s32.totalorder %s520, 63
      %s522 = scalar_select %p521, %s520, 63
      %s523 = smul.addr %s522, 4
      %s524 = scalar_lea.vmem %s2, %s523
      // Predicated region
      $region29: #{generator_forward.19} parent=27 // pred_check
        %p525 = pneg %p78
      $region30: #{generator_forward.19} parent=27 // pred_check_branch
        %527 = sbr.rel (%p525) target = $region32
      $region31: #{generator_forward.19} parent=27 // pred_region
        %s528 = smul.u32 32, %s13
      $region32: #{generator_forward.19} parent=27 // pred_fallthru
        _
    $region28: #{generator_forward.19} parent=5 // pred_fallthru
      _
    %p529 = scmp.le.s32.totalorder 2, %s8
    // Predicated region
    $region33: #{generator_forward.19} parent=5 // pred_check
      %p530 = pneg %p529
    $region34: #{generator_forward.19} parent=5 // pred_check_branch
      %532 = sbr.rel (%p530) target = $region36
    $region35: #{generator_forward.19} parent=5 // pred_region
      %s533 = ssub.s32 %s8, 2
      // Predicated region
      $region37: #{generator_forward.19} parent=35 // pred_check
        %p534 = pneg %p84
      $region38: #{generator_forward.19} parent=35 // pred_check_branch
        %536 = sbr.rel (%p534) target = $region40
      $region39: #{generator_forward.19} parent=35 // pred_region
        %s537 = smul.u32 32, %s14
        %p538 = scmp.lt.s32.totalorder %s537, 63
        %s539 = scalar_select %p538, %s537, 63
        %s540 = smul.addr %s539, 4
        %s541 = scalar_lea.vmem %s2, %s540
      $region40: #{generator_forward.19} parent=35 // pred_fallthru
        _
    $region36: #{generator_forward.19} parent=5 // pred_fallthru
      _
  $region6: #{generator_forward.19} parent=0 // loop_footer
    %s12 = sadd.s32 1, %s8
  $region7: #{generator_forward.19} parent=0 // loop_footer_branch
    %7 = sbr.rel target = $region3
  $region8: #{generator_forward.19} parent=0 // loop_exit
    _

// kernel: generator_forward.21
$region0: #{generator_forward.21}
  #allocation0 [shape = 'u32[]', space=smem, size = 0x4, offset = 0x4, fixed_abs, tag = 'smem constant byte address 0x4 - core index']
  #allocation1 [shape = 'u32[72,128]{1,0:T(1,128)}', space=vmem, size = 0x9000, scoped, tag = 'internal scratch']
  %s0 = inlined_call_operand.vmem [shape: f32[48,128], index: 0, kind: input, shape index: {}]
  %s1 = inlined_call_operand.vmem [shape: f32[48,128], index: 1, kind: output, shape index: {}]
  %s2 = sld [smem:[#allocation0]]
  $region14: #{generator_forward.21} parent=0
    _
  %s4 = ssub.s32 1, %s2
  %s5 = scalar_select 0, %s4, %s2
  // Predicated region
  $region2: #{generator_forward.21} parent=0 // pred_check
    _
  $region3: #{generator_forward.21} parent=0 // pred_check_branch
    %7 = sbr.rel (0) target = $region5
  $region4: #{generator_forward.21} parent=0 // pred_region
    _
  $region5: #{generator_forward.21} parent=0 // pred_fallthru
    _
  %v8 = vld [vmem:[%s0] sm:$0xff]
  %v9 = vld [vmem:[%s0 + $0x8] sm:$0xff]
  %v10 = vld [vmem:[%s0 + $0x10] sm:$0xff]
  %v11 = vld [vmem:[%s0 + $0x18] sm:$0xff]
  %v12 = vld [vmem:[%s0 + $0x20] sm:$0xff]
  %v13 = vld [vmem:[%s0 + $0x28] sm:$0xff]
  %v14 = vsub.f32 0.0, %v8
  %v15 = vsub.f32 0.0, %v9
  %v16 = vsub.f32 0.0, %v10
  %v17 = vsub.f32 0.0, %v11
  %v18 = vsub.f32 0.0, %v12
  %v19 = vsub.f32 0.0, %v13
  %v20 = vmul.f32 %v14, 1.442695
  %v21 = vpow.pop %v20
  %v22 = vmul.f32 %v15, 1.442695
  %v23 = vpow.pop %v22
  %v24 = vmul.f32 %v16, 1.442695
  %v25 = vpow.pop %v24
  %v26 = vmul.f32 %v17, 1.442695
  %v27 = vpow.pop %v26
  %v28 = vmul.f32 %v18, 1.442695
  %v29 = vpow.pop %v28
  %v30 = vmul.f32 %v19, 1.442695
  %v31 = vpow.pop %v30
  %v32 = vadd.f32 %v21, 1.0
  %v33 = vadd.f32 %v23, 1.0
  %v34 = vadd.f32 %v25, 1.0
  %v35 = vadd.f32 %v27, 1.0
  %v36 = vadd.f32 %v29, 1.0
  %v37 = vadd.f32 %v31, 1.0
  %v38 = vrcp.pop %v32
  %v39 = vmul.f32 %v32, %v38
  %v40 = vsub.f32 1.0, %v39
  %v41 = vmul.f32 %v38, %v40
  %v42 = vadd.f32 %v38, %v41
  %vm43 = vweird.f32 %v32
  %vm44 = vweird.f32 %v38
  %vm45 = vmor %vm43, %vm44
  %v46 = vsel %vm45, %v38, %v42
  %v47 = vand.u32 2147483647, %v32
  %vm48 = vcmp.eq.f32.partialorder %v47, 8.507059e+37
  %v49 = vand.u32 %v32, 2147483648
  %v50 = vor.u32 1.1754944e-38, %v49
  %v51 = vsel %vm48, %v50, %v46
  %v52 = vmul.f32 1.0, %v51
  %v53 = vrcp.pop %v33
  %v54 = vmul.f32 %v33, %v53
  %v55 = vsub.f32 1.0, %v54
  %v56 = vmul.f32 %v53, %v55
  %v57 = vadd.f32 %v53, %v56
  %vm58 = vweird.f32 %v33
  %vm59 = vweird.f32 %v53
  %vm60 = vmor %vm58, %vm59
  %v61 = vsel %vm60, %v53, %v57
  %v62 = vand.u32 2147483647, %v33
  %vm63 = vcmp.eq.f32.partialorder %v62, 8.507059e+37
  %v64 = vand.u32 %v33, 2147483648
  %v65 = vor.u32 1.1754944e-38, %v64
  %v66 = vsel %vm63, %v65, %v61
  %v67 = vmul.f32 1.0, %v66
  %v68 = vrcp.pop %v34
  %v69 = vmul.f32 %v34, %v68
  %v70 = vsub.f32 1.0, %v69
  %v71 = vmul.f32 %v68, %v70
  %v72 = vadd.f32 %v68, %v71
  %vm73 = vweird.f32 %v34
  %vm74 = vweird.f32 %v68
  %vm75 = vmor %vm73, %vm74
  %v76 = vsel %vm75, %v68, %v72
  %v77 = vand.u32 2147483647, %v34
  %vm78 = vcmp.eq.f32.partialorder %v77, 8.507059e+37
  %v79 = vand.u32 %v34, 2147483648
  %v80 = vor.u32 1.1754944e-38, %v79
  %v81 = vsel %vm78, %v80, %v76
  %v82 = vmul.f32 1.0, %v81
  %v83 = vrcp.pop %v35
  %v84 = vmul.f32 %v35, %v83
  %v85 = vsub.f32 1.0, %v84
  %v86 = vmul.f32 %v83, %v85
  %v87 = vadd.f32 %v83, %v86
  %vm88 = vweird.f32 %v35
  %vm89 = vweird.f32 %v83
  %vm90 = vmor %vm88, %vm89
  %v91 = vsel %vm90, %v83, %v87
  %v92 = vand.u32 2147483647, %v35
  %vm93 = vcmp.eq.f32.partialorder %v92, 8.507059e+37
  %v94 = vand.u32 %v35, 2147483648
  %v95 = vor.u32 1.1754944e-38, %v94
  %v96 = vsel %vm93, %v95, %v91
  %v97 = vmul.f32 1.0, %v96
  %v98 = vrcp.pop %v36
  %v99 = vmul.f32 %v36, %v98
  %v100 = vsub.f32 1.0, %v99
  %v101 = vmul.f32 %v98, %v100
  %v102 = vadd.f32 %v98, %v101
  %vm103 = vweird.f32 %v36
  %vm104 = vweird.f32 %v98
  %vm105 = vmor %vm103, %vm104
  %v106 = vsel %vm105, %v98, %v102
  %v107 = vand.u32 2147483647, %v36
  %vm108 = vcmp.eq.f32.partialorder %v107, 8.507059e+37
  %v109 = vand.u32 %v36, 2147483648
  %v110 = vor.u32 1.1754944e-38, %v109
  %v111 = vsel %vm108, %v110, %v106
  %v112 = vmul.f32 1.0, %v111
  %v113 = vrcp.pop %v37
  %v114 = vmul.f32 %v37, %v113
  %v115 = vsub.f32 1.0, %v114
  %v116 = vmul.f32 %v113, %v115
  %v117 = vadd.f32 %v113, %v116
  %vm118 = vweird.f32 %v37
  %vm119 = vweird.f32 %v113
  %vm120 = vmor %vm118, %vm119
  %v121 = vsel %vm120, %v113, %v117
  %v122 = vand.u32 2147483647, %v37
  %vm123 = vcmp.eq.f32.partialorder %v122, 8.507059e+37
  %v124 = vand.u32 %v37, 2147483648
  %v125 = vor.u32 1.1754944e-38, %v124
  %v126 = vsel %vm123, %v125, %v121
  %v127 = vmul.f32 1.0, %v126
  %128 = vst [vmem:[%s1] sm:$0xff] %v52
  %129 = vst [vmem:[%s1 + $0x8] sm:$0xff] %v67
  %130 = vst [vmem:[%s1 + $0x10] sm:$0xff] %v82
  %131 = vst [vmem:[%s1 + $0x18] sm:$0xff] %v97
  %132 = vst [vmem:[%s1 + $0x20] sm:$0xff] %v112
  %133 = vst [vmem:[%s1 + $0x28] sm:$0xff] %v127
  // Predicated region
  $region6: #{generator_forward.21} parent=0 // pred_check
    _
  $region7: #{generator_forward.21} parent=0 // pred_check_branch
    %135 = sbr.rel (0) target = $region9
  $region8: #{generator_forward.21} parent=0 // pred_region
    _
  $region9: #{generator_forward.21} parent=0 // pred_fallthru
    _
  // Predicated region
  $region10: #{generator_forward.21} parent=0 // pred_check
    _
  $region11: #{generator_forward.21} parent=0 // pred_check_branch
    %137 = sbr.rel (0) target = $region13
  $region12: #{generator_forward.21} parent=0 // pred_region
    _
  $region13: #{generator_forward.21} parent=0 // pred_fallthru
    _

</llo_original>
